<compile_context>
chip_gen: v5e
topology: v5e:2x2
jax: 0.10.0
libtpu: 0.0.40
codegen_flags: <defaults>
</compile_context>

<pallas_src>
import functools

import jax
import jax.numpy as jnp
from jax.experimental import pallas as pl
from jax.experimental.pallas import tpu as pltpu


def mha_kernel(x_ref, wqkv_ref, wpT_ref, bp_ref, o_ref, *, num_heads, head_size):
    # x_ref:    (b_blk, T, C)  activation block (input dtype, e.g. f32)
    # wqkv_ref: (C, 3C)        pre-transposed, head-packed [Q*scale | K | V], matmul dtype
    # wpT_ref:  (C, C)         pre-transposed output projection (y = ctx @ wpT), matmul dtype
    # bp_ref:   (1, C)         output-projection bias (f32)
    # o_ref:    (b_blk, T, C)
    b_blk, T, C = x_ref.shape
    H, hs = num_heads, head_size
    N = b_blk * T
    mm_dtype = wqkv_ref.dtype  # matmul dtype is carried by the pre-cast weights

    # One fused projection for all heads / batch rows: (N, C) x (C, 3C), f32 accumulate.
    x2d = x_ref[...].reshape(N, C).astype(mm_dtype)            # single bulk cast of x
    qkv = jnp.dot(x2d, wqkv_ref[...], preferred_element_type=jnp.float32)   # (N, 3C) f32
    # Single bulk cast for the attention matmuls (replaces ~3H per-slice casts).
    qkv = qkv.astype(mm_dtype).reshape(b_blk, T, 3 * C)

    # Lane-aligned slices of the fused projection (offsets 0, C, 2C are multiples of 128).
    q = qkv[:, :, :C]              # attention scale already folded into the Q weights
    k = qkv[:, :, C:2 * C]
    v = qkv[:, :, 2 * C:]

    # Additive causal mask, hoisted out of the head loop (broadcast over batch).
    row = jax.lax.broadcasted_iota(jnp.int32, (T, T), 0)
    col = jax.lax.broadcasted_iota(jnp.int32, (T, T), 1)
    mask = jnp.where(col <= row, 0.0, -jnp.inf).astype(jnp.float32)   # (T, T)

    # Small static head loop (H = 6). Degenerate b_blk == 1 still lowers fine (the big
    # projection matmuls are already 2-D); see TODO about flash tiling for production T.
    ctx_heads = []
    for h in range(H):
        lo = h * hs
        qh = q[:, :, lo:lo + hs]                               # (b, T, hs) mm_dtype
        kh = k[:, :, lo:lo + hs]
        vh = v[:, :, lo:lo + hs]

        s = jnp.einsum("btd,bsd->bts", qh, kh,
                       preferred_element_type=jnp.float32)     # (b, T, T) f32
        s = s + mask

        # softmax in f32; exact reciprocal on the EUP (keeps accuracy with bf16 matmuls)
        m = jnp.max(s, axis=-1, keepdims=True)
        p = jnp.exp(s - m)
        denom = jnp.sum(p, axis=-1, keepdims=True)
        attn = p * pl.reciprocal(denom)

        ctx_heads.append(
            jnp.einsum("bts,bsd->btd", attn.astype(mm_dtype), vh,
                       preferred_element_type=jnp.float32))    # (b, T, hs) f32

    # Assemble a lane-dense (N, C) context slab and do ONE K=C output projection
    # (instead of H narrow K=hs matmuls + H f32 adds of an (N, C) accumulator).
    ctx = jnp.concatenate(ctx_heads, axis=-1).reshape(N, C).astype(mm_dtype)
    y = jnp.dot(ctx, wpT_ref[...], preferred_element_type=jnp.float32)      # (N, C) f32
    y = y + bp_ref[...].astype(jnp.float32)
    o_ref[...] = y.reshape(b_blk, T, C).astype(o_ref.dtype)


def _pack_qkv(wq, wk, wv, scale):
    """(H, hs, C) PyTorch-style per-head weights -> (C, 3*H*hs) packed, pre-transposed.

    The attention scale is folded into the Q columns so the kernel never multiplies by it.
    """
    H, hs, C = wq.shape

    def cols(w):  # column block h of the result equals w[h].T
        return jnp.transpose(w, (2, 0, 1)).reshape(C, H * hs)

    return jnp.concatenate([cols(wq) * scale, cols(wk), cols(wv)], axis=1)   # (C, 3C)


def _pick_batch_block_and_vmem(B, T, C, H, mm_bytes):
    """Generation-aware block sizing: fill VMEM on 128-MiB v5e/v6e, stay conservative on v7x."""
    try:
        vmem_cap = int(pltpu.get_tpu_info().vmem_capacity_bytes)
    except Exception:  # pragma: no cover - conservative fallback (v7x per-TC budget)
        vmem_cap = 64 << 20
    vmem_limit = int(max(32 << 20, min(vmem_cap - (16 << 20), 64 << 20)))
    budget = vmem_limit // 2  # leave headroom for compiler scratch / spills

    def working_set(bb):  # rough per-grid-step estimate, bytes
        N = bb * T
        act = (N * 3 * C * (4 + mm_bytes)          # fused qkv: f32 result + bulk low-prec copy
               + 2 * 2 * bb * T * T * 4            # ~2 heads of scores/probs live (f32)
               + N * C * (4 + mm_bytes)            # assembled ctx slab (f32 + low-prec)
               + 2 * 2 * bb * T * C * 4)           # double-buffered x and o blocks
        wts = 2 * (3 * C * C + C * C + C) * mm_bytes   # double-buffered weight blocks
        return act + wts

    divisors = [d for d in range(B, 0, -1) if B % d == 0]
    bb = next((d for d in divisors if working_set(d) <= budget), 1)
    if vmem_cap <= (64 << 20) and bb == B and B >= 2:
        # v7x-class chip: 2 TensorCores share the "parallel" grid axis -> keep >= 2 steps.
        bb = max(d for d in divisors if d < B)
    return bb, vmem_limit


def multi_head_attention(x, wq, wk, wv, wp, bp, *, num_heads, head_size,
                         batch_block=None, matmul_dtype=jnp.bfloat16):
    B, T, C = x.shape
    assert num_heads * head_size == C
    scale = float(C) ** -0.5   # NOTE: module scales by n_embd**-0.5 (not head_size**-0.5)

    # Layout plumbing wrapper-side: pack/transpose weights once, pre-cast to matmul dtype.
    wqkv = _pack_qkv(wq, wk, wv, scale).astype(matmul_dtype)   # (C, 3C)
    wpT = wp.T.astype(matmul_dtype)                            # (C, C)
    bp = bp.astype(jnp.float32)                                # (1, C), added in f32

    mm_bytes = jnp.dtype(matmul_dtype).itemsize
    auto_bb, vmem_limit = _pick_batch_block_and_vmem(B, T, C, num_heads, mm_bytes)
    if batch_block is None:
        batch_block = auto_bb
    assert B % batch_block == 0
    grid_b = B // batch_block

    kernel = functools.partial(mha_kernel, num_heads=num_heads, head_size=head_size)

    return pl.pallas_call(
        kernel,
        out_shape=jax.ShapeDtypeStruct((B, T, C), x.dtype),
        grid_spec=pltpu.PrefetchScalarGridSpec(
            num_scalar_prefetch=0,
            grid=(grid_b,),
            in_specs=[
                pl.BlockSpec((batch_block, T, C), lambda b: (b, 0, 0)),
                pl.BlockSpec((C, 3 * C), lambda b: (0, 0)),
                pl.BlockSpec((C, C), lambda b: (0, 0)),
                pl.BlockSpec((1, C), lambda b: (0, 0)),
            ],
            out_specs=pl.BlockSpec((batch_block, T, C), lambda b: (b, 0, 0)),
        ),
        compiler_params=pltpu.CompilerParams(
            dimension_semantics=("parallel",),
            vmem_limit_bytes=vmem_limit,
        ),
    )(x, wqkv, wpT, bp)


def reference(x, wq, wk, wv, wp, bp, *, num_heads, head_size):
    """Pure-JAX reference matching the PyTorch module (eval mode, dropout = identity)."""
    B, T, C = x.shape
    scale = C ** (-0.5)
    causal = jnp.tril(jnp.ones((T, T), dtype=bool))
    outs = []
    for h in range(num_heads):
        q = jnp.einsum("btc,dc->btd", x, wq[h])
        k = jnp.einsum("btc,dc->btd", x, wk[h])
        v = jnp.einsum("btc,dc->btd", x, wv[h])
        wei = jnp.einsum("btd,bsd->bts", q, k) * scale
        wei = jnp.where(causal[None], wei, -jnp.inf)
        attn = jax.nn.softmax(wei, axis=-1)
        outs.append(jnp.einsum("bts,bsd->btd", attn, v))
    concat = jnp.concatenate(outs, axis=-1)
    return jnp.einsum("btc,dc->btd", concat, wp) + bp[0]


if __name__ == "__main__":
    # Small but module-consistent shapes: n_embd = 384 (lane-dense, = 3 * 128),
    # 6 heads x 64, T = 128 <= block_size = 256, batch = 2.
    B, T = 2, 128
    num_heads, head_size = 6, 64
    n_embd = num_heads * head_size   # 384, as in the PyTorch module

    key = jax.random.PRNGKey(0)
    kx, kq, kk, kv, kp, kb = jax.random.split(key, 6)

    x = jax.random.normal(kx, (B, T, n_embd), dtype=jnp.float32)
    wq = jax.random.normal(kq, (num_heads, head_size, n_embd), jnp.float32) / jnp.sqrt(n_embd)
    wk = jax.random.normal(kk, (num_heads, head_size, n_embd), jnp.float32) / jnp.sqrt(n_embd)
    wv = jax.random.normal(kv, (num_heads, head_size, n_embd), jnp.float32) / jnp.sqrt(n_embd)
    wp = jax.random.normal(kp, (n_embd, n_embd), jnp.float32) / jnp.sqrt(n_embd)
    bp = jax.random.normal(kb, (1, n_embd), jnp.float32) * 0.01

    ref = reference(x, wq, wk, wv, wp, bp, num_heads=num_heads, head_size=head_size)

    # 1) Default path: bf16 MXU operands, f32 accumulation / softmax.
    out_bf16 = multi_head_attention(x, wq, wk, wv, wp, bp,
                                    num_heads=num_heads, head_size=head_size)
    out_bf16 = jax.block_until_ready(out_bf16)
    assert out_bf16.shape == (B, T, n_embd)
    err_bf16 = float(jnp.max(jnp.abs(out_bf16 - ref)))
    assert err_bf16 < 8e-2, f"bf16 path max abs err {err_bf16}"

    # 2) Full-f32 matmul path (tighter check; proves the structure independent of bf16 rounding).
    out_f32 = multi_head_attention(x, wq, wk, wv, wp, bp,
                                   num_heads=num_heads, head_size=head_size,
                                   matmul_dtype=jnp.float32)
    out_f32 = jax.block_until_ready(out_f32)
    err_f32 = float(jnp.max(jnp.abs(out_f32 - ref)))
    assert err_f32 < 1e-2, f"f32 path max abs err {err_f32}"

    print("KERNEL_OK")
</pallas_src>

<mosaic_0001>
module attributes {stable_mosaic.version = 11 : i64} {
  func.func @mha_kernel(%arg0: i32, %arg1: memref<1x128x384xf32, #tpu.memory_space<vmem>>, %arg2: memref<384x1152xbf16, #tpu.memory_space<vmem>>, %arg3: memref<384x384xbf16, #tpu.memory_space<vmem>>, %arg4: memref<1x384xf32, #tpu.memory_space<vmem>>, %arg5: memref<1x128x384xf32, #tpu.memory_space<vmem>>) attributes {dimension_semantics = [#tpu.dimension_semantics<parallel>], iteration_bounds = array<i64: 2>, scalar_prefetch = 0 : i64, scratch_operands = 0 : i64, tpu.core_type = #tpu.core_type<tc>, window_params = [{transform_indices = @transform_0, window_bounds = array<i64: 1, 128, 384>}, {pipeline_mode = #tpu.pipeline_mode<synchronous>, transform_indices = @transform_1, window_bounds = array<i64: 384, 1152>}, {pipeline_mode = #tpu.pipeline_mode<synchronous>, transform_indices = @transform_2, window_bounds = array<i64: 384, 384>}, {pipeline_mode = #tpu.pipeline_mode<synchronous>, transform_indices = @transform_3, window_bounds = array<i64: 1, 384>}, {transform_indices = @transform_4, window_bounds = array<i64: 1, 128, 384>}]} {
    %c0 = arith.constant 0 : index
    %c0_0 = arith.constant 0 : index
    %c0_1 = arith.constant 0 : index
    %0 = vector.load %arg1[%c0, %c0_0, %c0_1] : memref<1x128x384xf32, #tpu.memory_space<vmem>>, vector<1x128x384xf32>
    %1 = vector.shape_cast %0 : vector<1x128x384xf32> to vector<128x384xf32>
    %2 = arith.truncf %1 : vector<128x384xf32> to vector<128x384xbf16>
    %c0_2 = arith.constant 0 : index
    %c0_3 = arith.constant 0 : index
    %3 = vector.load %arg2[%c0_2, %c0_3] : memref<384x1152xbf16, #tpu.memory_space<vmem>>, vector<384x1152xbf16>
    %cst = arith.constant dense<0.000000e+00> : vector<128x1152xf32>
    %4 = tpu.matmul %2, %3, %cst {dimension_numbers = #tpu.dot_dimension_numbers<[1], [0], [0], [1], [0, 0, 1, 1], [], []>} : vector<128x384xbf16>, vector<384x1152xbf16>, vector<128x1152xf32> -> vector<128x1152xf32>
    %5 = arith.truncf %4 : vector<128x1152xf32> to vector<128x1152xbf16>
    %6 = vector.shape_cast %5 : vector<128x1152xbf16> to vector<1x128x1152xbf16>
    %7 = vector.extract_strided_slice %6 {offsets = [0, 0, 0], sizes = [1, 128, 384], strides = [1, 1, 1]} : vector<1x128x1152xbf16> to vector<1x128x384xbf16>
    %8 = vector.extract_strided_slice %6 {offsets = [0, 0, 384], sizes = [1, 128, 384], strides = [1, 1, 1]} : vector<1x128x1152xbf16> to vector<1x128x384xbf16>
    %9 = vector.extract_strided_slice %6 {offsets = [0, 0, 768], sizes = [1, 128, 384], strides = [1, 1, 1]} : vector<1x128x1152xbf16> to vector<1x128x384xbf16>
    %10 = tpu.iota {dimensions = array<i32: 0>} : vector<128x128xi32>
    %11 = tpu.iota {dimensions = array<i32: 1>} : vector<128x128xi32>
    %12 = arith.cmpi sle, %11, %10 : vector<128x128xi32>
    %cst_4 = arith.constant 0.000000e+00 : f32
    %cst_5 = arith.constant 0xFF800000 : f32
    %13 = vector.broadcast %cst_4 : f32 to vector<128x128xf32>
    %14 = vector.broadcast %cst_5 : f32 to vector<128x128xf32>
    %15 = arith.select %12, %13, %14 : vector<128x128xi1>, vector<128x128xf32>
    %16 = vector.extract_strided_slice %7 {offsets = [0, 0, 0], sizes = [1, 128, 64], strides = [1, 1, 1]} : vector<1x128x384xbf16> to vector<1x128x64xbf16>
    %17 = vector.extract_strided_slice %8 {offsets = [0, 0, 0], sizes = [1, 128, 64], strides = [1, 1, 1]} : vector<1x128x384xbf16> to vector<1x128x64xbf16>
    %18 = vector.extract_strided_slice %9 {offsets = [0, 0, 0], sizes = [1, 128, 64], strides = [1, 1, 1]} : vector<1x128x384xbf16> to vector<1x128x64xbf16>
    "tpu.trace_start"() <{level = 10 : i32, message = "btd,bsd->bts"}> : () -> ()
    %cst_6 = arith.constant dense<0.000000e+00> : vector<1x128x128xf32>
    %19 = tpu.matmul %16, %17, %cst_6 {dimension_numbers = #tpu.dot_dimension_numbers<[2], [2], [1], [1], [0, 0, 0, 1, 1, 1], [0], [0]>} : vector<1x128x64xbf16>, vector<1x128x64xbf16>, vector<1x128x128xf32> -> vector<1x128x128xf32>
    "tpu.trace_stop"() : () -> ()
    %20 = vector.shape_cast %15 : vector<128x128xf32> to vector<1x128x128xf32>
    %21 = arith.addf %19, %20 : vector<1x128x128xf32>
    %cst_7 = arith.constant dense<0xFF800000> : vector<1x128xf32>
    %22 = vector.multi_reduction <maximumf>, %21, %cst_7 [2] : vector<1x128x128xf32> to vector<1x128xf32>
    %23 = vector.shape_cast %22 : vector<1x128xf32> to vector<1x128x1xf32>
    %24 = vector.broadcast %23 : vector<1x128x1xf32> to vector<1x128x128xf32>
    %25 = arith.subf %21, %24 : vector<1x128x128xf32>
    %26 = math.exp %25 : vector<1x128x128xf32>
    %cst_8 = arith.constant dense<0.000000e+00> : vector<1x128xf32>
    %27 = vector.multi_reduction <add>, %26, %cst_8 [2] : vector<1x128x128xf32> to vector<1x128xf32>
    %28 = vector.shape_cast %27 : vector<1x128xf32> to vector<1x128x1xf32>
    %29 = tpu.reciprocal %28 : vector<1x128x1xf32> -> vector<1x128x1xf32>
    %30 = vector.broadcast %29 : vector<1x128x1xf32> to vector<1x128x128xf32>
    %31 = arith.mulf %26, %30 : vector<1x128x128xf32>
    %32 = arith.truncf %31 : vector<1x128x128xf32> to vector<1x128x128xbf16>
    "tpu.trace_start"() <{level = 10 : i32, message = "bts,bsd->btd"}> : () -> ()
    %cst_9 = arith.constant dense<0.000000e+00> : vector<1x128x64xf32>
    %33 = tpu.matmul %32, %18, %cst_9 {dimension_numbers = #tpu.dot_dimension_numbers<[2], [1], [1], [2], [0, 0, 0, 1, 1, 2], [0], [0]>} : vector<1x128x128xbf16>, vector<1x128x64xbf16>, vector<1x128x64xf32> -> vector<1x128x64xf32>
    "tpu.trace_stop"() : () -> ()
    %34 = vector.extract_strided_slice %7 {offsets = [0, 0, 64], sizes = [1, 128, 64], strides = [1, 1, 1]} : vector<1x128x384xbf16> to vector<1x128x64xbf16>
    %35 = vector.extract_strided_slice %8 {offsets = [0, 0, 64], sizes = [1, 128, 64], strides = [1, 1, 1]} : vector<1x128x384xbf16> to vector<1x128x64xbf16>
    %36 = vector.extract_strided_slice %9 {offsets = [0, 0, 64], sizes = [1, 128, 64], strides = [1, 1, 1]} : vector<1x128x384xbf16> to vector<1x128x64xbf16>
    "tpu.trace_start"() <{level = 10 : i32, message = "btd,bsd->bts"}> : () -> ()
    %cst_10 = arith.constant dense<0.000000e+00> : vector<1x128x128xf32>
    %37 = tpu.matmul %34, %35, %cst_10 {dimension_numbers = #tpu.dot_dimension_numbers<[2], [2], [1], [1], [0, 0, 0, 1, 1, 1], [0], [0]>} : vector<1x128x64xbf16>, vector<1x128x64xbf16>, vector<1x128x128xf32> -> vector<1x128x128xf32>
    "tpu.trace_stop"() : () -> ()
    %38 = vector.shape_cast %15 : vector<128x128xf32> to vector<1x128x128xf32>
    %39 = arith.addf %37, %38 : vector<1x128x128xf32>
    %cst_11 = arith.constant dense<0xFF800000> : vector<1x128xf32>
    %40 = vector.multi_reduction <maximumf>, %39, %cst_11 [2] : vector<1x128x128xf32> to vector<1x128xf32>
    %41 = vector.shape_cast %40 : vector<1x128xf32> to vector<1x128x1xf32>
    %42 = vector.broadcast %41 : vector<1x128x1xf32> to vector<1x128x128xf32>
    %43 = arith.subf %39, %42 : vector<1x128x128xf32>
    %44 = math.exp %43 : vector<1x128x128xf32>
    %cst_12 = arith.constant dense<0.000000e+00> : vector<1x128xf32>
    %45 = vector.multi_reduction <add>, %44, %cst_12 [2] : vector<1x128x128xf32> to vector<1x128xf32>
    %46 = vector.shape_cast %45 : vector<1x128xf32> to vector<1x128x1xf32>
    %47 = tpu.reciprocal %46 : vector<1x128x1xf32> -> vector<1x128x1xf32>
    %48 = vector.broadcast %47 : vector<1x128x1xf32> to vector<1x128x128xf32>
    %49 = arith.mulf %44, %48 : vector<1x128x128xf32>
    %50 = arith.truncf %49 : vector<1x128x128xf32> to vector<1x128x128xbf16>
    "tpu.trace_start"() <{level = 10 : i32, message = "bts,bsd->btd"}> : () -> ()
    %cst_13 = arith.constant dense<0.000000e+00> : vector<1x128x64xf32>
    %51 = tpu.matmul %50, %36, %cst_13 {dimension_numbers = #tpu.dot_dimension_numbers<[2], [1], [1], [2], [0, 0, 0, 1, 1, 2], [0], [0]>} : vector<1x128x128xbf16>, vector<1x128x64xbf16>, vector<1x128x64xf32> -> vector<1x128x64xf32>
    "tpu.trace_stop"() : () -> ()
    %52 = vector.extract_strided_slice %7 {offsets = [0, 0, 128], sizes = [1, 128, 64], strides = [1, 1, 1]} : vector<1x128x384xbf16> to vector<1x128x64xbf16>
    %53 = vector.extract_strided_slice %8 {offsets = [0, 0, 128], sizes = [1, 128, 64], strides = [1, 1, 1]} : vector<1x128x384xbf16> to vector<1x128x64xbf16>
    %54 = vector.extract_strided_slice %9 {offsets = [0, 0, 128], sizes = [1, 128, 64], strides = [1, 1, 1]} : vector<1x128x384xbf16> to vector<1x128x64xbf16>
    "tpu.trace_start"() <{level = 10 : i32, message = "btd,bsd->bts"}> : () -> ()
    %cst_14 = arith.constant dense<0.000000e+00> : vector<1x128x128xf32>
    %55 = tpu.matmul %52, %53, %cst_14 {dimension_numbers = #tpu.dot_dimension_numbers<[2], [2], [1], [1], [0, 0, 0, 1, 1, 1], [0], [0]>} : vector<1x128x64xbf16>, vector<1x128x64xbf16>, vector<1x128x128xf32> -> vector<1x128x128xf32>
    "tpu.trace_stop"() : () -> ()
    %56 = vector.shape_cast %15 : vector<128x128xf32> to vector<1x128x128xf32>
    %57 = arith.addf %55, %56 : vector<1x128x128xf32>
    %cst_15 = arith.constant dense<0xFF800000> : vector<1x128xf32>
    %58 = vector.multi_reduction <maximumf>, %57, %cst_15 [2] : vector<1x128x128xf32> to vector<1x128xf32>
    %59 = vector.shape_cast %58 : vector<1x128xf32> to vector<1x128x1xf32>
    %60 = vector.broadcast %59 : vector<1x128x1xf32> to vector<1x128x128xf32>
    %61 = arith.subf %57, %60 : vector<1x128x128xf32>
    %62 = math.exp %61 : vector<1x128x128xf32>
    %cst_16 = arith.constant dense<0.000000e+00> : vector<1x128xf32>
    %63 = vector.multi_reduction <add>, %62, %cst_16 [2] : vector<1x128x128xf32> to vector<1x128xf32>
    %64 = vector.shape_cast %63 : vector<1x128xf32> to vector<1x128x1xf32>
    %65 = tpu.reciprocal %64 : vector<1x128x1xf32> -> vector<1x128x1xf32>
    %66 = vector.broadcast %65 : vector<1x128x1xf32> to vector<1x128x128xf32>
    %67 = arith.mulf %62, %66 : vector<1x128x128xf32>
    %68 = arith.truncf %67 : vector<1x128x128xf32> to vector<1x128x128xbf16>
    "tpu.trace_start"() <{level = 10 : i32, message = "bts,bsd->btd"}> : () -> ()
    %cst_17 = arith.constant dense<0.000000e+00> : vector<1x128x64xf32>
    %69 = tpu.matmul %68, %54, %cst_17 {dimension_numbers = #tpu.dot_dimension_numbers<[2], [1], [1], [2], [0, 0, 0, 1, 1, 2], [0], [0]>} : vector<1x128x128xbf16>, vector<1x128x64xbf16>, vector<1x128x64xf32> -> vector<1x128x64xf32>
    "tpu.trace_stop"() : () -> ()
    %70 = vector.extract_strided_slice %7 {offsets = [0, 0, 192], sizes = [1, 128, 64], strides = [1, 1, 1]} : vector<1x128x384xbf16> to vector<1x128x64xbf16>
    %71 = vector.extract_strided_slice %8 {offsets = [0, 0, 192], sizes = [1, 128, 64], strides = [1, 1, 1]} : vector<1x128x384xbf16> to vector<1x128x64xbf16>
    %72 = vector.extract_strided_slice %9 {offsets = [0, 0, 192], sizes = [1, 128, 64], strides = [1, 1, 1]} : vector<1x128x384xbf16> to vector<1x128x64xbf16>
    "tpu.trace_start"() <{level = 10 : i32, message = "btd,bsd->bts"}> : () -> ()
    %cst_18 = arith.constant dense<0.000000e+00> : vector<1x128x128xf32>
    %73 = tpu.matmul %70, %71, %cst_18 {dimension_numbers = #tpu.dot_dimension_numbers<[2], [2], [1], [1], [0, 0, 0, 1, 1, 1], [0], [0]>} : vector<1x128x64xbf16>, vector<1x128x64xbf16>, vector<1x128x128xf32> -> vector<1x128x128xf32>
    "tpu.trace_stop"() : () -> ()
    %74 = vector.shape_cast %15 : vector<128x128xf32> to vector<1x128x128xf32>
    %75 = arith.addf %73, %74 : vector<1x128x128xf32>
    %cst_19 = arith.constant dense<0xFF800000> : vector<1x128xf32>
    %76 = vector.multi_reduction <maximumf>, %75, %cst_19 [2] : vector<1x128x128xf32> to vector<1x128xf32>
    %77 = vector.shape_cast %76 : vector<1x128xf32> to vector<1x128x1xf32>
    %78 = vector.broadcast %77 : vector<1x128x1xf32> to vector<1x128x128xf32>
    %79 = arith.subf %75, %78 : vector<1x128x128xf32>
    %80 = math.exp %79 : vector<1x128x128xf32>
    %cst_20 = arith.constant dense<0.000000e+00> : vector<1x128xf32>
    %81 = vector.multi_reduction <add>, %80, %cst_20 [2] : vector<1x128x128xf32> to vector<1x128xf32>
    %82 = vector.shape_cast %81 : vector<1x128xf32> to vector<1x128x1xf32>
    %83 = tpu.reciprocal %82 : vector<1x128x1xf32> -> vector<1x128x1xf32>
    %84 = vector.broadcast %83 : vector<1x128x1xf32> to vector<1x128x128xf32>
    %85 = arith.mulf %80, %84 : vector<1x128x128xf32>
    %86 = arith.truncf %85 : vector<1x128x128xf32> to vector<1x128x128xbf16>
    "tpu.trace_start"() <{level = 10 : i32, message = "bts,bsd->btd"}> : () -> ()
    %cst_21 = arith.constant dense<0.000000e+00> : vector<1x128x64xf32>
    %87 = tpu.matmul %86, %72, %cst_21 {dimension_numbers = #tpu.dot_dimension_numbers<[2], [1], [1], [2], [0, 0, 0, 1, 1, 2], [0], [0]>} : vector<1x128x128xbf16>, vector<1x128x64xbf16>, vector<1x128x64xf32> -> vector<1x128x64xf32>
    "tpu.trace_stop"() : () -> ()
    %88 = vector.extract_strided_slice %7 {offsets = [0, 0, 256], sizes = [1, 128, 64], strides = [1, 1, 1]} : vector<1x128x384xbf16> to vector<1x128x64xbf16>
    %89 = vector.extract_strided_slice %8 {offsets = [0, 0, 256], sizes = [1, 128, 64], strides = [1, 1, 1]} : vector<1x128x384xbf16> to vector<1x128x64xbf16>
    %90 = vector.extract_strided_slice %9 {offsets = [0, 0, 256], sizes = [1, 128, 64], strides = [1, 1, 1]} : vector<1x128x384xbf16> to vector<1x128x64xbf16>
    "tpu.trace_start"() <{level = 10 : i32, message = "btd,bsd->bts"}> : () -> ()
    %cst_22 = arith.constant dense<0.000000e+00> : vector<1x128x128xf32>
    %91 = tpu.matmul %88, %89, %cst_22 {dimension_numbers = #tpu.dot_dimension_numbers<[2], [2], [1], [1], [0, 0, 0, 1, 1, 1], [0], [0]>} : vector<1x128x64xbf16>, vector<1x128x64xbf16>, vector<1x128x128xf32> -> vector<1x128x128xf32>
    "tpu.trace_stop"() : () -> ()
    %92 = vector.shape_cast %15 : vector<128x128xf32> to vector<1x128x128xf32>
    %93 = arith.addf %91, %92 : vector<1x128x128xf32>
    %cst_23 = arith.constant dense<0xFF800000> : vector<1x128xf32>
    %94 = vector.multi_reduction <maximumf>, %93, %cst_23 [2] : vector<1x128x128xf32> to vector<1x128xf32>
    %95 = vector.shape_cast %94 : vector<1x128xf32> to vector<1x128x1xf32>
    %96 = vector.broadcast %95 : vector<1x128x1xf32> to vector<1x128x128xf32>
    %97 = arith.subf %93, %96 : vector<1x128x128xf32>
    %98 = math.exp %97 : vector<1x128x128xf32>
    %cst_24 = arith.constant dense<0.000000e+00> : vector<1x128xf32>
    %99 = vector.multi_reduction <add>, %98, %cst_24 [2] : vector<1x128x128xf32> to vector<1x128xf32>
    %100 = vector.shape_cast %99 : vector<1x128xf32> to vector<1x128x1xf32>
    %101 = tpu.reciprocal %100 : vector<1x128x1xf32> -> vector<1x128x1xf32>
    %102 = vector.broadcast %101 : vector<1x128x1xf32> to vector<1x128x128xf32>
    %103 = arith.mulf %98, %102 : vector<1x128x128xf32>
    %104 = arith.truncf %103 : vector<1x128x128xf32> to vector<1x128x128xbf16>
    "tpu.trace_start"() <{level = 10 : i32, message = "bts,bsd->btd"}> : () -> ()
    %cst_25 = arith.constant dense<0.000000e+00> : vector<1x128x64xf32>
    %105 = tpu.matmul %104, %90, %cst_25 {dimension_numbers = #tpu.dot_dimension_numbers<[2], [1], [1], [2], [0, 0, 0, 1, 1, 2], [0], [0]>} : vector<1x128x128xbf16>, vector<1x128x64xbf16>, vector<1x128x64xf32> -> vector<1x128x64xf32>
    "tpu.trace_stop"() : () -> ()
    %106 = vector.extract_strided_slice %7 {offsets = [0, 0, 320], sizes = [1, 128, 64], strides = [1, 1, 1]} : vector<1x128x384xbf16> to vector<1x128x64xbf16>
    %107 = vector.extract_strided_slice %8 {offsets = [0, 0, 320], sizes = [1, 128, 64], strides = [1, 1, 1]} : vector<1x128x384xbf16> to vector<1x128x64xbf16>
    %108 = vector.extract_strided_slice %9 {offsets = [0, 0, 320], sizes = [1, 128, 64], strides = [1, 1, 1]} : vector<1x128x384xbf16> to vector<1x128x64xbf16>
    "tpu.trace_start"() <{level = 10 : i32, message = "btd,bsd->bts"}> : () -> ()
    %cst_26 = arith.constant dense<0.000000e+00> : vector<1x128x128xf32>
    %109 = tpu.matmul %106, %107, %cst_26 {dimension_numbers = #tpu.dot_dimension_numbers<[2], [2], [1], [1], [0, 0, 0, 1, 1, 1], [0], [0]>} : vector<1x128x64xbf16>, vector<1x128x64xbf16>, vector<1x128x128xf32> -> vector<1x128x128xf32>
    "tpu.trace_stop"() : () -> ()
    %110 = vector.shape_cast %15 : vector<128x128xf32> to vector<1x128x128xf32>
    %111 = arith.addf %109, %110 : vector<1x128x128xf32>
    %cst_27 = arith.constant dense<0xFF800000> : vector<1x128xf32>
    %112 = vector.multi_reduction <maximumf>, %111, %cst_27 [2] : vector<1x128x128xf32> to vector<1x128xf32>
    %113 = vector.shape_cast %112 : vector<1x128xf32> to vector<1x128x1xf32>
    %114 = vector.broadcast %113 : vector<1x128x1xf32> to vector<1x128x128xf32>
    %115 = arith.subf %111, %114 : vector<1x128x128xf32>
    %116 = math.exp %115 : vector<1x128x128xf32>
    %cst_28 = arith.constant dense<0.000000e+00> : vector<1x128xf32>
    %117 = vector.multi_reduction <add>, %116, %cst_28 [2] : vector<1x128x128xf32> to vector<1x128xf32>
    %118 = vector.shape_cast %117 : vector<1x128xf32> to vector<1x128x1xf32>
    %119 = tpu.reciprocal %118 : vector<1x128x1xf32> -> vector<1x128x1xf32>
    %120 = vector.broadcast %119 : vector<1x128x1xf32> to vector<1x128x128xf32>
    %121 = arith.mulf %116, %120 : vector<1x128x128xf32>
    %122 = arith.truncf %121 : vector<1x128x128xf32> to vector<1x128x128xbf16>
    "tpu.trace_start"() <{level = 10 : i32, message = "bts,bsd->btd"}> : () -> ()
    %cst_29 = arith.constant dense<0.000000e+00> : vector<1x128x64xf32>
    %123 = tpu.matmul %122, %108, %cst_29 {dimension_numbers = #tpu.dot_dimension_numbers<[2], [1], [1], [2], [0, 0, 0, 1, 1, 2], [0], [0]>} : vector<1x128x128xbf16>, vector<1x128x64xbf16>, vector<1x128x64xf32> -> vector<1x128x64xf32>
    "tpu.trace_stop"() : () -> ()
    %124 = tpu.concatenate %33, %51, %69, %87, %105, %123 in 2 : vector<1x128x64xf32>, vector<1x128x64xf32>, vector<1x128x64xf32>, vector<1x128x64xf32>, vector<1x128x64xf32>, vector<1x128x64xf32> -> vector<1x128x384xf32>
    %125 = vector.shape_cast %124 : vector<1x128x384xf32> to vector<128x384xf32>
    %126 = arith.truncf %125 : vector<128x384xf32> to vector<128x384xbf16>
    %c0_30 = arith.constant 0 : index
    %c0_31 = arith.constant 0 : index
    %127 = vector.load %arg3[%c0_30, %c0_31] : memref<384x384xbf16, #tpu.memory_space<vmem>>, vector<384x384xbf16>
    %cst_32 = arith.constant dense<0.000000e+00> : vector<128x384xf32>
    %128 = tpu.matmul %126, %127, %cst_32 {dimension_numbers = #tpu.dot_dimension_numbers<[1], [0], [0], [1], [0, 0, 1, 1], [], []>} : vector<128x384xbf16>, vector<384x384xbf16>, vector<128x384xf32> -> vector<128x384xf32>
    %c0_33 = arith.constant 0 : index
    %c0_34 = arith.constant 0 : index
    %129 = vector.load %arg4[%c0_33, %c0_34] : memref<1x384xf32, #tpu.memory_space<vmem>>, vector<1x384xf32>
    %130 = vector.broadcast %129 : vector<1x384xf32> to vector<128x384xf32>
    %131 = arith.addf %128, %130 : vector<128x384xf32>
    %132 = vector.shape_cast %131 : vector<128x384xf32> to vector<1x128x384xf32>
    %c0_35 = arith.constant 0 : index
    %c0_36 = arith.constant 0 : index
    %c0_37 = arith.constant 0 : index
    %133 = vector.load %arg5[%c0_35, %c0_36, %c0_37] : memref<1x128x384xf32, #tpu.memory_space<vmem>>, vector<1x128x384xf32>
    tpu.vector_store %arg5[%c0_35, %c0_36, %c0_37], %132 {strides = array<i32>} : memref<1x128x384xf32, #tpu.memory_space<vmem>>, vector<1x128x384xf32>,
    return
  }
  func.func @transform_0(%arg0: i32) -> (i32, i32, i32) {
    %c0_i32 = arith.constant 0 : i32
    %c0_i32_0 = arith.constant 0 : i32
    %c0_i32_1 = arith.constant 0 : i32
    return %arg0, %c0_i32, %c0_i32_0 : i32, i32, i32
  }
  func.func @transform_1(%arg0: i32) -> (i32, i32) {
    %c0_i32 = arith.constant 0 : i32
    %c0_i32_0 = arith.constant 0 : i32
    %c0_i32_1 = arith.constant 0 : i32
    return %c0_i32, %c0_i32_0 : i32, i32
  }
  func.func @transform_2(%arg0: i32) -> (i32, i32) {
    %c0_i32 = arith.constant 0 : i32
    %c0_i32_0 = arith.constant 0 : i32
    %c0_i32_1 = arith.constant 0 : i32
    return %c0_i32, %c0_i32_0 : i32, i32
  }
  func.func @transform_3(%arg0: i32) -> (i32, i32) {
    %c0_i32 = arith.constant 0 : i32
    %c0_i32_0 = arith.constant 0 : i32
    %c0_i32_1 = arith.constant 0 : i32
    return %c0_i32, %c0_i32_0 : i32, i32
  }
  func.func @transform_4(%arg0: i32) -> (i32, i32, i32) {
    %c0_i32 = arith.constant 0 : i32
    %c0_i32_0 = arith.constant 0 : i32
    %c0_i32_1 = arith.constant 0 : i32
    return %arg0, %c0_i32, %c0_i32_0 : i32, i32, i32
  }
}

</mosaic_0001>

<llo_original>
// kernel: tpu_custom_call.1
$region0: #{tpu_custom_call.1}
  #allocation0 [shape = 'u32[]', space=smem, size = 0x4, offset = 0x4, fixed_abs, tag = 'smem constant byte address 0x4 - core index']
  #allocation1 [shape = 'u32[72,128]{1,0:T(1,128)}', space=vmem, size = 0x9000, scoped, tag = 'internal scratch']
  %s0 = inlined_call_operand.hbm [shape: f32[2,128,384], index: 0, kind: input, shape index: {}]
  %s1 = inlined_call_operand.hbm [shape: bf16[384,1152], index: 1, kind: input, shape index: {}]
  %s2 = inlined_call_operand.hbm [shape: bf16[384,384], index: 2, kind: input, shape index: {}]
  %s3 = inlined_call_operand.hbm [shape: f32[1,384], index: 3, kind: input, shape index: {}]
  %s4 = inlined_call_operand.hbm [shape: f32[2,128,384], index: 4, kind: output, shape index: {}]
  %s5 = sld [smem:[#allocation0]]
  $region65: #{tpu_custom_call.1} parent=0
    _
  %s7 = ssub.s32 1, %s5
  %s8 = scalar_select 0, %s7, %s5
  $region1: #{tpu_custom_call.1} parent=0
    #allocation2 [shape = 'u8[393216]{0}', space=vmem, size = 0x60000, scoped, tag = 'input window, operand 0']
    #allocation3 [shape = 's32[2]{0}', space=sflag, size = 0x8, scoped, tag = 'scoped memory for tpu_custom_call.1']
    #allocation4 [shape = 's32[2]{0}', space=sflag, size = 0x8, scoped, tag = 'scoped memory for tpu_custom_call.1']
    #allocation5 [shape = 'u8[884736]{0}', space=vmem, size = 0xd8000, scoped, tag = 'input window, operand 1, single buffered']
    #allocation6 [shape = 's32[1]{0}', space=sflag, size = 0x4, scoped, tag = 'scoped memory for tpu_custom_call.1']
    #allocation7 [shape = 'u8[294912]{0}', space=vmem, size = 0x48000, scoped, tag = 'input window, operand 2, single buffered']
    #allocation8 [shape = 'u8[1536]{0}', space=vmem, size = 0x800, scoped, tag = 'input window, operand 3, single buffered']
    #allocation9 [shape = 's32[1]{0}', space=sflag, size = 0x4, scoped, tag = 'scoped memory for tpu_custom_call.1']
    #allocation10 [shape = 'u8[393216]{0}', space=vmem, size = 0x60000, scoped, tag = 'output window, operand 0']
    %9 = vsyncpa [#allocation3], 0
    %s10 = scalar_lea.sflag [#allocation3], 1
    %11 = vsyncpa %s10, 0
    %12 = vsyncpa [#allocation6], 0
    %13 = vsyncpa [#allocation9], 0
    %14 = vsyncpa [#allocation4], 0
    %s15 = scalar_lea.sflag [#allocation4], 1
    %16 = vsyncpa %s15, 0
    loop: start=0, step=1, limit=4
    $region2: #{tpu_custom_call.1} parent=1 // loop_pre_header
      _
    $region3: #{tpu_custom_call.1} parent=1 // loop_header
      %s18 = sphi 0, %s22
      %p19 = scmp.ge.s32.totalorder %s18, 4
      %s28 = sphi 0, %s30
      %s31 = sphi 0, %s28
      %s32 = sphi 0, %s31
      %s48 = sphi 0, %s32
      %s52 = sphi 0, %s52
      %s54 = sphi 0, %s52
      %s55 = sphi 0, %s54
      %s69 = sphi 0, %s55
      %s73 = sphi 0, %s73
      %s75 = sphi 0, %s73
      %s76 = sphi 0, %s75
      %s90 = sphi 0, %s76
      %s94 = sphi 0, %s94
      %s96 = sphi 0, %s94
      %s97 = sphi 0, %s96
      %s111 = sphi 0, %s97
      %s117 = sphi 0, %s119
      %s120 = sphi 0, %s117
      %s121 = sphi 0, %s120
      %s137 = sphi 0, %s121
    $region4: #{tpu_custom_call.1} parent=1 // loop_header_branch
      %21 = sbr.rel (%p19) target = $region8
    $region5: #{tpu_custom_call.1} parent=1 // loop_body
      %s23 = ssub.s32 %s18, 1
      %s24 = ssub.s32 %s18, 2
      %s25 = sadd.s32 %s18, 1
      %s26 = ssub.s32 %s18, %s25
      %p27 = scmp.eq.s32.totalorder %s26, 0
      %s29 = sadd.s32 %s28, 1
      %s30 = scalar_select %p27, %s28, %s29
      %p33 = pneg %p27
      %p34 = scmp.eq.s32.totalorder %s18, 1
      %p35 = por %p33, %p34
      %p36 = scmp.ne.s32.totalorder %s28, %s31
      %p37 = scmp.eq.s32.totalorder %s18, 0
      %p38 = por %p36, %p37
      %p39 = scmp.ne.s32.totalorder %s28, %s31
      %p40 = scmp.eq.s32.totalorder %s23, 1
      %p41 = por %p39, %p40
      %p42 = scmp.ne.s32.totalorder %s31, %s32
      %p43 = scmp.eq.s32.totalorder %s23, 0
      %p44 = por %p42, %p43
      %p45 = scmp.ne.s32.totalorder %s31, %s32
      %p46 = scmp.eq.s32.totalorder %s24, 1
      %p47 = por %p45, %p46
      %p49 = scmp.ne.s32.totalorder %s32, %s48
      %p50 = scmp.eq.s32.totalorder %s24, 0
      %p51 = por %p49, %p50
      %s53 = sadd.s32 %s52, 1
      %p56 = scmp.eq.s32.totalorder %s18, 1
      %p57 = scmp.ne.s32.totalorder %s52, %s54
      %p58 = scmp.eq.s32.totalorder %s18, 0
      %p59 = por %p57, %p58
      %p60 = scmp.ne.s32.totalorder %s52, %s54
      %p61 = scmp.eq.s32.totalorder %s23, 1
      %p62 = por %p60, %p61
      %p63 = scmp.ne.s32.totalorder %s54, %s55
      %p64 = scmp.eq.s32.totalorder %s23, 0
      %p65 = por %p63, %p64
      %p66 = scmp.ne.s32.totalorder %s54, %s55
      %p67 = scmp.eq.s32.totalorder %s24, 1
      %p68 = por %p66, %p67
      %p70 = scmp.ne.s32.totalorder %s55, %s69
      %p71 = scmp.eq.s32.totalorder %s24, 0
      %p72 = por %p70, %p71
      %s74 = sadd.s32 %s73, 1
      %p77 = scmp.eq.s32.totalorder %s18, 1
      %p78 = scmp.ne.s32.totalorder %s73, %s75
      %p79 = scmp.eq.s32.totalorder %s18, 0
      %p80 = por %p78, %p79
      %p81 = scmp.ne.s32.totalorder %s73, %s75
      %p82 = scmp.eq.s32.totalorder %s23, 1
      %p83 = por %p81, %p82
      %p84 = scmp.ne.s32.totalorder %s75, %s76
      %p85 = scmp.eq.s32.totalorder %s23, 0
      %p86 = por %p84, %p85
      %p87 = scmp.ne.s32.totalorder %s75, %s76
      %p88 = scmp.eq.s32.totalorder %s24, 1
      %p89 = por %p87, %p88
      %p91 = scmp.ne.s32.totalorder %s76, %s90
      %p92 = scmp.eq.s32.totalorder %s24, 0
      %p93 = por %p91, %p92
      %s95 = sadd.s32 %s94, 1
      %p98 = scmp.eq.s32.totalorder %s18, 1
      %p99 = scmp.ne.s32.totalorder %s94, %s96
      %p100 = scmp.eq.s32.totalorder %s18, 0
      %p101 = por %p99, %p100
      %p102 = scmp.ne.s32.totalorder %s94, %s96
      %p103 = scmp.eq.s32.totalorder %s23, 1
      %p104 = por %p102, %p103
      %p105 = scmp.ne.s32.totalorder %s96, %s97
      %p106 = scmp.eq.s32.totalorder %s23, 0
      %p107 = por %p105, %p106
      %p108 = scmp.ne.s32.totalorder %s96, %s97
      %p109 = scmp.eq.s32.totalorder %s24, 1
      %p110 = por %p108, %p109
      %p112 = scmp.ne.s32.totalorder %s97, %s111
      %p113 = scmp.eq.s32.totalorder %s24, 0
      %p114 = por %p112, %p113
      %s115 = ssub.s32 %s18, %s25
      %p116 = scmp.eq.s32.totalorder %s115, 0
      %s118 = sadd.s32 %s117, 1
      %s119 = scalar_select %p116, %s117, %s118
      %p122 = pneg %p116
      %p123 = scmp.eq.s32.totalorder %s18, 1
      %p124 = por %p122, %p123
      %p125 = scmp.ne.s32.totalorder %s117, %s120
      %p126 = scmp.eq.s32.totalorder %s18, 0
      %p127 = por %p125, %p126
      %p128 = scmp.ne.s32.totalorder %s117, %s120
      %p129 = scmp.eq.s32.totalorder %s23, 1
      %p130 = por %p128, %p129
      %p131 = scmp.ne.s32.totalorder %s120, %s121
      %p132 = scmp.eq.s32.totalorder %s23, 0
      %p133 = por %p131, %p132
      %p134 = scmp.ne.s32.totalorder %s120, %s121
      %p135 = scmp.eq.s32.totalorder %s24, 1
      %p136 = por %p134, %p135
      %p138 = scmp.ne.s32.totalorder %s121, %s137
      %p139 = scmp.eq.s32.totalorder %s24, 0
      %p140 = por %p138, %p139
      %p141 = scmp.le.s32.totalorder 1, %s18
      %p142 = scmp.lt.s32.totalorder %s18, 3
      %p143 = pnand %p141, %p142
      %p144 = pneg %p143
      // Predicated region
      $region9: #{tpu_custom_call.1} parent=5 // pred_check
        _
      $region10: #{tpu_custom_call.1} parent=5 // pred_check_branch
        %146 = sbr.rel (%p143) target = $region12
      $region11: #{tpu_custom_call.1} parent=5 // pred_region
        %s147 = ssub.s32 %s18, 1
        // Predicated region
        $region13: #{tpu_custom_call.1} parent=11 // pred_check
          %p148 = pneg %p65
        $region14: #{tpu_custom_call.1} parent=11 // pred_check_branch
          %150 = sbr.rel (%p148) target = $region16
        $region15: #{tpu_custom_call.1} parent=11 // pred_region
          %152 = vsyncadd [#allocation6], 0
          %s153 = sshll.u32 %s1, 4
          %s154 = int_to_ptr.hbm [resolvable:$true] %s153
          %s155 = sshll.u32 [#allocation5], 4
          %s156 = int_to_ptr.vmem [resolvable:$true] %s155
          %161 = dma.hbm_to_vmem [thread:$0]  %s154, 27648, %s156, [#allocation6], 576, 576, 36
        $region16: #{tpu_custom_call.1} parent=11 // pred_fallthru
          _
        // Predicated region
        $region17: #{tpu_custom_call.1} parent=11 // pred_check
          %p162 = pneg %p86
        $region18: #{tpu_custom_call.1} parent=11 // pred_check_branch
          %164 = sbr.rel (%p162) target = $region20
        $region19: #{tpu_custom_call.1} parent=11 // pred_region
          %166 = vsyncadd [#allocation6], 0
          %s167 = sshll.u32 %s2, 4
          %s168 = int_to_ptr.hbm [resolvable:$true] %s167
          %s169 = sshll.u32 [#allocation7], 4
          %s170 = int_to_ptr.vmem [resolvable:$true] %s169
          %175 = dma.hbm_to_vmem [thread:$0]  %s168, 9216, %s170, [#allocation6], 192, 192, 12
        $region20: #{tpu_custom_call.1} parent=11 // pred_fallthru
          _
        // Predicated region
        $region21: #{tpu_custom_call.1} parent=11 // pred_check
          %p176 = pneg %p107
        $region22: #{tpu_custom_call.1} parent=11 // pred_check_branch
          %178 = sbr.rel (%p176) target = $region24
        $region23: #{tpu_custom_call.1} parent=11 // pred_region
          %180 = vsyncadd [#allocation9], 0
          %s182 = sshll.u32 %s3, 4
          %s183 = int_to_ptr.hbm [resolvable:$true] %s182
          %s184 = sshll.u32 [#allocation8], 4
          %s185 = int_to_ptr.vmem [resolvable:$true] %s184
          %187 = dma.hbm_to_vmem [thread:$0]  %s183, 48, %s185, [#allocation9]
        $region24: #{tpu_custom_call.1} parent=11 // pred_fallthru
          _
      $region12: #{tpu_custom_call.1} parent=5 // pred_fallthru
        _
      %p188 = scmp.lt.s32.totalorder %s18, 2
      // Predicated region
      $region25: #{tpu_custom_call.1} parent=5 // pred_check
        %p189 = pneg %p188
      $region26: #{tpu_custom_call.1} parent=5 // pred_check_branch
        %191 = sbr.rel (%p189) target = $region28
      $region27: #{tpu_custom_call.1} parent=5 // pred_region
        // Predicated region
        $region29: #{tpu_custom_call.1} parent=27 // pred_check
          %p192 = pneg %p38
        $region30: #{tpu_custom_call.1} parent=27 // pred_check_branch
          %194 = sbr.rel (%p192) target = $region32
        $region31: #{tpu_custom_call.1} parent=27 // pred_region
          %s195 = sand.u32 %s28, 1
          %s196 = scalar_lea.sflag [#allocation3], %s195
          %s197 = sand.u32 %s28, 1
          %s198 = smul.addr %s197, 384
          %s199 = scalar_lea.vmem [#allocation2], %s198
          %201 = vsyncadd %s196, 0
          %s202 = smul.addr %s18, 48
          %s203 = smul.addr %s202, 8
          %s204 = scalar_lea.hbm %s0, %s203
          %s205 = sshll.u32 %s204, 4
          %s206 = int_to_ptr.hbm [resolvable:$true] %s205
          %s207 = sshll.u32 %s199, 4
          %s208 = int_to_ptr.vmem [resolvable:$true] %s207
          %213 = dma.hbm_to_vmem [thread:$0]  %s206, 6144, %s208, %s196, 384, 384, 24
        $region32: #{tpu_custom_call.1} parent=27 // pred_fallthru
          _
      $region28: #{tpu_custom_call.1} parent=5 // pred_fallthru
        _
      %p214 = scmp.le.s32.totalorder 1, %s18
      %p215 = scmp.lt.s32.totalorder %s18, 3
      %p216 = pnand %p214, %p215
      %p217 = pneg %p216
      // Predicated region
      $region33: #{tpu_custom_call.1} parent=5 // pred_check
        _
      $region34: #{tpu_custom_call.1} parent=5 // pred_check_branch
        %219 = sbr.rel (%p216) target = $region36
      $region35: #{tpu_custom_call.1} parent=5 // pred_region
        %s220 = ssub.s32 %s18, 1
        %s221 = sand.u32 %s31, 1
        %s222 = scalar_lea.sflag [#allocation3], %s221
        %s223 = sand.u32 %s31, 1
        %s224 = smul.addr %s223, 384
        %s225 = scalar_lea.vmem [#allocation2], %s224
        // Predicated region
        $region37: #{tpu_custom_call.1} parent=35 // pred_check
          %p226 = pneg %p44
        $region38: #{tpu_custom_call.1} parent=35 // pred_check_branch
          %228 = sbr.rel (%p226) target = $region40
        $region39: #{tpu_custom_call.1} parent=35 // pred_region
          %230 = dma.done %s222, 6144
        $region40: #{tpu_custom_call.1} parent=35 // pred_fallthru
          _
        // Predicated region
        $region41: #{tpu_custom_call.1} parent=35 // pred_check
          %p231 = pneg %p65
        $region42: #{tpu_custom_call.1} parent=35 // pred_check_branch
          %233 = sbr.rel (%p231) target = $region44
        $region43: #{tpu_custom_call.1} parent=35 // pred_region
          %235 = dma.done [#allocation6], 27648
        $region44: #{tpu_custom_call.1} parent=35 // pred_fallthru
          _
        // Predicated region
        $region45: #{tpu_custom_call.1} parent=35 // pred_check
          %p236 = pneg %p86
        $region46: #{tpu_custom_call.1} parent=35 // pred_check_branch
          %238 = sbr.rel (%p236) target = $region48
        $region47: #{tpu_custom_call.1} parent=35 // pred_region
          %240 = dma.done [#allocation6], 9216
        $region48: #{tpu_custom_call.1} parent=35 // pred_fallthru
          _
        // Predicated region
        $region49: #{tpu_custom_call.1} parent=35 // pred_check
          %p241 = pneg %p107
        $region50: #{tpu_custom_call.1} parent=35 // pred_check_branch
          %243 = sbr.rel (%p241) target = $region52
        $region51: #{tpu_custom_call.1} parent=35 // pred_region
          %245 = dma.done [#allocation9], 48
        $region52: #{tpu_custom_call.1} parent=35 // pred_fallthru
          _
        %s246 = sand.u32 %s31, 1
        %s247 = scalar_lea.sflag [#allocation3], %s246
        %s248 = sand.u32 %s31, 1
        %s249 = smul.addr %s248, 384
        %s250 = scalar_lea.vmem [#allocation2], %s249
        %p251 = pneg %p44
        %p252 = pneg %p41
        %p253 = pneg %p65
        %p254 = pneg %p62
        %p255 = pneg %p86
        %p256 = pneg %p83
        %p257 = pneg %p107
        %p258 = pneg %p104
        %p259 = pneg %p133
        %p260 = pneg %p130
        %s261 = sand.u32 %s120, 1
        %s262 = scalar_lea.sflag [#allocation4], %s261
        %s263 = sand.u32 %s120, 1
        %s264 = smul.addr %s263, 384
        %s265 = scalar_lea.vmem [#allocation10], %s264
        %v266 = vld [vmem:[%s225] sm:$0xff]
        %v267 = vld [vmem:[%s225 + $0x8] sm:$0xff]
        %v268 = vld [vmem:[%s225 + $0x10] sm:$0xff]
        %v269 = vld [vmem:[%s225 + $0x18] sm:$0xff]
        %v270 = vld [vmem:[%s225 + $0x20] sm:$0xff]
        %v271 = vld [vmem:[%s225 + $0x28] sm:$0xff]
        %v272 = vld [vmem:[%s225 + $0x30] sm:$0xff]
        %v273 = vld [vmem:[%s225 + $0x38] sm:$0xff]
        %v274 = vld [vmem:[%s225 + $0x40] sm:$0xff]
        %v275 = vld [vmem:[%s225 + $0x48] sm:$0xff]
        %v276 = vld [vmem:[%s225 + $0x50] sm:$0xff]
        %v277 = vld [vmem:[%s225 + $0x58] sm:$0xff]
        %v278 = vld [vmem:[%s225 + $0x60] sm:$0xff]
        %v279 = vld [vmem:[%s225 + $0x68] sm:$0xff]
        %v280 = vld [vmem:[%s225 + $0x70] sm:$0xff]
        %v281 = vld [vmem:[%s225 + $0x78] sm:$0xff]
        %v282 = vld [vmem:[%s225 + $0x80] sm:$0xff]
        %v283 = vld [vmem:[%s225 + $0x88] sm:$0xff]
        %v284 = vld [vmem:[%s225 + $0x90] sm:$0xff]
        %v285 = vld [vmem:[%s225 + $0x98] sm:$0xff]
        %v286 = vld [vmem:[%s225 + $0xa0] sm:$0xff]
        %v287 = vld [vmem:[%s225 + $0xa8] sm:$0xff]
        %v288 = vld [vmem:[%s225 + $0xb0] sm:$0xff]
        %v289 = vld [vmem:[%s225 + $0xb8] sm:$0xff]
        %v290 = vld [vmem:[%s225 + $0xc0] sm:$0xff]
        %v291 = vld [vmem:[%s225 + $0xc8] sm:$0xff]
        %v292 = vld [vmem:[%s225 + $0xd0] sm:$0xff]
        %v293 = vld [vmem:[%s225 + $0xd8] sm:$0xff]
        %v294 = vld [vmem:[%s225 + $0xe0] sm:$0xff]
        %v295 = vld [vmem:[%s225 + $0xe8] sm:$0xff]
        %v296 = vld [vmem:[%s225 + $0xf0] sm:$0xff]
        %v297 = vld [vmem:[%s225 + $0xf8] sm:$0xff]
        %v298 = vld [vmem:[%s225 + $0x100] sm:$0xff]
        %v299 = vld [vmem:[%s225 + $0x108] sm:$0xff]
        %v300 = vld [vmem:[%s225 + $0x110] sm:$0xff]
        %v301 = vld [vmem:[%s225 + $0x118] sm:$0xff]
        %v302 = vld [vmem:[%s225 + $0x120] sm:$0xff]
        %v303 = vld [vmem:[%s225 + $0x128] sm:$0xff]
        %v304 = vld [vmem:[%s225 + $0x130] sm:$0xff]
        %v305 = vld [vmem:[%s225 + $0x138] sm:$0xff]
        %v306 = vld [vmem:[%s225 + $0x140] sm:$0xff]
        %v307 = vld [vmem:[%s225 + $0x148] sm:$0xff]
        %v308 = vld [vmem:[%s225 + $0x150] sm:$0xff]
        %v309 = vld [vmem:[%s225 + $0x158] sm:$0xff]
        %v310 = vld [vmem:[%s225 + $0x160] sm:$0xff]
        %v311 = vld [vmem:[%s225 + $0x168] sm:$0xff]
        %v312 = vld [vmem:[%s225 + $0x170] sm:$0xff]
        %v313 = vld [vmem:[%s225 + $0x178] sm:$0xff]
        %v314 = vpack.c.bf16 %v269, %v266
        %v315 = vpack.c.bf16 %v270, %v267
        %v316 = vpack.c.bf16 %v271, %v268
        %v317 = vpack.c.bf16 %v275, %v272
        %v318 = vpack.c.bf16 %v276, %v273
        %v319 = vpack.c.bf16 %v277, %v274
        %v320 = vpack.c.bf16 %v281, %v278
        %v321 = vpack.c.bf16 %v282, %v279
        %v322 = vpack.c.bf16 %v283, %v280
        %v323 = vpack.c.bf16 %v287, %v284
        %v324 = vpack.c.bf16 %v288, %v285
        %v325 = vpack.c.bf16 %v289, %v286
        %v326 = vpack.c.bf16 %v293, %v290
        %v327 = vpack.c.bf16 %v294, %v291
        %v328 = vpack.c.bf16 %v295, %v292
        %v329 = vpack.c.bf16 %v299, %v296
        %v330 = vpack.c.bf16 %v300, %v297
        %v331 = vpack.c.bf16 %v301, %v298
        %v332 = vpack.c.bf16 %v305, %v302
        %v333 = vpack.c.bf16 %v306, %v303
        %v334 = vpack.c.bf16 %v307, %v304
        %v335 = vpack.c.bf16 %v311, %v308
        %v336 = vpack.c.bf16 %v312, %v309
        %v337 = vpack.c.bf16 %v313, %v310
        %v338 = vld [vmem:[#allocation5] sm:$0xff]
        %v339 = vld [vmem:[#allocation5 + $0x8] sm:$0xff]
        %v340 = vld [vmem:[#allocation5 + $0x10] sm:$0xff]
        %v341 = vld [vmem:[#allocation5 + $0x18] sm:$0xff]
        %v342 = vld [vmem:[#allocation5 + $0x20] sm:$0xf]
        %v343 = vld [vmem:[#allocation5 + $0x24] sm:$0xff]
        %v344 = vld [vmem:[#allocation5 + $0x2c] sm:$0xff]
        %v345 = vld [vmem:[#allocation5 + $0x34] sm:$0xff]
        %v346 = vld [vmem:[#allocation5 + $0x3c] sm:$0xff]
        %v347 = vld [vmem:[#allocation5 + $0x44] sm:$0xf]
        %v348 = vld [vmem:[#allocation5 + $0x48] sm:$0xff]
        %v349 = vld [vmem:[#allocation5 + $0x50] sm:$0xff]
        %v350 = vld [vmem:[#allocation5 + $0x58] sm:$0xff]
        %v351 = vld [vmem:[#allocation5 + $0x60] sm:$0xff]
        %v352 = vld [vmem:[#allocation5 + $0x68] sm:$0xf]
        %v353 = vld [vmem:[#allocation5 + $0x6c] sm:$0xff]
        %v354 = vld [vmem:[#allocation5 + $0x74] sm:$0xff]
        %v355 = vld [vmem:[#allocation5 + $0x7c] sm:$0xff]
        %v356 = vld [vmem:[#allocation5 + $0x84] sm:$0xff]
        %v357 = vld [vmem:[#allocation5 + $0x8c] sm:$0xf]
        %v358 = vld [vmem:[#allocation5 + $0x90] sm:$0xff]
        %v359 = vld [vmem:[#allocation5 + $0x98] sm:$0xff]
        %v360 = vld [vmem:[#allocation5 + $0xa0] sm:$0xff]
        %v361 = vld [vmem:[#allocation5 + $0xa8] sm:$0xff]
        %v362 = vld [vmem:[#allocation5 + $0xb0] sm:$0xf]
        %v363 = vld [vmem:[#allocation5 + $0xb4] sm:$0xff]
        %v364 = vld [vmem:[#allocation5 + $0xbc] sm:$0xff]
        %v365 = vld [vmem:[#allocation5 + $0xc4] sm:$0xff]
        %v366 = vld [vmem:[#allocation5 + $0xcc] sm:$0xff]
        %v367 = vld [vmem:[#allocation5 + $0xd4] sm:$0xf]
        %v368 = vld [vmem:[#allocation5 + $0xd8] sm:$0xff]
        %v369 = vld [vmem:[#allocation5 + $0xe0] sm:$0xff]
        %v370 = vld [vmem:[#allocation5 + $0xe8] sm:$0xff]
        %v371 = vld [vmem:[#allocation5 + $0xf0] sm:$0xff]
        %v372 = vld [vmem:[#allocation5 + $0xf8] sm:$0xf]
        %v373 = vld [vmem:[#allocation5 + $0xfc] sm:$0xff]
        %v374 = vld [vmem:[#allocation5 + $0x104] sm:$0xff]
        %v375 = vld [vmem:[#allocation5 + $0x10c] sm:$0xff]
        %v376 = vld [vmem:[#allocation5 + $0x114] sm:$0xff]
        %v377 = vld [vmem:[#allocation5 + $0x11c] sm:$0xf]
        %v378 = vld [vmem:[#allocation5 + $0x120] sm:$0xff]
        %v379 = vld [vmem:[#allocation5 + $0x128] sm:$0xff]
        %v380 = vld [vmem:[#allocation5 + $0x130] sm:$0xff]
        %v381 = vld [vmem:[#allocation5 + $0x138] sm:$0xff]
        %v382 = vld [vmem:[#allocation5 + $0x140] sm:$0xf]
        %v383 = vld [vmem:[#allocation5 + $0x144] sm:$0xff]
        %v384 = vld [vmem:[#allocation5 + $0x14c] sm:$0xff]
        %v385 = vld [vmem:[#allocation5 + $0x154] sm:$0xff]
        %v386 = vld [vmem:[#allocation5 + $0x15c] sm:$0xff]
        %v387 = vld [vmem:[#allocation5 + $0x164] sm:$0xf]
        %v388 = vld [vmem:[#allocation5 + $0x168] sm:$0xff]
        %v389 = vld [vmem:[#allocation5 + $0x170] sm:$0xff]
        %v390 = vld [vmem:[#allocation5 + $0x178] sm:$0xff]
        %v391 = vld [vmem:[#allocation5 + $0x180] sm:$0xff]
        %v392 = vld [vmem:[#allocation5 + $0x188] sm:$0xf]
        %v393 = vld [vmem:[#allocation5 + $0x18c] sm:$0xff]
        %v394 = vld [vmem:[#allocation5 + $0x194] sm:$0xff]
        %v395 = vld [vmem:[#allocation5 + $0x19c] sm:$0xff]
        %v396 = vld [vmem:[#allocation5 + $0x1a4] sm:$0xff]
        %v397 = vld [vmem:[#allocation5 + $0x1ac] sm:$0xf]
        %v398 = vld [vmem:[#allocation5 + $0x1b0] sm:$0xff]
        %v399 = vld [vmem:[#allocation5 + $0x1b8] sm:$0xff]
        %v400 = vld [vmem:[#allocation5 + $0x1c0] sm:$0xff]
        %v401 = vld [vmem:[#allocation5 + $0x1c8] sm:$0xff]
        %v402 = vld [vmem:[#allocation5 + $0x1d0] sm:$0xf]
        %v403 = vld [vmem:[#allocation5 + $0x1d4] sm:$0xff]
        %v404 = vld [vmem:[#allocation5 + $0x1dc] sm:$0xff]
        %v405 = vld [vmem:[#allocation5 + $0x1e4] sm:$0xff]
        %v406 = vld [vmem:[#allocation5 + $0x1ec] sm:$0xff]
        %v407 = vld [vmem:[#allocation5 + $0x1f4] sm:$0xf]
        %v408 = vld [vmem:[#allocation5 + $0x1f8] sm:$0xff]
        %v409 = vld [vmem:[#allocation5 + $0x200] sm:$0xff]
        %v410 = vld [vmem:[#allocation5 + $0x208] sm:$0xff]
        %v411 = vld [vmem:[#allocation5 + $0x210] sm:$0xff]
        %v412 = vld [vmem:[#allocation5 + $0x218] sm:$0xf]
        %v413 = vld [vmem:[#allocation5 + $0x21c] sm:$0xff]
        %v414 = vld [vmem:[#allocation5 + $0x224] sm:$0xff]
        %v415 = vld [vmem:[#allocation5 + $0x22c] sm:$0xff]
        %v416 = vld [vmem:[#allocation5 + $0x234] sm:$0xff]
        %v417 = vld [vmem:[#allocation5 + $0x23c] sm:$0xf]
        %v418 = vld [vmem:[#allocation5 + $0x240] sm:$0xff]
        %v419 = vld [vmem:[#allocation5 + $0x248] sm:$0xff]
        %v420 = vld [vmem:[#allocation5 + $0x250] sm:$0xff]
        %v421 = vld [vmem:[#allocation5 + $0x258] sm:$0xff]
        %v422 = vld [vmem:[#allocation5 + $0x260] sm:$0xf]
        %v423 = vld [vmem:[#allocation5 + $0x264] sm:$0xff]
        %v424 = vld [vmem:[#allocation5 + $0x26c] sm:$0xff]
        %v425 = vld [vmem:[#allocation5 + $0x274] sm:$0xff]
        %v426 = vld [vmem:[#allocation5 + $0x27c] sm:$0xff]
        %v427 = vld [vmem:[#allocation5 + $0x284] sm:$0xf]
        %v428 = vld [vmem:[#allocation5 + $0x288] sm:$0xff]
        %v429 = vld [vmem:[#allocation5 + $0x290] sm:$0xff]
        %v430 = vld [vmem:[#allocation5 + $0x298] sm:$0xff]
        %v431 = vld [vmem:[#allocation5 + $0x2a0] sm:$0xff]
        %v432 = vld [vmem:[#allocation5 + $0x2a8] sm:$0xf]
        %v433 = vld [vmem:[#allocation5 + $0x2ac] sm:$0xff]
        %v434 = vld [vmem:[#allocation5 + $0x2b4] sm:$0xff]
        %v435 = vld [vmem:[#allocation5 + $0x2bc] sm:$0xff]
        %v436 = vld [vmem:[#allocation5 + $0x2c4] sm:$0xff]
        %v437 = vld [vmem:[#allocation5 + $0x2cc] sm:$0xf]
        %v438 = vld [vmem:[#allocation5 + $0x2d0] sm:$0xff]
        %v439 = vld [vmem:[#allocation5 + $0x2d8] sm:$0xff]
        %v440 = vld [vmem:[#allocation5 + $0x2e0] sm:$0xff]
        %v441 = vld [vmem:[#allocation5 + $0x2e8] sm:$0xff]
        %v442 = vld [vmem:[#allocation5 + $0x2f0] sm:$0xf]
        %v443 = vld [vmem:[#allocation5 + $0x2f4] sm:$0xff]
        %v444 = vld [vmem:[#allocation5 + $0x2fc] sm:$0xff]
        %v445 = vld [vmem:[#allocation5 + $0x304] sm:$0xff]
        %v446 = vld [vmem:[#allocation5 + $0x30c] sm:$0xff]
        %v447 = vld [vmem:[#allocation5 + $0x314] sm:$0xf]
        %v448 = vld [vmem:[#allocation5 + $0x318] sm:$0xff]
        %v449 = vld [vmem:[#allocation5 + $0x320] sm:$0xff]
        %v450 = vld [vmem:[#allocation5 + $0x328] sm:$0xff]
        %v451 = vld [vmem:[#allocation5 + $0x330] sm:$0xff]
        %v452 = vld [vmem:[#allocation5 + $0x338] sm:$0xf]
        %v453 = vld [vmem:[#allocation5 + $0x33c] sm:$0xff]
        %v454 = vld [vmem:[#allocation5 + $0x344] sm:$0xff]
        %v455 = vld [vmem:[#allocation5 + $0x34c] sm:$0xff]
        %v456 = vld [vmem:[#allocation5 + $0x354] sm:$0xff]
        %v457 = vld [vmem:[#allocation5 + $0x35c] sm:$0xf]
        %v458 = vld [vmem:[#allocation5 + $0x360] sm:$0xff]
        %v459 = vld [vmem:[#allocation5 + $0x368] sm:$0xff]
        %v460 = vld [vmem:[#allocation5 + $0x370] sm:$0xff]
        %v461 = vld [vmem:[#allocation5 + $0x378] sm:$0xff]
        %v462 = vld [vmem:[#allocation5 + $0x380] sm:$0xf]
        %v463 = vld [vmem:[#allocation5 + $0x384] sm:$0xff]
        %v464 = vld [vmem:[#allocation5 + $0x38c] sm:$0xff]
        %v465 = vld [vmem:[#allocation5 + $0x394] sm:$0xff]
        %v466 = vld [vmem:[#allocation5 + $0x39c] sm:$0xff]
        %v467 = vld [vmem:[#allocation5 + $0x3a4] sm:$0xf]
        %v468 = vld [vmem:[#allocation5 + $0x3a8] sm:$0xff]
        %v469 = vld [vmem:[#allocation5 + $0x3b0] sm:$0xff]
        %v470 = vld [vmem:[#allocation5 + $0x3b8] sm:$0xff]
        %v471 = vld [vmem:[#allocation5 + $0x3c0] sm:$0xff]
        %v472 = vld [vmem:[#allocation5 + $0x3c8] sm:$0xf]
        %v473 = vld [vmem:[#allocation5 + $0x3cc] sm:$0xff]
        %v474 = vld [vmem:[#allocation5 + $0x3d4] sm:$0xff]
        %v475 = vld [vmem:[#allocation5 + $0x3dc] sm:$0xff]
        %v476 = vld [vmem:[#allocation5 + $0x3e4] sm:$0xff]
        %v477 = vld [vmem:[#allocation5 + $0x3ec] sm:$0xf]
        %v478 = vld [vmem:[#allocation5 + $0x3f0] sm:$0xff]
        %v479 = vld [vmem:[#allocation5 + $0x3f8] sm:$0xff]
        %v480 = vld [vmem:[#allocation5 + $0x400] sm:$0xff]
        %v481 = vld [vmem:[#allocation5 + $0x408] sm:$0xff]
        %v482 = vld [vmem:[#allocation5 + $0x410] sm:$0xf]
        %v483 = vld [vmem:[#allocation5 + $0x414] sm:$0xff]
        %v484 = vld [vmem:[#allocation5 + $0x41c] sm:$0xff]
        %v485 = vld [vmem:[#allocation5 + $0x424] sm:$0xff]
        %v486 = vld [vmem:[#allocation5 + $0x42c] sm:$0xff]
        %v487 = vld [vmem:[#allocation5 + $0x434] sm:$0xf]
        %v488 = vld [vmem:[#allocation5 + $0x438] sm:$0xff]
        %v489 = vld [vmem:[#allocation5 + $0x440] sm:$0xff]
        %v490 = vld [vmem:[#allocation5 + $0x448] sm:$0xff]
        %v491 = vld [vmem:[#allocation5 + $0x450] sm:$0xff]
        %v492 = vld [vmem:[#allocation5 + $0x458] sm:$0xf]
        %v493 = vld [vmem:[#allocation5 + $0x45c] sm:$0xff]
        %v494 = vld [vmem:[#allocation5 + $0x464] sm:$0xff]
        %v495 = vld [vmem:[#allocation5 + $0x46c] sm:$0xff]
        %v496 = vld [vmem:[#allocation5 + $0x474] sm:$0xff]
        %v497 = vld [vmem:[#allocation5 + $0x47c] sm:$0xf]
        %v498 = vld [vmem:[#allocation5 + $0x480] sm:$0xff]
        %v499 = vld [vmem:[#allocation5 + $0x488] sm:$0xff]
        %v500 = vld [vmem:[#allocation5 + $0x490] sm:$0xff]
        %v501 = vld [vmem:[#allocation5 + $0x498] sm:$0xff]
        %v502 = vld [vmem:[#allocation5 + $0x4a0] sm:$0xf]
        %v503 = vld [vmem:[#allocation5 + $0x4a4] sm:$0xff]
        %v504 = vld [vmem:[#allocation5 + $0x4ac] sm:$0xff]
        %v505 = vld [vmem:[#allocation5 + $0x4b4] sm:$0xff]
        %v506 = vld [vmem:[#allocation5 + $0x4bc] sm:$0xff]
        %v507 = vld [vmem:[#allocation5 + $0x4c4] sm:$0xf]
        %v508 = vld [vmem:[#allocation5 + $0x4c8] sm:$0xff]
        %v509 = vld [vmem:[#allocation5 + $0x4d0] sm:$0xff]
        %v510 = vld [vmem:[#allocation5 + $0x4d8] sm:$0xff]
        %v511 = vld [vmem:[#allocation5 + $0x4e0] sm:$0xff]
        %v512 = vld [vmem:[#allocation5 + $0x4e8] sm:$0xf]
        %v513 = vld [vmem:[#allocation5 + $0x4ec] sm:$0xff]
        %v514 = vld [vmem:[#allocation5 + $0x4f4] sm:$0xff]
        %v515 = vld [vmem:[#allocation5 + $0x4fc] sm:$0xff]
        %v516 = vld [vmem:[#allocation5 + $0x504] sm:$0xff]
        %v517 = vld [vmem:[#allocation5 + $0x50c] sm:$0xf]
        %v518 = vld [vmem:[#allocation5 + $0x510] sm:$0xff]
        %v519 = vld [vmem:[#allocation5 + $0x518] sm:$0xff]
        %v520 = vld [vmem:[#allocation5 + $0x520] sm:$0xff]
        %v521 = vld [vmem:[#allocation5 + $0x528] sm:$0xff]
        %v522 = vld [vmem:[#allocation5 + $0x530] sm:$0xf]
        %v523 = vld [vmem:[#allocation5 + $0x534] sm:$0xff]
        %v524 = vld [vmem:[#allocation5 + $0x53c] sm:$0xff]
        %v525 = vld [vmem:[#allocation5 + $0x544] sm:$0xff]
        %v526 = vld [vmem:[#allocation5 + $0x54c] sm:$0xff]
        %v527 = vld [vmem:[#allocation5 + $0x554] sm:$0xf]
        %v528 = vld [vmem:[#allocation5 + $0x558] sm:$0xff]
        %v529 = vld [vmem:[#allocation5 + $0x560] sm:$0xff]
        %v530 = vld [vmem:[#allocation5 + $0x568] sm:$0xff]
        %v531 = vld [vmem:[#allocation5 + $0x570] sm:$0xff]
        %v532 = vld [vmem:[#allocation5 + $0x578] sm:$0xf]
        %v533 = vld [vmem:[#allocation5 + $0x57c] sm:$0xff]
        %v534 = vld [vmem:[#allocation5 + $0x584] sm:$0xff]
        %v535 = vld [vmem:[#allocation5 + $0x58c] sm:$0xff]
        %v536 = vld [vmem:[#allocation5 + $0x594] sm:$0xff]
        %v537 = vld [vmem:[#allocation5 + $0x59c] sm:$0xf]
        %v538 = vld [vmem:[#allocation5 + $0x5a0] sm:$0xff]
        %v539 = vld [vmem:[#allocation5 + $0x5a8] sm:$0xff]
        %v540 = vld [vmem:[#allocation5 + $0x5b0] sm:$0xff]
        %v541 = vld [vmem:[#allocation5 + $0x5b8] sm:$0xff]
        %v542 = vld [vmem:[#allocation5 + $0x5c0] sm:$0xf]
        %v543 = vld [vmem:[#allocation5 + $0x5c4] sm:$0xff]
        %v544 = vld [vmem:[#allocation5 + $0x5cc] sm:$0xff]
        %v545 = vld [vmem:[#allocation5 + $0x5d4] sm:$0xff]
        %v546 = vld [vmem:[#allocation5 + $0x5dc] sm:$0xff]
        %v547 = vld [vmem:[#allocation5 + $0x5e4] sm:$0xf]
        %v548 = vld [vmem:[#allocation5 + $0x5e8] sm:$0xff]
        %v549 = vld [vmem:[#allocation5 + $0x5f0] sm:$0xff]
        %v550 = vld [vmem:[#allocation5 + $0x5f8] sm:$0xff]
        %v551 = vld [vmem:[#allocation5 + $0x600] sm:$0xff]
        %v552 = vld [vmem:[#allocation5 + $0x608] sm:$0xf]
        %v553 = vld [vmem:[#allocation5 + $0x60c] sm:$0xff]
        %v554 = vld [vmem:[#allocation5 + $0x614] sm:$0xff]
        %v555 = vld [vmem:[#allocation5 + $0x61c] sm:$0xff]
        %v556 = vld [vmem:[#allocation5 + $0x624] sm:$0xff]
        %v557 = vld [vmem:[#allocation5 + $0x62c] sm:$0xf]
        %v558 = vld [vmem:[#allocation5 + $0x630] sm:$0xff]
        %v559 = vld [vmem:[#allocation5 + $0x638] sm:$0xff]
        %v560 = vld [vmem:[#allocation5 + $0x640] sm:$0xff]
        %v561 = vld [vmem:[#allocation5 + $0x648] sm:$0xff]
        %v562 = vld [vmem:[#allocation5 + $0x650] sm:$0xf]
        %v563 = vld [vmem:[#allocation5 + $0x654] sm:$0xff]
        %v564 = vld [vmem:[#allocation5 + $0x65c] sm:$0xff]
        %v565 = vld [vmem:[#allocation5 + $0x664] sm:$0xff]
        %v566 = vld [vmem:[#allocation5 + $0x66c] sm:$0xff]
        %v567 = vld [vmem:[#allocation5 + $0x674] sm:$0xf]
        %v568 = vld [vmem:[#allocation5 + $0x678] sm:$0xff]
        %v569 = vld [vmem:[#allocation5 + $0x680] sm:$0xff]
        %v570 = vld [vmem:[#allocation5 + $0x688] sm:$0xff]
        %v571 = vld [vmem:[#allocation5 + $0x690] sm:$0xff]
        %v572 = vld [vmem:[#allocation5 + $0x698] sm:$0xf]
        %v573 = vld [vmem:[#allocation5 + $0x69c] sm:$0xff]
        %v574 = vld [vmem:[#allocation5 + $0x6a4] sm:$0xff]
        %v575 = vld [vmem:[#allocation5 + $0x6ac] sm:$0xff]
        %v576 = vld [vmem:[#allocation5 + $0x6b4] sm:$0xff]
        %v577 = vld [vmem:[#allocation5 + $0x6bc] sm:$0xf]
        %v818 = vunpack.c.l.b16 %v338
        %v819 = vunpack.c.h.b16 %v338
        %v820 = vunpack.c.l.b16 %v339
        %v821 = vunpack.c.h.b16 %v339
        %v822 = vunpack.c.l.b16 %v340
        %v823 = vunpack.c.h.b16 %v340
        %v824 = vunpack.c.l.b16 %v341
        %v825 = vunpack.c.h.b16 %v341
        %v826 = vunpack.c.l.b16 %v342
        %v827 = vunpack.c.l.b16 %v343
        %v828 = vunpack.c.h.b16 %v343
        %v829 = vunpack.c.l.b16 %v344
        %v830 = vunpack.c.h.b16 %v344
        %v831 = vunpack.c.l.b16 %v345
        %v832 = vunpack.c.h.b16 %v345
        %v833 = vunpack.c.l.b16 %v346
        %v834 = vunpack.c.h.b16 %v346
        %v835 = vunpack.c.l.b16 %v347
        %v836 = vunpack.c.l.b16 %v348
        %v837 = vunpack.c.h.b16 %v348
        %v838 = vunpack.c.l.b16 %v349
        %v839 = vunpack.c.h.b16 %v349
        %v840 = vunpack.c.l.b16 %v350
        %v841 = vunpack.c.h.b16 %v350
        %v842 = vunpack.c.l.b16 %v351
        %v843 = vunpack.c.h.b16 %v351
        %v844 = vunpack.c.l.b16 %v352
        %v845 = vunpack.c.l.b16 %v353
        %v846 = vunpack.c.h.b16 %v353
        %v847 = vunpack.c.l.b16 %v354
        %v848 = vunpack.c.h.b16 %v354
        %v849 = vunpack.c.l.b16 %v355
        %v850 = vunpack.c.h.b16 %v355
        %v851 = vunpack.c.l.b16 %v356
        %v852 = vunpack.c.h.b16 %v356
        %v853 = vunpack.c.l.b16 %v357
        %v854 = vunpack.c.l.b16 %v358
        %v855 = vunpack.c.h.b16 %v358
        %v856 = vunpack.c.l.b16 %v359
        %v857 = vunpack.c.h.b16 %v359
        %v858 = vunpack.c.l.b16 %v360
        %v859 = vunpack.c.h.b16 %v360
        %v860 = vunpack.c.l.b16 %v361
        %v861 = vunpack.c.h.b16 %v361
        %v862 = vunpack.c.l.b16 %v362
        %v863 = vunpack.c.l.b16 %v363
        %v864 = vunpack.c.h.b16 %v363
        %v865 = vunpack.c.l.b16 %v364
        %v866 = vunpack.c.h.b16 %v364
        %v867 = vunpack.c.l.b16 %v365
        %v868 = vunpack.c.h.b16 %v365
        %v869 = vunpack.c.l.b16 %v366
        %v870 = vunpack.c.h.b16 %v366
        %v871 = vunpack.c.l.b16 %v367
        %v872 = vunpack.c.l.b16 %v368
        %v873 = vunpack.c.h.b16 %v368
        %v874 = vunpack.c.l.b16 %v369
        %v875 = vunpack.c.h.b16 %v369
        %v876 = vunpack.c.l.b16 %v370
        %v877 = vunpack.c.h.b16 %v370
        %v878 = vunpack.c.l.b16 %v371
        %v879 = vunpack.c.h.b16 %v371
        %v880 = vunpack.c.l.b16 %v372
        %v881 = vunpack.c.l.b16 %v373
        %v882 = vunpack.c.h.b16 %v373
        %v883 = vunpack.c.l.b16 %v374
        %v884 = vunpack.c.h.b16 %v374
        %v885 = vunpack.c.l.b16 %v375
        %v886 = vunpack.c.h.b16 %v375
        %v887 = vunpack.c.l.b16 %v376
        %v888 = vunpack.c.h.b16 %v376
        %v889 = vunpack.c.l.b16 %v377
        %v890 = vunpack.c.l.b16 %v378
        %v891 = vunpack.c.h.b16 %v378
        %v892 = vunpack.c.l.b16 %v379
        %v893 = vunpack.c.h.b16 %v379
        %v894 = vunpack.c.l.b16 %v380
        %v895 = vunpack.c.h.b16 %v380
        %v896 = vunpack.c.l.b16 %v381
        %v897 = vunpack.c.h.b16 %v381
        %v898 = vunpack.c.l.b16 %v382
        %v899 = vunpack.c.l.b16 %v383
        %v900 = vunpack.c.h.b16 %v383
        %v901 = vunpack.c.l.b16 %v384
        %v902 = vunpack.c.h.b16 %v384
        %v903 = vunpack.c.l.b16 %v385
        %v904 = vunpack.c.h.b16 %v385
        %v905 = vunpack.c.l.b16 %v386
        %v906 = vunpack.c.h.b16 %v386
        %v907 = vunpack.c.l.b16 %v387
        %v908 = vunpack.c.l.b16 %v388
        %v909 = vunpack.c.h.b16 %v388
        %v910 = vunpack.c.l.b16 %v389
        %v911 = vunpack.c.h.b16 %v389
        %v912 = vunpack.c.l.b16 %v390
        %v913 = vunpack.c.h.b16 %v390
        %v914 = vunpack.c.l.b16 %v391
        %v915 = vunpack.c.h.b16 %v391
        %v916 = vunpack.c.l.b16 %v392
        %v917 = vunpack.c.l.b16 %v393
        %v918 = vunpack.c.h.b16 %v393
        %v919 = vunpack.c.l.b16 %v394
        %v920 = vunpack.c.h.b16 %v394
        %v921 = vunpack.c.l.b16 %v395
        %v922 = vunpack.c.h.b16 %v395
        %v923 = vunpack.c.l.b16 %v396
        %v924 = vunpack.c.h.b16 %v396
        %v925 = vunpack.c.l.b16 %v397
        %v926 = vunpack.c.l.b16 %v398
        %v927 = vunpack.c.h.b16 %v398
        %v928 = vunpack.c.l.b16 %v399
        %v929 = vunpack.c.h.b16 %v399
        %v930 = vunpack.c.l.b16 %v400
        %v931 = vunpack.c.h.b16 %v400
        %v932 = vunpack.c.l.b16 %v401
        %v933 = vunpack.c.h.b16 %v401
        %v934 = vunpack.c.l.b16 %v402
        %v935 = vunpack.c.l.b16 %v403
        %v936 = vunpack.c.h.b16 %v403
        %v937 = vunpack.c.l.b16 %v404
        %v938 = vunpack.c.h.b16 %v404
        %v939 = vunpack.c.l.b16 %v405
        %v940 = vunpack.c.h.b16 %v405
        %v941 = vunpack.c.l.b16 %v406
        %v942 = vunpack.c.h.b16 %v406
        %v943 = vunpack.c.l.b16 %v407
        %v944 = vunpack.c.l.b16 %v408
        %v945 = vunpack.c.h.b16 %v408
        %v946 = vunpack.c.l.b16 %v409
        %v947 = vunpack.c.h.b16 %v409
        %v948 = vunpack.c.l.b16 %v410
        %v949 = vunpack.c.h.b16 %v410
        %v950 = vunpack.c.l.b16 %v411
        %v951 = vunpack.c.h.b16 %v411
        %v952 = vunpack.c.l.b16 %v412
        %v953 = vunpack.c.l.b16 %v413
        %v954 = vunpack.c.h.b16 %v413
        %v955 = vunpack.c.l.b16 %v414
        %v956 = vunpack.c.h.b16 %v414
        %v957 = vunpack.c.l.b16 %v415
        %v958 = vunpack.c.h.b16 %v415
        %v959 = vunpack.c.l.b16 %v416
        %v960 = vunpack.c.h.b16 %v416
        %v961 = vunpack.c.l.b16 %v417
        %v962 = vunpack.c.l.b16 %v418
        %v963 = vunpack.c.h.b16 %v418
        %v964 = vunpack.c.l.b16 %v419
        %v965 = vunpack.c.h.b16 %v419
        %v966 = vunpack.c.l.b16 %v420
        %v967 = vunpack.c.h.b16 %v420
        %v968 = vunpack.c.l.b16 %v421
        %v969 = vunpack.c.h.b16 %v421
        %v970 = vunpack.c.l.b16 %v422
        %v971 = vunpack.c.l.b16 %v423
        %v972 = vunpack.c.h.b16 %v423
        %v973 = vunpack.c.l.b16 %v424
        %v974 = vunpack.c.h.b16 %v424
        %v975 = vunpack.c.l.b16 %v425
        %v976 = vunpack.c.h.b16 %v425
        %v977 = vunpack.c.l.b16 %v426
        %v978 = vunpack.c.h.b16 %v426
        %v979 = vunpack.c.l.b16 %v427
        %v980 = vunpack.c.l.b16 %v428
        %v981 = vunpack.c.h.b16 %v428
        %v982 = vunpack.c.l.b16 %v429
        %v983 = vunpack.c.h.b16 %v429
        %v984 = vunpack.c.l.b16 %v430
        %v985 = vunpack.c.h.b16 %v430
        %v986 = vunpack.c.l.b16 %v431
        %v987 = vunpack.c.h.b16 %v431
        %v988 = vunpack.c.l.b16 %v432
        %v989 = vunpack.c.l.b16 %v433
        %v990 = vunpack.c.h.b16 %v433
        %v991 = vunpack.c.l.b16 %v434
        %v992 = vunpack.c.h.b16 %v434
        %v993 = vunpack.c.l.b16 %v435
        %v994 = vunpack.c.h.b16 %v435
        %v995 = vunpack.c.l.b16 %v436
        %v996 = vunpack.c.h.b16 %v436
        %v997 = vunpack.c.l.b16 %v437
        %v998 = vunpack.c.l.b16 %v438
        %v999 = vunpack.c.h.b16 %v438
        %v1000 = vunpack.c.l.b16 %v439
        %v1001 = vunpack.c.h.b16 %v439
        %v1002 = vunpack.c.l.b16 %v440
        %v1003 = vunpack.c.h.b16 %v440
        %v1004 = vunpack.c.l.b16 %v441
        %v1005 = vunpack.c.h.b16 %v441
        %v1006 = vunpack.c.l.b16 %v442
        %v1007 = vunpack.c.l.b16 %v443
        %v1008 = vunpack.c.h.b16 %v443
        %v1009 = vunpack.c.l.b16 %v444
        %v1010 = vunpack.c.h.b16 %v444
        %v1011 = vunpack.c.l.b16 %v445
        %v1012 = vunpack.c.h.b16 %v445
        %v1013 = vunpack.c.l.b16 %v446
        %v1014 = vunpack.c.h.b16 %v446
        %v1015 = vunpack.c.l.b16 %v447
        %v1016 = vunpack.c.l.b16 %v448
        %v1017 = vunpack.c.h.b16 %v448
        %v1018 = vunpack.c.l.b16 %v449
        %v1019 = vunpack.c.h.b16 %v449
        %v1020 = vunpack.c.l.b16 %v450
        %v1021 = vunpack.c.h.b16 %v450
        %v1022 = vunpack.c.l.b16 %v451
        %v1023 = vunpack.c.h.b16 %v451
        %v1024 = vunpack.c.l.b16 %v452
        %v1025 = vunpack.c.l.b16 %v453
        %v1026 = vunpack.c.h.b16 %v453
        %v1027 = vunpack.c.l.b16 %v454
        %v1028 = vunpack.c.h.b16 %v454
        %v1029 = vunpack.c.l.b16 %v455
        %v1030 = vunpack.c.h.b16 %v455
        %v1031 = vunpack.c.l.b16 %v456
        %v1032 = vunpack.c.h.b16 %v456
        %v1033 = vunpack.c.l.b16 %v457
        %v1034 = vunpack.c.l.b16 %v458
        %v1035 = vunpack.c.h.b16 %v458
        %v1036 = vunpack.c.l.b16 %v459
        %v1037 = vunpack.c.h.b16 %v459
        %v1038 = vunpack.c.l.b16 %v460
        %v1039 = vunpack.c.h.b16 %v460
        %v1040 = vunpack.c.l.b16 %v461
        %v1041 = vunpack.c.h.b16 %v461
        %v1042 = vunpack.c.l.b16 %v462
        %v1043 = vunpack.c.l.b16 %v463
        %v1044 = vunpack.c.h.b16 %v463
        %v1045 = vunpack.c.l.b16 %v464
        %v1046 = vunpack.c.h.b16 %v464
        %v1047 = vunpack.c.l.b16 %v465
        %v1048 = vunpack.c.h.b16 %v465
        %v1049 = vunpack.c.l.b16 %v466
        %v1050 = vunpack.c.h.b16 %v466
        %v1051 = vunpack.c.l.b16 %v467
        %v1052 = vunpack.c.l.b16 %v468
        %v1053 = vunpack.c.h.b16 %v468
        %v1054 = vunpack.c.l.b16 %v469
        %v1055 = vunpack.c.h.b16 %v469
        %v1056 = vunpack.c.l.b16 %v470
        %v1057 = vunpack.c.h.b16 %v470
        %v1058 = vunpack.c.l.b16 %v471
        %v1059 = vunpack.c.h.b16 %v471
        %v1060 = vunpack.c.l.b16 %v472
        %v1061 = vunpack.c.l.b16 %v473
        %v1062 = vunpack.c.h.b16 %v473
        %v1063 = vunpack.c.l.b16 %v474
        %v1064 = vunpack.c.h.b16 %v474
        %v1065 = vunpack.c.l.b16 %v475
        %v1066 = vunpack.c.h.b16 %v475
        %v1067 = vunpack.c.l.b16 %v476
        %v1068 = vunpack.c.h.b16 %v476
        %v1069 = vunpack.c.l.b16 %v477
        %v1070 = vunpack.c.l.b16 %v478
        %v1071 = vunpack.c.h.b16 %v478
        %v1072 = vunpack.c.l.b16 %v479
        %v1073 = vunpack.c.h.b16 %v479
        %v1074 = vunpack.c.l.b16 %v480
        %v1075 = vunpack.c.h.b16 %v480
        %v1076 = vunpack.c.l.b16 %v481
        %v1077 = vunpack.c.h.b16 %v481
        %v1078 = vunpack.c.l.b16 %v482
        %v1079 = vunpack.c.l.b16 %v483
        %v1080 = vunpack.c.h.b16 %v483
        %v1081 = vunpack.c.l.b16 %v484
        %v1082 = vunpack.c.h.b16 %v484
        %v1083 = vunpack.c.l.b16 %v485
        %v1084 = vunpack.c.h.b16 %v485
        %v1085 = vunpack.c.l.b16 %v486
        %v1086 = vunpack.c.h.b16 %v486
        %v1087 = vunpack.c.l.b16 %v487
        %v1088 = vunpack.c.l.b16 %v488
        %v1089 = vunpack.c.h.b16 %v488
        %v1090 = vunpack.c.l.b16 %v489
        %v1091 = vunpack.c.h.b16 %v489
        %v1092 = vunpack.c.l.b16 %v490
        %v1093 = vunpack.c.h.b16 %v490
        %v1094 = vunpack.c.l.b16 %v491
        %v1095 = vunpack.c.h.b16 %v491
        %v1096 = vunpack.c.l.b16 %v492
        %v1097 = vunpack.c.l.b16 %v493
        %v1098 = vunpack.c.h.b16 %v493
        %v1099 = vunpack.c.l.b16 %v494
        %v1100 = vunpack.c.h.b16 %v494
        %v1101 = vunpack.c.l.b16 %v495
        %v1102 = vunpack.c.h.b16 %v495
        %v1103 = vunpack.c.l.b16 %v496
        %v1104 = vunpack.c.h.b16 %v496
        %v1105 = vunpack.c.l.b16 %v497
        %v1106 = vunpack.c.l.b16 %v498
        %v1107 = vunpack.c.h.b16 %v498
        %v1108 = vunpack.c.l.b16 %v499
        %v1109 = vunpack.c.h.b16 %v499
        %v1110 = vunpack.c.l.b16 %v500
        %v1111 = vunpack.c.h.b16 %v500
        %v1112 = vunpack.c.l.b16 %v501
        %v1113 = vunpack.c.h.b16 %v501
        %v1114 = vunpack.c.l.b16 %v502
        %v1115 = vunpack.c.l.b16 %v503
        %v1116 = vunpack.c.h.b16 %v503
        %v1117 = vunpack.c.l.b16 %v504
        %v1118 = vunpack.c.h.b16 %v504
        %v1119 = vunpack.c.l.b16 %v505
        %v1120 = vunpack.c.h.b16 %v505
        %v1121 = vunpack.c.l.b16 %v506
        %v1122 = vunpack.c.h.b16 %v506
        %v1123 = vunpack.c.l.b16 %v507
        %v1124 = vunpack.c.l.b16 %v508
        %v1125 = vunpack.c.h.b16 %v508
        %v1126 = vunpack.c.l.b16 %v509
        %v1127 = vunpack.c.h.b16 %v509
        %v1128 = vunpack.c.l.b16 %v510
        %v1129 = vunpack.c.h.b16 %v510
        %v1130 = vunpack.c.l.b16 %v511
        %v1131 = vunpack.c.h.b16 %v511
        %v1132 = vunpack.c.l.b16 %v512
        %v1133 = vunpack.c.l.b16 %v513
        %v1134 = vunpack.c.h.b16 %v513
        %v1135 = vunpack.c.l.b16 %v514
        %v1136 = vunpack.c.h.b16 %v514
        %v1137 = vunpack.c.l.b16 %v515
        %v1138 = vunpack.c.h.b16 %v515
        %v1139 = vunpack.c.l.b16 %v516
        %v1140 = vunpack.c.h.b16 %v516
        %v1141 = vunpack.c.l.b16 %v517
        %v1142 = vunpack.c.l.b16 %v518
        %v1143 = vunpack.c.h.b16 %v518
        %v1144 = vunpack.c.l.b16 %v519
        %v1145 = vunpack.c.h.b16 %v519
        %v1146 = vunpack.c.l.b16 %v520
        %v1147 = vunpack.c.h.b16 %v520
        %v1148 = vunpack.c.l.b16 %v521
        %v1149 = vunpack.c.h.b16 %v521
        %v1150 = vunpack.c.l.b16 %v522
        %v1151 = vunpack.c.l.b16 %v523
        %v1152 = vunpack.c.h.b16 %v523
        %v1153 = vunpack.c.l.b16 %v524
        %v1154 = vunpack.c.h.b16 %v524
        %v1155 = vunpack.c.l.b16 %v525
        %v1156 = vunpack.c.h.b16 %v525
        %v1157 = vunpack.c.l.b16 %v526
        %v1158 = vunpack.c.h.b16 %v526
        %v1159 = vunpack.c.l.b16 %v527
        %v1160 = vunpack.c.l.b16 %v528
        %v1161 = vunpack.c.h.b16 %v528
        %v1162 = vunpack.c.l.b16 %v529
        %v1163 = vunpack.c.h.b16 %v529
        %v1164 = vunpack.c.l.b16 %v530
        %v1165 = vunpack.c.h.b16 %v530
        %v1166 = vunpack.c.l.b16 %v531
        %v1167 = vunpack.c.h.b16 %v531
        %v1168 = vunpack.c.l.b16 %v532
        %v1169 = vunpack.c.l.b16 %v533
        %v1170 = vunpack.c.h.b16 %v533
        %v1171 = vunpack.c.l.b16 %v534
        %v1172 = vunpack.c.h.b16 %v534
        %v1173 = vunpack.c.l.b16 %v535
        %v1174 = vunpack.c.h.b16 %v535
        %v1175 = vunpack.c.l.b16 %v536
        %v1176 = vunpack.c.h.b16 %v536
        %v1177 = vunpack.c.l.b16 %v537
        %v1178 = vunpack.c.l.b16 %v538
        %v1179 = vunpack.c.h.b16 %v538
        %v1180 = vunpack.c.l.b16 %v539
        %v1181 = vunpack.c.h.b16 %v539
        %v1182 = vunpack.c.l.b16 %v540
        %v1183 = vunpack.c.h.b16 %v540
        %v1184 = vunpack.c.l.b16 %v541
        %v1185 = vunpack.c.h.b16 %v541
        %v1186 = vunpack.c.l.b16 %v542
        %v1187 = vunpack.c.l.b16 %v543
        %v1188 = vunpack.c.h.b16 %v543
        %v1189 = vunpack.c.l.b16 %v544
        %v1190 = vunpack.c.h.b16 %v544
        %v1191 = vunpack.c.l.b16 %v545
        %v1192 = vunpack.c.h.b16 %v545
        %v1193 = vunpack.c.l.b16 %v546
        %v1194 = vunpack.c.h.b16 %v546
        %v1195 = vunpack.c.l.b16 %v547
        %v1196 = vunpack.c.l.b16 %v548
        %v1197 = vunpack.c.h.b16 %v548
        %v1198 = vunpack.c.l.b16 %v549
        %v1199 = vunpack.c.h.b16 %v549
        %v1200 = vunpack.c.l.b16 %v550
        %v1201 = vunpack.c.h.b16 %v550
        %v1202 = vunpack.c.l.b16 %v551
        %v1203 = vunpack.c.h.b16 %v551
        %v1204 = vunpack.c.l.b16 %v552
        %v1205 = vunpack.c.l.b16 %v553
        %v1206 = vunpack.c.h.b16 %v553
        %v1207 = vunpack.c.l.b16 %v554
        %v1208 = vunpack.c.h.b16 %v554
        %v1209 = vunpack.c.l.b16 %v555
        %v1210 = vunpack.c.h.b16 %v555
        %v1211 = vunpack.c.l.b16 %v556
        %v1212 = vunpack.c.h.b16 %v556
        %v1213 = vunpack.c.l.b16 %v557
        %v1214 = vunpack.c.l.b16 %v558
        %v1215 = vunpack.c.h.b16 %v558
        %v1216 = vunpack.c.l.b16 %v559
        %v1217 = vunpack.c.h.b16 %v559
        %v1218 = vunpack.c.l.b16 %v560
        %v1219 = vunpack.c.h.b16 %v560
        %v1220 = vunpack.c.l.b16 %v561
        %v1221 = vunpack.c.h.b16 %v561
        %v1222 = vunpack.c.l.b16 %v562
        %v1223 = vunpack.c.l.b16 %v563
        %v1224 = vunpack.c.h.b16 %v563
        %v1225 = vunpack.c.l.b16 %v564
        %v1226 = vunpack.c.h.b16 %v564
        %v1227 = vunpack.c.l.b16 %v565
        %v1228 = vunpack.c.h.b16 %v565
        %v1229 = vunpack.c.l.b16 %v566
        %v1230 = vunpack.c.h.b16 %v566
        %v1231 = vunpack.c.l.b16 %v567
        %v1232 = vunpack.c.l.b16 %v568
        %v1233 = vunpack.c.h.b16 %v568
        %v1234 = vunpack.c.l.b16 %v569
        %v1235 = vunpack.c.h.b16 %v569
        %v1236 = vunpack.c.l.b16 %v570
        %v1237 = vunpack.c.h.b16 %v570
        %v1238 = vunpack.c.l.b16 %v571
        %v1239 = vunpack.c.h.b16 %v571
        %v1240 = vunpack.c.l.b16 %v572
        %v1241 = vunpack.c.l.b16 %v573
        %v1242 = vunpack.c.h.b16 %v573
        %v1243 = vunpack.c.l.b16 %v574
        %v1244 = vunpack.c.h.b16 %v574
        %v1245 = vunpack.c.l.b16 %v575
        %v1246 = vunpack.c.h.b16 %v575
        %v1247 = vunpack.c.l.b16 %v576
        %v1248 = vunpack.c.h.b16 %v576
        %v1249 = vunpack.c.l.b16 %v577
        %v1250 = vpack.c.b16 %v827, %v818
        %v1251 = vpack.c.b16 %v828, %v819
        %v1252 = vpack.c.b16 %v829, %v820
        %v1253 = vpack.c.b16 %v830, %v821
        %v1254 = vpack.c.b16 %v831, %v822
        %v1255 = vpack.c.b16 %v832, %v823
        %v1256 = vpack.c.b16 %v833, %v824
        %v1257 = vpack.c.b16 %v834, %v825
        %v1258 = vpack.c.b16 %v835, %v826
        %v1259 = vpack.c.b16 %v845, %v836
        %v1260 = vpack.c.b16 %v846, %v837
        %v1261 = vpack.c.b16 %v847, %v838
        %v1262 = vpack.c.b16 %v848, %v839
        %v1263 = vpack.c.b16 %v849, %v840
        %v1264 = vpack.c.b16 %v850, %v841
        %v1265 = vpack.c.b16 %v851, %v842
        %v1266 = vpack.c.b16 %v852, %v843
        %v1267 = vpack.c.b16 %v853, %v844
        %v1268 = vpack.c.b16 %v863, %v854
        %v1269 = vpack.c.b16 %v864, %v855
        %v1270 = vpack.c.b16 %v865, %v856
        %v1271 = vpack.c.b16 %v866, %v857
        %v1272 = vpack.c.b16 %v867, %v858
        %v1273 = vpack.c.b16 %v868, %v859
        %v1274 = vpack.c.b16 %v869, %v860
        %v1275 = vpack.c.b16 %v870, %v861
        %v1276 = vpack.c.b16 %v871, %v862
        %v1277 = vpack.c.b16 %v881, %v872
        %v1278 = vpack.c.b16 %v882, %v873
        %v1279 = vpack.c.b16 %v883, %v874
        %v1280 = vpack.c.b16 %v884, %v875
        %v1281 = vpack.c.b16 %v885, %v876
        %v1282 = vpack.c.b16 %v886, %v877
        %v1283 = vpack.c.b16 %v887, %v878
        %v1284 = vpack.c.b16 %v888, %v879
        %v1285 = vpack.c.b16 %v889, %v880
        %v1286 = vpack.c.b16 %v899, %v890
        %v1287 = vpack.c.b16 %v900, %v891
        %v1288 = vpack.c.b16 %v901, %v892
        %v1289 = vpack.c.b16 %v902, %v893
        %v1290 = vpack.c.b16 %v903, %v894
        %v1291 = vpack.c.b16 %v904, %v895
        %v1292 = vpack.c.b16 %v905, %v896
        %v1293 = vpack.c.b16 %v906, %v897
        %v1294 = vpack.c.b16 %v907, %v898
        %v1295 = vpack.c.b16 %v917, %v908
        %v1296 = vpack.c.b16 %v918, %v909
        %v1297 = vpack.c.b16 %v919, %v910
        %v1298 = vpack.c.b16 %v920, %v911
        %v1299 = vpack.c.b16 %v921, %v912
        %v1300 = vpack.c.b16 %v922, %v913
        %v1301 = vpack.c.b16 %v923, %v914
        %v1302 = vpack.c.b16 %v924, %v915
        %v1303 = vpack.c.b16 %v925, %v916
        %v1304 = vpack.c.b16 %v935, %v926
        %v1305 = vpack.c.b16 %v936, %v927
        %v1306 = vpack.c.b16 %v937, %v928
        %v1307 = vpack.c.b16 %v938, %v929
        %v1308 = vpack.c.b16 %v939, %v930
        %v1309 = vpack.c.b16 %v940, %v931
        %v1310 = vpack.c.b16 %v941, %v932
        %v1311 = vpack.c.b16 %v942, %v933
        %v1312 = vpack.c.b16 %v943, %v934
        %v1313 = vpack.c.b16 %v953, %v944
        %v1314 = vpack.c.b16 %v954, %v945
        %v1315 = vpack.c.b16 %v955, %v946
        %v1316 = vpack.c.b16 %v956, %v947
        %v1317 = vpack.c.b16 %v957, %v948
        %v1318 = vpack.c.b16 %v958, %v949
        %v1319 = vpack.c.b16 %v959, %v950
        %v1320 = vpack.c.b16 %v960, %v951
        %v1321 = vpack.c.b16 %v961, %v952
        %v1322 = vpack.c.b16 %v971, %v962
        %v1323 = vpack.c.b16 %v972, %v963
        %v1324 = vpack.c.b16 %v973, %v964
        %v1325 = vpack.c.b16 %v974, %v965
        %v1326 = vpack.c.b16 %v975, %v966
        %v1327 = vpack.c.b16 %v976, %v967
        %v1328 = vpack.c.b16 %v977, %v968
        %v1329 = vpack.c.b16 %v978, %v969
        %v1330 = vpack.c.b16 %v979, %v970
        %v1331 = vpack.c.b16 %v989, %v980
        %v1332 = vpack.c.b16 %v990, %v981
        %v1333 = vpack.c.b16 %v991, %v982
        %v1334 = vpack.c.b16 %v992, %v983
        %v1335 = vpack.c.b16 %v993, %v984
        %v1336 = vpack.c.b16 %v994, %v985
        %v1337 = vpack.c.b16 %v995, %v986
        %v1338 = vpack.c.b16 %v996, %v987
        %v1339 = vpack.c.b16 %v997, %v988
        %v1340 = vpack.c.b16 %v1007, %v998
        %v1341 = vpack.c.b16 %v1008, %v999
        %v1342 = vpack.c.b16 %v1009, %v1000
        %v1343 = vpack.c.b16 %v1010, %v1001
        %v1344 = vpack.c.b16 %v1011, %v1002
        %v1345 = vpack.c.b16 %v1012, %v1003
        %v1346 = vpack.c.b16 %v1013, %v1004
        %v1347 = vpack.c.b16 %v1014, %v1005
        %v1348 = vpack.c.b16 %v1015, %v1006
        %v1349 = vpack.c.b16 %v1025, %v1016
        %v1350 = vpack.c.b16 %v1026, %v1017
        %v1351 = vpack.c.b16 %v1027, %v1018
        %v1352 = vpack.c.b16 %v1028, %v1019
        %v1353 = vpack.c.b16 %v1029, %v1020
        %v1354 = vpack.c.b16 %v1030, %v1021
        %v1355 = vpack.c.b16 %v1031, %v1022
        %v1356 = vpack.c.b16 %v1032, %v1023
        %v1357 = vpack.c.b16 %v1033, %v1024
        %v1358 = vpack.c.b16 %v1043, %v1034
        %v1359 = vpack.c.b16 %v1044, %v1035
        %v1360 = vpack.c.b16 %v1045, %v1036
        %v1361 = vpack.c.b16 %v1046, %v1037
        %v1362 = vpack.c.b16 %v1047, %v1038
        %v1363 = vpack.c.b16 %v1048, %v1039
        %v1364 = vpack.c.b16 %v1049, %v1040
        %v1365 = vpack.c.b16 %v1050, %v1041
        %v1366 = vpack.c.b16 %v1051, %v1042
        %v1367 = vpack.c.b16 %v1061, %v1052
        %v1368 = vpack.c.b16 %v1062, %v1053
        %v1369 = vpack.c.b16 %v1063, %v1054
        %v1370 = vpack.c.b16 %v1064, %v1055
        %v1371 = vpack.c.b16 %v1065, %v1056
        %v1372 = vpack.c.b16 %v1066, %v1057
        %v1373 = vpack.c.b16 %v1067, %v1058
        %v1374 = vpack.c.b16 %v1068, %v1059
        %v1375 = vpack.c.b16 %v1069, %v1060
        %v1376 = vpack.c.b16 %v1079, %v1070
        %v1377 = vpack.c.b16 %v1080, %v1071
        %v1378 = vpack.c.b16 %v1081, %v1072
        %v1379 = vpack.c.b16 %v1082, %v1073
        %v1380 = vpack.c.b16 %v1083, %v1074
        %v1381 = vpack.c.b16 %v1084, %v1075
        %v1382 = vpack.c.b16 %v1085, %v1076
        %v1383 = vpack.c.b16 %v1086, %v1077
        %v1384 = vpack.c.b16 %v1087, %v1078
        %v1385 = vpack.c.b16 %v1097, %v1088
        %v1386 = vpack.c.b16 %v1098, %v1089
        %v1387 = vpack.c.b16 %v1099, %v1090
        %v1388 = vpack.c.b16 %v1100, %v1091
        %v1389 = vpack.c.b16 %v1101, %v1092
        %v1390 = vpack.c.b16 %v1102, %v1093
        %v1391 = vpack.c.b16 %v1103, %v1094
        %v1392 = vpack.c.b16 %v1104, %v1095
        %v1393 = vpack.c.b16 %v1105, %v1096
        %v1394 = vpack.c.b16 %v1115, %v1106
        %v1395 = vpack.c.b16 %v1116, %v1107
        %v1396 = vpack.c.b16 %v1117, %v1108
        %v1397 = vpack.c.b16 %v1118, %v1109
        %v1398 = vpack.c.b16 %v1119, %v1110
        %v1399 = vpack.c.b16 %v1120, %v1111
        %v1400 = vpack.c.b16 %v1121, %v1112
        %v1401 = vpack.c.b16 %v1122, %v1113
        %v1402 = vpack.c.b16 %v1123, %v1114
        %v1403 = vpack.c.b16 %v1133, %v1124
        %v1404 = vpack.c.b16 %v1134, %v1125
        %v1405 = vpack.c.b16 %v1135, %v1126
        %v1406 = vpack.c.b16 %v1136, %v1127
        %v1407 = vpack.c.b16 %v1137, %v1128
        %v1408 = vpack.c.b16 %v1138, %v1129
        %v1409 = vpack.c.b16 %v1139, %v1130
        %v1410 = vpack.c.b16 %v1140, %v1131
        %v1411 = vpack.c.b16 %v1141, %v1132
        %v1412 = vpack.c.b16 %v1151, %v1142
        %v1413 = vpack.c.b16 %v1152, %v1143
        %v1414 = vpack.c.b16 %v1153, %v1144
        %v1415 = vpack.c.b16 %v1154, %v1145
        %v1416 = vpack.c.b16 %v1155, %v1146
        %v1417 = vpack.c.b16 %v1156, %v1147
        %v1418 = vpack.c.b16 %v1157, %v1148
        %v1419 = vpack.c.b16 %v1158, %v1149
        %v1420 = vpack.c.b16 %v1159, %v1150
        %v1421 = vpack.c.b16 %v1169, %v1160
        %v1422 = vpack.c.b16 %v1170, %v1161
        %v1423 = vpack.c.b16 %v1171, %v1162
        %v1424 = vpack.c.b16 %v1172, %v1163
        %v1425 = vpack.c.b16 %v1173, %v1164
        %v1426 = vpack.c.b16 %v1174, %v1165
        %v1427 = vpack.c.b16 %v1175, %v1166
        %v1428 = vpack.c.b16 %v1176, %v1167
        %v1429 = vpack.c.b16 %v1177, %v1168
        %v1430 = vpack.c.b16 %v1187, %v1178
        %v1431 = vpack.c.b16 %v1188, %v1179
        %v1432 = vpack.c.b16 %v1189, %v1180
        %v1433 = vpack.c.b16 %v1190, %v1181
        %v1434 = vpack.c.b16 %v1191, %v1182
        %v1435 = vpack.c.b16 %v1192, %v1183
        %v1436 = vpack.c.b16 %v1193, %v1184
        %v1437 = vpack.c.b16 %v1194, %v1185
        %v1438 = vpack.c.b16 %v1195, %v1186
        %v1439 = vpack.c.b16 %v1205, %v1196
        %v1440 = vpack.c.b16 %v1206, %v1197
        %v1441 = vpack.c.b16 %v1207, %v1198
        %v1442 = vpack.c.b16 %v1208, %v1199
        %v1443 = vpack.c.b16 %v1209, %v1200
        %v1444 = vpack.c.b16 %v1210, %v1201
        %v1445 = vpack.c.b16 %v1211, %v1202
        %v1446 = vpack.c.b16 %v1212, %v1203
        %v1447 = vpack.c.b16 %v1213, %v1204
        %v1448 = vpack.c.b16 %v1223, %v1214
        %v1449 = vpack.c.b16 %v1224, %v1215
        %v1450 = vpack.c.b16 %v1225, %v1216
        %v1451 = vpack.c.b16 %v1226, %v1217
        %v1452 = vpack.c.b16 %v1227, %v1218
        %v1453 = vpack.c.b16 %v1228, %v1219
        %v1454 = vpack.c.b16 %v1229, %v1220
        %v1455 = vpack.c.b16 %v1230, %v1221
        %v1456 = vpack.c.b16 %v1231, %v1222
        %v1457 = vpack.c.b16 %v1241, %v1232
        %v1458 = vpack.c.b16 %v1242, %v1233
        %v1459 = vpack.c.b16 %v1243, %v1234
        %v1460 = vpack.c.b16 %v1244, %v1235
        %v1461 = vpack.c.b16 %v1245, %v1236
        %v1462 = vpack.c.b16 %v1246, %v1237
        %v1463 = vpack.c.b16 %v1247, %v1238
        %v1464 = vpack.c.b16 %v1248, %v1239
        %v1465 = vpack.c.b16 %v1249, %v1240
        %1682 = vmatpush.bf16.msra.mxu0 %v1313
        %1683 = vmatpush.bf16.msra.mxu0 %v1304
        %1684 = vmatpush.bf16.msra.mxu0 %v1295
        %1685 = vmatpush.bf16.msra.mxu0 %v1286
        %1686 = vmatpush.bf16.msra.mxu0 %v1277
        %1687 = vmatpush.bf16.msra.mxu0 %v1268
        %1688 = vmatpush.bf16.msra.mxu0 %v1259
        %1689 = vmatpush.bf16.msra.mxu0 %v1250
        %1690 = vmatmul.bf16.gmra.mxu0 %v314
        %v1691 = vpop.f32.mrf.mxu0
        %v1692 = vadd.f32 0.0, %v1691
        %v1693 = vpop.f32.mrf.mxu0
        %v1694 = vadd.f32 0.0, %v1693
        %1695 = vmatmul.bf16.gmra.mxu0 %v317
        %v1696 = vpop.f32.mrf.mxu0
        %v1697 = vadd.f32 0.0, %v1696
        %v1698 = vpop.f32.mrf.mxu0
        %v1699 = vadd.f32 0.0, %v1698
        %1700 = vmatmul.bf16.gmra.mxu0 %v320
        %v1701 = vpop.f32.mrf.mxu0
        %v1702 = vadd.f32 0.0, %v1701
        %v1703 = vpop.f32.mrf.mxu0
        %v1704 = vadd.f32 0.0, %v1703
        %1705 = vmatmul.bf16.gmra.mxu0 %v323
        %v1706 = vpop.f32.mrf.mxu0
        %v1707 = vadd.f32 0.0, %v1706
        %v1708 = vpop.f32.mrf.mxu0
        %v1709 = vadd.f32 0.0, %v1708
        %1710 = vmatmul.bf16.gmra.mxu0 %v326
        %v1711 = vpop.f32.mrf.mxu0
        %v1712 = vadd.f32 0.0, %v1711
        %v1713 = vpop.f32.mrf.mxu0
        %v1714 = vadd.f32 0.0, %v1713
        %1715 = vmatmul.bf16.gmra.mxu0 %v329
        %v1716 = vpop.f32.mrf.mxu0
        %v1717 = vadd.f32 0.0, %v1716
        %v1718 = vpop.f32.mrf.mxu0
        %v1719 = vadd.f32 0.0, %v1718
        %1720 = vmatmul.bf16.gmra.mxu0 %v332
        %v1721 = vpop.f32.mrf.mxu0
        %v1722 = vadd.f32 0.0, %v1721
        %v1723 = vpop.f32.mrf.mxu0
        %v1724 = vadd.f32 0.0, %v1723
        %1725 = vmatmul.bf16.gmra.mxu0 %v335
        %v1726 = vpop.f32.mrf.mxu0
        %v1727 = vadd.f32 0.0, %v1726
        %v1728 = vpop.f32.mrf.mxu0
        %v1729 = vadd.f32 0.0, %v1728
        %1730 = vdwg.mxu0
        %1731 = vmatpush.bf16.msra.mxu0 %v1385
        %1732 = vmatpush.bf16.msra.mxu0 %v1376
        %1733 = vmatpush.bf16.msra.mxu0 %v1367
        %1734 = vmatpush.bf16.msra.mxu0 %v1358
        %1735 = vmatpush.bf16.msra.mxu0 %v1349
        %1736 = vmatpush.bf16.msra.mxu0 %v1340
        %1737 = vmatpush.bf16.msra.mxu0 %v1331
        %1738 = vmatpush.bf16.msra.mxu0 %v1322
        %1739 = vmatmul.bf16.gmra.mxu0 %v315
        %v1740 = vpop.f32.mrf.mxu0
        %v1741 = vadd.f32 %v1692, %v1740
        %v1742 = vpop.f32.mrf.mxu0
        %v1743 = vadd.f32 %v1694, %v1742
        %1744 = vmatmul.bf16.gmra.mxu0 %v318
        %v1745 = vpop.f32.mrf.mxu0
        %v1746 = vadd.f32 %v1697, %v1745
        %v1747 = vpop.f32.mrf.mxu0
        %v1748 = vadd.f32 %v1699, %v1747
        %1749 = vmatmul.bf16.gmra.mxu0 %v321
        %v1750 = vpop.f32.mrf.mxu0
        %v1751 = vadd.f32 %v1702, %v1750
        %v1752 = vpop.f32.mrf.mxu0
        %v1753 = vadd.f32 %v1704, %v1752
        %1754 = vmatmul.bf16.gmra.mxu0 %v324
        %v1755 = vpop.f32.mrf.mxu0
        %v1756 = vadd.f32 %v1707, %v1755
        %v1757 = vpop.f32.mrf.mxu0
        %v1758 = vadd.f32 %v1709, %v1757
        %1759 = vmatmul.bf16.gmra.mxu0 %v327
        %v1760 = vpop.f32.mrf.mxu0
        %v1761 = vadd.f32 %v1712, %v1760
        %v1762 = vpop.f32.mrf.mxu0
        %v1763 = vadd.f32 %v1714, %v1762
        %1764 = vmatmul.bf16.gmra.mxu0 %v330
        %v1765 = vpop.f32.mrf.mxu0
        %v1766 = vadd.f32 %v1717, %v1765
        %v1767 = vpop.f32.mrf.mxu0
        %v1768 = vadd.f32 %v1719, %v1767
        %1769 = vmatmul.bf16.gmra.mxu0 %v333
        %v1770 = vpop.f32.mrf.mxu0
        %v1771 = vadd.f32 %v1722, %v1770
        %v1772 = vpop.f32.mrf.mxu0
        %v1773 = vadd.f32 %v1724, %v1772
        %1774 = vmatmul.bf16.gmra.mxu0 %v336
        %v1775 = vpop.f32.mrf.mxu0
        %v1776 = vadd.f32 %v1727, %v1775
        %v1777 = vpop.f32.mrf.mxu0
        %v1778 = vadd.f32 %v1729, %v1777
        %1779 = vdwg.mxu0
        %1780 = vmatpush.bf16.msra.mxu0 %v1457
        %1781 = vmatpush.bf16.msra.mxu0 %v1448
        %1782 = vmatpush.bf16.msra.mxu0 %v1439
        %1783 = vmatpush.bf16.msra.mxu0 %v1430
        %1784 = vmatpush.bf16.msra.mxu0 %v1421
        %1785 = vmatpush.bf16.msra.mxu0 %v1412
        %1786 = vmatpush.bf16.msra.mxu0 %v1403
        %1787 = vmatpush.bf16.msra.mxu0 %v1394
        %1788 = vmatmul.bf16.gmra.mxu0 %v316
        %v1789 = vpop.f32.mrf.mxu0
        %v1790 = vadd.f32 %v1741, %v1789
        %v1791 = vpop.f32.mrf.mxu0
        %v1792 = vadd.f32 %v1743, %v1791
        %1793 = vmatmul.bf16.gmra.mxu0 %v319
        %v1794 = vpop.f32.mrf.mxu0
        %v1795 = vadd.f32 %v1746, %v1794
        %v1796 = vpop.f32.mrf.mxu0
        %v1797 = vadd.f32 %v1748, %v1796
        %1798 = vmatmul.bf16.gmra.mxu0 %v322
        %v1799 = vpop.f32.mrf.mxu0
        %v1800 = vadd.f32 %v1751, %v1799
        %v1801 = vpop.f32.mrf.mxu0
        %v1802 = vadd.f32 %v1753, %v1801
        %1803 = vmatmul.bf16.gmra.mxu0 %v325
        %v1804 = vpop.f32.mrf.mxu0
        %v1805 = vadd.f32 %v1756, %v1804
        %v1806 = vpop.f32.mrf.mxu0
        %v1807 = vadd.f32 %v1758, %v1806
        %1808 = vmatmul.bf16.gmra.mxu0 %v328
        %v1809 = vpop.f32.mrf.mxu0
        %v1810 = vadd.f32 %v1761, %v1809
        %v1811 = vpop.f32.mrf.mxu0
        %v1812 = vadd.f32 %v1763, %v1811
        %1813 = vmatmul.bf16.gmra.mxu0 %v331
        %v1814 = vpop.f32.mrf.mxu0
        %v1815 = vadd.f32 %v1766, %v1814
        %v1816 = vpop.f32.mrf.mxu0
        %v1817 = vadd.f32 %v1768, %v1816
        %1818 = vmatmul.bf16.gmra.mxu0 %v334
        %v1819 = vpop.f32.mrf.mxu0
        %v1820 = vadd.f32 %v1771, %v1819
        %v1821 = vpop.f32.mrf.mxu0
        %v1822 = vadd.f32 %v1773, %v1821
        %1823 = vmatmul.bf16.gmra.mxu0 %v337
        %v1824 = vpop.f32.mrf.mxu0
        %v1825 = vadd.f32 %v1776, %v1824
        %v1826 = vpop.f32.mrf.mxu0
        %v1827 = vadd.f32 %v1778, %v1826
        %1828 = vdwg.mxu0
        %1829 = vmatpush.bf16.msra.mxu0 %v1314
        %1830 = vmatpush.bf16.msra.mxu0 %v1305
        %1831 = vmatpush.bf16.msra.mxu0 %v1296
        %1832 = vmatpush.bf16.msra.mxu0 %v1287
        %1833 = vmatpush.bf16.msra.mxu0 %v1278
        %1834 = vmatpush.bf16.msra.mxu0 %v1269
        %1835 = vmatpush.bf16.msra.mxu0 %v1260
        %1836 = vmatpush.bf16.msra.mxu0 %v1251
        %1837 = vmatmul.bf16.gmra.mxu0 %v314
        %v1838 = vpop.f32.mrf.mxu0
        %v1839 = vadd.f32 0.0, %v1838
        %v1840 = vpop.f32.mrf.mxu0
        %v1841 = vadd.f32 0.0, %v1840
        %1842 = vmatmul.bf16.gmra.mxu0 %v317
        %v1843 = vpop.f32.mrf.mxu0
        %v1844 = vadd.f32 0.0, %v1843
        %v1845 = vpop.f32.mrf.mxu0
        %v1846 = vadd.f32 0.0, %v1845
        %1847 = vmatmul.bf16.gmra.mxu0 %v320
        %v1848 = vpop.f32.mrf.mxu0
        %v1849 = vadd.f32 0.0, %v1848
        %v1850 = vpop.f32.mrf.mxu0
        %v1851 = vadd.f32 0.0, %v1850
        %1852 = vmatmul.bf16.gmra.mxu0 %v323
        %v1853 = vpop.f32.mrf.mxu0
        %v1854 = vadd.f32 0.0, %v1853
        %v1855 = vpop.f32.mrf.mxu0
        %v1856 = vadd.f32 0.0, %v1855
        %1857 = vmatmul.bf16.gmra.mxu0 %v326
        %v1858 = vpop.f32.mrf.mxu0
        %v1859 = vadd.f32 0.0, %v1858
        %v1860 = vpop.f32.mrf.mxu0
        %v1861 = vadd.f32 0.0, %v1860
        %1862 = vmatmul.bf16.gmra.mxu0 %v329
        %v1863 = vpop.f32.mrf.mxu0
        %v1864 = vadd.f32 0.0, %v1863
        %v1865 = vpop.f32.mrf.mxu0
        %v1866 = vadd.f32 0.0, %v1865
        %1867 = vmatmul.bf16.gmra.mxu0 %v332
        %v1868 = vpop.f32.mrf.mxu0
        %v1869 = vadd.f32 0.0, %v1868
        %v1870 = vpop.f32.mrf.mxu0
        %v1871 = vadd.f32 0.0, %v1870
        %1872 = vmatmul.bf16.gmra.mxu0 %v335
        %v1873 = vpop.f32.mrf.mxu0
        %v1874 = vadd.f32 0.0, %v1873
        %v1875 = vpop.f32.mrf.mxu0
        %v1876 = vadd.f32 0.0, %v1875
        %1877 = vdwg.mxu0
        %1878 = vmatpush.bf16.msra.mxu0 %v1386
        %1879 = vmatpush.bf16.msra.mxu0 %v1377
        %1880 = vmatpush.bf16.msra.mxu0 %v1368
        %1881 = vmatpush.bf16.msra.mxu0 %v1359
        %1882 = vmatpush.bf16.msra.mxu0 %v1350
        %1883 = vmatpush.bf16.msra.mxu0 %v1341
        %1884 = vmatpush.bf16.msra.mxu0 %v1332
        %1885 = vmatpush.bf16.msra.mxu0 %v1323
        %1886 = vmatmul.bf16.gmra.mxu0 %v315
        %v1887 = vpop.f32.mrf.mxu0
        %v1888 = vadd.f32 %v1839, %v1887
        %v1889 = vpop.f32.mrf.mxu0
        %v1890 = vadd.f32 %v1841, %v1889
        %1891 = vmatmul.bf16.gmra.mxu0 %v318
        %v1892 = vpop.f32.mrf.mxu0
        %v1893 = vadd.f32 %v1844, %v1892
        %v1894 = vpop.f32.mrf.mxu0
        %v1895 = vadd.f32 %v1846, %v1894
        %1896 = vmatmul.bf16.gmra.mxu0 %v321
        %v1897 = vpop.f32.mrf.mxu0
        %v1898 = vadd.f32 %v1849, %v1897
        %v1899 = vpop.f32.mrf.mxu0
        %v1900 = vadd.f32 %v1851, %v1899
        %1901 = vmatmul.bf16.gmra.mxu0 %v324
        %v1902 = vpop.f32.mrf.mxu0
        %v1903 = vadd.f32 %v1854, %v1902
        %v1904 = vpop.f32.mrf.mxu0
        %v1905 = vadd.f32 %v1856, %v1904
        %1906 = vmatmul.bf16.gmra.mxu0 %v327
        %v1907 = vpop.f32.mrf.mxu0
        %v1908 = vadd.f32 %v1859, %v1907
        %v1909 = vpop.f32.mrf.mxu0
        %v1910 = vadd.f32 %v1861, %v1909
        %1911 = vmatmul.bf16.gmra.mxu0 %v330
        %v1912 = vpop.f32.mrf.mxu0
        %v1913 = vadd.f32 %v1864, %v1912
        %v1914 = vpop.f32.mrf.mxu0
        %v1915 = vadd.f32 %v1866, %v1914
        %1916 = vmatmul.bf16.gmra.mxu0 %v333
        %v1917 = vpop.f32.mrf.mxu0
        %v1918 = vadd.f32 %v1869, %v1917
        %v1919 = vpop.f32.mrf.mxu0
        %v1920 = vadd.f32 %v1871, %v1919
        %1921 = vmatmul.bf16.gmra.mxu0 %v336
        %v1922 = vpop.f32.mrf.mxu0
        %v1923 = vadd.f32 %v1874, %v1922
        %v1924 = vpop.f32.mrf.mxu0
        %v1925 = vadd.f32 %v1876, %v1924
        %1926 = vdwg.mxu0
        %1927 = vmatpush.bf16.msra.mxu0 %v1458
        %1928 = vmatpush.bf16.msra.mxu0 %v1449
        %1929 = vmatpush.bf16.msra.mxu0 %v1440
        %1930 = vmatpush.bf16.msra.mxu0 %v1431
        %1931 = vmatpush.bf16.msra.mxu0 %v1422
        %1932 = vmatpush.bf16.msra.mxu0 %v1413
        %1933 = vmatpush.bf16.msra.mxu0 %v1404
        %1934 = vmatpush.bf16.msra.mxu0 %v1395
        %1935 = vmatmul.bf16.gmra.mxu0 %v316
        %v1936 = vpop.f32.mrf.mxu0
        %v1937 = vadd.f32 %v1888, %v1936
        %v1938 = vpop.f32.mrf.mxu0
        %v1939 = vadd.f32 %v1890, %v1938
        %1940 = vmatmul.bf16.gmra.mxu0 %v319
        %v1941 = vpop.f32.mrf.mxu0
        %v1942 = vadd.f32 %v1893, %v1941
        %v1943 = vpop.f32.mrf.mxu0
        %v1944 = vadd.f32 %v1895, %v1943
        %1945 = vmatmul.bf16.gmra.mxu0 %v322
        %v1946 = vpop.f32.mrf.mxu0
        %v1947 = vadd.f32 %v1898, %v1946
        %v1948 = vpop.f32.mrf.mxu0
        %v1949 = vadd.f32 %v1900, %v1948
        %1950 = vmatmul.bf16.gmra.mxu0 %v325
        %v1951 = vpop.f32.mrf.mxu0
        %v1952 = vadd.f32 %v1903, %v1951
        %v1953 = vpop.f32.mrf.mxu0
        %v1954 = vadd.f32 %v1905, %v1953
        %1955 = vmatmul.bf16.gmra.mxu0 %v328
        %v1956 = vpop.f32.mrf.mxu0
        %v1957 = vadd.f32 %v1908, %v1956
        %v1958 = vpop.f32.mrf.mxu0
        %v1959 = vadd.f32 %v1910, %v1958
        %1960 = vmatmul.bf16.gmra.mxu0 %v331
        %v1961 = vpop.f32.mrf.mxu0
        %v1962 = vadd.f32 %v1913, %v1961
        %v1963 = vpop.f32.mrf.mxu0
        %v1964 = vadd.f32 %v1915, %v1963
        %1965 = vmatmul.bf16.gmra.mxu0 %v334
        %v1966 = vpop.f32.mrf.mxu0
        %v1967 = vadd.f32 %v1918, %v1966
        %v1968 = vpop.f32.mrf.mxu0
        %v1969 = vadd.f32 %v1920, %v1968
        %1970 = vmatmul.bf16.gmra.mxu0 %v337
        %v1971 = vpop.f32.mrf.mxu0
        %v1972 = vadd.f32 %v1923, %v1971
        %v1973 = vpop.f32.mrf.mxu0
        %v1974 = vadd.f32 %v1925, %v1973
        %1975 = vdwg.mxu0
        %1976 = vmatpush.bf16.msra.mxu0 %v1315
        %1977 = vmatpush.bf16.msra.mxu0 %v1306
        %1978 = vmatpush.bf16.msra.mxu0 %v1297
        %1979 = vmatpush.bf16.msra.mxu0 %v1288
        %1980 = vmatpush.bf16.msra.mxu0 %v1279
        %1981 = vmatpush.bf16.msra.mxu0 %v1270
        %1982 = vmatpush.bf16.msra.mxu0 %v1261
        %1983 = vmatpush.bf16.msra.mxu0 %v1252
        %1984 = vmatmul.bf16.gmra.mxu0 %v314
        %v1985 = vpop.f32.mrf.mxu0
        %v1986 = vadd.f32 0.0, %v1985
        %v1987 = vpop.f32.mrf.mxu0
        %v1988 = vadd.f32 0.0, %v1987
        %1989 = vmatmul.bf16.gmra.mxu0 %v317
        %v1990 = vpop.f32.mrf.mxu0
        %v1991 = vadd.f32 0.0, %v1990
        %v1992 = vpop.f32.mrf.mxu0
        %v1993 = vadd.f32 0.0, %v1992
        %1994 = vmatmul.bf16.gmra.mxu0 %v320
        %v1995 = vpop.f32.mrf.mxu0
        %v1996 = vadd.f32 0.0, %v1995
        %v1997 = vpop.f32.mrf.mxu0
        %v1998 = vadd.f32 0.0, %v1997
        %1999 = vmatmul.bf16.gmra.mxu0 %v323
        %v2000 = vpop.f32.mrf.mxu0
        %v2001 = vadd.f32 0.0, %v2000
        %v2002 = vpop.f32.mrf.mxu0
        %v2003 = vadd.f32 0.0, %v2002
        %2004 = vmatmul.bf16.gmra.mxu0 %v326
        %v2005 = vpop.f32.mrf.mxu0
        %v2006 = vadd.f32 0.0, %v2005
        %v2007 = vpop.f32.mrf.mxu0
        %v2008 = vadd.f32 0.0, %v2007
        %2009 = vmatmul.bf16.gmra.mxu0 %v329
        %v2010 = vpop.f32.mrf.mxu0
        %v2011 = vadd.f32 0.0, %v2010
        %v2012 = vpop.f32.mrf.mxu0
        %v2013 = vadd.f32 0.0, %v2012
        %2014 = vmatmul.bf16.gmra.mxu0 %v332
        %v2015 = vpop.f32.mrf.mxu0
        %v2016 = vadd.f32 0.0, %v2015
        %v2017 = vpop.f32.mrf.mxu0
        %v2018 = vadd.f32 0.0, %v2017
        %2019 = vmatmul.bf16.gmra.mxu0 %v335
        %v2020 = vpop.f32.mrf.mxu0
        %v2021 = vadd.f32 0.0, %v2020
        %v2022 = vpop.f32.mrf.mxu0
        %v2023 = vadd.f32 0.0, %v2022
        %2024 = vdwg.mxu0
        %2025 = vmatpush.bf16.msra.mxu0 %v1387
        %2026 = vmatpush.bf16.msra.mxu0 %v1378
        %2027 = vmatpush.bf16.msra.mxu0 %v1369
        %2028 = vmatpush.bf16.msra.mxu0 %v1360
        %2029 = vmatpush.bf16.msra.mxu0 %v1351
        %2030 = vmatpush.bf16.msra.mxu0 %v1342
        %2031 = vmatpush.bf16.msra.mxu0 %v1333
        %2032 = vmatpush.bf16.msra.mxu0 %v1324
        %2033 = vmatmul.bf16.gmra.mxu0 %v315
        %v2034 = vpop.f32.mrf.mxu0
        %v2035 = vadd.f32 %v1986, %v2034
        %v2036 = vpop.f32.mrf.mxu0
        %v2037 = vadd.f32 %v1988, %v2036
        %2038 = vmatmul.bf16.gmra.mxu0 %v318
        %v2039 = vpop.f32.mrf.mxu0
        %v2040 = vadd.f32 %v1991, %v2039
        %v2041 = vpop.f32.mrf.mxu0
        %v2042 = vadd.f32 %v1993, %v2041
        %2043 = vmatmul.bf16.gmra.mxu0 %v321
        %v2044 = vpop.f32.mrf.mxu0
        %v2045 = vadd.f32 %v1996, %v2044
        %v2046 = vpop.f32.mrf.mxu0
        %v2047 = vadd.f32 %v1998, %v2046
        %2048 = vmatmul.bf16.gmra.mxu0 %v324
        %v2049 = vpop.f32.mrf.mxu0
        %v2050 = vadd.f32 %v2001, %v2049
        %v2051 = vpop.f32.mrf.mxu0
        %v2052 = vadd.f32 %v2003, %v2051
        %2053 = vmatmul.bf16.gmra.mxu0 %v327
        %v2054 = vpop.f32.mrf.mxu0
        %v2055 = vadd.f32 %v2006, %v2054
        %v2056 = vpop.f32.mrf.mxu0
        %v2057 = vadd.f32 %v2008, %v2056
        %2058 = vmatmul.bf16.gmra.mxu0 %v330
        %v2059 = vpop.f32.mrf.mxu0
        %v2060 = vadd.f32 %v2011, %v2059
        %v2061 = vpop.f32.mrf.mxu0
        %v2062 = vadd.f32 %v2013, %v2061
        %2063 = vmatmul.bf16.gmra.mxu0 %v333
        %v2064 = vpop.f32.mrf.mxu0
        %v2065 = vadd.f32 %v2016, %v2064
        %v2066 = vpop.f32.mrf.mxu0
        %v2067 = vadd.f32 %v2018, %v2066
        %2068 = vmatmul.bf16.gmra.mxu0 %v336
        %v2069 = vpop.f32.mrf.mxu0
        %v2070 = vadd.f32 %v2021, %v2069
        %v2071 = vpop.f32.mrf.mxu0
        %v2072 = vadd.f32 %v2023, %v2071
        %2073 = vdwg.mxu0
        %2074 = vmatpush.bf16.msra.mxu0 %v1459
        %2075 = vmatpush.bf16.msra.mxu0 %v1450
        %2076 = vmatpush.bf16.msra.mxu0 %v1441
        %2077 = vmatpush.bf16.msra.mxu0 %v1432
        %2078 = vmatpush.bf16.msra.mxu0 %v1423
        %2079 = vmatpush.bf16.msra.mxu0 %v1414
        %2080 = vmatpush.bf16.msra.mxu0 %v1405
        %2081 = vmatpush.bf16.msra.mxu0 %v1396
        %2082 = vmatmul.bf16.gmra.mxu0 %v316
        %v2083 = vpop.f32.mrf.mxu0
        %v2084 = vadd.f32 %v2035, %v2083
        %v2085 = vpop.f32.mrf.mxu0
        %v2086 = vadd.f32 %v2037, %v2085
        %2087 = vmatmul.bf16.gmra.mxu0 %v319
        %v2088 = vpop.f32.mrf.mxu0
        %v2089 = vadd.f32 %v2040, %v2088
        %v2090 = vpop.f32.mrf.mxu0
        %v2091 = vadd.f32 %v2042, %v2090
        %2092 = vmatmul.bf16.gmra.mxu0 %v322
        %v2093 = vpop.f32.mrf.mxu0
        %v2094 = vadd.f32 %v2045, %v2093
        %v2095 = vpop.f32.mrf.mxu0
        %v2096 = vadd.f32 %v2047, %v2095
        %2097 = vmatmul.bf16.gmra.mxu0 %v325
        %v2098 = vpop.f32.mrf.mxu0
        %v2099 = vadd.f32 %v2050, %v2098
        %v2100 = vpop.f32.mrf.mxu0
        %v2101 = vadd.f32 %v2052, %v2100
        %2102 = vmatmul.bf16.gmra.mxu0 %v328
        %v2103 = vpop.f32.mrf.mxu0
        %v2104 = vadd.f32 %v2055, %v2103
        %v2105 = vpop.f32.mrf.mxu0
        %v2106 = vadd.f32 %v2057, %v2105
        %2107 = vmatmul.bf16.gmra.mxu0 %v331
        %v2108 = vpop.f32.mrf.mxu0
        %v2109 = vadd.f32 %v2060, %v2108
        %v2110 = vpop.f32.mrf.mxu0
        %v2111 = vadd.f32 %v2062, %v2110
        %2112 = vmatmul.bf16.gmra.mxu0 %v334
        %v2113 = vpop.f32.mrf.mxu0
        %v2114 = vadd.f32 %v2065, %v2113
        %v2115 = vpop.f32.mrf.mxu0
        %v2116 = vadd.f32 %v2067, %v2115
        %2117 = vmatmul.bf16.gmra.mxu0 %v337
        %v2118 = vpop.f32.mrf.mxu0
        %v2119 = vadd.f32 %v2070, %v2118
        %v2120 = vpop.f32.mrf.mxu0
        %v2121 = vadd.f32 %v2072, %v2120
        %2122 = vdwg.mxu0
        %2123 = vmatpush.bf16.msra.mxu0 %v1316
        %2124 = vmatpush.bf16.msra.mxu0 %v1307
        %2125 = vmatpush.bf16.msra.mxu0 %v1298
        %2126 = vmatpush.bf16.msra.mxu0 %v1289
        %2127 = vmatpush.bf16.msra.mxu0 %v1280
        %2128 = vmatpush.bf16.msra.mxu0 %v1271
        %2129 = vmatpush.bf16.msra.mxu0 %v1262
        %2130 = vmatpush.bf16.msra.mxu0 %v1253
        %2131 = vmatmul.bf16.gmra.mxu0 %v314
        %v2132 = vpop.f32.mrf.mxu0
        %v2133 = vadd.f32 0.0, %v2132
        %v2134 = vpop.f32.mrf.mxu0
        %v2135 = vadd.f32 0.0, %v2134
        %2136 = vmatmul.bf16.gmra.mxu0 %v317
        %v2137 = vpop.f32.mrf.mxu0
        %v2138 = vadd.f32 0.0, %v2137
        %v2139 = vpop.f32.mrf.mxu0
        %v2140 = vadd.f32 0.0, %v2139
        %2141 = vmatmul.bf16.gmra.mxu0 %v320
        %v2142 = vpop.f32.mrf.mxu0
        %v2143 = vadd.f32 0.0, %v2142
        %v2144 = vpop.f32.mrf.mxu0
        %v2145 = vadd.f32 0.0, %v2144
        %2146 = vmatmul.bf16.gmra.mxu0 %v323
        %v2147 = vpop.f32.mrf.mxu0
        %v2148 = vadd.f32 0.0, %v2147
        %v2149 = vpop.f32.mrf.mxu0
        %v2150 = vadd.f32 0.0, %v2149
        %2151 = vmatmul.bf16.gmra.mxu0 %v326
        %v2152 = vpop.f32.mrf.mxu0
        %v2153 = vadd.f32 0.0, %v2152
        %v2154 = vpop.f32.mrf.mxu0
        %v2155 = vadd.f32 0.0, %v2154
        %2156 = vmatmul.bf16.gmra.mxu0 %v329
        %v2157 = vpop.f32.mrf.mxu0
        %v2158 = vadd.f32 0.0, %v2157
        %v2159 = vpop.f32.mrf.mxu0
        %v2160 = vadd.f32 0.0, %v2159
        %2161 = vmatmul.bf16.gmra.mxu0 %v332
        %v2162 = vpop.f32.mrf.mxu0
        %v2163 = vadd.f32 0.0, %v2162
        %v2164 = vpop.f32.mrf.mxu0
        %v2165 = vadd.f32 0.0, %v2164
        %2166 = vmatmul.bf16.gmra.mxu0 %v335
        %v2167 = vpop.f32.mrf.mxu0
        %v2168 = vadd.f32 0.0, %v2167
        %v2169 = vpop.f32.mrf.mxu0
        %v2170 = vadd.f32 0.0, %v2169
        %2171 = vdwg.mxu0
        %2172 = vmatpush.bf16.msra.mxu0 %v1388
        %2173 = vmatpush.bf16.msra.mxu0 %v1379
        %2174 = vmatpush.bf16.msra.mxu0 %v1370
        %2175 = vmatpush.bf16.msra.mxu0 %v1361
        %2176 = vmatpush.bf16.msra.mxu0 %v1352
        %2177 = vmatpush.bf16.msra.mxu0 %v1343
        %2178 = vmatpush.bf16.msra.mxu0 %v1334
        %2179 = vmatpush.bf16.msra.mxu0 %v1325
        %2180 = vmatmul.bf16.gmra.mxu0 %v315
        %v2181 = vpop.f32.mrf.mxu0
        %v2182 = vadd.f32 %v2133, %v2181
        %v2183 = vpop.f32.mrf.mxu0
        %v2184 = vadd.f32 %v2135, %v2183
        %2185 = vmatmul.bf16.gmra.mxu0 %v318
        %v2186 = vpop.f32.mrf.mxu0
        %v2187 = vadd.f32 %v2138, %v2186
        %v2188 = vpop.f32.mrf.mxu0
        %v2189 = vadd.f32 %v2140, %v2188
        %2190 = vmatmul.bf16.gmra.mxu0 %v321
        %v2191 = vpop.f32.mrf.mxu0
        %v2192 = vadd.f32 %v2143, %v2191
        %v2193 = vpop.f32.mrf.mxu0
        %v2194 = vadd.f32 %v2145, %v2193
        %2195 = vmatmul.bf16.gmra.mxu0 %v324
        %v2196 = vpop.f32.mrf.mxu0
        %v2197 = vadd.f32 %v2148, %v2196
        %v2198 = vpop.f32.mrf.mxu0
        %v2199 = vadd.f32 %v2150, %v2198
        %2200 = vmatmul.bf16.gmra.mxu0 %v327
        %v2201 = vpop.f32.mrf.mxu0
        %v2202 = vadd.f32 %v2153, %v2201
        %v2203 = vpop.f32.mrf.mxu0
        %v2204 = vadd.f32 %v2155, %v2203
        %2205 = vmatmul.bf16.gmra.mxu0 %v330
        %v2206 = vpop.f32.mrf.mxu0
        %v2207 = vadd.f32 %v2158, %v2206
        %v2208 = vpop.f32.mrf.mxu0
        %v2209 = vadd.f32 %v2160, %v2208
        %2210 = vmatmul.bf16.gmra.mxu0 %v333
        %v2211 = vpop.f32.mrf.mxu0
        %v2212 = vadd.f32 %v2163, %v2211
        %v2213 = vpop.f32.mrf.mxu0
        %v2214 = vadd.f32 %v2165, %v2213
        %2215 = vmatmul.bf16.gmra.mxu0 %v336
        %v2216 = vpop.f32.mrf.mxu0
        %v2217 = vadd.f32 %v2168, %v2216
        %v2218 = vpop.f32.mrf.mxu0
        %v2219 = vadd.f32 %v2170, %v2218
        %2220 = vdwg.mxu0
        %2221 = vmatpush.bf16.msra.mxu0 %v1460
        %2222 = vmatpush.bf16.msra.mxu0 %v1451
        %2223 = vmatpush.bf16.msra.mxu0 %v1442
        %2224 = vmatpush.bf16.msra.mxu0 %v1433
        %2225 = vmatpush.bf16.msra.mxu0 %v1424
        %2226 = vmatpush.bf16.msra.mxu0 %v1415
        %2227 = vmatpush.bf16.msra.mxu0 %v1406
        %2228 = vmatpush.bf16.msra.mxu0 %v1397
        %2229 = vmatmul.bf16.gmra.mxu0 %v316
        %v2230 = vpop.f32.mrf.mxu0
        %v2231 = vadd.f32 %v2182, %v2230
        %v2232 = vpop.f32.mrf.mxu0
        %v2233 = vadd.f32 %v2184, %v2232
        %2234 = vmatmul.bf16.gmra.mxu0 %v319
        %v2235 = vpop.f32.mrf.mxu0
        %v2236 = vadd.f32 %v2187, %v2235
        %v2237 = vpop.f32.mrf.mxu0
        %v2238 = vadd.f32 %v2189, %v2237
        %2239 = vmatmul.bf16.gmra.mxu0 %v322
        %v2240 = vpop.f32.mrf.mxu0
        %v2241 = vadd.f32 %v2192, %v2240
        %v2242 = vpop.f32.mrf.mxu0
        %v2243 = vadd.f32 %v2194, %v2242
        %2244 = vmatmul.bf16.gmra.mxu0 %v325
        %v2245 = vpop.f32.mrf.mxu0
        %v2246 = vadd.f32 %v2197, %v2245
        %v2247 = vpop.f32.mrf.mxu0
        %v2248 = vadd.f32 %v2199, %v2247
        %2249 = vmatmul.bf16.gmra.mxu0 %v328
        %v2250 = vpop.f32.mrf.mxu0
        %v2251 = vadd.f32 %v2202, %v2250
        %v2252 = vpop.f32.mrf.mxu0
        %v2253 = vadd.f32 %v2204, %v2252
        %2254 = vmatmul.bf16.gmra.mxu0 %v331
        %v2255 = vpop.f32.mrf.mxu0
        %v2256 = vadd.f32 %v2207, %v2255
        %v2257 = vpop.f32.mrf.mxu0
        %v2258 = vadd.f32 %v2209, %v2257
        %2259 = vmatmul.bf16.gmra.mxu0 %v334
        %v2260 = vpop.f32.mrf.mxu0
        %v2261 = vadd.f32 %v2212, %v2260
        %v2262 = vpop.f32.mrf.mxu0
        %v2263 = vadd.f32 %v2214, %v2262
        %2264 = vmatmul.bf16.gmra.mxu0 %v337
        %v2265 = vpop.f32.mrf.mxu0
        %v2266 = vadd.f32 %v2217, %v2265
        %v2267 = vpop.f32.mrf.mxu0
        %v2268 = vadd.f32 %v2219, %v2267
        %2269 = vdwg.mxu0
        %2270 = vmatpush.bf16.msra.mxu0 %v1317
        %2271 = vmatpush.bf16.msra.mxu0 %v1308
        %2272 = vmatpush.bf16.msra.mxu0 %v1299
        %2273 = vmatpush.bf16.msra.mxu0 %v1290
        %2274 = vmatpush.bf16.msra.mxu0 %v1281
        %2275 = vmatpush.bf16.msra.mxu0 %v1272
        %2276 = vmatpush.bf16.msra.mxu0 %v1263
        %2277 = vmatpush.bf16.msra.mxu0 %v1254
        %2278 = vmatmul.bf16.gmra.mxu0 %v314
        %v2279 = vpop.f32.mrf.mxu0
        %v2280 = vadd.f32 0.0, %v2279
        %v2281 = vpop.f32.mrf.mxu0
        %v2282 = vadd.f32 0.0, %v2281
        %2283 = vmatmul.bf16.gmra.mxu0 %v317
        %v2284 = vpop.f32.mrf.mxu0
        %v2285 = vadd.f32 0.0, %v2284
        %v2286 = vpop.f32.mrf.mxu0
        %v2287 = vadd.f32 0.0, %v2286
        %2288 = vmatmul.bf16.gmra.mxu0 %v320
        %v2289 = vpop.f32.mrf.mxu0
        %v2290 = vadd.f32 0.0, %v2289
        %v2291 = vpop.f32.mrf.mxu0
        %v2292 = vadd.f32 0.0, %v2291
        %2293 = vmatmul.bf16.gmra.mxu0 %v323
        %v2294 = vpop.f32.mrf.mxu0
        %v2295 = vadd.f32 0.0, %v2294
        %v2296 = vpop.f32.mrf.mxu0
        %v2297 = vadd.f32 0.0, %v2296
        %2298 = vmatmul.bf16.gmra.mxu0 %v326
        %v2299 = vpop.f32.mrf.mxu0
        %v2300 = vadd.f32 0.0, %v2299
        %v2301 = vpop.f32.mrf.mxu0
        %v2302 = vadd.f32 0.0, %v2301
        %2303 = vmatmul.bf16.gmra.mxu0 %v329
        %v2304 = vpop.f32.mrf.mxu0
        %v2305 = vadd.f32 0.0, %v2304
        %v2306 = vpop.f32.mrf.mxu0
        %v2307 = vadd.f32 0.0, %v2306
        %2308 = vmatmul.bf16.gmra.mxu0 %v332
        %v2309 = vpop.f32.mrf.mxu0
        %v2310 = vadd.f32 0.0, %v2309
        %v2311 = vpop.f32.mrf.mxu0
        %v2312 = vadd.f32 0.0, %v2311
        %2313 = vmatmul.bf16.gmra.mxu0 %v335
        %v2314 = vpop.f32.mrf.mxu0
        %v2315 = vadd.f32 0.0, %v2314
        %v2316 = vpop.f32.mrf.mxu0
        %v2317 = vadd.f32 0.0, %v2316
        %2318 = vdwg.mxu0
        %2319 = vmatpush.bf16.msra.mxu0 %v1389
        %2320 = vmatpush.bf16.msra.mxu0 %v1380
        %2321 = vmatpush.bf16.msra.mxu0 %v1371
        %2322 = vmatpush.bf16.msra.mxu0 %v1362
        %2323 = vmatpush.bf16.msra.mxu0 %v1353
        %2324 = vmatpush.bf16.msra.mxu0 %v1344
        %2325 = vmatpush.bf16.msra.mxu0 %v1335
        %2326 = vmatpush.bf16.msra.mxu0 %v1326
        %2327 = vmatmul.bf16.gmra.mxu0 %v315
        %v2328 = vpop.f32.mrf.mxu0
        %v2329 = vadd.f32 %v2280, %v2328
        %v2330 = vpop.f32.mrf.mxu0
        %v2331 = vadd.f32 %v2282, %v2330
        %2332 = vmatmul.bf16.gmra.mxu0 %v318
        %v2333 = vpop.f32.mrf.mxu0
        %v2334 = vadd.f32 %v2285, %v2333
        %v2335 = vpop.f32.mrf.mxu0
        %v2336 = vadd.f32 %v2287, %v2335
        %2337 = vmatmul.bf16.gmra.mxu0 %v321
        %v2338 = vpop.f32.mrf.mxu0
        %v2339 = vadd.f32 %v2290, %v2338
        %v2340 = vpop.f32.mrf.mxu0
        %v2341 = vadd.f32 %v2292, %v2340
        %2342 = vmatmul.bf16.gmra.mxu0 %v324
        %v2343 = vpop.f32.mrf.mxu0
        %v2344 = vadd.f32 %v2295, %v2343
        %v2345 = vpop.f32.mrf.mxu0
        %v2346 = vadd.f32 %v2297, %v2345
        %2347 = vmatmul.bf16.gmra.mxu0 %v327
        %v2348 = vpop.f32.mrf.mxu0
        %v2349 = vadd.f32 %v2300, %v2348
        %v2350 = vpop.f32.mrf.mxu0
        %v2351 = vadd.f32 %v2302, %v2350
        %2352 = vmatmul.bf16.gmra.mxu0 %v330
        %v2353 = vpop.f32.mrf.mxu0
        %v2354 = vadd.f32 %v2305, %v2353
        %v2355 = vpop.f32.mrf.mxu0
        %v2356 = vadd.f32 %v2307, %v2355
        %2357 = vmatmul.bf16.gmra.mxu0 %v333
        %v2358 = vpop.f32.mrf.mxu0
        %v2359 = vadd.f32 %v2310, %v2358
        %v2360 = vpop.f32.mrf.mxu0
        %v2361 = vadd.f32 %v2312, %v2360
        %2362 = vmatmul.bf16.gmra.mxu0 %v336
        %v2363 = vpop.f32.mrf.mxu0
        %v2364 = vadd.f32 %v2315, %v2363
        %v2365 = vpop.f32.mrf.mxu0
        %v2366 = vadd.f32 %v2317, %v2365
        %2367 = vdwg.mxu0
        %2368 = vmatpush.bf16.msra.mxu0 %v1461
        %2369 = vmatpush.bf16.msra.mxu0 %v1452
        %2370 = vmatpush.bf16.msra.mxu0 %v1443
        %2371 = vmatpush.bf16.msra.mxu0 %v1434
        %2372 = vmatpush.bf16.msra.mxu0 %v1425
        %2373 = vmatpush.bf16.msra.mxu0 %v1416
        %2374 = vmatpush.bf16.msra.mxu0 %v1407
        %2375 = vmatpush.bf16.msra.mxu0 %v1398
        %2376 = vmatmul.bf16.gmra.mxu0 %v316
        %v2377 = vpop.f32.mrf.mxu0
        %v2378 = vadd.f32 %v2329, %v2377
        %v2379 = vpop.f32.mrf.mxu0
        %v2380 = vadd.f32 %v2331, %v2379
        %2381 = vmatmul.bf16.gmra.mxu0 %v319
        %v2382 = vpop.f32.mrf.mxu0
        %v2383 = vadd.f32 %v2334, %v2382
        %v2384 = vpop.f32.mrf.mxu0
        %v2385 = vadd.f32 %v2336, %v2384
        %2386 = vmatmul.bf16.gmra.mxu0 %v322
        %v2387 = vpop.f32.mrf.mxu0
        %v2388 = vadd.f32 %v2339, %v2387
        %v2389 = vpop.f32.mrf.mxu0
        %v2390 = vadd.f32 %v2341, %v2389
        %2391 = vmatmul.bf16.gmra.mxu0 %v325
        %v2392 = vpop.f32.mrf.mxu0
        %v2393 = vadd.f32 %v2344, %v2392
        %v2394 = vpop.f32.mrf.mxu0
        %v2395 = vadd.f32 %v2346, %v2394
        %2396 = vmatmul.bf16.gmra.mxu0 %v328
        %v2397 = vpop.f32.mrf.mxu0
        %v2398 = vadd.f32 %v2349, %v2397
        %v2399 = vpop.f32.mrf.mxu0
        %v2400 = vadd.f32 %v2351, %v2399
        %2401 = vmatmul.bf16.gmra.mxu0 %v331
        %v2402 = vpop.f32.mrf.mxu0
        %v2403 = vadd.f32 %v2354, %v2402
        %v2404 = vpop.f32.mrf.mxu0
        %v2405 = vadd.f32 %v2356, %v2404
        %2406 = vmatmul.bf16.gmra.mxu0 %v334
        %v2407 = vpop.f32.mrf.mxu0
        %v2408 = vadd.f32 %v2359, %v2407
        %v2409 = vpop.f32.mrf.mxu0
        %v2410 = vadd.f32 %v2361, %v2409
        %2411 = vmatmul.bf16.gmra.mxu0 %v337
        %v2412 = vpop.f32.mrf.mxu0
        %v2413 = vadd.f32 %v2364, %v2412
        %v2414 = vpop.f32.mrf.mxu0
        %v2415 = vadd.f32 %v2366, %v2414
        %2416 = vdwg.mxu0
        %2417 = vmatpush.bf16.msra.mxu0 %v1318
        %2418 = vmatpush.bf16.msra.mxu0 %v1309
        %2419 = vmatpush.bf16.msra.mxu0 %v1300
        %2420 = vmatpush.bf16.msra.mxu0 %v1291
        %2421 = vmatpush.bf16.msra.mxu0 %v1282
        %2422 = vmatpush.bf16.msra.mxu0 %v1273
        %2423 = vmatpush.bf16.msra.mxu0 %v1264
        %2424 = vmatpush.bf16.msra.mxu0 %v1255
        %2425 = vmatmul.bf16.gmra.mxu0 %v314
        %v2426 = vpop.f32.mrf.mxu0
        %v2427 = vadd.f32 0.0, %v2426
        %v2428 = vpop.f32.mrf.mxu0
        %v2429 = vadd.f32 0.0, %v2428
        %2430 = vmatmul.bf16.gmra.mxu0 %v317
        %v2431 = vpop.f32.mrf.mxu0
        %v2432 = vadd.f32 0.0, %v2431
        %v2433 = vpop.f32.mrf.mxu0
        %v2434 = vadd.f32 0.0, %v2433
        %2435 = vmatmul.bf16.gmra.mxu0 %v320
        %v2436 = vpop.f32.mrf.mxu0
        %v2437 = vadd.f32 0.0, %v2436
        %v2438 = vpop.f32.mrf.mxu0
        %v2439 = vadd.f32 0.0, %v2438
        %2440 = vmatmul.bf16.gmra.mxu0 %v323
        %v2441 = vpop.f32.mrf.mxu0
        %v2442 = vadd.f32 0.0, %v2441
        %v2443 = vpop.f32.mrf.mxu0
        %v2444 = vadd.f32 0.0, %v2443
        %2445 = vmatmul.bf16.gmra.mxu0 %v326
        %v2446 = vpop.f32.mrf.mxu0
        %v2447 = vadd.f32 0.0, %v2446
        %v2448 = vpop.f32.mrf.mxu0
        %v2449 = vadd.f32 0.0, %v2448
        %2450 = vmatmul.bf16.gmra.mxu0 %v329
        %v2451 = vpop.f32.mrf.mxu0
        %v2452 = vadd.f32 0.0, %v2451
        %v2453 = vpop.f32.mrf.mxu0
        %v2454 = vadd.f32 0.0, %v2453
        %2455 = vmatmul.bf16.gmra.mxu0 %v332
        %v2456 = vpop.f32.mrf.mxu0
        %v2457 = vadd.f32 0.0, %v2456
        %v2458 = vpop.f32.mrf.mxu0
        %v2459 = vadd.f32 0.0, %v2458
        %2460 = vmatmul.bf16.gmra.mxu0 %v335
        %v2461 = vpop.f32.mrf.mxu0
        %v2462 = vadd.f32 0.0, %v2461
        %v2463 = vpop.f32.mrf.mxu0
        %v2464 = vadd.f32 0.0, %v2463
        %2465 = vdwg.mxu0
        %2466 = vmatpush.bf16.msra.mxu0 %v1390
        %2467 = vmatpush.bf16.msra.mxu0 %v1381
        %2468 = vmatpush.bf16.msra.mxu0 %v1372
        %2469 = vmatpush.bf16.msra.mxu0 %v1363
        %2470 = vmatpush.bf16.msra.mxu0 %v1354
        %2471 = vmatpush.bf16.msra.mxu0 %v1345
        %2472 = vmatpush.bf16.msra.mxu0 %v1336
        %2473 = vmatpush.bf16.msra.mxu0 %v1327
        %2474 = vmatmul.bf16.gmra.mxu0 %v315
        %v2475 = vpop.f32.mrf.mxu0
        %v2476 = vadd.f32 %v2427, %v2475
        %v2477 = vpop.f32.mrf.mxu0
        %v2478 = vadd.f32 %v2429, %v2477
        %2479 = vmatmul.bf16.gmra.mxu0 %v318
        %v2480 = vpop.f32.mrf.mxu0
        %v2481 = vadd.f32 %v2432, %v2480
        %v2482 = vpop.f32.mrf.mxu0
        %v2483 = vadd.f32 %v2434, %v2482
        %2484 = vmatmul.bf16.gmra.mxu0 %v321
        %v2485 = vpop.f32.mrf.mxu0
        %v2486 = vadd.f32 %v2437, %v2485
        %v2487 = vpop.f32.mrf.mxu0
        %v2488 = vadd.f32 %v2439, %v2487
        %2489 = vmatmul.bf16.gmra.mxu0 %v324
        %v2490 = vpop.f32.mrf.mxu0
        %v2491 = vadd.f32 %v2442, %v2490
        %v2492 = vpop.f32.mrf.mxu0
        %v2493 = vadd.f32 %v2444, %v2492
        %2494 = vmatmul.bf16.gmra.mxu0 %v327
        %v2495 = vpop.f32.mrf.mxu0
        %v2496 = vadd.f32 %v2447, %v2495
        %v2497 = vpop.f32.mrf.mxu0
        %v2498 = vadd.f32 %v2449, %v2497
        %2499 = vmatmul.bf16.gmra.mxu0 %v330
        %v2500 = vpop.f32.mrf.mxu0
        %v2501 = vadd.f32 %v2452, %v2500
        %v2502 = vpop.f32.mrf.mxu0
        %v2503 = vadd.f32 %v2454, %v2502
        %2504 = vmatmul.bf16.gmra.mxu0 %v333
        %v2505 = vpop.f32.mrf.mxu0
        %v2506 = vadd.f32 %v2457, %v2505
        %v2507 = vpop.f32.mrf.mxu0
        %v2508 = vadd.f32 %v2459, %v2507
        %2509 = vmatmul.bf16.gmra.mxu0 %v336
        %v2510 = vpop.f32.mrf.mxu0
        %v2511 = vadd.f32 %v2462, %v2510
        %v2512 = vpop.f32.mrf.mxu0
        %v2513 = vadd.f32 %v2464, %v2512
        %2514 = vdwg.mxu0
        %2515 = vmatpush.bf16.msra.mxu0 %v1462
        %2516 = vmatpush.bf16.msra.mxu0 %v1453
        %2517 = vmatpush.bf16.msra.mxu0 %v1444
        %2518 = vmatpush.bf16.msra.mxu0 %v1435
        %2519 = vmatpush.bf16.msra.mxu0 %v1426
        %2520 = vmatpush.bf16.msra.mxu0 %v1417
        %2521 = vmatpush.bf16.msra.mxu0 %v1408
        %2522 = vmatpush.bf16.msra.mxu0 %v1399
        %2523 = vmatmul.bf16.gmra.mxu0 %v316
        %v2524 = vpop.f32.mrf.mxu0
        %v2525 = vadd.f32 %v2476, %v2524
        %v2526 = vpop.f32.mrf.mxu0
        %v2527 = vadd.f32 %v2478, %v2526
        %2528 = vmatmul.bf16.gmra.mxu0 %v319
        %v2529 = vpop.f32.mrf.mxu0
        %v2530 = vadd.f32 %v2481, %v2529
        %v2531 = vpop.f32.mrf.mxu0
        %v2532 = vadd.f32 %v2483, %v2531
        %2533 = vmatmul.bf16.gmra.mxu0 %v322
        %v2534 = vpop.f32.mrf.mxu0
        %v2535 = vadd.f32 %v2486, %v2534
        %v2536 = vpop.f32.mrf.mxu0
        %v2537 = vadd.f32 %v2488, %v2536
        %2538 = vmatmul.bf16.gmra.mxu0 %v325
        %v2539 = vpop.f32.mrf.mxu0
        %v2540 = vadd.f32 %v2491, %v2539
        %v2541 = vpop.f32.mrf.mxu0
        %v2542 = vadd.f32 %v2493, %v2541
        %2543 = vmatmul.bf16.gmra.mxu0 %v328
        %v2544 = vpop.f32.mrf.mxu0
        %v2545 = vadd.f32 %v2496, %v2544
        %v2546 = vpop.f32.mrf.mxu0
        %v2547 = vadd.f32 %v2498, %v2546
        %2548 = vmatmul.bf16.gmra.mxu0 %v331
        %v2549 = vpop.f32.mrf.mxu0
        %v2550 = vadd.f32 %v2501, %v2549
        %v2551 = vpop.f32.mrf.mxu0
        %v2552 = vadd.f32 %v2503, %v2551
        %2553 = vmatmul.bf16.gmra.mxu0 %v334
        %v2554 = vpop.f32.mrf.mxu0
        %v2555 = vadd.f32 %v2506, %v2554
        %v2556 = vpop.f32.mrf.mxu0
        %v2557 = vadd.f32 %v2508, %v2556
        %2558 = vmatmul.bf16.gmra.mxu0 %v337
        %v2559 = vpop.f32.mrf.mxu0
        %v2560 = vadd.f32 %v2511, %v2559
        %v2561 = vpop.f32.mrf.mxu0
        %v2562 = vadd.f32 %v2513, %v2561
        %2563 = vdwg.mxu0
        %2564 = vmatpush.bf16.msra.mxu0 %v1319
        %2565 = vmatpush.bf16.msra.mxu0 %v1310
        %2566 = vmatpush.bf16.msra.mxu0 %v1301
        %2567 = vmatpush.bf16.msra.mxu0 %v1292
        %2568 = vmatpush.bf16.msra.mxu0 %v1283
        %2569 = vmatpush.bf16.msra.mxu0 %v1274
        %2570 = vmatpush.bf16.msra.mxu0 %v1265
        %2571 = vmatpush.bf16.msra.mxu0 %v1256
        %2572 = vmatmul.bf16.gmra.mxu0 %v314
        %v2573 = vpop.f32.mrf.mxu0
        %v2574 = vadd.f32 0.0, %v2573
        %v2575 = vpop.f32.mrf.mxu0
        %v2576 = vadd.f32 0.0, %v2575
        %2577 = vmatmul.bf16.gmra.mxu0 %v317
        %v2578 = vpop.f32.mrf.mxu0
        %v2579 = vadd.f32 0.0, %v2578
        %v2580 = vpop.f32.mrf.mxu0
        %v2581 = vadd.f32 0.0, %v2580
        %2582 = vmatmul.bf16.gmra.mxu0 %v320
        %v2583 = vpop.f32.mrf.mxu0
        %v2584 = vadd.f32 0.0, %v2583
        %v2585 = vpop.f32.mrf.mxu0
        %v2586 = vadd.f32 0.0, %v2585
        %2587 = vmatmul.bf16.gmra.mxu0 %v323
        %v2588 = vpop.f32.mrf.mxu0
        %v2589 = vadd.f32 0.0, %v2588
        %v2590 = vpop.f32.mrf.mxu0
        %v2591 = vadd.f32 0.0, %v2590
        %2592 = vmatmul.bf16.gmra.mxu0 %v326
        %v2593 = vpop.f32.mrf.mxu0
        %v2594 = vadd.f32 0.0, %v2593
        %v2595 = vpop.f32.mrf.mxu0
        %v2596 = vadd.f32 0.0, %v2595
        %2597 = vmatmul.bf16.gmra.mxu0 %v329
        %v2598 = vpop.f32.mrf.mxu0
        %v2599 = vadd.f32 0.0, %v2598
        %v2600 = vpop.f32.mrf.mxu0
        %v2601 = vadd.f32 0.0, %v2600
        %2602 = vmatmul.bf16.gmra.mxu0 %v332
        %v2603 = vpop.f32.mrf.mxu0
        %v2604 = vadd.f32 0.0, %v2603
        %v2605 = vpop.f32.mrf.mxu0
        %v2606 = vadd.f32 0.0, %v2605
        %2607 = vmatmul.bf16.gmra.mxu0 %v335
        %v2608 = vpop.f32.mrf.mxu0
        %v2609 = vadd.f32 0.0, %v2608
        %v2610 = vpop.f32.mrf.mxu0
        %v2611 = vadd.f32 0.0, %v2610
        %2612 = vdwg.mxu0
        %2613 = vmatpush.bf16.msra.mxu0 %v1391
        %2614 = vmatpush.bf16.msra.mxu0 %v1382
        %2615 = vmatpush.bf16.msra.mxu0 %v1373
        %2616 = vmatpush.bf16.msra.mxu0 %v1364
        %2617 = vmatpush.bf16.msra.mxu0 %v1355
        %2618 = vmatpush.bf16.msra.mxu0 %v1346
        %2619 = vmatpush.bf16.msra.mxu0 %v1337
        %2620 = vmatpush.bf16.msra.mxu0 %v1328
        %2621 = vmatmul.bf16.gmra.mxu0 %v315
        %v2622 = vpop.f32.mrf.mxu0
        %v2623 = vadd.f32 %v2574, %v2622
        %v2624 = vpop.f32.mrf.mxu0
        %v2625 = vadd.f32 %v2576, %v2624
        %2626 = vmatmul.bf16.gmra.mxu0 %v318
        %v2627 = vpop.f32.mrf.mxu0
        %v2628 = vadd.f32 %v2579, %v2627
        %v2629 = vpop.f32.mrf.mxu0
        %v2630 = vadd.f32 %v2581, %v2629
        %2631 = vmatmul.bf16.gmra.mxu0 %v321
        %v2632 = vpop.f32.mrf.mxu0
        %v2633 = vadd.f32 %v2584, %v2632
        %v2634 = vpop.f32.mrf.mxu0
        %v2635 = vadd.f32 %v2586, %v2634
        %2636 = vmatmul.bf16.gmra.mxu0 %v324
        %v2637 = vpop.f32.mrf.mxu0
        %v2638 = vadd.f32 %v2589, %v2637
        %v2639 = vpop.f32.mrf.mxu0
        %v2640 = vadd.f32 %v2591, %v2639
        %2641 = vmatmul.bf16.gmra.mxu0 %v327
        %v2642 = vpop.f32.mrf.mxu0
        %v2643 = vadd.f32 %v2594, %v2642
        %v2644 = vpop.f32.mrf.mxu0
        %v2645 = vadd.f32 %v2596, %v2644
        %2646 = vmatmul.bf16.gmra.mxu0 %v330
        %v2647 = vpop.f32.mrf.mxu0
        %v2648 = vadd.f32 %v2599, %v2647
        %v2649 = vpop.f32.mrf.mxu0
        %v2650 = vadd.f32 %v2601, %v2649
        %2651 = vmatmul.bf16.gmra.mxu0 %v333
        %v2652 = vpop.f32.mrf.mxu0
        %v2653 = vadd.f32 %v2604, %v2652
        %v2654 = vpop.f32.mrf.mxu0
        %v2655 = vadd.f32 %v2606, %v2654
        %2656 = vmatmul.bf16.gmra.mxu0 %v336
        %v2657 = vpop.f32.mrf.mxu0
        %v2658 = vadd.f32 %v2609, %v2657
        %v2659 = vpop.f32.mrf.mxu0
        %v2660 = vadd.f32 %v2611, %v2659
        %2661 = vdwg.mxu0
        %2662 = vmatpush.bf16.msra.mxu0 %v1463
        %2663 = vmatpush.bf16.msra.mxu0 %v1454
        %2664 = vmatpush.bf16.msra.mxu0 %v1445
        %2665 = vmatpush.bf16.msra.mxu0 %v1436
        %2666 = vmatpush.bf16.msra.mxu0 %v1427
        %2667 = vmatpush.bf16.msra.mxu0 %v1418
        %2668 = vmatpush.bf16.msra.mxu0 %v1409
        %2669 = vmatpush.bf16.msra.mxu0 %v1400
        %2670 = vmatmul.bf16.gmra.mxu0 %v316
        %v2671 = vpop.f32.mrf.mxu0
        %v2672 = vadd.f32 %v2623, %v2671
        %v2673 = vpop.f32.mrf.mxu0
        %v2674 = vadd.f32 %v2625, %v2673
        %2675 = vmatmul.bf16.gmra.mxu0 %v319
        %v2676 = vpop.f32.mrf.mxu0
        %v2677 = vadd.f32 %v2628, %v2676
        %v2678 = vpop.f32.mrf.mxu0
        %v2679 = vadd.f32 %v2630, %v2678
        %2680 = vmatmul.bf16.gmra.mxu0 %v322
        %v2681 = vpop.f32.mrf.mxu0
        %v2682 = vadd.f32 %v2633, %v2681
        %v2683 = vpop.f32.mrf.mxu0
        %v2684 = vadd.f32 %v2635, %v2683
        %2685 = vmatmul.bf16.gmra.mxu0 %v325
        %v2686 = vpop.f32.mrf.mxu0
        %v2687 = vadd.f32 %v2638, %v2686
        %v2688 = vpop.f32.mrf.mxu0
        %v2689 = vadd.f32 %v2640, %v2688
        %2690 = vmatmul.bf16.gmra.mxu0 %v328
        %v2691 = vpop.f32.mrf.mxu0
        %v2692 = vadd.f32 %v2643, %v2691
        %v2693 = vpop.f32.mrf.mxu0
        %v2694 = vadd.f32 %v2645, %v2693
        %2695 = vmatmul.bf16.gmra.mxu0 %v331
        %v2696 = vpop.f32.mrf.mxu0
        %v2697 = vadd.f32 %v2648, %v2696
        %v2698 = vpop.f32.mrf.mxu0
        %v2699 = vadd.f32 %v2650, %v2698
        %2700 = vmatmul.bf16.gmra.mxu0 %v334
        %v2701 = vpop.f32.mrf.mxu0
        %v2702 = vadd.f32 %v2653, %v2701
        %v2703 = vpop.f32.mrf.mxu0
        %v2704 = vadd.f32 %v2655, %v2703
        %2705 = vmatmul.bf16.gmra.mxu0 %v337
        %v2706 = vpop.f32.mrf.mxu0
        %v2707 = vadd.f32 %v2658, %v2706
        %v2708 = vpop.f32.mrf.mxu0
        %v2709 = vadd.f32 %v2660, %v2708
        %2710 = vdwg.mxu0
        %2711 = vmatpush.bf16.msra.mxu0 %v1320
        %2712 = vmatpush.bf16.msra.mxu0 %v1311
        %2713 = vmatpush.bf16.msra.mxu0 %v1302
        %2714 = vmatpush.bf16.msra.mxu0 %v1293
        %2715 = vmatpush.bf16.msra.mxu0 %v1284
        %2716 = vmatpush.bf16.msra.mxu0 %v1275
        %2717 = vmatpush.bf16.msra.mxu0 %v1266
        %2718 = vmatpush.bf16.msra.mxu0 %v1257
        %2719 = vmatmul.bf16.gmra.mxu0 %v314
        %v2720 = vpop.f32.mrf.mxu0
        %v2721 = vadd.f32 0.0, %v2720
        %v2722 = vpop.f32.mrf.mxu0
        %v2723 = vadd.f32 0.0, %v2722
        %2724 = vmatmul.bf16.gmra.mxu0 %v317
        %v2725 = vpop.f32.mrf.mxu0
        %v2726 = vadd.f32 0.0, %v2725
        %v2727 = vpop.f32.mrf.mxu0
        %v2728 = vadd.f32 0.0, %v2727
        %2729 = vmatmul.bf16.gmra.mxu0 %v320
        %v2730 = vpop.f32.mrf.mxu0
        %v2731 = vadd.f32 0.0, %v2730
        %v2732 = vpop.f32.mrf.mxu0
        %v2733 = vadd.f32 0.0, %v2732
        %2734 = vmatmul.bf16.gmra.mxu0 %v323
        %v2735 = vpop.f32.mrf.mxu0
        %v2736 = vadd.f32 0.0, %v2735
        %v2737 = vpop.f32.mrf.mxu0
        %v2738 = vadd.f32 0.0, %v2737
        %2739 = vmatmul.bf16.gmra.mxu0 %v326
        %v2740 = vpop.f32.mrf.mxu0
        %v2741 = vadd.f32 0.0, %v2740
        %v2742 = vpop.f32.mrf.mxu0
        %v2743 = vadd.f32 0.0, %v2742
        %2744 = vmatmul.bf16.gmra.mxu0 %v329
        %v2745 = vpop.f32.mrf.mxu0
        %v2746 = vadd.f32 0.0, %v2745
        %v2747 = vpop.f32.mrf.mxu0
        %v2748 = vadd.f32 0.0, %v2747
        %2749 = vmatmul.bf16.gmra.mxu0 %v332
        %v2750 = vpop.f32.mrf.mxu0
        %v2751 = vadd.f32 0.0, %v2750
        %v2752 = vpop.f32.mrf.mxu0
        %v2753 = vadd.f32 0.0, %v2752
        %2754 = vmatmul.bf16.gmra.mxu0 %v335
        %v2755 = vpop.f32.mrf.mxu0
        %v2756 = vadd.f32 0.0, %v2755
        %v2757 = vpop.f32.mrf.mxu0
        %v2758 = vadd.f32 0.0, %v2757
        %2759 = vdwg.mxu0
        %2760 = vmatpush.bf16.msra.mxu0 %v1392
        %2761 = vmatpush.bf16.msra.mxu0 %v1383
        %2762 = vmatpush.bf16.msra.mxu0 %v1374
        %2763 = vmatpush.bf16.msra.mxu0 %v1365
        %2764 = vmatpush.bf16.msra.mxu0 %v1356
        %2765 = vmatpush.bf16.msra.mxu0 %v1347
        %2766 = vmatpush.bf16.msra.mxu0 %v1338
        %2767 = vmatpush.bf16.msra.mxu0 %v1329
        %2768 = vmatmul.bf16.gmra.mxu0 %v315
        %v2769 = vpop.f32.mrf.mxu0
        %v2770 = vadd.f32 %v2721, %v2769
        %v2771 = vpop.f32.mrf.mxu0
        %v2772 = vadd.f32 %v2723, %v2771
        %2773 = vmatmul.bf16.gmra.mxu0 %v318
        %v2774 = vpop.f32.mrf.mxu0
        %v2775 = vadd.f32 %v2726, %v2774
        %v2776 = vpop.f32.mrf.mxu0
        %v2777 = vadd.f32 %v2728, %v2776
        %2778 = vmatmul.bf16.gmra.mxu0 %v321
        %v2779 = vpop.f32.mrf.mxu0
        %v2780 = vadd.f32 %v2731, %v2779
        %v2781 = vpop.f32.mrf.mxu0
        %v2782 = vadd.f32 %v2733, %v2781
        %2783 = vmatmul.bf16.gmra.mxu0 %v324
        %v2784 = vpop.f32.mrf.mxu0
        %v2785 = vadd.f32 %v2736, %v2784
        %v2786 = vpop.f32.mrf.mxu0
        %v2787 = vadd.f32 %v2738, %v2786
        %2788 = vmatmul.bf16.gmra.mxu0 %v327
        %v2789 = vpop.f32.mrf.mxu0
        %v2790 = vadd.f32 %v2741, %v2789
        %v2791 = vpop.f32.mrf.mxu0
        %v2792 = vadd.f32 %v2743, %v2791
        %2793 = vmatmul.bf16.gmra.mxu0 %v330
        %v2794 = vpop.f32.mrf.mxu0
        %v2795 = vadd.f32 %v2746, %v2794
        %v2796 = vpop.f32.mrf.mxu0
        %v2797 = vadd.f32 %v2748, %v2796
        %2798 = vmatmul.bf16.gmra.mxu0 %v333
        %v2799 = vpop.f32.mrf.mxu0
        %v2800 = vadd.f32 %v2751, %v2799
        %v2801 = vpop.f32.mrf.mxu0
        %v2802 = vadd.f32 %v2753, %v2801
        %2803 = vmatmul.bf16.gmra.mxu0 %v336
        %v2804 = vpop.f32.mrf.mxu0
        %v2805 = vadd.f32 %v2756, %v2804
        %v2806 = vpop.f32.mrf.mxu0
        %v2807 = vadd.f32 %v2758, %v2806
        %2808 = vdwg.mxu0
        %2809 = vmatpush.bf16.msra.mxu0 %v1464
        %2810 = vmatpush.bf16.msra.mxu0 %v1455
        %2811 = vmatpush.bf16.msra.mxu0 %v1446
        %2812 = vmatpush.bf16.msra.mxu0 %v1437
        %2813 = vmatpush.bf16.msra.mxu0 %v1428
        %2814 = vmatpush.bf16.msra.mxu0 %v1419
        %2815 = vmatpush.bf16.msra.mxu0 %v1410
        %2816 = vmatpush.bf16.msra.mxu0 %v1401
        %2817 = vmatmul.bf16.gmra.mxu0 %v316
        %v2818 = vpop.f32.mrf.mxu0
        %v2819 = vadd.f32 %v2770, %v2818
        %v2820 = vpop.f32.mrf.mxu0
        %v2821 = vadd.f32 %v2772, %v2820
        %2822 = vmatmul.bf16.gmra.mxu0 %v319
        %v2823 = vpop.f32.mrf.mxu0
        %v2824 = vadd.f32 %v2775, %v2823
        %v2825 = vpop.f32.mrf.mxu0
        %v2826 = vadd.f32 %v2777, %v2825
        %2827 = vmatmul.bf16.gmra.mxu0 %v322
        %v2828 = vpop.f32.mrf.mxu0
        %v2829 = vadd.f32 %v2780, %v2828
        %v2830 = vpop.f32.mrf.mxu0
        %v2831 = vadd.f32 %v2782, %v2830
        %2832 = vmatmul.bf16.gmra.mxu0 %v325
        %v2833 = vpop.f32.mrf.mxu0
        %v2834 = vadd.f32 %v2785, %v2833
        %v2835 = vpop.f32.mrf.mxu0
        %v2836 = vadd.f32 %v2787, %v2835
        %2837 = vmatmul.bf16.gmra.mxu0 %v328
        %v2838 = vpop.f32.mrf.mxu0
        %v2839 = vadd.f32 %v2790, %v2838
        %v2840 = vpop.f32.mrf.mxu0
        %v2841 = vadd.f32 %v2792, %v2840
        %2842 = vmatmul.bf16.gmra.mxu0 %v331
        %v2843 = vpop.f32.mrf.mxu0
        %v2844 = vadd.f32 %v2795, %v2843
        %v2845 = vpop.f32.mrf.mxu0
        %v2846 = vadd.f32 %v2797, %v2845
        %2847 = vmatmul.bf16.gmra.mxu0 %v334
        %v2848 = vpop.f32.mrf.mxu0
        %v2849 = vadd.f32 %v2800, %v2848
        %v2850 = vpop.f32.mrf.mxu0
        %v2851 = vadd.f32 %v2802, %v2850
        %2852 = vmatmul.bf16.gmra.mxu0 %v337
        %v2853 = vpop.f32.mrf.mxu0
        %v2854 = vadd.f32 %v2805, %v2853
        %v2855 = vpop.f32.mrf.mxu0
        %v2856 = vadd.f32 %v2807, %v2855
        %2857 = vdwg.mxu0
        %2858 = vmatpush.bf16.msra.mxu0 %v1321
        %2859 = vmatpush.bf16.msra.mxu0 %v1312
        %2860 = vmatpush.bf16.msra.mxu0 %v1303
        %2861 = vmatpush.bf16.msra.mxu0 %v1294
        %2862 = vmatpush.bf16.msra.mxu0 %v1285
        %2863 = vmatpush.bf16.msra.mxu0 %v1276
        %2864 = vmatpush.bf16.msra.mxu0 %v1267
        %2865 = vmatpush.bf16.msra.mxu0 %v1258
        %2866 = vmatmul.bf16.gmra.mxu0 %v314
        %v2867 = vpop.f32.mrf.mxu0
        %v2868 = vadd.f32 0.0, %v2867
        %v2869 = vpop.f32.mrf.mxu0
        %v2870 = vadd.f32 0.0, %v2869
        %2871 = vmatmul.bf16.gmra.mxu0 %v317
        %v2872 = vpop.f32.mrf.mxu0
        %v2873 = vadd.f32 0.0, %v2872
        %v2874 = vpop.f32.mrf.mxu0
        %v2875 = vadd.f32 0.0, %v2874
        %2876 = vmatmul.bf16.gmra.mxu0 %v320
        %v2877 = vpop.f32.mrf.mxu0
        %v2878 = vadd.f32 0.0, %v2877
        %v2879 = vpop.f32.mrf.mxu0
        %v2880 = vadd.f32 0.0, %v2879
        %2881 = vmatmul.bf16.gmra.mxu0 %v323
        %v2882 = vpop.f32.mrf.mxu0
        %v2883 = vadd.f32 0.0, %v2882
        %v2884 = vpop.f32.mrf.mxu0
        %v2885 = vadd.f32 0.0, %v2884
        %2886 = vmatmul.bf16.gmra.mxu0 %v326
        %v2887 = vpop.f32.mrf.mxu0
        %v2888 = vadd.f32 0.0, %v2887
        %v2889 = vpop.f32.mrf.mxu0
        %v2890 = vadd.f32 0.0, %v2889
        %2891 = vmatmul.bf16.gmra.mxu0 %v329
        %v2892 = vpop.f32.mrf.mxu0
        %v2893 = vadd.f32 0.0, %v2892
        %v2894 = vpop.f32.mrf.mxu0
        %v2895 = vadd.f32 0.0, %v2894
        %2896 = vmatmul.bf16.gmra.mxu0 %v332
        %v2897 = vpop.f32.mrf.mxu0
        %v2898 = vadd.f32 0.0, %v2897
        %v2899 = vpop.f32.mrf.mxu0
        %v2900 = vadd.f32 0.0, %v2899
        %2901 = vmatmul.bf16.gmra.mxu0 %v335
        %v2902 = vpop.f32.mrf.mxu0
        %v2903 = vadd.f32 0.0, %v2902
        %v2904 = vpop.f32.mrf.mxu0
        %v2905 = vadd.f32 0.0, %v2904
        %2906 = vdwg.mxu0
        %2907 = vmatpush.bf16.msra.mxu0 %v1393
        %2908 = vmatpush.bf16.msra.mxu0 %v1384
        %2909 = vmatpush.bf16.msra.mxu0 %v1375
        %2910 = vmatpush.bf16.msra.mxu0 %v1366
        %2911 = vmatpush.bf16.msra.mxu0 %v1357
        %2912 = vmatpush.bf16.msra.mxu0 %v1348
        %2913 = vmatpush.bf16.msra.mxu0 %v1339
        %2914 = vmatpush.bf16.msra.mxu0 %v1330
        %2915 = vmatmul.bf16.gmra.mxu0 %v315
        %v2916 = vpop.f32.mrf.mxu0
        %v2917 = vadd.f32 %v2868, %v2916
        %v2918 = vpop.f32.mrf.mxu0
        %v2919 = vadd.f32 %v2870, %v2918
        %2920 = vmatmul.bf16.gmra.mxu0 %v318
        %v2921 = vpop.f32.mrf.mxu0
        %v2922 = vadd.f32 %v2873, %v2921
        %v2923 = vpop.f32.mrf.mxu0
        %v2924 = vadd.f32 %v2875, %v2923
        %2925 = vmatmul.bf16.gmra.mxu0 %v321
        %v2926 = vpop.f32.mrf.mxu0
        %v2927 = vadd.f32 %v2878, %v2926
        %v2928 = vpop.f32.mrf.mxu0
        %v2929 = vadd.f32 %v2880, %v2928
        %2930 = vmatmul.bf16.gmra.mxu0 %v324
        %v2931 = vpop.f32.mrf.mxu0
        %v2932 = vadd.f32 %v2883, %v2931
        %v2933 = vpop.f32.mrf.mxu0
        %v2934 = vadd.f32 %v2885, %v2933
        %2935 = vmatmul.bf16.gmra.mxu0 %v327
        %v2936 = vpop.f32.mrf.mxu0
        %v2937 = vadd.f32 %v2888, %v2936
        %v2938 = vpop.f32.mrf.mxu0
        %v2939 = vadd.f32 %v2890, %v2938
        %2940 = vmatmul.bf16.gmra.mxu0 %v330
        %v2941 = vpop.f32.mrf.mxu0
        %v2942 = vadd.f32 %v2893, %v2941
        %v2943 = vpop.f32.mrf.mxu0
        %v2944 = vadd.f32 %v2895, %v2943
        %2945 = vmatmul.bf16.gmra.mxu0 %v333
        %v2946 = vpop.f32.mrf.mxu0
        %v2947 = vadd.f32 %v2898, %v2946
        %v2948 = vpop.f32.mrf.mxu0
        %v2949 = vadd.f32 %v2900, %v2948
        %2950 = vmatmul.bf16.gmra.mxu0 %v336
        %v2951 = vpop.f32.mrf.mxu0
        %v2952 = vadd.f32 %v2903, %v2951
        %v2953 = vpop.f32.mrf.mxu0
        %v2954 = vadd.f32 %v2905, %v2953
        %2955 = vdwg.mxu0
        %2956 = vmatpush.bf16.msra.mxu0 %v1465
        %2957 = vmatpush.bf16.msra.mxu0 %v1456
        %2958 = vmatpush.bf16.msra.mxu0 %v1447
        %2959 = vmatpush.bf16.msra.mxu0 %v1438
        %2960 = vmatpush.bf16.msra.mxu0 %v1429
        %2961 = vmatpush.bf16.msra.mxu0 %v1420
        %2962 = vmatpush.bf16.msra.mxu0 %v1411
        %2963 = vmatpush.bf16.msra.mxu0 %v1402
        %2964 = vmatmul.bf16.gmra.mxu0 %v316
        %v2965 = vpop.f32.mrf.mxu0
        %v2966 = vadd.f32 %v2917, %v2965
        %v2967 = vpop.f32.mrf.mxu0
        %v2968 = vadd.f32 %v2919, %v2967
        %2969 = vmatmul.bf16.gmra.mxu0 %v319
        %v2970 = vpop.f32.mrf.mxu0
        %v2971 = vadd.f32 %v2922, %v2970
        %v2972 = vpop.f32.mrf.mxu0
        %v2973 = vadd.f32 %v2924, %v2972
        %2974 = vmatmul.bf16.gmra.mxu0 %v322
        %v2975 = vpop.f32.mrf.mxu0
        %v2976 = vadd.f32 %v2927, %v2975
        %v2977 = vpop.f32.mrf.mxu0
        %v2978 = vadd.f32 %v2929, %v2977
        %2979 = vmatmul.bf16.gmra.mxu0 %v325
        %v2980 = vpop.f32.mrf.mxu0
        %v2981 = vadd.f32 %v2932, %v2980
        %v2982 = vpop.f32.mrf.mxu0
        %v2983 = vadd.f32 %v2934, %v2982
        %2984 = vmatmul.bf16.gmra.mxu0 %v328
        %v2985 = vpop.f32.mrf.mxu0
        %v2986 = vadd.f32 %v2937, %v2985
        %v2987 = vpop.f32.mrf.mxu0
        %v2988 = vadd.f32 %v2939, %v2987
        %2989 = vmatmul.bf16.gmra.mxu0 %v331
        %v2990 = vpop.f32.mrf.mxu0
        %v2991 = vadd.f32 %v2942, %v2990
        %v2992 = vpop.f32.mrf.mxu0
        %v2993 = vadd.f32 %v2944, %v2992
        %2994 = vmatmul.bf16.gmra.mxu0 %v334
        %v2995 = vpop.f32.mrf.mxu0
        %v2996 = vadd.f32 %v2947, %v2995
        %v2997 = vpop.f32.mrf.mxu0
        %v2998 = vadd.f32 %v2949, %v2997
        %2999 = vmatmul.bf16.gmra.mxu0 %v337
        %v3000 = vpop.f32.mrf.mxu0
        %v3001 = vadd.f32 %v2952, %v3000
        %v3002 = vpop.f32.mrf.mxu0
        %v3003 = vadd.f32 %v2954, %v3002
        %3004 = vdwg.mxu0
        %v3005 = vpack.c.bf16 %v1937, %v1790
        %v3006 = vpack.c.bf16 %v2231, %v2084
        %v3007 = vpack.c.bf16 %v2525, %v2378
        %v3008 = vpack.c.bf16 %v2819, %v2672
        %v3009 = vpack.c.bf16 %v2966, %v2966
        %v3010 = vpack.c.bf16 %v1939, %v1792
        %v3011 = vpack.c.bf16 %v2233, %v2086
        %v3012 = vpack.c.bf16 %v2527, %v2380
        %v3013 = vpack.c.bf16 %v2821, %v2674
        %v3014 = vpack.c.bf16 %v2968, %v2968
        %v3015 = vpack.c.bf16 %v1942, %v1795
        %v3016 = vpack.c.bf16 %v2236, %v2089
        %v3017 = vpack.c.bf16 %v2530, %v2383
        %v3018 = vpack.c.bf16 %v2824, %v2677
        %v3019 = vpack.c.bf16 %v2971, %v2971
        %v3020 = vpack.c.bf16 %v1944, %v1797
        %v3021 = vpack.c.bf16 %v2238, %v2091
        %v3022 = vpack.c.bf16 %v2532, %v2385
        %v3023 = vpack.c.bf16 %v2826, %v2679
        %v3024 = vpack.c.bf16 %v2973, %v2973
        %v3025 = vpack.c.bf16 %v1947, %v1800
        %v3026 = vpack.c.bf16 %v2241, %v2094
        %v3027 = vpack.c.bf16 %v2535, %v2388
        %v3028 = vpack.c.bf16 %v2829, %v2682
        %v3029 = vpack.c.bf16 %v2976, %v2976
        %v3030 = vpack.c.bf16 %v1949, %v1802
        %v3031 = vpack.c.bf16 %v2243, %v2096
        %v3032 = vpack.c.bf16 %v2537, %v2390
        %v3033 = vpack.c.bf16 %v2831, %v2684
        %v3034 = vpack.c.bf16 %v2978, %v2978
        %v3035 = vpack.c.bf16 %v1952, %v1805
        %v3036 = vpack.c.bf16 %v2246, %v2099
        %v3037 = vpack.c.bf16 %v2540, %v2393
        %v3038 = vpack.c.bf16 %v2834, %v2687
        %v3039 = vpack.c.bf16 %v2981, %v2981
        %v3040 = vpack.c.bf16 %v1954, %v1807
        %v3041 = vpack.c.bf16 %v2248, %v2101
        %v3042 = vpack.c.bf16 %v2542, %v2395
        %v3043 = vpack.c.bf16 %v2836, %v2689
        %v3044 = vpack.c.bf16 %v2983, %v2983
        %v3045 = vpack.c.bf16 %v1957, %v1810
        %v3046 = vpack.c.bf16 %v2251, %v2104
        %v3047 = vpack.c.bf16 %v2545, %v2398
        %v3048 = vpack.c.bf16 %v2839, %v2692
        %v3049 = vpack.c.bf16 %v2986, %v2986
        %v3050 = vpack.c.bf16 %v1959, %v1812
        %v3051 = vpack.c.bf16 %v2253, %v2106
        %v3052 = vpack.c.bf16 %v2547, %v2400
        %v3053 = vpack.c.bf16 %v2841, %v2694
        %v3054 = vpack.c.bf16 %v2988, %v2988
        %v3055 = vpack.c.bf16 %v1962, %v1815
        %v3056 = vpack.c.bf16 %v2256, %v2109
        %v3057 = vpack.c.bf16 %v2550, %v2403
        %v3058 = vpack.c.bf16 %v2844, %v2697
        %v3059 = vpack.c.bf16 %v2991, %v2991
        %v3060 = vpack.c.bf16 %v1964, %v1817
        %v3061 = vpack.c.bf16 %v2258, %v2111
        %v3062 = vpack.c.bf16 %v2552, %v2405
        %v3063 = vpack.c.bf16 %v2846, %v2699
        %v3064 = vpack.c.bf16 %v2993, %v2993
        %v3065 = vpack.c.bf16 %v1967, %v1820
        %v3066 = vpack.c.bf16 %v2261, %v2114
        %v3067 = vpack.c.bf16 %v2555, %v2408
        %v3068 = vpack.c.bf16 %v2849, %v2702
        %v3069 = vpack.c.bf16 %v2996, %v2996
        %v3070 = vpack.c.bf16 %v1969, %v1822
        %v3071 = vpack.c.bf16 %v2263, %v2116
        %v3072 = vpack.c.bf16 %v2557, %v2410
        %v3073 = vpack.c.bf16 %v2851, %v2704
        %v3074 = vpack.c.bf16 %v2998, %v2998
        %v3075 = vpack.c.bf16 %v1972, %v1825
        %v3076 = vpack.c.bf16 %v2266, %v2119
        %v3077 = vpack.c.bf16 %v2560, %v2413
        %v3078 = vpack.c.bf16 %v2854, %v2707
        %v3079 = vpack.c.bf16 %v3001, %v3001
        %v3080 = vpack.c.bf16 %v1974, %v1827
        %v3081 = vpack.c.bf16 %v2268, %v2121
        %v3082 = vpack.c.bf16 %v2562, %v2415
        %v3083 = vpack.c.bf16 %v2856, %v2709
        %v3084 = vpack.c.bf16 %v3003, %v3003
        %v3085 = vlaneseq
        %v3086 = vshrl.u32 %v3085, 7
        %v3087 = vadd.s32 %v3086, 8
        %v3088 = vadd.s32 %v3086, 16
        %v3089 = vadd.s32 %v3086, 24
        %v3090 = vadd.s32 %v3086, 32
        %v3091 = vadd.s32 %v3086, 40
        %v3092 = vadd.s32 %v3086, 48
        %v3093 = vadd.s32 %v3086, 56
        %v3094 = vadd.s32 %v3086, 64
        %v3095 = vadd.s32 %v3086, 72
        %v3096 = vadd.s32 %v3086, 80
        %v3097 = vadd.s32 %v3086, 88
        %v3098 = vadd.s32 %v3086, 96
        %v3099 = vadd.s32 %v3086, 104
        %v3100 = vadd.s32 %v3086, 112
        %v3101 = vadd.s32 %v3086, 120
        %v3102 = vlaneseq
        %v3103 = vand.u32 %v3102, 127
        %vm3104 = vcmp.le.s32.totalorder %v3103, %v3086
        %vm3105 = vcmp.le.s32.totalorder %v3103, %v3087
        %vm3106 = vcmp.le.s32.totalorder %v3103, %v3088
        %vm3107 = vcmp.le.s32.totalorder %v3103, %v3089
        %vm3108 = vcmp.le.s32.totalorder %v3103, %v3090
        %vm3109 = vcmp.le.s32.totalorder %v3103, %v3091
        %vm3110 = vcmp.le.s32.totalorder %v3103, %v3092
        %vm3111 = vcmp.le.s32.totalorder %v3103, %v3093
        %vm3112 = vcmp.le.s32.totalorder %v3103, %v3094
        %vm3113 = vcmp.le.s32.totalorder %v3103, %v3095
        %vm3114 = vcmp.le.s32.totalorder %v3103, %v3096
        %vm3115 = vcmp.le.s32.totalorder %v3103, %v3097
        %vm3116 = vcmp.le.s32.totalorder %v3103, %v3098
        %vm3117 = vcmp.le.s32.totalorder %v3103, %v3099
        %vm3118 = vcmp.le.s32.totalorder %v3103, %v3100
        %vm3119 = vcmp.le.s32.totalorder %v3103, %v3101
        %v3120 = vsel %vm3104, 0.0, -inf
        %v3121 = vsel %vm3105, 0.0, -inf
        %v3122 = vsel %vm3106, 0.0, -inf
        %v3123 = vsel %vm3107, 0.0, -inf
        %v3124 = vsel %vm3108, 0.0, -inf
        %v3125 = vsel %vm3109, 0.0, -inf
        %v3126 = vsel %vm3110, 0.0, -inf
        %v3127 = vsel %vm3111, 0.0, -inf
        %v3128 = vsel %vm3112, 0.0, -inf
        %v3129 = vsel %vm3113, 0.0, -inf
        %v3130 = vsel %vm3114, 0.0, -inf
        %v3131 = vsel %vm3115, 0.0, -inf
        %v3132 = vsel %vm3116, 0.0, -inf
        %v3133 = vsel %vm3117, 0.0, -inf
        %v3134 = vsel %vm3118, 0.0, -inf
        %v3135 = vsel %vm3119, 0.0, -inf
        %v3152 = vrot.slane %v3006, 4
        %v3153 = vrot.slane %v3011, 4
        %v3154 = vrot.slane %v3016, 4
        %v3155 = vrot.slane %v3021, 4
        %v3156 = vrot.slane %v3026, 4
        %v3157 = vrot.slane %v3031, 4
        %v3158 = vrot.slane %v3036, 4
        %v3159 = vrot.slane %v3041, 4
        %v3160 = vrot.slane %v3046, 4
        %v3161 = vrot.slane %v3051, 4
        %v3162 = vrot.slane %v3056, 4
        %v3163 = vrot.slane %v3061, 4
        %v3164 = vrot.slane %v3066, 4
        %v3165 = vrot.slane %v3071, 4
        %v3166 = vrot.slane %v3076, 4
        %v3167 = vrot.slane %v3081, 4
        %v3184 = vunpack.c.l.b16 %v3005
        %v3185 = vunpack.c.l.b16 %v3010
        %v3186 = vunpack.c.l.b16 %v3015
        %v3187 = vunpack.c.l.b16 %v3020
        %v3188 = vunpack.c.l.b16 %v3025
        %v3189 = vunpack.c.l.b16 %v3030
        %v3190 = vunpack.c.l.b16 %v3035
        %v3191 = vunpack.c.l.b16 %v3040
        %v3192 = vunpack.c.l.b16 %v3045
        %v3193 = vunpack.c.l.b16 %v3050
        %v3194 = vunpack.c.l.b16 %v3055
        %v3195 = vunpack.c.l.b16 %v3060
        %v3196 = vunpack.c.l.b16 %v3065
        %v3197 = vunpack.c.l.b16 %v3070
        %v3198 = vunpack.c.l.b16 %v3075
        %v3199 = vunpack.c.l.b16 %v3080
        %v3200 = vpack.c.b16 %v3185, %v3184
        %v3201 = vpack.c.b16 %v3187, %v3186
        %v3202 = vpack.c.b16 %v3189, %v3188
        %v3203 = vpack.c.b16 %v3191, %v3190
        %v3204 = vpack.c.b16 %v3193, %v3192
        %v3205 = vpack.c.b16 %v3195, %v3194
        %v3206 = vpack.c.b16 %v3197, %v3196
        %v3207 = vpack.c.b16 %v3199, %v3198
        %v3208 = vunpack.c.l.b16 %v3152
        %v3209 = vunpack.c.l.b16 %v3153
        %v3210 = vunpack.c.l.b16 %v3154
        %v3211 = vunpack.c.l.b16 %v3155
        %v3212 = vunpack.c.l.b16 %v3156
        %v3213 = vunpack.c.l.b16 %v3157
        %v3214 = vunpack.c.l.b16 %v3158
        %v3215 = vunpack.c.l.b16 %v3159
        %v3216 = vunpack.c.l.b16 %v3160
        %v3217 = vunpack.c.l.b16 %v3161
        %v3218 = vunpack.c.l.b16 %v3162
        %v3219 = vunpack.c.l.b16 %v3163
        %v3220 = vunpack.c.l.b16 %v3164
        %v3221 = vunpack.c.l.b16 %v3165
        %v3222 = vunpack.c.l.b16 %v3166
        %v3223 = vunpack.c.l.b16 %v3167
        %v3224 = vpack.c.b16 %v3209, %v3208
        %v3225 = vpack.c.b16 %v3211, %v3210
        %v3226 = vpack.c.b16 %v3213, %v3212
        %v3227 = vpack.c.b16 %v3215, %v3214
        %v3228 = vpack.c.b16 %v3217, %v3216
        %v3229 = vpack.c.b16 %v3219, %v3218
        %v3230 = vpack.c.b16 %v3221, %v3220
        %v3231 = vpack.c.b16 %v3223, %v3222
        %vm3232 = vcmask 523264
        %v3234 = vsel %vm3232, %v3200, 0
        %v3237 = vsel %vm3232, %v3201, 0
        %v3240 = vsel %vm3232, %v3202, 0
        %v3243 = vsel %vm3232, %v3203, 0
        %v3246 = vsel %vm3232, %v3204, 0
        %v3249 = vsel %vm3232, %v3205, 0
        %v3252 = vsel %vm3232, %v3206, 0
        %v3255 = vsel %vm3232, %v3207, 0
        %v3258 = vsel %vm3232, %v3224, 0
        %v3261 = vsel %vm3232, %v3225, 0
        %v3264 = vsel %vm3232, %v3226, 0
        %v3267 = vsel %vm3232, %v3227, 0
        %v3270 = vsel %vm3232, %v3228, 0
        %v3273 = vsel %vm3232, %v3229, 0
        %v3276 = vsel %vm3232, %v3230, 0
        %v3279 = vsel %vm3232, %v3231, 0
        %3281 = vmatpush.bf16.xpose.msra.mxu0 %v3279
        %3282 = vmatpush.bf16.xpose.msra.mxu0 %v3276
        %3283 = vmatpush.bf16.xpose.msra.mxu0 %v3273
        %3284 = vmatpush.bf16.xpose.msra.mxu0 %v3270
        %3285 = vmatpush.bf16.xpose.msra.mxu0 %v3267
        %3286 = vmatpush.bf16.xpose.msra.mxu0 %v3264
        %3287 = vmatpush.bf16.xpose.msra.mxu0 %v3261
        %3288 = vmatpush.bf16.xpose.msra.mxu0 %v3258
        %3289 = vmatmul.bf16.gmra.mxu0 %v3234
        %v3290 = vpop.f32.mrf.mxu0
        %v3291 = vadd.f32 %v3120, %v3290
        %v3292 = vpop.f32.mrf.mxu0
        %v3293 = vadd.f32 %v3121, %v3292
        %3294 = vmatmul.bf16.gmra.mxu0 %v3237
        %v3295 = vpop.f32.mrf.mxu0
        %v3296 = vadd.f32 %v3122, %v3295
        %v3297 = vpop.f32.mrf.mxu0
        %v3298 = vadd.f32 %v3123, %v3297
        %3299 = vmatmul.bf16.gmra.mxu0 %v3240
        %v3300 = vpop.f32.mrf.mxu0
        %v3301 = vadd.f32 %v3124, %v3300
        %v3302 = vpop.f32.mrf.mxu0
        %v3303 = vadd.f32 %v3125, %v3302
        %3304 = vmatmul.bf16.gmra.mxu0 %v3243
        %v3305 = vpop.f32.mrf.mxu0
        %v3306 = vadd.f32 %v3126, %v3305
        %v3307 = vpop.f32.mrf.mxu0
        %v3308 = vadd.f32 %v3127, %v3307
        %3309 = vmatmul.bf16.gmra.mxu0 %v3246
        %v3310 = vpop.f32.mrf.mxu0
        %v3311 = vadd.f32 %v3128, %v3310
        %v3312 = vpop.f32.mrf.mxu0
        %v3313 = vadd.f32 %v3129, %v3312
        %3314 = vmatmul.bf16.gmra.mxu0 %v3249
        %v3315 = vpop.f32.mrf.mxu0
        %v3316 = vadd.f32 %v3130, %v3315
        %v3317 = vpop.f32.mrf.mxu0
        %v3318 = vadd.f32 %v3131, %v3317
        %3319 = vmatmul.bf16.gmra.mxu0 %v3252
        %v3320 = vpop.f32.mrf.mxu0
        %v3321 = vadd.f32 %v3132, %v3320
        %v3322 = vpop.f32.mrf.mxu0
        %v3323 = vadd.f32 %v3133, %v3322
        %3324 = vmatmul.bf16.gmra.mxu0 %v3255
        %v3325 = vpop.f32.mrf.mxu0
        %v3326 = vadd.f32 %v3134, %v3325
        %v3327 = vpop.f32.mrf.mxu0
        %v3328 = vadd.f32 %v3135, %v3327
        %3329 = vdwg.mxu0
        %3330 = vmax.xlane.f32.xlu0 %v3291
        %v3331 = vpop.xlane.xlu0 %3330
        %3332 = vmax.xlane.f32.xlu0 %v3293
        %v3333 = vpop.xlane.xlu0 %3332
        %3334 = vmax.xlane.f32.xlu0 %v3296
        %v3335 = vpop.xlane.xlu0 %3334
        %3336 = vmax.xlane.f32.xlu0 %v3298
        %v3337 = vpop.xlane.xlu0 %3336
        %3338 = vmax.xlane.f32.xlu0 %v3301
        %v3339 = vpop.xlane.xlu0 %3338
        %3340 = vmax.xlane.f32.xlu0 %v3303
        %v3341 = vpop.xlane.xlu0 %3340
        %3342 = vmax.xlane.f32.xlu0 %v3306
        %v3343 = vpop.xlane.xlu0 %3342
        %3344 = vmax.xlane.f32.xlu0 %v3308
        %v3345 = vpop.xlane.xlu0 %3344
        %3346 = vmax.xlane.f32.xlu0 %v3311
        %v3347 = vpop.xlane.xlu0 %3346
        %3348 = vmax.xlane.f32.xlu0 %v3313
        %v3349 = vpop.xlane.xlu0 %3348
        %3350 = vmax.xlane.f32.xlu0 %v3316
        %v3351 = vpop.xlane.xlu0 %3350
        %3352 = vmax.xlane.f32.xlu0 %v3318
        %v3353 = vpop.xlane.xlu0 %3352
        %3354 = vmax.xlane.f32.xlu0 %v3321
        %v3355 = vpop.xlane.xlu0 %3354
        %3356 = vmax.xlane.f32.xlu0 %v3323
        %v3357 = vpop.xlane.xlu0 %3356
        %3358 = vmax.xlane.f32.xlu0 %v3326
        %v3359 = vpop.xlane.xlu0 %3358
        %3360 = vmax.xlane.f32.xlu0 %v3328
        %v3361 = vpop.xlane.xlu0 %3360
        %v3362 = vsub.f32 %v3291, %v3331
        %v3363 = vsub.f32 %v3293, %v3333
        %v3364 = vsub.f32 %v3296, %v3335
        %v3365 = vsub.f32 %v3298, %v3337
        %v3366 = vsub.f32 %v3301, %v3339
        %v3367 = vsub.f32 %v3303, %v3341
        %v3368 = vsub.f32 %v3306, %v3343
        %v3369 = vsub.f32 %v3308, %v3345
        %v3370 = vsub.f32 %v3311, %v3347
        %v3371 = vsub.f32 %v3313, %v3349
        %v3372 = vsub.f32 %v3316, %v3351
        %v3373 = vsub.f32 %v3318, %v3353
        %v3374 = vsub.f32 %v3321, %v3355
        %v3375 = vsub.f32 %v3323, %v3357
        %v3376 = vsub.f32 %v3326, %v3359
        %v3377 = vsub.f32 %v3328, %v3361
        %v3378 = vmul.f32 %v3362, 1.442695
        %v3379 = vpow.pop %v3378
        %v3380 = vmul.f32 %v3363, 1.442695
        %v3381 = vpow.pop %v3380
        %v3382 = vmul.f32 %v3364, 1.442695
        %v3383 = vpow.pop %v3382
        %v3384 = vmul.f32 %v3365, 1.442695
        %v3385 = vpow.pop %v3384
        %v3386 = vmul.f32 %v3366, 1.442695
        %v3387 = vpow.pop %v3386
        %v3388 = vmul.f32 %v3367, 1.442695
        %v3389 = vpow.pop %v3388
        %v3390 = vmul.f32 %v3368, 1.442695
        %v3391 = vpow.pop %v3390
        %v3392 = vmul.f32 %v3369, 1.442695
        %v3393 = vpow.pop %v3392
        %v3394 = vmul.f32 %v3370, 1.442695
        %v3395 = vpow.pop %v3394
        %v3396 = vmul.f32 %v3371, 1.442695
        %v3397 = vpow.pop %v3396
        %v3398 = vmul.f32 %v3372, 1.442695
        %v3399 = vpow.pop %v3398
        %v3400 = vmul.f32 %v3373, 1.442695
        %v3401 = vpow.pop %v3400
        %v3402 = vmul.f32 %v3374, 1.442695
        %v3403 = vpow.pop %v3402
        %v3404 = vmul.f32 %v3375, 1.442695
        %v3405 = vpow.pop %v3404
        %v3406 = vmul.f32 %v3376, 1.442695
        %v3407 = vpow.pop %v3406
        %v3408 = vmul.f32 %v3377, 1.442695
        %v3409 = vpow.pop %v3408
        %3410 = vadd.xlane.f32.xlu0 %v3379
        %v3411 = vpop.xlane.xlu0 %3410
        %3412 = vadd.xlane.f32.xlu0 %v3381
        %v3413 = vpop.xlane.xlu0 %3412
        %3414 = vadd.xlane.f32.xlu0 %v3383
        %v3415 = vpop.xlane.xlu0 %3414
        %3416 = vadd.xlane.f32.xlu0 %v3385
        %v3417 = vpop.xlane.xlu0 %3416
        %3418 = vadd.xlane.f32.xlu0 %v3387
        %v3419 = vpop.xlane.xlu0 %3418
        %3420 = vadd.xlane.f32.xlu0 %v3389
        %v3421 = vpop.xlane.xlu0 %3420
        %3422 = vadd.xlane.f32.xlu0 %v3391
        %v3423 = vpop.xlane.xlu0 %3422
        %3424 = vadd.xlane.f32.xlu0 %v3393
        %v3425 = vpop.xlane.xlu0 %3424
        %3426 = vadd.xlane.f32.xlu0 %v3395
        %v3427 = vpop.xlane.xlu0 %3426
        %3428 = vadd.xlane.f32.xlu0 %v3397
        %v3429 = vpop.xlane.xlu0 %3428
        %3430 = vadd.xlane.f32.xlu0 %v3399
        %v3431 = vpop.xlane.xlu0 %3430
        %3432 = vadd.xlane.f32.xlu0 %v3401
        %v3433 = vpop.xlane.xlu0 %3432
        %3434 = vadd.xlane.f32.xlu0 %v3403
        %v3435 = vpop.xlane.xlu0 %3434
        %3436 = vadd.xlane.f32.xlu0 %v3405
        %v3437 = vpop.xlane.xlu0 %3436
        %3438 = vadd.xlane.f32.xlu0 %v3407
        %v3439 = vpop.xlane.xlu0 %3438
        %3440 = vadd.xlane.f32.xlu0 %v3409
        %v3441 = vpop.xlane.xlu0 %3440
        %v3442 = vrcp.pop %v3411
        %v3443 = vmul.f32 %v3411, %v3442
        %v3444 = vsub.f32 1.0, %v3443
        %v3445 = vmul.f32 %v3442, %v3444
        %v3446 = vadd.f32 %v3442, %v3445
        %vm3447 = vweird.f32 %v3411
        %vm3448 = vweird.f32 %v3442
        %vm3449 = vmor %vm3447, %vm3448
        %v3450 = vsel %vm3449, %v3442, %v3446
        %v3451 = vand.u32 2147483647, %v3411
        %vm3452 = vcmp.eq.f32.partialorder %v3451, 8.507059e+37
        %v3453 = vand.u32 %v3411, 2147483648
        %v3454 = vor.u32 1.1754944e-38, %v3453
        %v3455 = vsel %vm3452, %v3454, %v3450
        %v3456 = vrcp.pop %v3413
        %v3457 = vmul.f32 %v3413, %v3456
        %v3458 = vsub.f32 1.0, %v3457
        %v3459 = vmul.f32 %v3456, %v3458
        %v3460 = vadd.f32 %v3456, %v3459
        %vm3461 = vweird.f32 %v3413
        %vm3462 = vweird.f32 %v3456
        %vm3463 = vmor %vm3461, %vm3462
        %v3464 = vsel %vm3463, %v3456, %v3460
        %v3465 = vand.u32 2147483647, %v3413
        %vm3466 = vcmp.eq.f32.partialorder %v3465, 8.507059e+37
        %v3467 = vand.u32 %v3413, 2147483648
        %v3468 = vor.u32 1.1754944e-38, %v3467
        %v3469 = vsel %vm3466, %v3468, %v3464
        %v3470 = vrcp.pop %v3415
        %v3471 = vmul.f32 %v3415, %v3470
        %v3472 = vsub.f32 1.0, %v3471
        %v3473 = vmul.f32 %v3470, %v3472
        %v3474 = vadd.f32 %v3470, %v3473
        %vm3475 = vweird.f32 %v3415
        %vm3476 = vweird.f32 %v3470
        %vm3477 = vmor %vm3475, %vm3476
        %v3478 = vsel %vm3477, %v3470, %v3474
        %v3479 = vand.u32 2147483647, %v3415
        %vm3480 = vcmp.eq.f32.partialorder %v3479, 8.507059e+37
        %v3481 = vand.u32 %v3415, 2147483648
        %v3482 = vor.u32 1.1754944e-38, %v3481
        %v3483 = vsel %vm3480, %v3482, %v3478
        %v3484 = vrcp.pop %v3417
        %v3485 = vmul.f32 %v3417, %v3484
        %v3486 = vsub.f32 1.0, %v3485
        %v3487 = vmul.f32 %v3484, %v3486
        %v3488 = vadd.f32 %v3484, %v3487
        %vm3489 = vweird.f32 %v3417
        %vm3490 = vweird.f32 %v3484
        %vm3491 = vmor %vm3489, %vm3490
        %v3492 = vsel %vm3491, %v3484, %v3488
        %v3493 = vand.u32 2147483647, %v3417
        %vm3494 = vcmp.eq.f32.partialorder %v3493, 8.507059e+37
        %v3495 = vand.u32 %v3417, 2147483648
        %v3496 = vor.u32 1.1754944e-38, %v3495
        %v3497 = vsel %vm3494, %v3496, %v3492
        %v3498 = vrcp.pop %v3419
        %v3499 = vmul.f32 %v3419, %v3498
        %v3500 = vsub.f32 1.0, %v3499
        %v3501 = vmul.f32 %v3498, %v3500
        %v3502 = vadd.f32 %v3498, %v3501
        %vm3503 = vweird.f32 %v3419
        %vm3504 = vweird.f32 %v3498
        %vm3505 = vmor %vm3503, %vm3504
        %v3506 = vsel %vm3505, %v3498, %v3502
        %v3507 = vand.u32 2147483647, %v3419
        %vm3508 = vcmp.eq.f32.partialorder %v3507, 8.507059e+37
        %v3509 = vand.u32 %v3419, 2147483648
        %v3510 = vor.u32 1.1754944e-38, %v3509
        %v3511 = vsel %vm3508, %v3510, %v3506
        %v3512 = vrcp.pop %v3421
        %v3513 = vmul.f32 %v3421, %v3512
        %v3514 = vsub.f32 1.0, %v3513
        %v3515 = vmul.f32 %v3512, %v3514
        %v3516 = vadd.f32 %v3512, %v3515
        %vm3517 = vweird.f32 %v3421
        %vm3518 = vweird.f32 %v3512
        %vm3519 = vmor %vm3517, %vm3518
        %v3520 = vsel %vm3519, %v3512, %v3516
        %v3521 = vand.u32 2147483647, %v3421
        %vm3522 = vcmp.eq.f32.partialorder %v3521, 8.507059e+37
        %v3523 = vand.u32 %v3421, 2147483648
        %v3524 = vor.u32 1.1754944e-38, %v3523
        %v3525 = vsel %vm3522, %v3524, %v3520
        %v3526 = vrcp.pop %v3423
        %v3527 = vmul.f32 %v3423, %v3526
        %v3528 = vsub.f32 1.0, %v3527
        %v3529 = vmul.f32 %v3526, %v3528
        %v3530 = vadd.f32 %v3526, %v3529
        %vm3531 = vweird.f32 %v3423
        %vm3532 = vweird.f32 %v3526
        %vm3533 = vmor %vm3531, %vm3532
        %v3534 = vsel %vm3533, %v3526, %v3530
        %v3535 = vand.u32 2147483647, %v3423
        %vm3536 = vcmp.eq.f32.partialorder %v3535, 8.507059e+37
        %v3537 = vand.u32 %v3423, 2147483648
        %v3538 = vor.u32 1.1754944e-38, %v3537
        %v3539 = vsel %vm3536, %v3538, %v3534
        %v3540 = vrcp.pop %v3425
        %v3541 = vmul.f32 %v3425, %v3540
        %v3542 = vsub.f32 1.0, %v3541
        %v3543 = vmul.f32 %v3540, %v3542
        %v3544 = vadd.f32 %v3540, %v3543
        %vm3545 = vweird.f32 %v3425
        %vm3546 = vweird.f32 %v3540
        %vm3547 = vmor %vm3545, %vm3546
        %v3548 = vsel %vm3547, %v3540, %v3544
        %v3549 = vand.u32 2147483647, %v3425
        %vm3550 = vcmp.eq.f32.partialorder %v3549, 8.507059e+37
        %v3551 = vand.u32 %v3425, 2147483648
        %v3552 = vor.u32 1.1754944e-38, %v3551
        %v3553 = vsel %vm3550, %v3552, %v3548
        %v3554 = vrcp.pop %v3427
        %v3555 = vmul.f32 %v3427, %v3554
        %v3556 = vsub.f32 1.0, %v3555
        %v3557 = vmul.f32 %v3554, %v3556
        %v3558 = vadd.f32 %v3554, %v3557
        %vm3559 = vweird.f32 %v3427
        %vm3560 = vweird.f32 %v3554
        %vm3561 = vmor %vm3559, %vm3560
        %v3562 = vsel %vm3561, %v3554, %v3558
        %v3563 = vand.u32 2147483647, %v3427
        %vm3564 = vcmp.eq.f32.partialorder %v3563, 8.507059e+37
        %v3565 = vand.u32 %v3427, 2147483648
        %v3566 = vor.u32 1.1754944e-38, %v3565
        %v3567 = vsel %vm3564, %v3566, %v3562
        %v3568 = vrcp.pop %v3429
        %v3569 = vmul.f32 %v3429, %v3568
        %v3570 = vsub.f32 1.0, %v3569
        %v3571 = vmul.f32 %v3568, %v3570
        %v3572 = vadd.f32 %v3568, %v3571
        %vm3573 = vweird.f32 %v3429
        %vm3574 = vweird.f32 %v3568
        %vm3575 = vmor %vm3573, %vm3574
        %v3576 = vsel %vm3575, %v3568, %v3572
        %v3577 = vand.u32 2147483647, %v3429
        %vm3578 = vcmp.eq.f32.partialorder %v3577, 8.507059e+37
        %v3579 = vand.u32 %v3429, 2147483648
        %v3580 = vor.u32 1.1754944e-38, %v3579
        %v3581 = vsel %vm3578, %v3580, %v3576
        %v3582 = vrcp.pop %v3431
        %v3583 = vmul.f32 %v3431, %v3582
        %v3584 = vsub.f32 1.0, %v3583
        %v3585 = vmul.f32 %v3582, %v3584
        %v3586 = vadd.f32 %v3582, %v3585
        %vm3587 = vweird.f32 %v3431
        %vm3588 = vweird.f32 %v3582
        %vm3589 = vmor %vm3587, %vm3588
        %v3590 = vsel %vm3589, %v3582, %v3586
        %v3591 = vand.u32 2147483647, %v3431
        %vm3592 = vcmp.eq.f32.partialorder %v3591, 8.507059e+37
        %v3593 = vand.u32 %v3431, 2147483648
        %v3594 = vor.u32 1.1754944e-38, %v3593
        %v3595 = vsel %vm3592, %v3594, %v3590
        %v3596 = vrcp.pop %v3433
        %v3597 = vmul.f32 %v3433, %v3596
        %v3598 = vsub.f32 1.0, %v3597
        %v3599 = vmul.f32 %v3596, %v3598
        %v3600 = vadd.f32 %v3596, %v3599
        %vm3601 = vweird.f32 %v3433
        %vm3602 = vweird.f32 %v3596
        %vm3603 = vmor %vm3601, %vm3602
        %v3604 = vsel %vm3603, %v3596, %v3600
        %v3605 = vand.u32 2147483647, %v3433
        %vm3606 = vcmp.eq.f32.partialorder %v3605, 8.507059e+37
        %v3607 = vand.u32 %v3433, 2147483648
        %v3608 = vor.u32 1.1754944e-38, %v3607
        %v3609 = vsel %vm3606, %v3608, %v3604
        %v3610 = vrcp.pop %v3435
        %v3611 = vmul.f32 %v3435, %v3610
        %v3612 = vsub.f32 1.0, %v3611
        %v3613 = vmul.f32 %v3610, %v3612
        %v3614 = vadd.f32 %v3610, %v3613
        %vm3615 = vweird.f32 %v3435
        %vm3616 = vweird.f32 %v3610
        %vm3617 = vmor %vm3615, %vm3616
        %v3618 = vsel %vm3617, %v3610, %v3614
        %v3619 = vand.u32 2147483647, %v3435
        %vm3620 = vcmp.eq.f32.partialorder %v3619, 8.507059e+37
        %v3621 = vand.u32 %v3435, 2147483648
        %v3622 = vor.u32 1.1754944e-38, %v3621
        %v3623 = vsel %vm3620, %v3622, %v3618
        %v3624 = vrcp.pop %v3437
        %v3625 = vmul.f32 %v3437, %v3624
        %v3626 = vsub.f32 1.0, %v3625
        %v3627 = vmul.f32 %v3624, %v3626
        %v3628 = vadd.f32 %v3624, %v3627
        %vm3629 = vweird.f32 %v3437
        %vm3630 = vweird.f32 %v3624
        %vm3631 = vmor %vm3629, %vm3630
        %v3632 = vsel %vm3631, %v3624, %v3628
        %v3633 = vand.u32 2147483647, %v3437
        %vm3634 = vcmp.eq.f32.partialorder %v3633, 8.507059e+37
        %v3635 = vand.u32 %v3437, 2147483648
        %v3636 = vor.u32 1.1754944e-38, %v3635
        %v3637 = vsel %vm3634, %v3636, %v3632
        %v3638 = vrcp.pop %v3439
        %v3639 = vmul.f32 %v3439, %v3638
        %v3640 = vsub.f32 1.0, %v3639
        %v3641 = vmul.f32 %v3638, %v3640
        %v3642 = vadd.f32 %v3638, %v3641
        %vm3643 = vweird.f32 %v3439
        %vm3644 = vweird.f32 %v3638
        %vm3645 = vmor %vm3643, %vm3644
        %v3646 = vsel %vm3645, %v3638, %v3642
        %v3647 = vand.u32 2147483647, %v3439
        %vm3648 = vcmp.eq.f32.partialorder %v3647, 8.507059e+37
        %v3649 = vand.u32 %v3439, 2147483648
        %v3650 = vor.u32 1.1754944e-38, %v3649
        %v3651 = vsel %vm3648, %v3650, %v3646
        %v3652 = vrcp.pop %v3441
        %v3653 = vmul.f32 %v3441, %v3652
        %v3654 = vsub.f32 1.0, %v3653
        %v3655 = vmul.f32 %v3652, %v3654
        %v3656 = vadd.f32 %v3652, %v3655
        %vm3657 = vweird.f32 %v3441
        %vm3658 = vweird.f32 %v3652
        %vm3659 = vmor %vm3657, %vm3658
        %v3660 = vsel %vm3659, %v3652, %v3656
        %v3661 = vand.u32 2147483647, %v3441
        %vm3662 = vcmp.eq.f32.partialorder %v3661, 8.507059e+37
        %v3663 = vand.u32 %v3441, 2147483648
        %v3664 = vor.u32 1.1754944e-38, %v3663
        %v3665 = vsel %vm3662, %v3664, %v3660
        %v3666 = vmul.f32 %v3379, %v3455
        %v3667 = vmul.f32 %v3381, %v3469
        %v3668 = vmul.f32 %v3383, %v3483
        %v3669 = vmul.f32 %v3385, %v3497
        %v3670 = vmul.f32 %v3387, %v3511
        %v3671 = vmul.f32 %v3389, %v3525
        %v3672 = vmul.f32 %v3391, %v3539
        %v3673 = vmul.f32 %v3393, %v3553
        %v3674 = vmul.f32 %v3395, %v3567
        %v3675 = vmul.f32 %v3397, %v3581
        %v3676 = vmul.f32 %v3399, %v3595
        %v3677 = vmul.f32 %v3401, %v3609
        %v3678 = vmul.f32 %v3403, %v3623
        %v3679 = vmul.f32 %v3405, %v3637
        %v3680 = vmul.f32 %v3407, %v3651
        %v3681 = vmul.f32 %v3409, %v3665
        %v3682 = vpack.c.bf16 %v3666, %v3666
        %v3683 = vpack.c.bf16 %v3667, %v3667
        %v3684 = vpack.c.bf16 %v3668, %v3668
        %v3685 = vpack.c.bf16 %v3669, %v3669
        %v3686 = vpack.c.bf16 %v3670, %v3670
        %v3687 = vpack.c.bf16 %v3671, %v3671
        %v3688 = vpack.c.bf16 %v3672, %v3672
        %v3689 = vpack.c.bf16 %v3673, %v3673
        %v3690 = vpack.c.bf16 %v3674, %v3674
        %v3691 = vpack.c.bf16 %v3675, %v3675
        %v3692 = vpack.c.bf16 %v3676, %v3676
        %v3693 = vpack.c.bf16 %v3677, %v3677
        %v3694 = vpack.c.bf16 %v3678, %v3678
        %v3695 = vpack.c.bf16 %v3679, %v3679
        %v3696 = vpack.c.bf16 %v3680, %v3680
        %v3697 = vpack.c.bf16 %v3681, %v3681
        %v3714 = vunpack.c.l.b16 %v3682
        %v3715 = vunpack.c.l.b16 %v3683
        %v3716 = vunpack.c.l.b16 %v3684
        %v3717 = vunpack.c.l.b16 %v3685
        %v3718 = vunpack.c.l.b16 %v3686
        %v3719 = vunpack.c.l.b16 %v3687
        %v3720 = vunpack.c.l.b16 %v3688
        %v3721 = vunpack.c.l.b16 %v3689
        %v3722 = vunpack.c.l.b16 %v3690
        %v3723 = vunpack.c.l.b16 %v3691
        %v3724 = vunpack.c.l.b16 %v3692
        %v3725 = vunpack.c.l.b16 %v3693
        %v3726 = vunpack.c.l.b16 %v3694
        %v3727 = vunpack.c.l.b16 %v3695
        %v3728 = vunpack.c.l.b16 %v3696
        %v3729 = vunpack.c.l.b16 %v3697
        %v3730 = vpack.c.b16 %v3715, %v3714
        %v3731 = vpack.c.b16 %v3717, %v3716
        %v3732 = vpack.c.b16 %v3719, %v3718
        %v3733 = vpack.c.b16 %v3721, %v3720
        %v3734 = vpack.c.b16 %v3723, %v3722
        %v3735 = vpack.c.b16 %v3725, %v3724
        %v3736 = vpack.c.b16 %v3727, %v3726
        %v3737 = vpack.c.b16 %v3729, %v3728
        %v3762 = vunpack.c.l.b16 %v3008
        %v3763 = vunpack.c.l.b16 %v3013
        %v3764 = vunpack.c.l.b16 %v3018
        %v3765 = vunpack.c.l.b16 %v3023
        %v3766 = vunpack.c.l.b16 %v3028
        %v3767 = vunpack.c.l.b16 %v3033
        %v3768 = vunpack.c.l.b16 %v3038
        %v3769 = vunpack.c.l.b16 %v3043
        %v3770 = vunpack.c.l.b16 %v3048
        %v3771 = vunpack.c.l.b16 %v3053
        %v3772 = vunpack.c.l.b16 %v3058
        %v3773 = vunpack.c.l.b16 %v3063
        %v3774 = vunpack.c.l.b16 %v3068
        %v3775 = vunpack.c.l.b16 %v3073
        %v3776 = vunpack.c.l.b16 %v3078
        %v3777 = vunpack.c.l.b16 %v3083
        %v3778 = vpack.c.b16 %v3763, %v3762
        %v3779 = vpack.c.b16 %v3765, %v3764
        %v3780 = vpack.c.b16 %v3767, %v3766
        %v3781 = vpack.c.b16 %v3769, %v3768
        %v3782 = vpack.c.b16 %v3771, %v3770
        %v3783 = vpack.c.b16 %v3773, %v3772
        %v3784 = vpack.c.b16 %v3775, %v3774
        %v3785 = vpack.c.b16 %v3777, %v3776
        %3794 = vmatpush.bf16.msra.mxu0 %v3785
        %3795 = vmatpush.bf16.msra.mxu0 %v3784
        %3796 = vmatpush.bf16.msra.mxu0 %v3783
        %3797 = vmatpush.bf16.msra.mxu0 %v3782
        %3798 = vmatpush.bf16.msra.mxu0 %v3781
        %3799 = vmatpush.bf16.msra.mxu0 %v3780
        %3800 = vmatpush.bf16.msra.mxu0 %v3779
        %3801 = vmatpush.bf16.msra.mxu0 %v3778
        %3802 = vmatmul.bf16.gmra.mxu0 %v3730
        %v3803 = vpop.f32.mrf.mxu0
        %v3804 = vadd.f32 0.0, %v3803
        %v3805 = vpop.f32.mrf.mxu0
        %v3806 = vadd.f32 0.0, %v3805
        %3807 = vmatmul.bf16.gmra.mxu0 %v3731
        %v3808 = vpop.f32.mrf.mxu0
        %v3809 = vadd.f32 0.0, %v3808
        %v3810 = vpop.f32.mrf.mxu0
        %v3811 = vadd.f32 0.0, %v3810
        %3812 = vmatmul.bf16.gmra.mxu0 %v3732
        %v3813 = vpop.f32.mrf.mxu0
        %v3814 = vadd.f32 0.0, %v3813
        %v3815 = vpop.f32.mrf.mxu0
        %v3816 = vadd.f32 0.0, %v3815
        %3817 = vmatmul.bf16.gmra.mxu0 %v3733
        %v3818 = vpop.f32.mrf.mxu0
        %v3819 = vadd.f32 0.0, %v3818
        %v3820 = vpop.f32.mrf.mxu0
        %v3821 = vadd.f32 0.0, %v3820
        %3822 = vmatmul.bf16.gmra.mxu0 %v3734
        %v3823 = vpop.f32.mrf.mxu0
        %v3824 = vadd.f32 0.0, %v3823
        %v3825 = vpop.f32.mrf.mxu0
        %v3826 = vadd.f32 0.0, %v3825
        %3827 = vmatmul.bf16.gmra.mxu0 %v3735
        %v3828 = vpop.f32.mrf.mxu0
        %v3829 = vadd.f32 0.0, %v3828
        %v3830 = vpop.f32.mrf.mxu0
        %v3831 = vadd.f32 0.0, %v3830
        %3832 = vmatmul.bf16.gmra.mxu0 %v3736
        %v3833 = vpop.f32.mrf.mxu0
        %v3834 = vadd.f32 0.0, %v3833
        %v3835 = vpop.f32.mrf.mxu0
        %v3836 = vadd.f32 0.0, %v3835
        %3837 = vmatmul.bf16.gmra.mxu0 %v3737
        %v3838 = vpop.f32.mrf.mxu0
        %v3839 = vadd.f32 0.0, %v3838
        %v3840 = vpop.f32.mrf.mxu0
        %v3841 = vadd.f32 0.0, %v3840
        %3842 = vdwg.mxu0
        %3843 = vrot.lane.b32.xlu0 %v3006, 64
        %v3844 = vpop.permute.xlu0 %3843
        %3845 = vrot.lane.b32.xlu0 %v3011, 64
        %v3846 = vpop.permute.xlu0 %3845
        %3847 = vrot.lane.b32.xlu0 %v3016, 64
        %v3848 = vpop.permute.xlu0 %3847
        %3849 = vrot.lane.b32.xlu0 %v3021, 64
        %v3850 = vpop.permute.xlu0 %3849
        %3851 = vrot.lane.b32.xlu0 %v3026, 64
        %v3852 = vpop.permute.xlu0 %3851
        %3853 = vrot.lane.b32.xlu0 %v3031, 64
        %v3854 = vpop.permute.xlu0 %3853
        %3855 = vrot.lane.b32.xlu0 %v3036, 64
        %v3856 = vpop.permute.xlu0 %3855
        %3857 = vrot.lane.b32.xlu0 %v3041, 64
        %v3858 = vpop.permute.xlu0 %3857
        %3859 = vrot.lane.b32.xlu0 %v3046, 64
        %v3860 = vpop.permute.xlu0 %3859
        %3861 = vrot.lane.b32.xlu0 %v3051, 64
        %v3862 = vpop.permute.xlu0 %3861
        %3863 = vrot.lane.b32.xlu0 %v3056, 64
        %v3864 = vpop.permute.xlu0 %3863
        %3865 = vrot.lane.b32.xlu0 %v3061, 64
        %v3866 = vpop.permute.xlu0 %3865
        %3867 = vrot.lane.b32.xlu0 %v3066, 64
        %v3868 = vpop.permute.xlu0 %3867
        %3869 = vrot.lane.b32.xlu0 %v3071, 64
        %v3870 = vpop.permute.xlu0 %3869
        %3871 = vrot.lane.b32.xlu0 %v3076, 64
        %v3872 = vpop.permute.xlu0 %3871
        %3873 = vrot.lane.b32.xlu0 %v3081, 64
        %v3874 = vpop.permute.xlu0 %3873
        %v3875 = vrot.slane %v3844, 4
        %v3876 = vrot.slane %v3846, 4
        %v3877 = vrot.slane %v3848, 4
        %v3878 = vrot.slane %v3850, 4
        %v3879 = vrot.slane %v3852, 4
        %v3880 = vrot.slane %v3854, 4
        %v3881 = vrot.slane %v3856, 4
        %v3882 = vrot.slane %v3858, 4
        %v3883 = vrot.slane %v3860, 4
        %v3884 = vrot.slane %v3862, 4
        %v3885 = vrot.slane %v3864, 4
        %v3886 = vrot.slane %v3866, 4
        %v3887 = vrot.slane %v3868, 4
        %v3888 = vrot.slane %v3870, 4
        %v3889 = vrot.slane %v3872, 4
        %v3890 = vrot.slane %v3874, 4
        %3891 = vrot.lane.b32.xlu0 %v3200, 64
        %v3892 = vpop.permute.xlu0 %3891
        %3893 = vrot.lane.b32.xlu0 %v3201, 64
        %v3894 = vpop.permute.xlu0 %3893
        %3895 = vrot.lane.b32.xlu0 %v3202, 64
        %v3896 = vpop.permute.xlu0 %3895
        %3897 = vrot.lane.b32.xlu0 %v3203, 64
        %v3898 = vpop.permute.xlu0 %3897
        %3899 = vrot.lane.b32.xlu0 %v3204, 64
        %v3900 = vpop.permute.xlu0 %3899
        %3901 = vrot.lane.b32.xlu0 %v3205, 64
        %v3902 = vpop.permute.xlu0 %3901
        %3903 = vrot.lane.b32.xlu0 %v3206, 64
        %v3904 = vpop.permute.xlu0 %3903
        %3905 = vrot.lane.b32.xlu0 %v3207, 64
        %v3906 = vpop.permute.xlu0 %3905
        %v3907 = vunpack.c.l.b16 %v3875
        %v3908 = vunpack.c.l.b16 %v3876
        %v3909 = vunpack.c.l.b16 %v3877
        %v3910 = vunpack.c.l.b16 %v3878
        %v3911 = vunpack.c.l.b16 %v3879
        %v3912 = vunpack.c.l.b16 %v3880
        %v3913 = vunpack.c.l.b16 %v3881
        %v3914 = vunpack.c.l.b16 %v3882
        %v3915 = vunpack.c.l.b16 %v3883
        %v3916 = vunpack.c.l.b16 %v3884
        %v3917 = vunpack.c.l.b16 %v3885
        %v3918 = vunpack.c.l.b16 %v3886
        %v3919 = vunpack.c.l.b16 %v3887
        %v3920 = vunpack.c.l.b16 %v3888
        %v3921 = vunpack.c.l.b16 %v3889
        %v3922 = vunpack.c.l.b16 %v3890
        %v3923 = vpack.c.b16 %v3908, %v3907
        %v3924 = vpack.c.b16 %v3910, %v3909
        %v3925 = vpack.c.b16 %v3912, %v3911
        %v3926 = vpack.c.b16 %v3914, %v3913
        %v3927 = vpack.c.b16 %v3916, %v3915
        %v3928 = vpack.c.b16 %v3918, %v3917
        %v3929 = vpack.c.b16 %v3920, %v3919
        %v3930 = vpack.c.b16 %v3922, %v3921
        %v3932 = vsel %vm3232, %v3892, 0
        %v3935 = vsel %vm3232, %v3894, 0
        %v3938 = vsel %vm3232, %v3896, 0
        %v3941 = vsel %vm3232, %v3898, 0
        %v3944 = vsel %vm3232, %v3900, 0
        %v3947 = vsel %vm3232, %v3902, 0
        %v3950 = vsel %vm3232, %v3904, 0
        %v3953 = vsel %vm3232, %v3906, 0
        %v3956 = vsel %vm3232, %v3923, 0
        %v3959 = vsel %vm3232, %v3924, 0
        %v3962 = vsel %vm3232, %v3925, 0
        %v3965 = vsel %vm3232, %v3926, 0
        %v3968 = vsel %vm3232, %v3927, 0
        %v3971 = vsel %vm3232, %v3928, 0
        %v3974 = vsel %vm3232, %v3929, 0
        %v3977 = vsel %vm3232, %v3930, 0
        %3979 = vmatpush.bf16.xpose.msra.mxu0 %v3977
        %3980 = vmatpush.bf16.xpose.msra.mxu0 %v3974
        %3981 = vmatpush.bf16.xpose.msra.mxu0 %v3971
        %3982 = vmatpush.bf16.xpose.msra.mxu0 %v3968
        %3983 = vmatpush.bf16.xpose.msra.mxu0 %v3965
        %3984 = vmatpush.bf16.xpose.msra.mxu0 %v3962
        %3985 = vmatpush.bf16.xpose.msra.mxu0 %v3959
        %3986 = vmatpush.bf16.xpose.msra.mxu0 %v3956
        %3987 = vmatmul.bf16.gmra.mxu0 %v3932
        %v3988 = vpop.f32.mrf.mxu0
        %v3989 = vadd.f32 %v3120, %v3988
        %v3990 = vpop.f32.mrf.mxu0
        %v3991 = vadd.f32 %v3121, %v3990
        %3992 = vmatmul.bf16.gmra.mxu0 %v3935
        %v3993 = vpop.f32.mrf.mxu0
        %v3994 = vadd.f32 %v3122, %v3993
        %v3995 = vpop.f32.mrf.mxu0
        %v3996 = vadd.f32 %v3123, %v3995
        %3997 = vmatmul.bf16.gmra.mxu0 %v3938
        %v3998 = vpop.f32.mrf.mxu0
        %v3999 = vadd.f32 %v3124, %v3998
        %v4000 = vpop.f32.mrf.mxu0
        %v4001 = vadd.f32 %v3125, %v4000
        %4002 = vmatmul.bf16.gmra.mxu0 %v3941
        %v4003 = vpop.f32.mrf.mxu0
        %v4004 = vadd.f32 %v3126, %v4003
        %v4005 = vpop.f32.mrf.mxu0
        %v4006 = vadd.f32 %v3127, %v4005
        %4007 = vmatmul.bf16.gmra.mxu0 %v3944
        %v4008 = vpop.f32.mrf.mxu0
        %v4009 = vadd.f32 %v3128, %v4008
        %v4010 = vpop.f32.mrf.mxu0
        %v4011 = vadd.f32 %v3129, %v4010
        %4012 = vmatmul.bf16.gmra.mxu0 %v3947
        %v4013 = vpop.f32.mrf.mxu0
        %v4014 = vadd.f32 %v3130, %v4013
        %v4015 = vpop.f32.mrf.mxu0
        %v4016 = vadd.f32 %v3131, %v4015
        %4017 = vmatmul.bf16.gmra.mxu0 %v3950
        %v4018 = vpop.f32.mrf.mxu0
        %v4019 = vadd.f32 %v3132, %v4018
        %v4020 = vpop.f32.mrf.mxu0
        %v4021 = vadd.f32 %v3133, %v4020
        %4022 = vmatmul.bf16.gmra.mxu0 %v3953
        %v4023 = vpop.f32.mrf.mxu0
        %v4024 = vadd.f32 %v3134, %v4023
        %v4025 = vpop.f32.mrf.mxu0
        %v4026 = vadd.f32 %v3135, %v4025
        %4027 = vdwg.mxu0
        %4028 = vmax.xlane.f32.xlu0 %v3989
        %v4029 = vpop.xlane.xlu0 %4028
        %4030 = vmax.xlane.f32.xlu0 %v3991
        %v4031 = vpop.xlane.xlu0 %4030
        %4032 = vmax.xlane.f32.xlu0 %v3994
        %v4033 = vpop.xlane.xlu0 %4032
        %4034 = vmax.xlane.f32.xlu0 %v3996
        %v4035 = vpop.xlane.xlu0 %4034
        %4036 = vmax.xlane.f32.xlu0 %v3999
        %v4037 = vpop.xlane.xlu0 %4036
        %4038 = vmax.xlane.f32.xlu0 %v4001
        %v4039 = vpop.xlane.xlu0 %4038
        %4040 = vmax.xlane.f32.xlu0 %v4004
        %v4041 = vpop.xlane.xlu0 %4040
        %4042 = vmax.xlane.f32.xlu0 %v4006
        %v4043 = vpop.xlane.xlu0 %4042
        %4044 = vmax.xlane.f32.xlu0 %v4009
        %v4045 = vpop.xlane.xlu0 %4044
        %4046 = vmax.xlane.f32.xlu0 %v4011
        %v4047 = vpop.xlane.xlu0 %4046
        %4048 = vmax.xlane.f32.xlu0 %v4014
        %v4049 = vpop.xlane.xlu0 %4048
        %4050 = vmax.xlane.f32.xlu0 %v4016
        %v4051 = vpop.xlane.xlu0 %4050
        %4052 = vmax.xlane.f32.xlu0 %v4019
        %v4053 = vpop.xlane.xlu0 %4052
        %4054 = vmax.xlane.f32.xlu0 %v4021
        %v4055 = vpop.xlane.xlu0 %4054
        %4056 = vmax.xlane.f32.xlu0 %v4024
        %v4057 = vpop.xlane.xlu0 %4056
        %4058 = vmax.xlane.f32.xlu0 %v4026
        %v4059 = vpop.xlane.xlu0 %4058
        %v4060 = vsub.f32 %v3989, %v4029
        %v4061 = vsub.f32 %v3991, %v4031
        %v4062 = vsub.f32 %v3994, %v4033
        %v4063 = vsub.f32 %v3996, %v4035
        %v4064 = vsub.f32 %v3999, %v4037
        %v4065 = vsub.f32 %v4001, %v4039
        %v4066 = vsub.f32 %v4004, %v4041
        %v4067 = vsub.f32 %v4006, %v4043
        %v4068 = vsub.f32 %v4009, %v4045
        %v4069 = vsub.f32 %v4011, %v4047
        %v4070 = vsub.f32 %v4014, %v4049
        %v4071 = vsub.f32 %v4016, %v4051
        %v4072 = vsub.f32 %v4019, %v4053
        %v4073 = vsub.f32 %v4021, %v4055
        %v4074 = vsub.f32 %v4024, %v4057
        %v4075 = vsub.f32 %v4026, %v4059
        %v4076 = vmul.f32 %v4060, 1.442695
        %v4077 = vpow.pop %v4076
        %v4078 = vmul.f32 %v4061, 1.442695
        %v4079 = vpow.pop %v4078
        %v4080 = vmul.f32 %v4062, 1.442695
        %v4081 = vpow.pop %v4080
        %v4082 = vmul.f32 %v4063, 1.442695
        %v4083 = vpow.pop %v4082
        %v4084 = vmul.f32 %v4064, 1.442695
        %v4085 = vpow.pop %v4084
        %v4086 = vmul.f32 %v4065, 1.442695
        %v4087 = vpow.pop %v4086
        %v4088 = vmul.f32 %v4066, 1.442695
        %v4089 = vpow.pop %v4088
        %v4090 = vmul.f32 %v4067, 1.442695
        %v4091 = vpow.pop %v4090
        %v4092 = vmul.f32 %v4068, 1.442695
        %v4093 = vpow.pop %v4092
        %v4094 = vmul.f32 %v4069, 1.442695
        %v4095 = vpow.pop %v4094
        %v4096 = vmul.f32 %v4070, 1.442695
        %v4097 = vpow.pop %v4096
        %v4098 = vmul.f32 %v4071, 1.442695
        %v4099 = vpow.pop %v4098
        %v4100 = vmul.f32 %v4072, 1.442695
        %v4101 = vpow.pop %v4100
        %v4102 = vmul.f32 %v4073, 1.442695
        %v4103 = vpow.pop %v4102
        %v4104 = vmul.f32 %v4074, 1.442695
        %v4105 = vpow.pop %v4104
        %v4106 = vmul.f32 %v4075, 1.442695
        %v4107 = vpow.pop %v4106
        %4108 = vadd.xlane.f32.xlu0 %v4077
        %v4109 = vpop.xlane.xlu0 %4108
        %4110 = vadd.xlane.f32.xlu0 %v4079
        %v4111 = vpop.xlane.xlu0 %4110
        %4112 = vadd.xlane.f32.xlu0 %v4081
        %v4113 = vpop.xlane.xlu0 %4112
        %4114 = vadd.xlane.f32.xlu0 %v4083
        %v4115 = vpop.xlane.xlu0 %4114
        %4116 = vadd.xlane.f32.xlu0 %v4085
        %v4117 = vpop.xlane.xlu0 %4116
        %4118 = vadd.xlane.f32.xlu0 %v4087
        %v4119 = vpop.xlane.xlu0 %4118
        %4120 = vadd.xlane.f32.xlu0 %v4089
        %v4121 = vpop.xlane.xlu0 %4120
        %4122 = vadd.xlane.f32.xlu0 %v4091
        %v4123 = vpop.xlane.xlu0 %4122
        %4124 = vadd.xlane.f32.xlu0 %v4093
        %v4125 = vpop.xlane.xlu0 %4124
        %4126 = vadd.xlane.f32.xlu0 %v4095
        %v4127 = vpop.xlane.xlu0 %4126
        %4128 = vadd.xlane.f32.xlu0 %v4097
        %v4129 = vpop.xlane.xlu0 %4128
        %4130 = vadd.xlane.f32.xlu0 %v4099
        %v4131 = vpop.xlane.xlu0 %4130
        %4132 = vadd.xlane.f32.xlu0 %v4101
        %v4133 = vpop.xlane.xlu0 %4132
        %4134 = vadd.xlane.f32.xlu0 %v4103
        %v4135 = vpop.xlane.xlu0 %4134
        %4136 = vadd.xlane.f32.xlu0 %v4105
        %v4137 = vpop.xlane.xlu0 %4136
        %4138 = vadd.xlane.f32.xlu0 %v4107
        %v4139 = vpop.xlane.xlu0 %4138
        %v4140 = vrcp.pop %v4109
        %v4141 = vmul.f32 %v4109, %v4140
        %v4142 = vsub.f32 1.0, %v4141
        %v4143 = vmul.f32 %v4140, %v4142
        %v4144 = vadd.f32 %v4140, %v4143
        %vm4145 = vweird.f32 %v4109
        %vm4146 = vweird.f32 %v4140
        %vm4147 = vmor %vm4145, %vm4146
        %v4148 = vsel %vm4147, %v4140, %v4144
        %v4149 = vand.u32 2147483647, %v4109
        %vm4150 = vcmp.eq.f32.partialorder %v4149, 8.507059e+37
        %v4151 = vand.u32 %v4109, 2147483648
        %v4152 = vor.u32 1.1754944e-38, %v4151
        %v4153 = vsel %vm4150, %v4152, %v4148
        %v4154 = vrcp.pop %v4111
        %v4155 = vmul.f32 %v4111, %v4154
        %v4156 = vsub.f32 1.0, %v4155
        %v4157 = vmul.f32 %v4154, %v4156
        %v4158 = vadd.f32 %v4154, %v4157
        %vm4159 = vweird.f32 %v4111
        %vm4160 = vweird.f32 %v4154
        %vm4161 = vmor %vm4159, %vm4160
        %v4162 = vsel %vm4161, %v4154, %v4158
        %v4163 = vand.u32 2147483647, %v4111
        %vm4164 = vcmp.eq.f32.partialorder %v4163, 8.507059e+37
        %v4165 = vand.u32 %v4111, 2147483648
        %v4166 = vor.u32 1.1754944e-38, %v4165
        %v4167 = vsel %vm4164, %v4166, %v4162
        %v4168 = vrcp.pop %v4113
        %v4169 = vmul.f32 %v4113, %v4168
        %v4170 = vsub.f32 1.0, %v4169
        %v4171 = vmul.f32 %v4168, %v4170
        %v4172 = vadd.f32 %v4168, %v4171
        %vm4173 = vweird.f32 %v4113
        %vm4174 = vweird.f32 %v4168
        %vm4175 = vmor %vm4173, %vm4174
        %v4176 = vsel %vm4175, %v4168, %v4172
        %v4177 = vand.u32 2147483647, %v4113
        %vm4178 = vcmp.eq.f32.partialorder %v4177, 8.507059e+37
        %v4179 = vand.u32 %v4113, 2147483648
        %v4180 = vor.u32 1.1754944e-38, %v4179
        %v4181 = vsel %vm4178, %v4180, %v4176
        %v4182 = vrcp.pop %v4115
        %v4183 = vmul.f32 %v4115, %v4182
        %v4184 = vsub.f32 1.0, %v4183
        %v4185 = vmul.f32 %v4182, %v4184
        %v4186 = vadd.f32 %v4182, %v4185
        %vm4187 = vweird.f32 %v4115
        %vm4188 = vweird.f32 %v4182
        %vm4189 = vmor %vm4187, %vm4188
        %v4190 = vsel %vm4189, %v4182, %v4186
        %v4191 = vand.u32 2147483647, %v4115
        %vm4192 = vcmp.eq.f32.partialorder %v4191, 8.507059e+37
        %v4193 = vand.u32 %v4115, 2147483648
        %v4194 = vor.u32 1.1754944e-38, %v4193
        %v4195 = vsel %vm4192, %v4194, %v4190
        %v4196 = vrcp.pop %v4117
        %v4197 = vmul.f32 %v4117, %v4196
        %v4198 = vsub.f32 1.0, %v4197
        %v4199 = vmul.f32 %v4196, %v4198
        %v4200 = vadd.f32 %v4196, %v4199
        %vm4201 = vweird.f32 %v4117
        %vm4202 = vweird.f32 %v4196
        %vm4203 = vmor %vm4201, %vm4202
        %v4204 = vsel %vm4203, %v4196, %v4200
        %v4205 = vand.u32 2147483647, %v4117
        %vm4206 = vcmp.eq.f32.partialorder %v4205, 8.507059e+37
        %v4207 = vand.u32 %v4117, 2147483648
        %v4208 = vor.u32 1.1754944e-38, %v4207
        %v4209 = vsel %vm4206, %v4208, %v4204
        %v4210 = vrcp.pop %v4119
        %v4211 = vmul.f32 %v4119, %v4210
        %v4212 = vsub.f32 1.0, %v4211
        %v4213 = vmul.f32 %v4210, %v4212
        %v4214 = vadd.f32 %v4210, %v4213
        %vm4215 = vweird.f32 %v4119
        %vm4216 = vweird.f32 %v4210
        %vm4217 = vmor %vm4215, %vm4216
        %v4218 = vsel %vm4217, %v4210, %v4214
        %v4219 = vand.u32 2147483647, %v4119
        %vm4220 = vcmp.eq.f32.partialorder %v4219, 8.507059e+37
        %v4221 = vand.u32 %v4119, 2147483648
        %v4222 = vor.u32 1.1754944e-38, %v4221
        %v4223 = vsel %vm4220, %v4222, %v4218
        %v4224 = vrcp.pop %v4121
        %v4225 = vmul.f32 %v4121, %v4224
        %v4226 = vsub.f32 1.0, %v4225
        %v4227 = vmul.f32 %v4224, %v4226
        %v4228 = vadd.f32 %v4224, %v4227
        %vm4229 = vweird.f32 %v4121
        %vm4230 = vweird.f32 %v4224
        %vm4231 = vmor %vm4229, %vm4230
        %v4232 = vsel %vm4231, %v4224, %v4228
        %v4233 = vand.u32 2147483647, %v4121
        %vm4234 = vcmp.eq.f32.partialorder %v4233, 8.507059e+37
        %v4235 = vand.u32 %v4121, 2147483648
        %v4236 = vor.u32 1.1754944e-38, %v4235
        %v4237 = vsel %vm4234, %v4236, %v4232
        %v4238 = vrcp.pop %v4123
        %v4239 = vmul.f32 %v4123, %v4238
        %v4240 = vsub.f32 1.0, %v4239
        %v4241 = vmul.f32 %v4238, %v4240
        %v4242 = vadd.f32 %v4238, %v4241
        %vm4243 = vweird.f32 %v4123
        %vm4244 = vweird.f32 %v4238
        %vm4245 = vmor %vm4243, %vm4244
        %v4246 = vsel %vm4245, %v4238, %v4242
        %v4247 = vand.u32 2147483647, %v4123
        %vm4248 = vcmp.eq.f32.partialorder %v4247, 8.507059e+37
        %v4249 = vand.u32 %v4123, 2147483648
        %v4250 = vor.u32 1.1754944e-38, %v4249
        %v4251 = vsel %vm4248, %v4250, %v4246
        %v4252 = vrcp.pop %v4125
        %v4253 = vmul.f32 %v4125, %v4252
        %v4254 = vsub.f32 1.0, %v4253
        %v4255 = vmul.f32 %v4252, %v4254
        %v4256 = vadd.f32 %v4252, %v4255
        %vm4257 = vweird.f32 %v4125
        %vm4258 = vweird.f32 %v4252
        %vm4259 = vmor %vm4257, %vm4258
        %v4260 = vsel %vm4259, %v4252, %v4256
        %v4261 = vand.u32 2147483647, %v4125
        %vm4262 = vcmp.eq.f32.partialorder %v4261, 8.507059e+37
        %v4263 = vand.u32 %v4125, 2147483648
        %v4264 = vor.u32 1.1754944e-38, %v4263
        %v4265 = vsel %vm4262, %v4264, %v4260
        %v4266 = vrcp.pop %v4127
        %v4267 = vmul.f32 %v4127, %v4266
        %v4268 = vsub.f32 1.0, %v4267
        %v4269 = vmul.f32 %v4266, %v4268
        %v4270 = vadd.f32 %v4266, %v4269
        %vm4271 = vweird.f32 %v4127
        %vm4272 = vweird.f32 %v4266
        %vm4273 = vmor %vm4271, %vm4272
        %v4274 = vsel %vm4273, %v4266, %v4270
        %v4275 = vand.u32 2147483647, %v4127
        %vm4276 = vcmp.eq.f32.partialorder %v4275, 8.507059e+37
        %v4277 = vand.u32 %v4127, 2147483648
        %v4278 = vor.u32 1.1754944e-38, %v4277
        %v4279 = vsel %vm4276, %v4278, %v4274
        %v4280 = vrcp.pop %v4129
        %v4281 = vmul.f32 %v4129, %v4280
        %v4282 = vsub.f32 1.0, %v4281
        %v4283 = vmul.f32 %v4280, %v4282
        %v4284 = vadd.f32 %v4280, %v4283
        %vm4285 = vweird.f32 %v4129
        %vm4286 = vweird.f32 %v4280
        %vm4287 = vmor %vm4285, %vm4286
        %v4288 = vsel %vm4287, %v4280, %v4284
        %v4289 = vand.u32 2147483647, %v4129
        %vm4290 = vcmp.eq.f32.partialorder %v4289, 8.507059e+37
        %v4291 = vand.u32 %v4129, 2147483648
        %v4292 = vor.u32 1.1754944e-38, %v4291
        %v4293 = vsel %vm4290, %v4292, %v4288
        %v4294 = vrcp.pop %v4131
        %v4295 = vmul.f32 %v4131, %v4294
        %v4296 = vsub.f32 1.0, %v4295
        %v4297 = vmul.f32 %v4294, %v4296
        %v4298 = vadd.f32 %v4294, %v4297
        %vm4299 = vweird.f32 %v4131
        %vm4300 = vweird.f32 %v4294
        %vm4301 = vmor %vm4299, %vm4300
        %v4302 = vsel %vm4301, %v4294, %v4298
        %v4303 = vand.u32 2147483647, %v4131
        %vm4304 = vcmp.eq.f32.partialorder %v4303, 8.507059e+37
        %v4305 = vand.u32 %v4131, 2147483648
        %v4306 = vor.u32 1.1754944e-38, %v4305
        %v4307 = vsel %vm4304, %v4306, %v4302
        %v4308 = vrcp.pop %v4133
        %v4309 = vmul.f32 %v4133, %v4308
        %v4310 = vsub.f32 1.0, %v4309
        %v4311 = vmul.f32 %v4308, %v4310
        %v4312 = vadd.f32 %v4308, %v4311
        %vm4313 = vweird.f32 %v4133
        %vm4314 = vweird.f32 %v4308
        %vm4315 = vmor %vm4313, %vm4314
        %v4316 = vsel %vm4315, %v4308, %v4312
        %v4317 = vand.u32 2147483647, %v4133
        %vm4318 = vcmp.eq.f32.partialorder %v4317, 8.507059e+37
        %v4319 = vand.u32 %v4133, 2147483648
        %v4320 = vor.u32 1.1754944e-38, %v4319
        %v4321 = vsel %vm4318, %v4320, %v4316
        %v4322 = vrcp.pop %v4135
        %v4323 = vmul.f32 %v4135, %v4322
        %v4324 = vsub.f32 1.0, %v4323
        %v4325 = vmul.f32 %v4322, %v4324
        %v4326 = vadd.f32 %v4322, %v4325
        %vm4327 = vweird.f32 %v4135
        %vm4328 = vweird.f32 %v4322
        %vm4329 = vmor %vm4327, %vm4328
        %v4330 = vsel %vm4329, %v4322, %v4326
        %v4331 = vand.u32 2147483647, %v4135
        %vm4332 = vcmp.eq.f32.partialorder %v4331, 8.507059e+37
        %v4333 = vand.u32 %v4135, 2147483648
        %v4334 = vor.u32 1.1754944e-38, %v4333
        %v4335 = vsel %vm4332, %v4334, %v4330
        %v4336 = vrcp.pop %v4137
        %v4337 = vmul.f32 %v4137, %v4336
        %v4338 = vsub.f32 1.0, %v4337
        %v4339 = vmul.f32 %v4336, %v4338
        %v4340 = vadd.f32 %v4336, %v4339
        %vm4341 = vweird.f32 %v4137
        %vm4342 = vweird.f32 %v4336
        %vm4343 = vmor %vm4341, %vm4342
        %v4344 = vsel %vm4343, %v4336, %v4340
        %v4345 = vand.u32 2147483647, %v4137
        %vm4346 = vcmp.eq.f32.partialorder %v4345, 8.507059e+37
        %v4347 = vand.u32 %v4137, 2147483648
        %v4348 = vor.u32 1.1754944e-38, %v4347
        %v4349 = vsel %vm4346, %v4348, %v4344
        %v4350 = vrcp.pop %v4139
        %v4351 = vmul.f32 %v4139, %v4350
        %v4352 = vsub.f32 1.0, %v4351
        %v4353 = vmul.f32 %v4350, %v4352
        %v4354 = vadd.f32 %v4350, %v4353
        %vm4355 = vweird.f32 %v4139
        %vm4356 = vweird.f32 %v4350
        %vm4357 = vmor %vm4355, %vm4356
        %v4358 = vsel %vm4357, %v4350, %v4354
        %v4359 = vand.u32 2147483647, %v4139
        %vm4360 = vcmp.eq.f32.partialorder %v4359, 8.507059e+37
        %v4361 = vand.u32 %v4139, 2147483648
        %v4362 = vor.u32 1.1754944e-38, %v4361
        %v4363 = vsel %vm4360, %v4362, %v4358
        %v4364 = vmul.f32 %v4077, %v4153
        %v4365 = vmul.f32 %v4079, %v4167
        %v4366 = vmul.f32 %v4081, %v4181
        %v4367 = vmul.f32 %v4083, %v4195
        %v4368 = vmul.f32 %v4085, %v4209
        %v4369 = vmul.f32 %v4087, %v4223
        %v4370 = vmul.f32 %v4089, %v4237
        %v4371 = vmul.f32 %v4091, %v4251
        %v4372 = vmul.f32 %v4093, %v4265
        %v4373 = vmul.f32 %v4095, %v4279
        %v4374 = vmul.f32 %v4097, %v4293
        %v4375 = vmul.f32 %v4099, %v4307
        %v4376 = vmul.f32 %v4101, %v4321
        %v4377 = vmul.f32 %v4103, %v4335
        %v4378 = vmul.f32 %v4105, %v4349
        %v4379 = vmul.f32 %v4107, %v4363
        %v4380 = vpack.c.bf16 %v4364, %v4364
        %v4381 = vpack.c.bf16 %v4365, %v4365
        %v4382 = vpack.c.bf16 %v4366, %v4366
        %v4383 = vpack.c.bf16 %v4367, %v4367
        %v4384 = vpack.c.bf16 %v4368, %v4368
        %v4385 = vpack.c.bf16 %v4369, %v4369
        %v4386 = vpack.c.bf16 %v4370, %v4370
        %v4387 = vpack.c.bf16 %v4371, %v4371
        %v4388 = vpack.c.bf16 %v4372, %v4372
        %v4389 = vpack.c.bf16 %v4373, %v4373
        %v4390 = vpack.c.bf16 %v4374, %v4374
        %v4391 = vpack.c.bf16 %v4375, %v4375
        %v4392 = vpack.c.bf16 %v4376, %v4376
        %v4393 = vpack.c.bf16 %v4377, %v4377
        %v4394 = vpack.c.bf16 %v4378, %v4378
        %v4395 = vpack.c.bf16 %v4379, %v4379
        %v4412 = vunpack.c.l.b16 %v4380
        %v4413 = vunpack.c.l.b16 %v4381
        %v4414 = vunpack.c.l.b16 %v4382
        %v4415 = vunpack.c.l.b16 %v4383
        %v4416 = vunpack.c.l.b16 %v4384
        %v4417 = vunpack.c.l.b16 %v4385
        %v4418 = vunpack.c.l.b16 %v4386
        %v4419 = vunpack.c.l.b16 %v4387
        %v4420 = vunpack.c.l.b16 %v4388
        %v4421 = vunpack.c.l.b16 %v4389
        %v4422 = vunpack.c.l.b16 %v4390
        %v4423 = vunpack.c.l.b16 %v4391
        %v4424 = vunpack.c.l.b16 %v4392
        %v4425 = vunpack.c.l.b16 %v4393
        %v4426 = vunpack.c.l.b16 %v4394
        %v4427 = vunpack.c.l.b16 %v4395
        %v4428 = vpack.c.b16 %v4413, %v4412
        %v4429 = vpack.c.b16 %v4415, %v4414
        %v4430 = vpack.c.b16 %v4417, %v4416
        %v4431 = vpack.c.b16 %v4419, %v4418
        %v4432 = vpack.c.b16 %v4421, %v4420
        %v4433 = vpack.c.b16 %v4423, %v4422
        %v4434 = vpack.c.b16 %v4425, %v4424
        %v4435 = vpack.c.b16 %v4427, %v4426
        %4444 = vrot.lane.b32.xlu0 %v3778, 64
        %v4445 = vpop.permute.xlu0 %4444
        %4446 = vrot.lane.b32.xlu0 %v3779, 64
        %v4447 = vpop.permute.xlu0 %4446
        %4448 = vrot.lane.b32.xlu0 %v3780, 64
        %v4449 = vpop.permute.xlu0 %4448
        %4450 = vrot.lane.b32.xlu0 %v3781, 64
        %v4451 = vpop.permute.xlu0 %4450
        %4452 = vrot.lane.b32.xlu0 %v3782, 64
        %v4453 = vpop.permute.xlu0 %4452
        %4454 = vrot.lane.b32.xlu0 %v3783, 64
        %v4455 = vpop.permute.xlu0 %4454
        %4456 = vrot.lane.b32.xlu0 %v3784, 64
        %v4457 = vpop.permute.xlu0 %4456
        %4458 = vrot.lane.b32.xlu0 %v3785, 64
        %v4459 = vpop.permute.xlu0 %4458
        %4468 = vmatpush.bf16.msra.mxu0 %v4459
        %4469 = vmatpush.bf16.msra.mxu0 %v4457
        %4470 = vmatpush.bf16.msra.mxu0 %v4455
        %4471 = vmatpush.bf16.msra.mxu0 %v4453
        %4472 = vmatpush.bf16.msra.mxu0 %v4451
        %4473 = vmatpush.bf16.msra.mxu0 %v4449
        %4474 = vmatpush.bf16.msra.mxu0 %v4447
        %4475 = vmatpush.bf16.msra.mxu0 %v4445
        %4476 = vmatmul.bf16.gmra.mxu0 %v4428
        %v4477 = vpop.f32.mrf.mxu0
        %v4478 = vadd.f32 0.0, %v4477
        %v4479 = vpop.f32.mrf.mxu0
        %v4480 = vadd.f32 0.0, %v4479
        %4481 = vmatmul.bf16.gmra.mxu0 %v4429
        %v4482 = vpop.f32.mrf.mxu0
        %v4483 = vadd.f32 0.0, %v4482
        %v4484 = vpop.f32.mrf.mxu0
        %v4485 = vadd.f32 0.0, %v4484
        %4486 = vmatmul.bf16.gmra.mxu0 %v4430
        %v4487 = vpop.f32.mrf.mxu0
        %v4488 = vadd.f32 0.0, %v4487
        %v4489 = vpop.f32.mrf.mxu0
        %v4490 = vadd.f32 0.0, %v4489
        %4491 = vmatmul.bf16.gmra.mxu0 %v4431
        %v4492 = vpop.f32.mrf.mxu0
        %v4493 = vadd.f32 0.0, %v4492
        %v4494 = vpop.f32.mrf.mxu0
        %v4495 = vadd.f32 0.0, %v4494
        %4496 = vmatmul.bf16.gmra.mxu0 %v4432
        %v4497 = vpop.f32.mrf.mxu0
        %v4498 = vadd.f32 0.0, %v4497
        %v4499 = vpop.f32.mrf.mxu0
        %v4500 = vadd.f32 0.0, %v4499
        %4501 = vmatmul.bf16.gmra.mxu0 %v4433
        %v4502 = vpop.f32.mrf.mxu0
        %v4503 = vadd.f32 0.0, %v4502
        %v4504 = vpop.f32.mrf.mxu0
        %v4505 = vadd.f32 0.0, %v4504
        %4506 = vmatmul.bf16.gmra.mxu0 %v4434
        %v4507 = vpop.f32.mrf.mxu0
        %v4508 = vadd.f32 0.0, %v4507
        %v4509 = vpop.f32.mrf.mxu0
        %v4510 = vadd.f32 0.0, %v4509
        %4511 = vmatmul.bf16.gmra.mxu0 %v4435
        %v4512 = vpop.f32.mrf.mxu0
        %v4513 = vadd.f32 0.0, %v4512
        %v4514 = vpop.f32.mrf.mxu0
        %v4515 = vadd.f32 0.0, %v4514
        %4516 = vdwg.mxu0
        %v4517 = vrot.slane %v3005, 4
        %v4518 = vrot.slane %v3010, 4
        %v4519 = vrot.slane %v3015, 4
        %v4520 = vrot.slane %v3020, 4
        %v4521 = vrot.slane %v3025, 4
        %v4522 = vrot.slane %v3030, 4
        %v4523 = vrot.slane %v3035, 4
        %v4524 = vrot.slane %v3040, 4
        %v4525 = vrot.slane %v3045, 4
        %v4526 = vrot.slane %v3050, 4
        %v4527 = vrot.slane %v3055, 4
        %v4528 = vrot.slane %v3060, 4
        %v4529 = vrot.slane %v3065, 4
        %v4530 = vrot.slane %v3070, 4
        %v4531 = vrot.slane %v3075, 4
        %v4532 = vrot.slane %v3080, 4
        %v4533 = vunpack.c.l.b16 %v4517
        %v4534 = vunpack.c.l.b16 %v4518
        %v4535 = vunpack.c.l.b16 %v4519
        %v4536 = vunpack.c.l.b16 %v4520
        %v4537 = vunpack.c.l.b16 %v4521
        %v4538 = vunpack.c.l.b16 %v4522
        %v4539 = vunpack.c.l.b16 %v4523
        %v4540 = vunpack.c.l.b16 %v4524
        %v4541 = vunpack.c.l.b16 %v4525
        %v4542 = vunpack.c.l.b16 %v4526
        %v4543 = vunpack.c.l.b16 %v4527
        %v4544 = vunpack.c.l.b16 %v4528
        %v4545 = vunpack.c.l.b16 %v4529
        %v4546 = vunpack.c.l.b16 %v4530
        %v4547 = vunpack.c.l.b16 %v4531
        %v4548 = vunpack.c.l.b16 %v4532
        %v4549 = vpack.c.b16 %v4534, %v4533
        %v4550 = vpack.c.b16 %v4536, %v4535
        %v4551 = vpack.c.b16 %v4538, %v4537
        %v4552 = vpack.c.b16 %v4540, %v4539
        %v4553 = vpack.c.b16 %v4542, %v4541
        %v4554 = vpack.c.b16 %v4544, %v4543
        %v4555 = vpack.c.b16 %v4546, %v4545
        %v4556 = vpack.c.b16 %v4548, %v4547
        %v4573 = vunpack.c.l.b16 %v3007
        %v4574 = vunpack.c.l.b16 %v3012
        %v4575 = vunpack.c.l.b16 %v3017
        %v4576 = vunpack.c.l.b16 %v3022
        %v4577 = vunpack.c.l.b16 %v3027
        %v4578 = vunpack.c.l.b16 %v3032
        %v4579 = vunpack.c.l.b16 %v3037
        %v4580 = vunpack.c.l.b16 %v3042
        %v4581 = vunpack.c.l.b16 %v3047
        %v4582 = vunpack.c.l.b16 %v3052
        %v4583 = vunpack.c.l.b16 %v3057
        %v4584 = vunpack.c.l.b16 %v3062
        %v4585 = vunpack.c.l.b16 %v3067
        %v4586 = vunpack.c.l.b16 %v3072
        %v4587 = vunpack.c.l.b16 %v3077
        %v4588 = vunpack.c.l.b16 %v3082
        %v4589 = vpack.c.b16 %v4574, %v4573
        %v4590 = vpack.c.b16 %v4576, %v4575
        %v4591 = vpack.c.b16 %v4578, %v4577
        %v4592 = vpack.c.b16 %v4580, %v4579
        %v4593 = vpack.c.b16 %v4582, %v4581
        %v4594 = vpack.c.b16 %v4584, %v4583
        %v4595 = vpack.c.b16 %v4586, %v4585
        %v4596 = vpack.c.b16 %v4588, %v4587
        %v4598 = vsel %vm3232, %v4549, 0
        %v4601 = vsel %vm3232, %v4550, 0
        %v4604 = vsel %vm3232, %v4551, 0
        %v4607 = vsel %vm3232, %v4552, 0
        %v4610 = vsel %vm3232, %v4553, 0
        %v4613 = vsel %vm3232, %v4554, 0
        %v4616 = vsel %vm3232, %v4555, 0
        %v4619 = vsel %vm3232, %v4556, 0
        %v4622 = vsel %vm3232, %v4589, 0
        %v4625 = vsel %vm3232, %v4590, 0
        %v4628 = vsel %vm3232, %v4591, 0
        %v4631 = vsel %vm3232, %v4592, 0
        %v4634 = vsel %vm3232, %v4593, 0
        %v4637 = vsel %vm3232, %v4594, 0
        %v4640 = vsel %vm3232, %v4595, 0
        %v4643 = vsel %vm3232, %v4596, 0
        %4645 = vmatpush.bf16.xpose.msra.mxu0 %v4643
        %4646 = vmatpush.bf16.xpose.msra.mxu0 %v4640
        %4647 = vmatpush.bf16.xpose.msra.mxu0 %v4637
        %4648 = vmatpush.bf16.xpose.msra.mxu0 %v4634
        %4649 = vmatpush.bf16.xpose.msra.mxu0 %v4631
        %4650 = vmatpush.bf16.xpose.msra.mxu0 %v4628
        %4651 = vmatpush.bf16.xpose.msra.mxu0 %v4625
        %4652 = vmatpush.bf16.xpose.msra.mxu0 %v4622
        %4653 = vmatmul.bf16.gmra.mxu0 %v4598
        %v4654 = vpop.f32.mrf.mxu0
        %v4655 = vadd.f32 %v3120, %v4654
        %v4656 = vpop.f32.mrf.mxu0
        %v4657 = vadd.f32 %v3121, %v4656
        %4658 = vmatmul.bf16.gmra.mxu0 %v4601
        %v4659 = vpop.f32.mrf.mxu0
        %v4660 = vadd.f32 %v3122, %v4659
        %v4661 = vpop.f32.mrf.mxu0
        %v4662 = vadd.f32 %v3123, %v4661
        %4663 = vmatmul.bf16.gmra.mxu0 %v4604
        %v4664 = vpop.f32.mrf.mxu0
        %v4665 = vadd.f32 %v3124, %v4664
        %v4666 = vpop.f32.mrf.mxu0
        %v4667 = vadd.f32 %v3125, %v4666
        %4668 = vmatmul.bf16.gmra.mxu0 %v4607
        %v4669 = vpop.f32.mrf.mxu0
        %v4670 = vadd.f32 %v3126, %v4669
        %v4671 = vpop.f32.mrf.mxu0
        %v4672 = vadd.f32 %v3127, %v4671
        %4673 = vmatmul.bf16.gmra.mxu0 %v4610
        %v4674 = vpop.f32.mrf.mxu0
        %v4675 = vadd.f32 %v3128, %v4674
        %v4676 = vpop.f32.mrf.mxu0
        %v4677 = vadd.f32 %v3129, %v4676
        %4678 = vmatmul.bf16.gmra.mxu0 %v4613
        %v4679 = vpop.f32.mrf.mxu0
        %v4680 = vadd.f32 %v3130, %v4679
        %v4681 = vpop.f32.mrf.mxu0
        %v4682 = vadd.f32 %v3131, %v4681
        %4683 = vmatmul.bf16.gmra.mxu0 %v4616
        %v4684 = vpop.f32.mrf.mxu0
        %v4685 = vadd.f32 %v3132, %v4684
        %v4686 = vpop.f32.mrf.mxu0
        %v4687 = vadd.f32 %v3133, %v4686
        %4688 = vmatmul.bf16.gmra.mxu0 %v4619
        %v4689 = vpop.f32.mrf.mxu0
        %v4690 = vadd.f32 %v3134, %v4689
        %v4691 = vpop.f32.mrf.mxu0
        %v4692 = vadd.f32 %v3135, %v4691
        %4693 = vdwg.mxu0
        %4694 = vmax.xlane.f32.xlu0 %v4655
        %v4695 = vpop.xlane.xlu0 %4694
        %4696 = vmax.xlane.f32.xlu0 %v4657
        %v4697 = vpop.xlane.xlu0 %4696
        %4698 = vmax.xlane.f32.xlu0 %v4660
        %v4699 = vpop.xlane.xlu0 %4698
        %4700 = vmax.xlane.f32.xlu0 %v4662
        %v4701 = vpop.xlane.xlu0 %4700
        %4702 = vmax.xlane.f32.xlu0 %v4665
        %v4703 = vpop.xlane.xlu0 %4702
        %4704 = vmax.xlane.f32.xlu0 %v4667
        %v4705 = vpop.xlane.xlu0 %4704
        %4706 = vmax.xlane.f32.xlu0 %v4670
        %v4707 = vpop.xlane.xlu0 %4706
        %4708 = vmax.xlane.f32.xlu0 %v4672
        %v4709 = vpop.xlane.xlu0 %4708
        %4710 = vmax.xlane.f32.xlu0 %v4675
        %v4711 = vpop.xlane.xlu0 %4710
        %4712 = vmax.xlane.f32.xlu0 %v4677
        %v4713 = vpop.xlane.xlu0 %4712
        %4714 = vmax.xlane.f32.xlu0 %v4680
        %v4715 = vpop.xlane.xlu0 %4714
        %4716 = vmax.xlane.f32.xlu0 %v4682
        %v4717 = vpop.xlane.xlu0 %4716
        %4718 = vmax.xlane.f32.xlu0 %v4685
        %v4719 = vpop.xlane.xlu0 %4718
        %4720 = vmax.xlane.f32.xlu0 %v4687
        %v4721 = vpop.xlane.xlu0 %4720
        %4722 = vmax.xlane.f32.xlu0 %v4690
        %v4723 = vpop.xlane.xlu0 %4722
        %4724 = vmax.xlane.f32.xlu0 %v4692
        %v4725 = vpop.xlane.xlu0 %4724
        %v4726 = vsub.f32 %v4655, %v4695
        %v4727 = vsub.f32 %v4657, %v4697
        %v4728 = vsub.f32 %v4660, %v4699
        %v4729 = vsub.f32 %v4662, %v4701
        %v4730 = vsub.f32 %v4665, %v4703
        %v4731 = vsub.f32 %v4667, %v4705
        %v4732 = vsub.f32 %v4670, %v4707
        %v4733 = vsub.f32 %v4672, %v4709
        %v4734 = vsub.f32 %v4675, %v4711
        %v4735 = vsub.f32 %v4677, %v4713
        %v4736 = vsub.f32 %v4680, %v4715
        %v4737 = vsub.f32 %v4682, %v4717
        %v4738 = vsub.f32 %v4685, %v4719
        %v4739 = vsub.f32 %v4687, %v4721
        %v4740 = vsub.f32 %v4690, %v4723
        %v4741 = vsub.f32 %v4692, %v4725
        %v4742 = vmul.f32 %v4726, 1.442695
        %v4743 = vpow.pop %v4742
        %v4744 = vmul.f32 %v4727, 1.442695
        %v4745 = vpow.pop %v4744
        %v4746 = vmul.f32 %v4728, 1.442695
        %v4747 = vpow.pop %v4746
        %v4748 = vmul.f32 %v4729, 1.442695
        %v4749 = vpow.pop %v4748
        %v4750 = vmul.f32 %v4730, 1.442695
        %v4751 = vpow.pop %v4750
        %v4752 = vmul.f32 %v4731, 1.442695
        %v4753 = vpow.pop %v4752
        %v4754 = vmul.f32 %v4732, 1.442695
        %v4755 = vpow.pop %v4754
        %v4756 = vmul.f32 %v4733, 1.442695
        %v4757 = vpow.pop %v4756
        %v4758 = vmul.f32 %v4734, 1.442695
        %v4759 = vpow.pop %v4758
        %v4760 = vmul.f32 %v4735, 1.442695
        %v4761 = vpow.pop %v4760
        %v4762 = vmul.f32 %v4736, 1.442695
        %v4763 = vpow.pop %v4762
        %v4764 = vmul.f32 %v4737, 1.442695
        %v4765 = vpow.pop %v4764
        %v4766 = vmul.f32 %v4738, 1.442695
        %v4767 = vpow.pop %v4766
        %v4768 = vmul.f32 %v4739, 1.442695
        %v4769 = vpow.pop %v4768
        %v4770 = vmul.f32 %v4740, 1.442695
        %v4771 = vpow.pop %v4770
        %v4772 = vmul.f32 %v4741, 1.442695
        %v4773 = vpow.pop %v4772
        %4774 = vadd.xlane.f32.xlu0 %v4743
        %v4775 = vpop.xlane.xlu0 %4774
        %4776 = vadd.xlane.f32.xlu0 %v4745
        %v4777 = vpop.xlane.xlu0 %4776
        %4778 = vadd.xlane.f32.xlu0 %v4747
        %v4779 = vpop.xlane.xlu0 %4778
        %4780 = vadd.xlane.f32.xlu0 %v4749
        %v4781 = vpop.xlane.xlu0 %4780
        %4782 = vadd.xlane.f32.xlu0 %v4751
        %v4783 = vpop.xlane.xlu0 %4782
        %4784 = vadd.xlane.f32.xlu0 %v4753
        %v4785 = vpop.xlane.xlu0 %4784
        %4786 = vadd.xlane.f32.xlu0 %v4755
        %v4787 = vpop.xlane.xlu0 %4786
        %4788 = vadd.xlane.f32.xlu0 %v4757
        %v4789 = vpop.xlane.xlu0 %4788
        %4790 = vadd.xlane.f32.xlu0 %v4759
        %v4791 = vpop.xlane.xlu0 %4790
        %4792 = vadd.xlane.f32.xlu0 %v4761
        %v4793 = vpop.xlane.xlu0 %4792
        %4794 = vadd.xlane.f32.xlu0 %v4763
        %v4795 = vpop.xlane.xlu0 %4794
        %4796 = vadd.xlane.f32.xlu0 %v4765
        %v4797 = vpop.xlane.xlu0 %4796
        %4798 = vadd.xlane.f32.xlu0 %v4767
        %v4799 = vpop.xlane.xlu0 %4798
        %4800 = vadd.xlane.f32.xlu0 %v4769
        %v4801 = vpop.xlane.xlu0 %4800
        %4802 = vadd.xlane.f32.xlu0 %v4771
        %v4803 = vpop.xlane.xlu0 %4802
        %4804 = vadd.xlane.f32.xlu0 %v4773
        %v4805 = vpop.xlane.xlu0 %4804
        %v4806 = vrcp.pop %v4775
        %v4807 = vmul.f32 %v4775, %v4806
        %v4808 = vsub.f32 1.0, %v4807
        %v4809 = vmul.f32 %v4806, %v4808
        %v4810 = vadd.f32 %v4806, %v4809
        %vm4811 = vweird.f32 %v4775
        %vm4812 = vweird.f32 %v4806
        %vm4813 = vmor %vm4811, %vm4812
        %v4814 = vsel %vm4813, %v4806, %v4810
        %v4815 = vand.u32 2147483647, %v4775
        %vm4816 = vcmp.eq.f32.partialorder %v4815, 8.507059e+37
        %v4817 = vand.u32 %v4775, 2147483648
        %v4818 = vor.u32 1.1754944e-38, %v4817
        %v4819 = vsel %vm4816, %v4818, %v4814
        %v4820 = vrcp.pop %v4777
        %v4821 = vmul.f32 %v4777, %v4820
        %v4822 = vsub.f32 1.0, %v4821
        %v4823 = vmul.f32 %v4820, %v4822
        %v4824 = vadd.f32 %v4820, %v4823
        %vm4825 = vweird.f32 %v4777
        %vm4826 = vweird.f32 %v4820
        %vm4827 = vmor %vm4825, %vm4826
        %v4828 = vsel %vm4827, %v4820, %v4824
        %v4829 = vand.u32 2147483647, %v4777
        %vm4830 = vcmp.eq.f32.partialorder %v4829, 8.507059e+37
        %v4831 = vand.u32 %v4777, 2147483648
        %v4832 = vor.u32 1.1754944e-38, %v4831
        %v4833 = vsel %vm4830, %v4832, %v4828
        %v4834 = vrcp.pop %v4779
        %v4835 = vmul.f32 %v4779, %v4834
        %v4836 = vsub.f32 1.0, %v4835
        %v4837 = vmul.f32 %v4834, %v4836
        %v4838 = vadd.f32 %v4834, %v4837
        %vm4839 = vweird.f32 %v4779
        %vm4840 = vweird.f32 %v4834
        %vm4841 = vmor %vm4839, %vm4840
        %v4842 = vsel %vm4841, %v4834, %v4838
        %v4843 = vand.u32 2147483647, %v4779
        %vm4844 = vcmp.eq.f32.partialorder %v4843, 8.507059e+37
        %v4845 = vand.u32 %v4779, 2147483648
        %v4846 = vor.u32 1.1754944e-38, %v4845
        %v4847 = vsel %vm4844, %v4846, %v4842
        %v4848 = vrcp.pop %v4781
        %v4849 = vmul.f32 %v4781, %v4848
        %v4850 = vsub.f32 1.0, %v4849
        %v4851 = vmul.f32 %v4848, %v4850
        %v4852 = vadd.f32 %v4848, %v4851
        %vm4853 = vweird.f32 %v4781
        %vm4854 = vweird.f32 %v4848
        %vm4855 = vmor %vm4853, %vm4854
        %v4856 = vsel %vm4855, %v4848, %v4852
        %v4857 = vand.u32 2147483647, %v4781
        %vm4858 = vcmp.eq.f32.partialorder %v4857, 8.507059e+37
        %v4859 = vand.u32 %v4781, 2147483648
        %v4860 = vor.u32 1.1754944e-38, %v4859
        %v4861 = vsel %vm4858, %v4860, %v4856
        %v4862 = vrcp.pop %v4783
        %v4863 = vmul.f32 %v4783, %v4862
        %v4864 = vsub.f32 1.0, %v4863
        %v4865 = vmul.f32 %v4862, %v4864
        %v4866 = vadd.f32 %v4862, %v4865
        %vm4867 = vweird.f32 %v4783
        %vm4868 = vweird.f32 %v4862
        %vm4869 = vmor %vm4867, %vm4868
        %v4870 = vsel %vm4869, %v4862, %v4866
        %v4871 = vand.u32 2147483647, %v4783
        %vm4872 = vcmp.eq.f32.partialorder %v4871, 8.507059e+37
        %v4873 = vand.u32 %v4783, 2147483648
        %v4874 = vor.u32 1.1754944e-38, %v4873
        %v4875 = vsel %vm4872, %v4874, %v4870
        %v4876 = vrcp.pop %v4785
        %v4877 = vmul.f32 %v4785, %v4876
        %v4878 = vsub.f32 1.0, %v4877
        %v4879 = vmul.f32 %v4876, %v4878
        %v4880 = vadd.f32 %v4876, %v4879
        %vm4881 = vweird.f32 %v4785
        %vm4882 = vweird.f32 %v4876
        %vm4883 = vmor %vm4881, %vm4882
        %v4884 = vsel %vm4883, %v4876, %v4880
        %v4885 = vand.u32 2147483647, %v4785
        %vm4886 = vcmp.eq.f32.partialorder %v4885, 8.507059e+37
        %v4887 = vand.u32 %v4785, 2147483648
        %v4888 = vor.u32 1.1754944e-38, %v4887
        %v4889 = vsel %vm4886, %v4888, %v4884
        %v4890 = vrcp.pop %v4787
        %v4891 = vmul.f32 %v4787, %v4890
        %v4892 = vsub.f32 1.0, %v4891
        %v4893 = vmul.f32 %v4890, %v4892
        %v4894 = vadd.f32 %v4890, %v4893
        %vm4895 = vweird.f32 %v4787
        %vm4896 = vweird.f32 %v4890
        %vm4897 = vmor %vm4895, %vm4896
        %v4898 = vsel %vm4897, %v4890, %v4894
        %v4899 = vand.u32 2147483647, %v4787
        %vm4900 = vcmp.eq.f32.partialorder %v4899, 8.507059e+37
        %v4901 = vand.u32 %v4787, 2147483648
        %v4902 = vor.u32 1.1754944e-38, %v4901
        %v4903 = vsel %vm4900, %v4902, %v4898
        %v4904 = vrcp.pop %v4789
        %v4905 = vmul.f32 %v4789, %v4904
        %v4906 = vsub.f32 1.0, %v4905
        %v4907 = vmul.f32 %v4904, %v4906
        %v4908 = vadd.f32 %v4904, %v4907
        %vm4909 = vweird.f32 %v4789
        %vm4910 = vweird.f32 %v4904
        %vm4911 = vmor %vm4909, %vm4910
        %v4912 = vsel %vm4911, %v4904, %v4908
        %v4913 = vand.u32 2147483647, %v4789
        %vm4914 = vcmp.eq.f32.partialorder %v4913, 8.507059e+37
        %v4915 = vand.u32 %v4789, 2147483648
        %v4916 = vor.u32 1.1754944e-38, %v4915
        %v4917 = vsel %vm4914, %v4916, %v4912
        %v4918 = vrcp.pop %v4791
        %v4919 = vmul.f32 %v4791, %v4918
        %v4920 = vsub.f32 1.0, %v4919
        %v4921 = vmul.f32 %v4918, %v4920
        %v4922 = vadd.f32 %v4918, %v4921
        %vm4923 = vweird.f32 %v4791
        %vm4924 = vweird.f32 %v4918
        %vm4925 = vmor %vm4923, %vm4924
        %v4926 = vsel %vm4925, %v4918, %v4922
        %v4927 = vand.u32 2147483647, %v4791
        %vm4928 = vcmp.eq.f32.partialorder %v4927, 8.507059e+37
        %v4929 = vand.u32 %v4791, 2147483648
        %v4930 = vor.u32 1.1754944e-38, %v4929
        %v4931 = vsel %vm4928, %v4930, %v4926
        %v4932 = vrcp.pop %v4793
        %v4933 = vmul.f32 %v4793, %v4932
        %v4934 = vsub.f32 1.0, %v4933
        %v4935 = vmul.f32 %v4932, %v4934
        %v4936 = vadd.f32 %v4932, %v4935
        %vm4937 = vweird.f32 %v4793
        %vm4938 = vweird.f32 %v4932
        %vm4939 = vmor %vm4937, %vm4938
        %v4940 = vsel %vm4939, %v4932, %v4936
        %v4941 = vand.u32 2147483647, %v4793
        %vm4942 = vcmp.eq.f32.partialorder %v4941, 8.507059e+37
        %v4943 = vand.u32 %v4793, 2147483648
        %v4944 = vor.u32 1.1754944e-38, %v4943
        %v4945 = vsel %vm4942, %v4944, %v4940
        %v4946 = vrcp.pop %v4795
        %v4947 = vmul.f32 %v4795, %v4946
        %v4948 = vsub.f32 1.0, %v4947
        %v4949 = vmul.f32 %v4946, %v4948
        %v4950 = vadd.f32 %v4946, %v4949
        %vm4951 = vweird.f32 %v4795
        %vm4952 = vweird.f32 %v4946
        %vm4953 = vmor %vm4951, %vm4952
        %v4954 = vsel %vm4953, %v4946, %v4950
        %v4955 = vand.u32 2147483647, %v4795
        %vm4956 = vcmp.eq.f32.partialorder %v4955, 8.507059e+37
        %v4957 = vand.u32 %v4795, 2147483648
        %v4958 = vor.u32 1.1754944e-38, %v4957
        %v4959 = vsel %vm4956, %v4958, %v4954
        %v4960 = vrcp.pop %v4797
        %v4961 = vmul.f32 %v4797, %v4960
        %v4962 = vsub.f32 1.0, %v4961
        %v4963 = vmul.f32 %v4960, %v4962
        %v4964 = vadd.f32 %v4960, %v4963
        %vm4965 = vweird.f32 %v4797
        %vm4966 = vweird.f32 %v4960
        %vm4967 = vmor %vm4965, %vm4966
        %v4968 = vsel %vm4967, %v4960, %v4964
        %v4969 = vand.u32 2147483647, %v4797
        %vm4970 = vcmp.eq.f32.partialorder %v4969, 8.507059e+37
        %v4971 = vand.u32 %v4797, 2147483648
        %v4972 = vor.u32 1.1754944e-38, %v4971
        %v4973 = vsel %vm4970, %v4972, %v4968
        %v4974 = vrcp.pop %v4799
        %v4975 = vmul.f32 %v4799, %v4974
        %v4976 = vsub.f32 1.0, %v4975
        %v4977 = vmul.f32 %v4974, %v4976
        %v4978 = vadd.f32 %v4974, %v4977
        %vm4979 = vweird.f32 %v4799
        %vm4980 = vweird.f32 %v4974
        %vm4981 = vmor %vm4979, %vm4980
        %v4982 = vsel %vm4981, %v4974, %v4978
        %v4983 = vand.u32 2147483647, %v4799
        %vm4984 = vcmp.eq.f32.partialorder %v4983, 8.507059e+37
        %v4985 = vand.u32 %v4799, 2147483648
        %v4986 = vor.u32 1.1754944e-38, %v4985
        %v4987 = vsel %vm4984, %v4986, %v4982
        %v4988 = vrcp.pop %v4801
        %v4989 = vmul.f32 %v4801, %v4988
        %v4990 = vsub.f32 1.0, %v4989
        %v4991 = vmul.f32 %v4988, %v4990
        %v4992 = vadd.f32 %v4988, %v4991
        %vm4993 = vweird.f32 %v4801
        %vm4994 = vweird.f32 %v4988
        %vm4995 = vmor %vm4993, %vm4994
        %v4996 = vsel %vm4995, %v4988, %v4992
        %v4997 = vand.u32 2147483647, %v4801
        %vm4998 = vcmp.eq.f32.partialorder %v4997, 8.507059e+37
        %v4999 = vand.u32 %v4801, 2147483648
        %v5000 = vor.u32 1.1754944e-38, %v4999
        %v5001 = vsel %vm4998, %v5000, %v4996
        %v5002 = vrcp.pop %v4803
        %v5003 = vmul.f32 %v4803, %v5002
        %v5004 = vsub.f32 1.0, %v5003
        %v5005 = vmul.f32 %v5002, %v5004
        %v5006 = vadd.f32 %v5002, %v5005
        %vm5007 = vweird.f32 %v4803
        %vm5008 = vweird.f32 %v5002
        %vm5009 = vmor %vm5007, %vm5008
        %v5010 = vsel %vm5009, %v5002, %v5006
        %v5011 = vand.u32 2147483647, %v4803
        %vm5012 = vcmp.eq.f32.partialorder %v5011, 8.507059e+37
        %v5013 = vand.u32 %v4803, 2147483648
        %v5014 = vor.u32 1.1754944e-38, %v5013
        %v5015 = vsel %vm5012, %v5014, %v5010
        %v5016 = vrcp.pop %v4805
        %v5017 = vmul.f32 %v4805, %v5016
        %v5018 = vsub.f32 1.0, %v5017
        %v5019 = vmul.f32 %v5016, %v5018
        %v5020 = vadd.f32 %v5016, %v5019
        %vm5021 = vweird.f32 %v4805
        %vm5022 = vweird.f32 %v5016
        %vm5023 = vmor %vm5021, %vm5022
        %v5024 = vsel %vm5023, %v5016, %v5020
        %v5025 = vand.u32 2147483647, %v4805
        %vm5026 = vcmp.eq.f32.partialorder %v5025, 8.507059e+37
        %v5027 = vand.u32 %v4805, 2147483648
        %v5028 = vor.u32 1.1754944e-38, %v5027
        %v5029 = vsel %vm5026, %v5028, %v5024
        %v5030 = vmul.f32 %v4743, %v4819
        %v5031 = vmul.f32 %v4745, %v4833
        %v5032 = vmul.f32 %v4747, %v4847
        %v5033 = vmul.f32 %v4749, %v4861
        %v5034 = vmul.f32 %v4751, %v4875
        %v5035 = vmul.f32 %v4753, %v4889
        %v5036 = vmul.f32 %v4755, %v4903
        %v5037 = vmul.f32 %v4757, %v4917
        %v5038 = vmul.f32 %v4759, %v4931
        %v5039 = vmul.f32 %v4761, %v4945
        %v5040 = vmul.f32 %v4763, %v4959
        %v5041 = vmul.f32 %v4765, %v4973
        %v5042 = vmul.f32 %v4767, %v4987
        %v5043 = vmul.f32 %v4769, %v5001
        %v5044 = vmul.f32 %v4771, %v5015
        %v5045 = vmul.f32 %v4773, %v5029
        %v5046 = vpack.c.bf16 %v5030, %v5030
        %v5047 = vpack.c.bf16 %v5031, %v5031
        %v5048 = vpack.c.bf16 %v5032, %v5032
        %v5049 = vpack.c.bf16 %v5033, %v5033
        %v5050 = vpack.c.bf16 %v5034, %v5034
        %v5051 = vpack.c.bf16 %v5035, %v5035
        %v5052 = vpack.c.bf16 %v5036, %v5036
        %v5053 = vpack.c.bf16 %v5037, %v5037
        %v5054 = vpack.c.bf16 %v5038, %v5038
        %v5055 = vpack.c.bf16 %v5039, %v5039
        %v5056 = vpack.c.bf16 %v5040, %v5040
        %v5057 = vpack.c.bf16 %v5041, %v5041
        %v5058 = vpack.c.bf16 %v5042, %v5042
        %v5059 = vpack.c.bf16 %v5043, %v5043
        %v5060 = vpack.c.bf16 %v5044, %v5044
        %v5061 = vpack.c.bf16 %v5045, %v5045
        %v5062 = vrot.slane %v3008, 4
        %v5063 = vrot.slane %v3013, 4
        %v5064 = vrot.slane %v3018, 4
        %v5065 = vrot.slane %v3023, 4
        %v5066 = vrot.slane %v3028, 4
        %v5067 = vrot.slane %v3033, 4
        %v5068 = vrot.slane %v3038, 4
        %v5069 = vrot.slane %v3043, 4
        %v5070 = vrot.slane %v3048, 4
        %v5071 = vrot.slane %v3053, 4
        %v5072 = vrot.slane %v3058, 4
        %v5073 = vrot.slane %v3063, 4
        %v5074 = vrot.slane %v3068, 4
        %v5075 = vrot.slane %v3073, 4
        %v5076 = vrot.slane %v3078, 4
        %v5077 = vrot.slane %v3083, 4
        %v5094 = vunpack.c.l.b16 %v5046
        %v5095 = vunpack.c.l.b16 %v5047
        %v5096 = vunpack.c.l.b16 %v5048
        %v5097 = vunpack.c.l.b16 %v5049
        %v5098 = vunpack.c.l.b16 %v5050
        %v5099 = vunpack.c.l.b16 %v5051
        %v5100 = vunpack.c.l.b16 %v5052
        %v5101 = vunpack.c.l.b16 %v5053
        %v5102 = vunpack.c.l.b16 %v5054
        %v5103 = vunpack.c.l.b16 %v5055
        %v5104 = vunpack.c.l.b16 %v5056
        %v5105 = vunpack.c.l.b16 %v5057
        %v5106 = vunpack.c.l.b16 %v5058
        %v5107 = vunpack.c.l.b16 %v5059
        %v5108 = vunpack.c.l.b16 %v5060
        %v5109 = vunpack.c.l.b16 %v5061
        %v5110 = vpack.c.b16 %v5095, %v5094
        %v5111 = vpack.c.b16 %v5097, %v5096
        %v5112 = vpack.c.b16 %v5099, %v5098
        %v5113 = vpack.c.b16 %v5101, %v5100
        %v5114 = vpack.c.b16 %v5103, %v5102
        %v5115 = vpack.c.b16 %v5105, %v5104
        %v5116 = vpack.c.b16 %v5107, %v5106
        %v5117 = vpack.c.b16 %v5109, %v5108
        %v5126 = vunpack.c.l.b16 %v5062
        %v5127 = vunpack.c.l.b16 %v5063
        %v5128 = vunpack.c.l.b16 %v5064
        %v5129 = vunpack.c.l.b16 %v5065
        %v5130 = vunpack.c.l.b16 %v5066
        %v5131 = vunpack.c.l.b16 %v5067
        %v5132 = vunpack.c.l.b16 %v5068
        %v5133 = vunpack.c.l.b16 %v5069
        %v5134 = vunpack.c.l.b16 %v5070
        %v5135 = vunpack.c.l.b16 %v5071
        %v5136 = vunpack.c.l.b16 %v5072
        %v5137 = vunpack.c.l.b16 %v5073
        %v5138 = vunpack.c.l.b16 %v5074
        %v5139 = vunpack.c.l.b16 %v5075
        %v5140 = vunpack.c.l.b16 %v5076
        %v5141 = vunpack.c.l.b16 %v5077
        %v5142 = vpack.c.b16 %v5127, %v5126
        %v5143 = vpack.c.b16 %v5129, %v5128
        %v5144 = vpack.c.b16 %v5131, %v5130
        %v5145 = vpack.c.b16 %v5133, %v5132
        %v5146 = vpack.c.b16 %v5135, %v5134
        %v5147 = vpack.c.b16 %v5137, %v5136
        %v5148 = vpack.c.b16 %v5139, %v5138
        %v5149 = vpack.c.b16 %v5141, %v5140
        %5158 = vmatpush.bf16.msra.mxu0 %v5149
        %5159 = vmatpush.bf16.msra.mxu0 %v5148
        %5160 = vmatpush.bf16.msra.mxu0 %v5147
        %5161 = vmatpush.bf16.msra.mxu0 %v5146
        %5162 = vmatpush.bf16.msra.mxu0 %v5145
        %5163 = vmatpush.bf16.msra.mxu0 %v5144
        %5164 = vmatpush.bf16.msra.mxu0 %v5143
        %5165 = vmatpush.bf16.msra.mxu0 %v5142
        %5166 = vmatmul.bf16.gmra.mxu0 %v5110
        %v5167 = vpop.f32.mrf.mxu0
        %v5168 = vadd.f32 0.0, %v5167
        %v5169 = vpop.f32.mrf.mxu0
        %v5170 = vadd.f32 0.0, %v5169
        %5171 = vmatmul.bf16.gmra.mxu0 %v5111
        %v5172 = vpop.f32.mrf.mxu0
        %v5173 = vadd.f32 0.0, %v5172
        %v5174 = vpop.f32.mrf.mxu0
        %v5175 = vadd.f32 0.0, %v5174
        %5176 = vmatmul.bf16.gmra.mxu0 %v5112
        %v5177 = vpop.f32.mrf.mxu0
        %v5178 = vadd.f32 0.0, %v5177
        %v5179 = vpop.f32.mrf.mxu0
        %v5180 = vadd.f32 0.0, %v5179
        %5181 = vmatmul.bf16.gmra.mxu0 %v5113
        %v5182 = vpop.f32.mrf.mxu0
        %v5183 = vadd.f32 0.0, %v5182
        %v5184 = vpop.f32.mrf.mxu0
        %v5185 = vadd.f32 0.0, %v5184
        %5186 = vmatmul.bf16.gmra.mxu0 %v5114
        %v5187 = vpop.f32.mrf.mxu0
        %v5188 = vadd.f32 0.0, %v5187
        %v5189 = vpop.f32.mrf.mxu0
        %v5190 = vadd.f32 0.0, %v5189
        %5191 = vmatmul.bf16.gmra.mxu0 %v5115
        %v5192 = vpop.f32.mrf.mxu0
        %v5193 = vadd.f32 0.0, %v5192
        %v5194 = vpop.f32.mrf.mxu0
        %v5195 = vadd.f32 0.0, %v5194
        %5196 = vmatmul.bf16.gmra.mxu0 %v5116
        %v5197 = vpop.f32.mrf.mxu0
        %v5198 = vadd.f32 0.0, %v5197
        %v5199 = vpop.f32.mrf.mxu0
        %v5200 = vadd.f32 0.0, %v5199
        %5201 = vmatmul.bf16.gmra.mxu0 %v5117
        %v5202 = vpop.f32.mrf.mxu0
        %v5203 = vadd.f32 0.0, %v5202
        %v5204 = vpop.f32.mrf.mxu0
        %v5205 = vadd.f32 0.0, %v5204
        %5206 = vdwg.mxu0
        %5207 = vrot.lane.b32.xlu0 %v3005, 64
        %v5208 = vpop.permute.xlu0 %5207
        %5209 = vrot.lane.b32.xlu0 %v3010, 64
        %v5210 = vpop.permute.xlu0 %5209
        %5211 = vrot.lane.b32.xlu0 %v3015, 64
        %v5212 = vpop.permute.xlu0 %5211
        %5213 = vrot.lane.b32.xlu0 %v3020, 64
        %v5214 = vpop.permute.xlu0 %5213
        %5215 = vrot.lane.b32.xlu0 %v3025, 64
        %v5216 = vpop.permute.xlu0 %5215
        %5217 = vrot.lane.b32.xlu0 %v3030, 64
        %v5218 = vpop.permute.xlu0 %5217
        %5219 = vrot.lane.b32.xlu0 %v3035, 64
        %v5220 = vpop.permute.xlu0 %5219
        %5221 = vrot.lane.b32.xlu0 %v3040, 64
        %v5222 = vpop.permute.xlu0 %5221
        %5223 = vrot.lane.b32.xlu0 %v3045, 64
        %v5224 = vpop.permute.xlu0 %5223
        %5225 = vrot.lane.b32.xlu0 %v3050, 64
        %v5226 = vpop.permute.xlu0 %5225
        %5227 = vrot.lane.b32.xlu0 %v3055, 64
        %v5228 = vpop.permute.xlu0 %5227
        %5229 = vrot.lane.b32.xlu0 %v3060, 64
        %v5230 = vpop.permute.xlu0 %5229
        %5231 = vrot.lane.b32.xlu0 %v3065, 64
        %v5232 = vpop.permute.xlu0 %5231
        %5233 = vrot.lane.b32.xlu0 %v3070, 64
        %v5234 = vpop.permute.xlu0 %5233
        %5235 = vrot.lane.b32.xlu0 %v3075, 64
        %v5236 = vpop.permute.xlu0 %5235
        %5237 = vrot.lane.b32.xlu0 %v3080, 64
        %v5238 = vpop.permute.xlu0 %5237
        %v5239 = vrot.slane %v5208, 4
        %v5240 = vrot.slane %v5210, 4
        %v5241 = vrot.slane %v5212, 4
        %v5242 = vrot.slane %v5214, 4
        %v5243 = vrot.slane %v5216, 4
        %v5244 = vrot.slane %v5218, 4
        %v5245 = vrot.slane %v5220, 4
        %v5246 = vrot.slane %v5222, 4
        %v5247 = vrot.slane %v5224, 4
        %v5248 = vrot.slane %v5226, 4
        %v5249 = vrot.slane %v5228, 4
        %v5250 = vrot.slane %v5230, 4
        %v5251 = vrot.slane %v5232, 4
        %v5252 = vrot.slane %v5234, 4
        %v5253 = vrot.slane %v5236, 4
        %v5254 = vrot.slane %v5238, 4
        %v5255 = vunpack.c.l.b16 %v5239
        %v5256 = vunpack.c.l.b16 %v5240
        %v5257 = vunpack.c.l.b16 %v5241
        %v5258 = vunpack.c.l.b16 %v5242
        %v5259 = vunpack.c.l.b16 %v5243
        %v5260 = vunpack.c.l.b16 %v5244
        %v5261 = vunpack.c.l.b16 %v5245
        %v5262 = vunpack.c.l.b16 %v5246
        %v5263 = vunpack.c.l.b16 %v5247
        %v5264 = vunpack.c.l.b16 %v5248
        %v5265 = vunpack.c.l.b16 %v5249
        %v5266 = vunpack.c.l.b16 %v5250
        %v5267 = vunpack.c.l.b16 %v5251
        %v5268 = vunpack.c.l.b16 %v5252
        %v5269 = vunpack.c.l.b16 %v5253
        %v5270 = vunpack.c.l.b16 %v5254
        %v5271 = vpack.c.b16 %v5256, %v5255
        %v5272 = vpack.c.b16 %v5258, %v5257
        %v5273 = vpack.c.b16 %v5260, %v5259
        %v5274 = vpack.c.b16 %v5262, %v5261
        %v5275 = vpack.c.b16 %v5264, %v5263
        %v5276 = vpack.c.b16 %v5266, %v5265
        %v5277 = vpack.c.b16 %v5268, %v5267
        %v5278 = vpack.c.b16 %v5270, %v5269
        %5279 = vrot.lane.b32.xlu0 %v4589, 64
        %v5280 = vpop.permute.xlu0 %5279
        %5281 = vrot.lane.b32.xlu0 %v4590, 64
        %v5282 = vpop.permute.xlu0 %5281
        %5283 = vrot.lane.b32.xlu0 %v4591, 64
        %v5284 = vpop.permute.xlu0 %5283
        %5285 = vrot.lane.b32.xlu0 %v4592, 64
        %v5286 = vpop.permute.xlu0 %5285
        %5287 = vrot.lane.b32.xlu0 %v4593, 64
        %v5288 = vpop.permute.xlu0 %5287
        %5289 = vrot.lane.b32.xlu0 %v4594, 64
        %v5290 = vpop.permute.xlu0 %5289
        %5291 = vrot.lane.b32.xlu0 %v4595, 64
        %v5292 = vpop.permute.xlu0 %5291
        %5293 = vrot.lane.b32.xlu0 %v4596, 64
        %v5294 = vpop.permute.xlu0 %5293
        %v5296 = vsel %vm3232, %v5271, 0
        %v5299 = vsel %vm3232, %v5272, 0
        %v5302 = vsel %vm3232, %v5273, 0
        %v5305 = vsel %vm3232, %v5274, 0
        %v5308 = vsel %vm3232, %v5275, 0
        %v5311 = vsel %vm3232, %v5276, 0
        %v5314 = vsel %vm3232, %v5277, 0
        %v5317 = vsel %vm3232, %v5278, 0
        %v5320 = vsel %vm3232, %v5280, 0
        %v5323 = vsel %vm3232, %v5282, 0
        %v5326 = vsel %vm3232, %v5284, 0
        %v5329 = vsel %vm3232, %v5286, 0
        %v5332 = vsel %vm3232, %v5288, 0
        %v5335 = vsel %vm3232, %v5290, 0
        %v5338 = vsel %vm3232, %v5292, 0
        %v5341 = vsel %vm3232, %v5294, 0
        %5343 = vmatpush.bf16.xpose.msra.mxu0 %v5341
        %5344 = vmatpush.bf16.xpose.msra.mxu0 %v5338
        %5345 = vmatpush.bf16.xpose.msra.mxu0 %v5335
        %5346 = vmatpush.bf16.xpose.msra.mxu0 %v5332
        %5347 = vmatpush.bf16.xpose.msra.mxu0 %v5329
        %5348 = vmatpush.bf16.xpose.msra.mxu0 %v5326
        %5349 = vmatpush.bf16.xpose.msra.mxu0 %v5323
        %5350 = vmatpush.bf16.xpose.msra.mxu0 %v5320
        %5351 = vmatmul.bf16.gmra.mxu0 %v5296
        %v5352 = vpop.f32.mrf.mxu0
        %v5353 = vadd.f32 %v3120, %v5352
        %v5354 = vpop.f32.mrf.mxu0
        %v5355 = vadd.f32 %v3121, %v5354
        %5356 = vmatmul.bf16.gmra.mxu0 %v5299
        %v5357 = vpop.f32.mrf.mxu0
        %v5358 = vadd.f32 %v3122, %v5357
        %v5359 = vpop.f32.mrf.mxu0
        %v5360 = vadd.f32 %v3123, %v5359
        %5361 = vmatmul.bf16.gmra.mxu0 %v5302
        %v5362 = vpop.f32.mrf.mxu0
        %v5363 = vadd.f32 %v3124, %v5362
        %v5364 = vpop.f32.mrf.mxu0
        %v5365 = vadd.f32 %v3125, %v5364
        %5366 = vmatmul.bf16.gmra.mxu0 %v5305
        %v5367 = vpop.f32.mrf.mxu0
        %v5368 = vadd.f32 %v3126, %v5367
        %v5369 = vpop.f32.mrf.mxu0
        %v5370 = vadd.f32 %v3127, %v5369
        %5371 = vmatmul.bf16.gmra.mxu0 %v5308
        %v5372 = vpop.f32.mrf.mxu0
        %v5373 = vadd.f32 %v3128, %v5372
        %v5374 = vpop.f32.mrf.mxu0
        %v5375 = vadd.f32 %v3129, %v5374
        %5376 = vmatmul.bf16.gmra.mxu0 %v5311
        %v5377 = vpop.f32.mrf.mxu0
        %v5378 = vadd.f32 %v3130, %v5377
        %v5379 = vpop.f32.mrf.mxu0
        %v5380 = vadd.f32 %v3131, %v5379
        %5381 = vmatmul.bf16.gmra.mxu0 %v5314
        %v5382 = vpop.f32.mrf.mxu0
        %v5383 = vadd.f32 %v3132, %v5382
        %v5384 = vpop.f32.mrf.mxu0
        %v5385 = vadd.f32 %v3133, %v5384
        %5386 = vmatmul.bf16.gmra.mxu0 %v5317
        %v5387 = vpop.f32.mrf.mxu0
        %v5388 = vadd.f32 %v3134, %v5387
        %v5389 = vpop.f32.mrf.mxu0
        %v5390 = vadd.f32 %v3135, %v5389
        %5391 = vdwg.mxu0
        %5392 = vmax.xlane.f32.xlu0 %v5353
        %v5393 = vpop.xlane.xlu0 %5392
        %5394 = vmax.xlane.f32.xlu0 %v5355
        %v5395 = vpop.xlane.xlu0 %5394
        %5396 = vmax.xlane.f32.xlu0 %v5358
        %v5397 = vpop.xlane.xlu0 %5396
        %5398 = vmax.xlane.f32.xlu0 %v5360
        %v5399 = vpop.xlane.xlu0 %5398
        %5400 = vmax.xlane.f32.xlu0 %v5363
        %v5401 = vpop.xlane.xlu0 %5400
        %5402 = vmax.xlane.f32.xlu0 %v5365
        %v5403 = vpop.xlane.xlu0 %5402
        %5404 = vmax.xlane.f32.xlu0 %v5368
        %v5405 = vpop.xlane.xlu0 %5404
        %5406 = vmax.xlane.f32.xlu0 %v5370
        %v5407 = vpop.xlane.xlu0 %5406
        %5408 = vmax.xlane.f32.xlu0 %v5373
        %v5409 = vpop.xlane.xlu0 %5408
        %5410 = vmax.xlane.f32.xlu0 %v5375
        %v5411 = vpop.xlane.xlu0 %5410
        %5412 = vmax.xlane.f32.xlu0 %v5378
        %v5413 = vpop.xlane.xlu0 %5412
        %5414 = vmax.xlane.f32.xlu0 %v5380
        %v5415 = vpop.xlane.xlu0 %5414
        %5416 = vmax.xlane.f32.xlu0 %v5383
        %v5417 = vpop.xlane.xlu0 %5416
        %5418 = vmax.xlane.f32.xlu0 %v5385
        %v5419 = vpop.xlane.xlu0 %5418
        %5420 = vmax.xlane.f32.xlu0 %v5388
        %v5421 = vpop.xlane.xlu0 %5420
        %5422 = vmax.xlane.f32.xlu0 %v5390
        %v5423 = vpop.xlane.xlu0 %5422
        %v5424 = vsub.f32 %v5353, %v5393
        %v5425 = vsub.f32 %v5355, %v5395
        %v5426 = vsub.f32 %v5358, %v5397
        %v5427 = vsub.f32 %v5360, %v5399
        %v5428 = vsub.f32 %v5363, %v5401
        %v5429 = vsub.f32 %v5365, %v5403
        %v5430 = vsub.f32 %v5368, %v5405
        %v5431 = vsub.f32 %v5370, %v5407
        %v5432 = vsub.f32 %v5373, %v5409
        %v5433 = vsub.f32 %v5375, %v5411
        %v5434 = vsub.f32 %v5378, %v5413
        %v5435 = vsub.f32 %v5380, %v5415
        %v5436 = vsub.f32 %v5383, %v5417
        %v5437 = vsub.f32 %v5385, %v5419
        %v5438 = vsub.f32 %v5388, %v5421
        %v5439 = vsub.f32 %v5390, %v5423
        %v5440 = vmul.f32 %v5424, 1.442695
        %v5441 = vpow.pop %v5440
        %v5442 = vmul.f32 %v5425, 1.442695
        %v5443 = vpow.pop %v5442
        %v5444 = vmul.f32 %v5426, 1.442695
        %v5445 = vpow.pop %v5444
        %v5446 = vmul.f32 %v5427, 1.442695
        %v5447 = vpow.pop %v5446
        %v5448 = vmul.f32 %v5428, 1.442695
        %v5449 = vpow.pop %v5448
        %v5450 = vmul.f32 %v5429, 1.442695
        %v5451 = vpow.pop %v5450
        %v5452 = vmul.f32 %v5430, 1.442695
        %v5453 = vpow.pop %v5452
        %v5454 = vmul.f32 %v5431, 1.442695
        %v5455 = vpow.pop %v5454
        %v5456 = vmul.f32 %v5432, 1.442695
        %v5457 = vpow.pop %v5456
        %v5458 = vmul.f32 %v5433, 1.442695
        %v5459 = vpow.pop %v5458
        %v5460 = vmul.f32 %v5434, 1.442695
        %v5461 = vpow.pop %v5460
        %v5462 = vmul.f32 %v5435, 1.442695
        %v5463 = vpow.pop %v5462
        %v5464 = vmul.f32 %v5436, 1.442695
        %v5465 = vpow.pop %v5464
        %v5466 = vmul.f32 %v5437, 1.442695
        %v5467 = vpow.pop %v5466
        %v5468 = vmul.f32 %v5438, 1.442695
        %v5469 = vpow.pop %v5468
        %v5470 = vmul.f32 %v5439, 1.442695
        %v5471 = vpow.pop %v5470
        %5472 = vadd.xlane.f32.xlu0 %v5441
        %v5473 = vpop.xlane.xlu0 %5472
        %5474 = vadd.xlane.f32.xlu0 %v5443
        %v5475 = vpop.xlane.xlu0 %5474
        %5476 = vadd.xlane.f32.xlu0 %v5445
        %v5477 = vpop.xlane.xlu0 %5476
        %5478 = vadd.xlane.f32.xlu0 %v5447
        %v5479 = vpop.xlane.xlu0 %5478
        %5480 = vadd.xlane.f32.xlu0 %v5449
        %v5481 = vpop.xlane.xlu0 %5480
        %5482 = vadd.xlane.f32.xlu0 %v5451
        %v5483 = vpop.xlane.xlu0 %5482
        %5484 = vadd.xlane.f32.xlu0 %v5453
        %v5485 = vpop.xlane.xlu0 %5484
        %5486 = vadd.xlane.f32.xlu0 %v5455
        %v5487 = vpop.xlane.xlu0 %5486
        %5488 = vadd.xlane.f32.xlu0 %v5457
        %v5489 = vpop.xlane.xlu0 %5488
        %5490 = vadd.xlane.f32.xlu0 %v5459
        %v5491 = vpop.xlane.xlu0 %5490
        %5492 = vadd.xlane.f32.xlu0 %v5461
        %v5493 = vpop.xlane.xlu0 %5492
        %5494 = vadd.xlane.f32.xlu0 %v5463
        %v5495 = vpop.xlane.xlu0 %5494
        %5496 = vadd.xlane.f32.xlu0 %v5465
        %v5497 = vpop.xlane.xlu0 %5496
        %5498 = vadd.xlane.f32.xlu0 %v5467
        %v5499 = vpop.xlane.xlu0 %5498
        %5500 = vadd.xlane.f32.xlu0 %v5469
        %v5501 = vpop.xlane.xlu0 %5500
        %5502 = vadd.xlane.f32.xlu0 %v5471
        %v5503 = vpop.xlane.xlu0 %5502
        %v5504 = vrcp.pop %v5473
        %v5505 = vmul.f32 %v5473, %v5504
        %v5506 = vsub.f32 1.0, %v5505
        %v5507 = vmul.f32 %v5504, %v5506
        %v5508 = vadd.f32 %v5504, %v5507
        %vm5509 = vweird.f32 %v5473
        %vm5510 = vweird.f32 %v5504
        %vm5511 = vmor %vm5509, %vm5510
        %v5512 = vsel %vm5511, %v5504, %v5508
        %v5513 = vand.u32 2147483647, %v5473
        %vm5514 = vcmp.eq.f32.partialorder %v5513, 8.507059e+37
        %v5515 = vand.u32 %v5473, 2147483648
        %v5516 = vor.u32 1.1754944e-38, %v5515
        %v5517 = vsel %vm5514, %v5516, %v5512
        %v5518 = vrcp.pop %v5475
        %v5519 = vmul.f32 %v5475, %v5518
        %v5520 = vsub.f32 1.0, %v5519
        %v5521 = vmul.f32 %v5518, %v5520
        %v5522 = vadd.f32 %v5518, %v5521
        %vm5523 = vweird.f32 %v5475
        %vm5524 = vweird.f32 %v5518
        %vm5525 = vmor %vm5523, %vm5524
        %v5526 = vsel %vm5525, %v5518, %v5522
        %v5527 = vand.u32 2147483647, %v5475
        %vm5528 = vcmp.eq.f32.partialorder %v5527, 8.507059e+37
        %v5529 = vand.u32 %v5475, 2147483648
        %v5530 = vor.u32 1.1754944e-38, %v5529
        %v5531 = vsel %vm5528, %v5530, %v5526
        %v5532 = vrcp.pop %v5477
        %v5533 = vmul.f32 %v5477, %v5532
        %v5534 = vsub.f32 1.0, %v5533
        %v5535 = vmul.f32 %v5532, %v5534
        %v5536 = vadd.f32 %v5532, %v5535
        %vm5537 = vweird.f32 %v5477
        %vm5538 = vweird.f32 %v5532
        %vm5539 = vmor %vm5537, %vm5538
        %v5540 = vsel %vm5539, %v5532, %v5536
        %v5541 = vand.u32 2147483647, %v5477
        %vm5542 = vcmp.eq.f32.partialorder %v5541, 8.507059e+37
        %v5543 = vand.u32 %v5477, 2147483648
        %v5544 = vor.u32 1.1754944e-38, %v5543
        %v5545 = vsel %vm5542, %v5544, %v5540
        %v5546 = vrcp.pop %v5479
        %v5547 = vmul.f32 %v5479, %v5546
        %v5548 = vsub.f32 1.0, %v5547
        %v5549 = vmul.f32 %v5546, %v5548
        %v5550 = vadd.f32 %v5546, %v5549
        %vm5551 = vweird.f32 %v5479
        %vm5552 = vweird.f32 %v5546
        %vm5553 = vmor %vm5551, %vm5552
        %v5554 = vsel %vm5553, %v5546, %v5550
        %v5555 = vand.u32 2147483647, %v5479
        %vm5556 = vcmp.eq.f32.partialorder %v5555, 8.507059e+37
        %v5557 = vand.u32 %v5479, 2147483648
        %v5558 = vor.u32 1.1754944e-38, %v5557
        %v5559 = vsel %vm5556, %v5558, %v5554
        %v5560 = vrcp.pop %v5481
        %v5561 = vmul.f32 %v5481, %v5560
        %v5562 = vsub.f32 1.0, %v5561
        %v5563 = vmul.f32 %v5560, %v5562
        %v5564 = vadd.f32 %v5560, %v5563
        %vm5565 = vweird.f32 %v5481
        %vm5566 = vweird.f32 %v5560
        %vm5567 = vmor %vm5565, %vm5566
        %v5568 = vsel %vm5567, %v5560, %v5564
        %v5569 = vand.u32 2147483647, %v5481
        %vm5570 = vcmp.eq.f32.partialorder %v5569, 8.507059e+37
        %v5571 = vand.u32 %v5481, 2147483648
        %v5572 = vor.u32 1.1754944e-38, %v5571
        %v5573 = vsel %vm5570, %v5572, %v5568
        %v5574 = vrcp.pop %v5483
        %v5575 = vmul.f32 %v5483, %v5574
        %v5576 = vsub.f32 1.0, %v5575
        %v5577 = vmul.f32 %v5574, %v5576
        %v5578 = vadd.f32 %v5574, %v5577
        %vm5579 = vweird.f32 %v5483
        %vm5580 = vweird.f32 %v5574
        %vm5581 = vmor %vm5579, %vm5580
        %v5582 = vsel %vm5581, %v5574, %v5578
        %v5583 = vand.u32 2147483647, %v5483
        %vm5584 = vcmp.eq.f32.partialorder %v5583, 8.507059e+37
        %v5585 = vand.u32 %v5483, 2147483648
        %v5586 = vor.u32 1.1754944e-38, %v5585
        %v5587 = vsel %vm5584, %v5586, %v5582
        %v5588 = vrcp.pop %v5485
        %v5589 = vmul.f32 %v5485, %v5588
        %v5590 = vsub.f32 1.0, %v5589
        %v5591 = vmul.f32 %v5588, %v5590
        %v5592 = vadd.f32 %v5588, %v5591
        %vm5593 = vweird.f32 %v5485
        %vm5594 = vweird.f32 %v5588
        %vm5595 = vmor %vm5593, %vm5594
        %v5596 = vsel %vm5595, %v5588, %v5592
        %v5597 = vand.u32 2147483647, %v5485
        %vm5598 = vcmp.eq.f32.partialorder %v5597, 8.507059e+37
        %v5599 = vand.u32 %v5485, 2147483648
        %v5600 = vor.u32 1.1754944e-38, %v5599
        %v5601 = vsel %vm5598, %v5600, %v5596
        %v5602 = vrcp.pop %v5487
        %v5603 = vmul.f32 %v5487, %v5602
        %v5604 = vsub.f32 1.0, %v5603
        %v5605 = vmul.f32 %v5602, %v5604
        %v5606 = vadd.f32 %v5602, %v5605
        %vm5607 = vweird.f32 %v5487
        %vm5608 = vweird.f32 %v5602
        %vm5609 = vmor %vm5607, %vm5608
        %v5610 = vsel %vm5609, %v5602, %v5606
        %v5611 = vand.u32 2147483647, %v5487
        %vm5612 = vcmp.eq.f32.partialorder %v5611, 8.507059e+37
        %v5613 = vand.u32 %v5487, 2147483648
        %v5614 = vor.u32 1.1754944e-38, %v5613
        %v5615 = vsel %vm5612, %v5614, %v5610
        %v5616 = vrcp.pop %v5489
        %v5617 = vmul.f32 %v5489, %v5616
        %v5618 = vsub.f32 1.0, %v5617
        %v5619 = vmul.f32 %v5616, %v5618
        %v5620 = vadd.f32 %v5616, %v5619
        %vm5621 = vweird.f32 %v5489
        %vm5622 = vweird.f32 %v5616
        %vm5623 = vmor %vm5621, %vm5622
        %v5624 = vsel %vm5623, %v5616, %v5620
        %v5625 = vand.u32 2147483647, %v5489
        %vm5626 = vcmp.eq.f32.partialorder %v5625, 8.507059e+37
        %v5627 = vand.u32 %v5489, 2147483648
        %v5628 = vor.u32 1.1754944e-38, %v5627
        %v5629 = vsel %vm5626, %v5628, %v5624
        %v5630 = vrcp.pop %v5491
        %v5631 = vmul.f32 %v5491, %v5630
        %v5632 = vsub.f32 1.0, %v5631
        %v5633 = vmul.f32 %v5630, %v5632
        %v5634 = vadd.f32 %v5630, %v5633
        %vm5635 = vweird.f32 %v5491
        %vm5636 = vweird.f32 %v5630
        %vm5637 = vmor %vm5635, %vm5636
        %v5638 = vsel %vm5637, %v5630, %v5634
        %v5639 = vand.u32 2147483647, %v5491
        %vm5640 = vcmp.eq.f32.partialorder %v5639, 8.507059e+37
        %v5641 = vand.u32 %v5491, 2147483648
        %v5642 = vor.u32 1.1754944e-38, %v5641
        %v5643 = vsel %vm5640, %v5642, %v5638
        %v5644 = vrcp.pop %v5493
        %v5645 = vmul.f32 %v5493, %v5644
        %v5646 = vsub.f32 1.0, %v5645
        %v5647 = vmul.f32 %v5644, %v5646
        %v5648 = vadd.f32 %v5644, %v5647
        %vm5649 = vweird.f32 %v5493
        %vm5650 = vweird.f32 %v5644
        %vm5651 = vmor %vm5649, %vm5650
        %v5652 = vsel %vm5651, %v5644, %v5648
        %v5653 = vand.u32 2147483647, %v5493
        %vm5654 = vcmp.eq.f32.partialorder %v5653, 8.507059e+37
        %v5655 = vand.u32 %v5493, 2147483648
        %v5656 = vor.u32 1.1754944e-38, %v5655
        %v5657 = vsel %vm5654, %v5656, %v5652
        %v5658 = vrcp.pop %v5495
        %v5659 = vmul.f32 %v5495, %v5658
        %v5660 = vsub.f32 1.0, %v5659
        %v5661 = vmul.f32 %v5658, %v5660
        %v5662 = vadd.f32 %v5658, %v5661
        %vm5663 = vweird.f32 %v5495
        %vm5664 = vweird.f32 %v5658
        %vm5665 = vmor %vm5663, %vm5664
        %v5666 = vsel %vm5665, %v5658, %v5662
        %v5667 = vand.u32 2147483647, %v5495
        %vm5668 = vcmp.eq.f32.partialorder %v5667, 8.507059e+37
        %v5669 = vand.u32 %v5495, 2147483648
        %v5670 = vor.u32 1.1754944e-38, %v5669
        %v5671 = vsel %vm5668, %v5670, %v5666
        %v5672 = vrcp.pop %v5497
        %v5673 = vmul.f32 %v5497, %v5672
        %v5674 = vsub.f32 1.0, %v5673
        %v5675 = vmul.f32 %v5672, %v5674
        %v5676 = vadd.f32 %v5672, %v5675
        %vm5677 = vweird.f32 %v5497
        %vm5678 = vweird.f32 %v5672
        %vm5679 = vmor %vm5677, %vm5678
        %v5680 = vsel %vm5679, %v5672, %v5676
        %v5681 = vand.u32 2147483647, %v5497
        %vm5682 = vcmp.eq.f32.partialorder %v5681, 8.507059e+37
        %v5683 = vand.u32 %v5497, 2147483648
        %v5684 = vor.u32 1.1754944e-38, %v5683
        %v5685 = vsel %vm5682, %v5684, %v5680
        %v5686 = vrcp.pop %v5499
        %v5687 = vmul.f32 %v5499, %v5686
        %v5688 = vsub.f32 1.0, %v5687
        %v5689 = vmul.f32 %v5686, %v5688
        %v5690 = vadd.f32 %v5686, %v5689
        %vm5691 = vweird.f32 %v5499
        %vm5692 = vweird.f32 %v5686
        %vm5693 = vmor %vm5691, %vm5692
        %v5694 = vsel %vm5693, %v5686, %v5690
        %v5695 = vand.u32 2147483647, %v5499
        %vm5696 = vcmp.eq.f32.partialorder %v5695, 8.507059e+37
        %v5697 = vand.u32 %v5499, 2147483648
        %v5698 = vor.u32 1.1754944e-38, %v5697
        %v5699 = vsel %vm5696, %v5698, %v5694
        %v5700 = vrcp.pop %v5501
        %v5701 = vmul.f32 %v5501, %v5700
        %v5702 = vsub.f32 1.0, %v5701
        %v5703 = vmul.f32 %v5700, %v5702
        %v5704 = vadd.f32 %v5700, %v5703
        %vm5705 = vweird.f32 %v5501
        %vm5706 = vweird.f32 %v5700
        %vm5707 = vmor %vm5705, %vm5706
        %v5708 = vsel %vm5707, %v5700, %v5704
        %v5709 = vand.u32 2147483647, %v5501
        %vm5710 = vcmp.eq.f32.partialorder %v5709, 8.507059e+37
        %v5711 = vand.u32 %v5501, 2147483648
        %v5712 = vor.u32 1.1754944e-38, %v5711
        %v5713 = vsel %vm5710, %v5712, %v5708
        %v5714 = vrcp.pop %v5503
        %v5715 = vmul.f32 %v5503, %v5714
        %v5716 = vsub.f32 1.0, %v5715
        %v5717 = vmul.f32 %v5714, %v5716
        %v5718 = vadd.f32 %v5714, %v5717
        %vm5719 = vweird.f32 %v5503
        %vm5720 = vweird.f32 %v5714
        %vm5721 = vmor %vm5719, %vm5720
        %v5722 = vsel %vm5721, %v5714, %v5718
        %v5723 = vand.u32 2147483647, %v5503
        %vm5724 = vcmp.eq.f32.partialorder %v5723, 8.507059e+37
        %v5725 = vand.u32 %v5503, 2147483648
        %v5726 = vor.u32 1.1754944e-38, %v5725
        %v5727 = vsel %vm5724, %v5726, %v5722
        %v5728 = vmul.f32 %v5441, %v5517
        %v5729 = vmul.f32 %v5443, %v5531
        %v5730 = vmul.f32 %v5445, %v5545
        %v5731 = vmul.f32 %v5447, %v5559
        %v5732 = vmul.f32 %v5449, %v5573
        %v5733 = vmul.f32 %v5451, %v5587
        %v5734 = vmul.f32 %v5453, %v5601
        %v5735 = vmul.f32 %v5455, %v5615
        %v5736 = vmul.f32 %v5457, %v5629
        %v5737 = vmul.f32 %v5459, %v5643
        %v5738 = vmul.f32 %v5461, %v5657
        %v5739 = vmul.f32 %v5463, %v5671
        %v5740 = vmul.f32 %v5465, %v5685
        %v5741 = vmul.f32 %v5467, %v5699
        %v5742 = vmul.f32 %v5469, %v5713
        %v5743 = vmul.f32 %v5471, %v5727
        %v5744 = vpack.c.bf16 %v5728, %v5728
        %v5745 = vpack.c.bf16 %v5729, %v5729
        %v5746 = vpack.c.bf16 %v5730, %v5730
        %v5747 = vpack.c.bf16 %v5731, %v5731
        %v5748 = vpack.c.bf16 %v5732, %v5732
        %v5749 = vpack.c.bf16 %v5733, %v5733
        %v5750 = vpack.c.bf16 %v5734, %v5734
        %v5751 = vpack.c.bf16 %v5735, %v5735
        %v5752 = vpack.c.bf16 %v5736, %v5736
        %v5753 = vpack.c.bf16 %v5737, %v5737
        %v5754 = vpack.c.bf16 %v5738, %v5738
        %v5755 = vpack.c.bf16 %v5739, %v5739
        %v5756 = vpack.c.bf16 %v5740, %v5740
        %v5757 = vpack.c.bf16 %v5741, %v5741
        %v5758 = vpack.c.bf16 %v5742, %v5742
        %v5759 = vpack.c.bf16 %v5743, %v5743
        %5760 = vrot.lane.b32.xlu0 %v3008, 64
        %v5761 = vpop.permute.xlu0 %5760
        %5762 = vrot.lane.b32.xlu0 %v3013, 64
        %v5763 = vpop.permute.xlu0 %5762
        %5764 = vrot.lane.b32.xlu0 %v3018, 64
        %v5765 = vpop.permute.xlu0 %5764
        %5766 = vrot.lane.b32.xlu0 %v3023, 64
        %v5767 = vpop.permute.xlu0 %5766
        %5768 = vrot.lane.b32.xlu0 %v3028, 64
        %v5769 = vpop.permute.xlu0 %5768
        %5770 = vrot.lane.b32.xlu0 %v3033, 64
        %v5771 = vpop.permute.xlu0 %5770
        %5772 = vrot.lane.b32.xlu0 %v3038, 64
        %v5773 = vpop.permute.xlu0 %5772
        %5774 = vrot.lane.b32.xlu0 %v3043, 64
        %v5775 = vpop.permute.xlu0 %5774
        %5776 = vrot.lane.b32.xlu0 %v3048, 64
        %v5777 = vpop.permute.xlu0 %5776
        %5778 = vrot.lane.b32.xlu0 %v3053, 64
        %v5779 = vpop.permute.xlu0 %5778
        %5780 = vrot.lane.b32.xlu0 %v3058, 64
        %v5781 = vpop.permute.xlu0 %5780
        %5782 = vrot.lane.b32.xlu0 %v3063, 64
        %v5783 = vpop.permute.xlu0 %5782
        %5784 = vrot.lane.b32.xlu0 %v3068, 64
        %v5785 = vpop.permute.xlu0 %5784
        %5786 = vrot.lane.b32.xlu0 %v3073, 64
        %v5787 = vpop.permute.xlu0 %5786
        %5788 = vrot.lane.b32.xlu0 %v3078, 64
        %v5789 = vpop.permute.xlu0 %5788
        %5790 = vrot.lane.b32.xlu0 %v3083, 64
        %v5791 = vpop.permute.xlu0 %5790
        %v5792 = vrot.slane %v5761, 4
        %v5793 = vrot.slane %v5763, 4
        %v5794 = vrot.slane %v5765, 4
        %v5795 = vrot.slane %v5767, 4
        %v5796 = vrot.slane %v5769, 4
        %v5797 = vrot.slane %v5771, 4
        %v5798 = vrot.slane %v5773, 4
        %v5799 = vrot.slane %v5775, 4
        %v5800 = vrot.slane %v5777, 4
        %v5801 = vrot.slane %v5779, 4
        %v5802 = vrot.slane %v5781, 4
        %v5803 = vrot.slane %v5783, 4
        %v5804 = vrot.slane %v5785, 4
        %v5805 = vrot.slane %v5787, 4
        %v5806 = vrot.slane %v5789, 4
        %v5807 = vrot.slane %v5791, 4
        %v5824 = vunpack.c.l.b16 %v5744
        %v5825 = vunpack.c.l.b16 %v5745
        %v5826 = vunpack.c.l.b16 %v5746
        %v5827 = vunpack.c.l.b16 %v5747
        %v5828 = vunpack.c.l.b16 %v5748
        %v5829 = vunpack.c.l.b16 %v5749
        %v5830 = vunpack.c.l.b16 %v5750
        %v5831 = vunpack.c.l.b16 %v5751
        %v5832 = vunpack.c.l.b16 %v5752
        %v5833 = vunpack.c.l.b16 %v5753
        %v5834 = vunpack.c.l.b16 %v5754
        %v5835 = vunpack.c.l.b16 %v5755
        %v5836 = vunpack.c.l.b16 %v5756
        %v5837 = vunpack.c.l.b16 %v5757
        %v5838 = vunpack.c.l.b16 %v5758
        %v5839 = vunpack.c.l.b16 %v5759
        %v5840 = vpack.c.b16 %v5825, %v5824
        %v5841 = vpack.c.b16 %v5827, %v5826
        %v5842 = vpack.c.b16 %v5829, %v5828
        %v5843 = vpack.c.b16 %v5831, %v5830
        %v5844 = vpack.c.b16 %v5833, %v5832
        %v5845 = vpack.c.b16 %v5835, %v5834
        %v5846 = vpack.c.b16 %v5837, %v5836
        %v5847 = vpack.c.b16 %v5839, %v5838
        %v5856 = vunpack.c.l.b16 %v5792
        %v5857 = vunpack.c.l.b16 %v5793
        %v5858 = vunpack.c.l.b16 %v5794
        %v5859 = vunpack.c.l.b16 %v5795
        %v5860 = vunpack.c.l.b16 %v5796
        %v5861 = vunpack.c.l.b16 %v5797
        %v5862 = vunpack.c.l.b16 %v5798
        %v5863 = vunpack.c.l.b16 %v5799
        %v5864 = vunpack.c.l.b16 %v5800
        %v5865 = vunpack.c.l.b16 %v5801
        %v5866 = vunpack.c.l.b16 %v5802
        %v5867 = vunpack.c.l.b16 %v5803
        %v5868 = vunpack.c.l.b16 %v5804
        %v5869 = vunpack.c.l.b16 %v5805
        %v5870 = vunpack.c.l.b16 %v5806
        %v5871 = vunpack.c.l.b16 %v5807
        %v5872 = vpack.c.b16 %v5857, %v5856
        %v5873 = vpack.c.b16 %v5859, %v5858
        %v5874 = vpack.c.b16 %v5861, %v5860
        %v5875 = vpack.c.b16 %v5863, %v5862
        %v5876 = vpack.c.b16 %v5865, %v5864
        %v5877 = vpack.c.b16 %v5867, %v5866
        %v5878 = vpack.c.b16 %v5869, %v5868
        %v5879 = vpack.c.b16 %v5871, %v5870
        %5888 = vmatpush.bf16.msra.mxu0 %v5879
        %5889 = vmatpush.bf16.msra.mxu0 %v5878
        %5890 = vmatpush.bf16.msra.mxu0 %v5877
        %5891 = vmatpush.bf16.msra.mxu0 %v5876
        %5892 = vmatpush.bf16.msra.mxu0 %v5875
        %5893 = vmatpush.bf16.msra.mxu0 %v5874
        %5894 = vmatpush.bf16.msra.mxu0 %v5873
        %5895 = vmatpush.bf16.msra.mxu0 %v5872
        %5896 = vmatmul.bf16.gmra.mxu0 %v5840
        %v5897 = vpop.f32.mrf.mxu0
        %v5898 = vadd.f32 0.0, %v5897
        %v5899 = vpop.f32.mrf.mxu0
        %v5900 = vadd.f32 0.0, %v5899
        %5901 = vmatmul.bf16.gmra.mxu0 %v5841
        %v5902 = vpop.f32.mrf.mxu0
        %v5903 = vadd.f32 0.0, %v5902
        %v5904 = vpop.f32.mrf.mxu0
        %v5905 = vadd.f32 0.0, %v5904
        %5906 = vmatmul.bf16.gmra.mxu0 %v5842
        %v5907 = vpop.f32.mrf.mxu0
        %v5908 = vadd.f32 0.0, %v5907
        %v5909 = vpop.f32.mrf.mxu0
        %v5910 = vadd.f32 0.0, %v5909
        %5911 = vmatmul.bf16.gmra.mxu0 %v5843
        %v5912 = vpop.f32.mrf.mxu0
        %v5913 = vadd.f32 0.0, %v5912
        %v5914 = vpop.f32.mrf.mxu0
        %v5915 = vadd.f32 0.0, %v5914
        %5916 = vmatmul.bf16.gmra.mxu0 %v5844
        %v5917 = vpop.f32.mrf.mxu0
        %v5918 = vadd.f32 0.0, %v5917
        %v5919 = vpop.f32.mrf.mxu0
        %v5920 = vadd.f32 0.0, %v5919
        %5921 = vmatmul.bf16.gmra.mxu0 %v5845
        %v5922 = vpop.f32.mrf.mxu0
        %v5923 = vadd.f32 0.0, %v5922
        %v5924 = vpop.f32.mrf.mxu0
        %v5925 = vadd.f32 0.0, %v5924
        %5926 = vmatmul.bf16.gmra.mxu0 %v5846
        %v5927 = vpop.f32.mrf.mxu0
        %v5928 = vadd.f32 0.0, %v5927
        %v5929 = vpop.f32.mrf.mxu0
        %v5930 = vadd.f32 0.0, %v5929
        %5931 = vmatmul.bf16.gmra.mxu0 %v5847
        %v5932 = vpop.f32.mrf.mxu0
        %v5933 = vadd.f32 0.0, %v5932
        %v5934 = vpop.f32.mrf.mxu0
        %v5935 = vadd.f32 0.0, %v5934
        %5936 = vdwg.mxu0
        %v5937 = vrot.slane %v3007, 4
        %v5938 = vrot.slane %v3012, 4
        %v5939 = vrot.slane %v3017, 4
        %v5940 = vrot.slane %v3022, 4
        %v5941 = vrot.slane %v3027, 4
        %v5942 = vrot.slane %v3032, 4
        %v5943 = vrot.slane %v3037, 4
        %v5944 = vrot.slane %v3042, 4
        %v5945 = vrot.slane %v3047, 4
        %v5946 = vrot.slane %v3052, 4
        %v5947 = vrot.slane %v3057, 4
        %v5948 = vrot.slane %v3062, 4
        %v5949 = vrot.slane %v3067, 4
        %v5950 = vrot.slane %v3072, 4
        %v5951 = vrot.slane %v3077, 4
        %v5952 = vrot.slane %v3082, 4
        %v5953 = vunpack.c.l.b16 %v3006
        %v5954 = vunpack.c.l.b16 %v3011
        %v5955 = vunpack.c.l.b16 %v3016
        %v5956 = vunpack.c.l.b16 %v3021
        %v5957 = vunpack.c.l.b16 %v3026
        %v5958 = vunpack.c.l.b16 %v3031
        %v5959 = vunpack.c.l.b16 %v3036
        %v5960 = vunpack.c.l.b16 %v3041
        %v5961 = vunpack.c.l.b16 %v3046
        %v5962 = vunpack.c.l.b16 %v3051
        %v5963 = vunpack.c.l.b16 %v3056
        %v5964 = vunpack.c.l.b16 %v3061
        %v5965 = vunpack.c.l.b16 %v3066
        %v5966 = vunpack.c.l.b16 %v3071
        %v5967 = vunpack.c.l.b16 %v3076
        %v5968 = vunpack.c.l.b16 %v3081
        %v5969 = vpack.c.b16 %v5954, %v5953
        %v5970 = vpack.c.b16 %v5956, %v5955
        %v5971 = vpack.c.b16 %v5958, %v5957
        %v5972 = vpack.c.b16 %v5960, %v5959
        %v5973 = vpack.c.b16 %v5962, %v5961
        %v5974 = vpack.c.b16 %v5964, %v5963
        %v5975 = vpack.c.b16 %v5966, %v5965
        %v5976 = vpack.c.b16 %v5968, %v5967
        %v5977 = vunpack.c.l.b16 %v5937
        %v5978 = vunpack.c.l.b16 %v5938
        %v5979 = vunpack.c.l.b16 %v5939
        %v5980 = vunpack.c.l.b16 %v5940
        %v5981 = vunpack.c.l.b16 %v5941
        %v5982 = vunpack.c.l.b16 %v5942
        %v5983 = vunpack.c.l.b16 %v5943
        %v5984 = vunpack.c.l.b16 %v5944
        %v5985 = vunpack.c.l.b16 %v5945
        %v5986 = vunpack.c.l.b16 %v5946
        %v5987 = vunpack.c.l.b16 %v5947
        %v5988 = vunpack.c.l.b16 %v5948
        %v5989 = vunpack.c.l.b16 %v5949
        %v5990 = vunpack.c.l.b16 %v5950
        %v5991 = vunpack.c.l.b16 %v5951
        %v5992 = vunpack.c.l.b16 %v5952
        %v5993 = vpack.c.b16 %v5978, %v5977
        %v5994 = vpack.c.b16 %v5980, %v5979
        %v5995 = vpack.c.b16 %v5982, %v5981
        %v5996 = vpack.c.b16 %v5984, %v5983
        %v5997 = vpack.c.b16 %v5986, %v5985
        %v5998 = vpack.c.b16 %v5988, %v5987
        %v5999 = vpack.c.b16 %v5990, %v5989
        %v6000 = vpack.c.b16 %v5992, %v5991
        %v6002 = vsel %vm3232, %v5969, 0
        %v6005 = vsel %vm3232, %v5970, 0
        %v6008 = vsel %vm3232, %v5971, 0
        %v6011 = vsel %vm3232, %v5972, 0
        %v6014 = vsel %vm3232, %v5973, 0
        %v6017 = vsel %vm3232, %v5974, 0
        %v6020 = vsel %vm3232, %v5975, 0
        %v6023 = vsel %vm3232, %v5976, 0
        %v6026 = vsel %vm3232, %v5993, 0
        %v6029 = vsel %vm3232, %v5994, 0
        %v6032 = vsel %vm3232, %v5995, 0
        %v6035 = vsel %vm3232, %v5996, 0
        %v6038 = vsel %vm3232, %v5997, 0
        %v6041 = vsel %vm3232, %v5998, 0
        %v6044 = vsel %vm3232, %v5999, 0
        %v6047 = vsel %vm3232, %v6000, 0
        %6049 = vmatpush.bf16.xpose.msra.mxu0 %v6047
        %6050 = vmatpush.bf16.xpose.msra.mxu0 %v6044
        %6051 = vmatpush.bf16.xpose.msra.mxu0 %v6041
        %6052 = vmatpush.bf16.xpose.msra.mxu0 %v6038
        %6053 = vmatpush.bf16.xpose.msra.mxu0 %v6035
        %6054 = vmatpush.bf16.xpose.msra.mxu0 %v6032
        %6055 = vmatpush.bf16.xpose.msra.mxu0 %v6029
        %6056 = vmatpush.bf16.xpose.msra.mxu0 %v6026
        %6057 = vmatmul.bf16.gmra.mxu0 %v6002
        %v6058 = vpop.f32.mrf.mxu0
        %v6059 = vadd.f32 %v3120, %v6058
        %v6060 = vpop.f32.mrf.mxu0
        %v6061 = vadd.f32 %v3121, %v6060
        %6062 = vmatmul.bf16.gmra.mxu0 %v6005
        %v6063 = vpop.f32.mrf.mxu0
        %v6064 = vadd.f32 %v3122, %v6063
        %v6065 = vpop.f32.mrf.mxu0
        %v6066 = vadd.f32 %v3123, %v6065
        %6067 = vmatmul.bf16.gmra.mxu0 %v6008
        %v6068 = vpop.f32.mrf.mxu0
        %v6069 = vadd.f32 %v3124, %v6068
        %v6070 = vpop.f32.mrf.mxu0
        %v6071 = vadd.f32 %v3125, %v6070
        %6072 = vmatmul.bf16.gmra.mxu0 %v6011
        %v6073 = vpop.f32.mrf.mxu0
        %v6074 = vadd.f32 %v3126, %v6073
        %v6075 = vpop.f32.mrf.mxu0
        %v6076 = vadd.f32 %v3127, %v6075
        %6077 = vmatmul.bf16.gmra.mxu0 %v6014
        %v6078 = vpop.f32.mrf.mxu0
        %v6079 = vadd.f32 %v3128, %v6078
        %v6080 = vpop.f32.mrf.mxu0
        %v6081 = vadd.f32 %v3129, %v6080
        %6082 = vmatmul.bf16.gmra.mxu0 %v6017
        %v6083 = vpop.f32.mrf.mxu0
        %v6084 = vadd.f32 %v3130, %v6083
        %v6085 = vpop.f32.mrf.mxu0
        %v6086 = vadd.f32 %v3131, %v6085
        %6087 = vmatmul.bf16.gmra.mxu0 %v6020
        %v6088 = vpop.f32.mrf.mxu0
        %v6089 = vadd.f32 %v3132, %v6088
        %v6090 = vpop.f32.mrf.mxu0
        %v6091 = vadd.f32 %v3133, %v6090
        %6092 = vmatmul.bf16.gmra.mxu0 %v6023
        %v6093 = vpop.f32.mrf.mxu0
        %v6094 = vadd.f32 %v3134, %v6093
        %v6095 = vpop.f32.mrf.mxu0
        %v6096 = vadd.f32 %v3135, %v6095
        %6097 = vdwg.mxu0
        %6098 = vmax.xlane.f32.xlu0 %v6059
        %v6099 = vpop.xlane.xlu0 %6098
        %6100 = vmax.xlane.f32.xlu0 %v6061
        %v6101 = vpop.xlane.xlu0 %6100
        %6102 = vmax.xlane.f32.xlu0 %v6064
        %v6103 = vpop.xlane.xlu0 %6102
        %6104 = vmax.xlane.f32.xlu0 %v6066
        %v6105 = vpop.xlane.xlu0 %6104
        %6106 = vmax.xlane.f32.xlu0 %v6069
        %v6107 = vpop.xlane.xlu0 %6106
        %6108 = vmax.xlane.f32.xlu0 %v6071
        %v6109 = vpop.xlane.xlu0 %6108
        %6110 = vmax.xlane.f32.xlu0 %v6074
        %v6111 = vpop.xlane.xlu0 %6110
        %6112 = vmax.xlane.f32.xlu0 %v6076
        %v6113 = vpop.xlane.xlu0 %6112
        %6114 = vmax.xlane.f32.xlu0 %v6079
        %v6115 = vpop.xlane.xlu0 %6114
        %6116 = vmax.xlane.f32.xlu0 %v6081
        %v6117 = vpop.xlane.xlu0 %6116
        %6118 = vmax.xlane.f32.xlu0 %v6084
        %v6119 = vpop.xlane.xlu0 %6118
        %6120 = vmax.xlane.f32.xlu0 %v6086
        %v6121 = vpop.xlane.xlu0 %6120
        %6122 = vmax.xlane.f32.xlu0 %v6089
        %v6123 = vpop.xlane.xlu0 %6122
        %6124 = vmax.xlane.f32.xlu0 %v6091
        %v6125 = vpop.xlane.xlu0 %6124
        %6126 = vmax.xlane.f32.xlu0 %v6094
        %v6127 = vpop.xlane.xlu0 %6126
        %6128 = vmax.xlane.f32.xlu0 %v6096
        %v6129 = vpop.xlane.xlu0 %6128
        %v6130 = vsub.f32 %v6059, %v6099
        %v6131 = vsub.f32 %v6061, %v6101
        %v6132 = vsub.f32 %v6064, %v6103
        %v6133 = vsub.f32 %v6066, %v6105
        %v6134 = vsub.f32 %v6069, %v6107
        %v6135 = vsub.f32 %v6071, %v6109
        %v6136 = vsub.f32 %v6074, %v6111
        %v6137 = vsub.f32 %v6076, %v6113
        %v6138 = vsub.f32 %v6079, %v6115
        %v6139 = vsub.f32 %v6081, %v6117
        %v6140 = vsub.f32 %v6084, %v6119
        %v6141 = vsub.f32 %v6086, %v6121
        %v6142 = vsub.f32 %v6089, %v6123
        %v6143 = vsub.f32 %v6091, %v6125
        %v6144 = vsub.f32 %v6094, %v6127
        %v6145 = vsub.f32 %v6096, %v6129
        %v6146 = vmul.f32 %v6130, 1.442695
        %v6147 = vpow.pop %v6146
        %v6148 = vmul.f32 %v6131, 1.442695
        %v6149 = vpow.pop %v6148
        %v6150 = vmul.f32 %v6132, 1.442695
        %v6151 = vpow.pop %v6150
        %v6152 = vmul.f32 %v6133, 1.442695
        %v6153 = vpow.pop %v6152
        %v6154 = vmul.f32 %v6134, 1.442695
        %v6155 = vpow.pop %v6154
        %v6156 = vmul.f32 %v6135, 1.442695
        %v6157 = vpow.pop %v6156
        %v6158 = vmul.f32 %v6136, 1.442695
        %v6159 = vpow.pop %v6158
        %v6160 = vmul.f32 %v6137, 1.442695
        %v6161 = vpow.pop %v6160
        %v6162 = vmul.f32 %v6138, 1.442695
        %v6163 = vpow.pop %v6162
        %v6164 = vmul.f32 %v6139, 1.442695
        %v6165 = vpow.pop %v6164
        %v6166 = vmul.f32 %v6140, 1.442695
        %v6167 = vpow.pop %v6166
        %v6168 = vmul.f32 %v6141, 1.442695
        %v6169 = vpow.pop %v6168
        %v6170 = vmul.f32 %v6142, 1.442695
        %v6171 = vpow.pop %v6170
        %v6172 = vmul.f32 %v6143, 1.442695
        %v6173 = vpow.pop %v6172
        %v6174 = vmul.f32 %v6144, 1.442695
        %v6175 = vpow.pop %v6174
        %v6176 = vmul.f32 %v6145, 1.442695
        %v6177 = vpow.pop %v6176
        %6178 = vadd.xlane.f32.xlu0 %v6147
        %v6179 = vpop.xlane.xlu0 %6178
        %6180 = vadd.xlane.f32.xlu0 %v6149
        %v6181 = vpop.xlane.xlu0 %6180
        %6182 = vadd.xlane.f32.xlu0 %v6151
        %v6183 = vpop.xlane.xlu0 %6182
        %6184 = vadd.xlane.f32.xlu0 %v6153
        %v6185 = vpop.xlane.xlu0 %6184
        %6186 = vadd.xlane.f32.xlu0 %v6155
        %v6187 = vpop.xlane.xlu0 %6186
        %6188 = vadd.xlane.f32.xlu0 %v6157
        %v6189 = vpop.xlane.xlu0 %6188
        %6190 = vadd.xlane.f32.xlu0 %v6159
        %v6191 = vpop.xlane.xlu0 %6190
        %6192 = vadd.xlane.f32.xlu0 %v6161
        %v6193 = vpop.xlane.xlu0 %6192
        %6194 = vadd.xlane.f32.xlu0 %v6163
        %v6195 = vpop.xlane.xlu0 %6194
        %6196 = vadd.xlane.f32.xlu0 %v6165
        %v6197 = vpop.xlane.xlu0 %6196
        %6198 = vadd.xlane.f32.xlu0 %v6167
        %v6199 = vpop.xlane.xlu0 %6198
        %6200 = vadd.xlane.f32.xlu0 %v6169
        %v6201 = vpop.xlane.xlu0 %6200
        %6202 = vadd.xlane.f32.xlu0 %v6171
        %v6203 = vpop.xlane.xlu0 %6202
        %6204 = vadd.xlane.f32.xlu0 %v6173
        %v6205 = vpop.xlane.xlu0 %6204
        %6206 = vadd.xlane.f32.xlu0 %v6175
        %v6207 = vpop.xlane.xlu0 %6206
        %6208 = vadd.xlane.f32.xlu0 %v6177
        %v6209 = vpop.xlane.xlu0 %6208
        %v6210 = vrcp.pop %v6179
        %v6211 = vmul.f32 %v6179, %v6210
        %v6212 = vsub.f32 1.0, %v6211
        %v6213 = vmul.f32 %v6210, %v6212
        %v6214 = vadd.f32 %v6210, %v6213
        %vm6215 = vweird.f32 %v6179
        %vm6216 = vweird.f32 %v6210
        %vm6217 = vmor %vm6215, %vm6216
        %v6218 = vsel %vm6217, %v6210, %v6214
        %v6219 = vand.u32 2147483647, %v6179
        %vm6220 = vcmp.eq.f32.partialorder %v6219, 8.507059e+37
        %v6221 = vand.u32 %v6179, 2147483648
        %v6222 = vor.u32 1.1754944e-38, %v6221
        %v6223 = vsel %vm6220, %v6222, %v6218
        %v6224 = vrcp.pop %v6181
        %v6225 = vmul.f32 %v6181, %v6224
        %v6226 = vsub.f32 1.0, %v6225
        %v6227 = vmul.f32 %v6224, %v6226
        %v6228 = vadd.f32 %v6224, %v6227
        %vm6229 = vweird.f32 %v6181
        %vm6230 = vweird.f32 %v6224
        %vm6231 = vmor %vm6229, %vm6230
        %v6232 = vsel %vm6231, %v6224, %v6228
        %v6233 = vand.u32 2147483647, %v6181
        %vm6234 = vcmp.eq.f32.partialorder %v6233, 8.507059e+37
        %v6235 = vand.u32 %v6181, 2147483648
        %v6236 = vor.u32 1.1754944e-38, %v6235
        %v6237 = vsel %vm6234, %v6236, %v6232
        %v6238 = vrcp.pop %v6183
        %v6239 = vmul.f32 %v6183, %v6238
        %v6240 = vsub.f32 1.0, %v6239
        %v6241 = vmul.f32 %v6238, %v6240
        %v6242 = vadd.f32 %v6238, %v6241
        %vm6243 = vweird.f32 %v6183
        %vm6244 = vweird.f32 %v6238
        %vm6245 = vmor %vm6243, %vm6244
        %v6246 = vsel %vm6245, %v6238, %v6242
        %v6247 = vand.u32 2147483647, %v6183
        %vm6248 = vcmp.eq.f32.partialorder %v6247, 8.507059e+37
        %v6249 = vand.u32 %v6183, 2147483648
        %v6250 = vor.u32 1.1754944e-38, %v6249
        %v6251 = vsel %vm6248, %v6250, %v6246
        %v6252 = vrcp.pop %v6185
        %v6253 = vmul.f32 %v6185, %v6252
        %v6254 = vsub.f32 1.0, %v6253
        %v6255 = vmul.f32 %v6252, %v6254
        %v6256 = vadd.f32 %v6252, %v6255
        %vm6257 = vweird.f32 %v6185
        %vm6258 = vweird.f32 %v6252
        %vm6259 = vmor %vm6257, %vm6258
        %v6260 = vsel %vm6259, %v6252, %v6256
        %v6261 = vand.u32 2147483647, %v6185
        %vm6262 = vcmp.eq.f32.partialorder %v6261, 8.507059e+37
        %v6263 = vand.u32 %v6185, 2147483648
        %v6264 = vor.u32 1.1754944e-38, %v6263
        %v6265 = vsel %vm6262, %v6264, %v6260
        %v6266 = vrcp.pop %v6187
        %v6267 = vmul.f32 %v6187, %v6266
        %v6268 = vsub.f32 1.0, %v6267
        %v6269 = vmul.f32 %v6266, %v6268
        %v6270 = vadd.f32 %v6266, %v6269
        %vm6271 = vweird.f32 %v6187
        %vm6272 = vweird.f32 %v6266
        %vm6273 = vmor %vm6271, %vm6272
        %v6274 = vsel %vm6273, %v6266, %v6270
        %v6275 = vand.u32 2147483647, %v6187
        %vm6276 = vcmp.eq.f32.partialorder %v6275, 8.507059e+37
        %v6277 = vand.u32 %v6187, 2147483648
        %v6278 = vor.u32 1.1754944e-38, %v6277
        %v6279 = vsel %vm6276, %v6278, %v6274
        %v6280 = vrcp.pop %v6189
        %v6281 = vmul.f32 %v6189, %v6280
        %v6282 = vsub.f32 1.0, %v6281
        %v6283 = vmul.f32 %v6280, %v6282
        %v6284 = vadd.f32 %v6280, %v6283
        %vm6285 = vweird.f32 %v6189
        %vm6286 = vweird.f32 %v6280
        %vm6287 = vmor %vm6285, %vm6286
        %v6288 = vsel %vm6287, %v6280, %v6284
        %v6289 = vand.u32 2147483647, %v6189
        %vm6290 = vcmp.eq.f32.partialorder %v6289, 8.507059e+37
        %v6291 = vand.u32 %v6189, 2147483648
        %v6292 = vor.u32 1.1754944e-38, %v6291
        %v6293 = vsel %vm6290, %v6292, %v6288
        %v6294 = vrcp.pop %v6191
        %v6295 = vmul.f32 %v6191, %v6294
        %v6296 = vsub.f32 1.0, %v6295
        %v6297 = vmul.f32 %v6294, %v6296
        %v6298 = vadd.f32 %v6294, %v6297
        %vm6299 = vweird.f32 %v6191
        %vm6300 = vweird.f32 %v6294
        %vm6301 = vmor %vm6299, %vm6300
        %v6302 = vsel %vm6301, %v6294, %v6298
        %v6303 = vand.u32 2147483647, %v6191
        %vm6304 = vcmp.eq.f32.partialorder %v6303, 8.507059e+37
        %v6305 = vand.u32 %v6191, 2147483648
        %v6306 = vor.u32 1.1754944e-38, %v6305
        %v6307 = vsel %vm6304, %v6306, %v6302
        %v6308 = vrcp.pop %v6193
        %v6309 = vmul.f32 %v6193, %v6308
        %v6310 = vsub.f32 1.0, %v6309
        %v6311 = vmul.f32 %v6308, %v6310
        %v6312 = vadd.f32 %v6308, %v6311
        %vm6313 = vweird.f32 %v6193
        %vm6314 = vweird.f32 %v6308
        %vm6315 = vmor %vm6313, %vm6314
        %v6316 = vsel %vm6315, %v6308, %v6312
        %v6317 = vand.u32 2147483647, %v6193
        %vm6318 = vcmp.eq.f32.partialorder %v6317, 8.507059e+37
        %v6319 = vand.u32 %v6193, 2147483648
        %v6320 = vor.u32 1.1754944e-38, %v6319
        %v6321 = vsel %vm6318, %v6320, %v6316
        %v6322 = vrcp.pop %v6195
        %v6323 = vmul.f32 %v6195, %v6322
        %v6324 = vsub.f32 1.0, %v6323
        %v6325 = vmul.f32 %v6322, %v6324
        %v6326 = vadd.f32 %v6322, %v6325
        %vm6327 = vweird.f32 %v6195
        %vm6328 = vweird.f32 %v6322
        %vm6329 = vmor %vm6327, %vm6328
        %v6330 = vsel %vm6329, %v6322, %v6326
        %v6331 = vand.u32 2147483647, %v6195
        %vm6332 = vcmp.eq.f32.partialorder %v6331, 8.507059e+37
        %v6333 = vand.u32 %v6195, 2147483648
        %v6334 = vor.u32 1.1754944e-38, %v6333
        %v6335 = vsel %vm6332, %v6334, %v6330
        %v6336 = vrcp.pop %v6197
        %v6337 = vmul.f32 %v6197, %v6336
        %v6338 = vsub.f32 1.0, %v6337
        %v6339 = vmul.f32 %v6336, %v6338
        %v6340 = vadd.f32 %v6336, %v6339
        %vm6341 = vweird.f32 %v6197
        %vm6342 = vweird.f32 %v6336
        %vm6343 = vmor %vm6341, %vm6342
        %v6344 = vsel %vm6343, %v6336, %v6340
        %v6345 = vand.u32 2147483647, %v6197
        %vm6346 = vcmp.eq.f32.partialorder %v6345, 8.507059e+37
        %v6347 = vand.u32 %v6197, 2147483648
        %v6348 = vor.u32 1.1754944e-38, %v6347
        %v6349 = vsel %vm6346, %v6348, %v6344
        %v6350 = vrcp.pop %v6199
        %v6351 = vmul.f32 %v6199, %v6350
        %v6352 = vsub.f32 1.0, %v6351
        %v6353 = vmul.f32 %v6350, %v6352
        %v6354 = vadd.f32 %v6350, %v6353
        %vm6355 = vweird.f32 %v6199
        %vm6356 = vweird.f32 %v6350
        %vm6357 = vmor %vm6355, %vm6356
        %v6358 = vsel %vm6357, %v6350, %v6354
        %v6359 = vand.u32 2147483647, %v6199
        %vm6360 = vcmp.eq.f32.partialorder %v6359, 8.507059e+37
        %v6361 = vand.u32 %v6199, 2147483648
        %v6362 = vor.u32 1.1754944e-38, %v6361
        %v6363 = vsel %vm6360, %v6362, %v6358
        %v6364 = vrcp.pop %v6201
        %v6365 = vmul.f32 %v6201, %v6364
        %v6366 = vsub.f32 1.0, %v6365
        %v6367 = vmul.f32 %v6364, %v6366
        %v6368 = vadd.f32 %v6364, %v6367
        %vm6369 = vweird.f32 %v6201
        %vm6370 = vweird.f32 %v6364
        %vm6371 = vmor %vm6369, %vm6370
        %v6372 = vsel %vm6371, %v6364, %v6368
        %v6373 = vand.u32 2147483647, %v6201
        %vm6374 = vcmp.eq.f32.partialorder %v6373, 8.507059e+37
        %v6375 = vand.u32 %v6201, 2147483648
        %v6376 = vor.u32 1.1754944e-38, %v6375
        %v6377 = vsel %vm6374, %v6376, %v6372
        %v6378 = vrcp.pop %v6203
        %v6379 = vmul.f32 %v6203, %v6378
        %v6380 = vsub.f32 1.0, %v6379
        %v6381 = vmul.f32 %v6378, %v6380
        %v6382 = vadd.f32 %v6378, %v6381
        %vm6383 = vweird.f32 %v6203
        %vm6384 = vweird.f32 %v6378
        %vm6385 = vmor %vm6383, %vm6384
        %v6386 = vsel %vm6385, %v6378, %v6382
        %v6387 = vand.u32 2147483647, %v6203
        %vm6388 = vcmp.eq.f32.partialorder %v6387, 8.507059e+37
        %v6389 = vand.u32 %v6203, 2147483648
        %v6390 = vor.u32 1.1754944e-38, %v6389
        %v6391 = vsel %vm6388, %v6390, %v6386
        %v6392 = vrcp.pop %v6205
        %v6393 = vmul.f32 %v6205, %v6392
        %v6394 = vsub.f32 1.0, %v6393
        %v6395 = vmul.f32 %v6392, %v6394
        %v6396 = vadd.f32 %v6392, %v6395
        %vm6397 = vweird.f32 %v6205
        %vm6398 = vweird.f32 %v6392
        %vm6399 = vmor %vm6397, %vm6398
        %v6400 = vsel %vm6399, %v6392, %v6396
        %v6401 = vand.u32 2147483647, %v6205
        %vm6402 = vcmp.eq.f32.partialorder %v6401, 8.507059e+37
        %v6403 = vand.u32 %v6205, 2147483648
        %v6404 = vor.u32 1.1754944e-38, %v6403
        %v6405 = vsel %vm6402, %v6404, %v6400
        %v6406 = vrcp.pop %v6207
        %v6407 = vmul.f32 %v6207, %v6406
        %v6408 = vsub.f32 1.0, %v6407
        %v6409 = vmul.f32 %v6406, %v6408
        %v6410 = vadd.f32 %v6406, %v6409
        %vm6411 = vweird.f32 %v6207
        %vm6412 = vweird.f32 %v6406
        %vm6413 = vmor %vm6411, %vm6412
        %v6414 = vsel %vm6413, %v6406, %v6410
        %v6415 = vand.u32 2147483647, %v6207
        %vm6416 = vcmp.eq.f32.partialorder %v6415, 8.507059e+37
        %v6417 = vand.u32 %v6207, 2147483648
        %v6418 = vor.u32 1.1754944e-38, %v6417
        %v6419 = vsel %vm6416, %v6418, %v6414
        %v6420 = vrcp.pop %v6209
        %v6421 = vmul.f32 %v6209, %v6420
        %v6422 = vsub.f32 1.0, %v6421
        %v6423 = vmul.f32 %v6420, %v6422
        %v6424 = vadd.f32 %v6420, %v6423
        %vm6425 = vweird.f32 %v6209
        %vm6426 = vweird.f32 %v6420
        %vm6427 = vmor %vm6425, %vm6426
        %v6428 = vsel %vm6427, %v6420, %v6424
        %v6429 = vand.u32 2147483647, %v6209
        %vm6430 = vcmp.eq.f32.partialorder %v6429, 8.507059e+37
        %v6431 = vand.u32 %v6209, 2147483648
        %v6432 = vor.u32 1.1754944e-38, %v6431
        %v6433 = vsel %vm6430, %v6432, %v6428
        %v6434 = vmul.f32 %v6147, %v6223
        %v6435 = vmul.f32 %v6149, %v6237
        %v6436 = vmul.f32 %v6151, %v6251
        %v6437 = vmul.f32 %v6153, %v6265
        %v6438 = vmul.f32 %v6155, %v6279
        %v6439 = vmul.f32 %v6157, %v6293
        %v6440 = vmul.f32 %v6159, %v6307
        %v6441 = vmul.f32 %v6161, %v6321
        %v6442 = vmul.f32 %v6163, %v6335
        %v6443 = vmul.f32 %v6165, %v6349
        %v6444 = vmul.f32 %v6167, %v6363
        %v6445 = vmul.f32 %v6169, %v6377
        %v6446 = vmul.f32 %v6171, %v6391
        %v6447 = vmul.f32 %v6173, %v6405
        %v6448 = vmul.f32 %v6175, %v6419
        %v6449 = vmul.f32 %v6177, %v6433
        %v6450 = vpack.c.bf16 %v6434, %v6434
        %v6451 = vpack.c.bf16 %v6435, %v6435
        %v6452 = vpack.c.bf16 %v6436, %v6436
        %v6453 = vpack.c.bf16 %v6437, %v6437
        %v6454 = vpack.c.bf16 %v6438, %v6438
        %v6455 = vpack.c.bf16 %v6439, %v6439
        %v6456 = vpack.c.bf16 %v6440, %v6440
        %v6457 = vpack.c.bf16 %v6441, %v6441
        %v6458 = vpack.c.bf16 %v6442, %v6442
        %v6459 = vpack.c.bf16 %v6443, %v6443
        %v6460 = vpack.c.bf16 %v6444, %v6444
        %v6461 = vpack.c.bf16 %v6445, %v6445
        %v6462 = vpack.c.bf16 %v6446, %v6446
        %v6463 = vpack.c.bf16 %v6447, %v6447
        %v6464 = vpack.c.bf16 %v6448, %v6448
        %v6465 = vpack.c.bf16 %v6449, %v6449
        %v6482 = vunpack.c.l.b16 %v6450
        %v6483 = vunpack.c.l.b16 %v6451
        %v6484 = vunpack.c.l.b16 %v6452
        %v6485 = vunpack.c.l.b16 %v6453
        %v6486 = vunpack.c.l.b16 %v6454
        %v6487 = vunpack.c.l.b16 %v6455
        %v6488 = vunpack.c.l.b16 %v6456
        %v6489 = vunpack.c.l.b16 %v6457
        %v6490 = vunpack.c.l.b16 %v6458
        %v6491 = vunpack.c.l.b16 %v6459
        %v6492 = vunpack.c.l.b16 %v6460
        %v6493 = vunpack.c.l.b16 %v6461
        %v6494 = vunpack.c.l.b16 %v6462
        %v6495 = vunpack.c.l.b16 %v6463
        %v6496 = vunpack.c.l.b16 %v6464
        %v6497 = vunpack.c.l.b16 %v6465
        %v6498 = vpack.c.b16 %v6483, %v6482
        %v6499 = vpack.c.b16 %v6485, %v6484
        %v6500 = vpack.c.b16 %v6487, %v6486
        %v6501 = vpack.c.b16 %v6489, %v6488
        %v6502 = vpack.c.b16 %v6491, %v6490
        %v6503 = vpack.c.b16 %v6493, %v6492
        %v6504 = vpack.c.b16 %v6495, %v6494
        %v6505 = vpack.c.b16 %v6497, %v6496
        %v6530 = vunpack.c.l.b16 %v3009
        %v6531 = vunpack.c.l.b16 %v3014
        %v6532 = vunpack.c.l.b16 %v3019
        %v6533 = vunpack.c.l.b16 %v3024
        %v6534 = vunpack.c.l.b16 %v3029
        %v6535 = vunpack.c.l.b16 %v3034
        %v6536 = vunpack.c.l.b16 %v3039
        %v6537 = vunpack.c.l.b16 %v3044
        %v6538 = vunpack.c.l.b16 %v3049
        %v6539 = vunpack.c.l.b16 %v3054
        %v6540 = vunpack.c.l.b16 %v3059
        %v6541 = vunpack.c.l.b16 %v3064
        %v6542 = vunpack.c.l.b16 %v3069
        %v6543 = vunpack.c.l.b16 %v3074
        %v6544 = vunpack.c.l.b16 %v3079
        %v6545 = vunpack.c.l.b16 %v3084
        %v6546 = vpack.c.b16 %v6531, %v6530
        %v6547 = vpack.c.b16 %v6533, %v6532
        %v6548 = vpack.c.b16 %v6535, %v6534
        %v6549 = vpack.c.b16 %v6537, %v6536
        %v6550 = vpack.c.b16 %v6539, %v6538
        %v6551 = vpack.c.b16 %v6541, %v6540
        %v6552 = vpack.c.b16 %v6543, %v6542
        %v6553 = vpack.c.b16 %v6545, %v6544
        %6562 = vmatpush.bf16.msra.mxu0 %v6553
        %6563 = vmatpush.bf16.msra.mxu0 %v6552
        %6564 = vmatpush.bf16.msra.mxu0 %v6551
        %6565 = vmatpush.bf16.msra.mxu0 %v6550
        %6566 = vmatpush.bf16.msra.mxu0 %v6549
        %6567 = vmatpush.bf16.msra.mxu0 %v6548
        %6568 = vmatpush.bf16.msra.mxu0 %v6547
        %6569 = vmatpush.bf16.msra.mxu0 %v6546
        %6570 = vmatmul.bf16.gmra.mxu0 %v6498
        %v6571 = vpop.f32.mrf.mxu0
        %v6572 = vadd.f32 0.0, %v6571
        %v6573 = vpop.f32.mrf.mxu0
        %v6574 = vadd.f32 0.0, %v6573
        %6575 = vmatmul.bf16.gmra.mxu0 %v6499
        %v6576 = vpop.f32.mrf.mxu0
        %v6577 = vadd.f32 0.0, %v6576
        %v6578 = vpop.f32.mrf.mxu0
        %v6579 = vadd.f32 0.0, %v6578
        %6580 = vmatmul.bf16.gmra.mxu0 %v6500
        %v6581 = vpop.f32.mrf.mxu0
        %v6582 = vadd.f32 0.0, %v6581
        %v6583 = vpop.f32.mrf.mxu0
        %v6584 = vadd.f32 0.0, %v6583
        %6585 = vmatmul.bf16.gmra.mxu0 %v6501
        %v6586 = vpop.f32.mrf.mxu0
        %v6587 = vadd.f32 0.0, %v6586
        %v6588 = vpop.f32.mrf.mxu0
        %v6589 = vadd.f32 0.0, %v6588
        %6590 = vmatmul.bf16.gmra.mxu0 %v6502
        %v6591 = vpop.f32.mrf.mxu0
        %v6592 = vadd.f32 0.0, %v6591
        %v6593 = vpop.f32.mrf.mxu0
        %v6594 = vadd.f32 0.0, %v6593
        %6595 = vmatmul.bf16.gmra.mxu0 %v6503
        %v6596 = vpop.f32.mrf.mxu0
        %v6597 = vadd.f32 0.0, %v6596
        %v6598 = vpop.f32.mrf.mxu0
        %v6599 = vadd.f32 0.0, %v6598
        %6600 = vmatmul.bf16.gmra.mxu0 %v6504
        %v6601 = vpop.f32.mrf.mxu0
        %v6602 = vadd.f32 0.0, %v6601
        %v6603 = vpop.f32.mrf.mxu0
        %v6604 = vadd.f32 0.0, %v6603
        %6605 = vmatmul.bf16.gmra.mxu0 %v6505
        %v6606 = vpop.f32.mrf.mxu0
        %v6607 = vadd.f32 0.0, %v6606
        %v6608 = vpop.f32.mrf.mxu0
        %v6609 = vadd.f32 0.0, %v6608
        %6610 = vdwg.mxu0
        %6611 = vrot.lane.b32.xlu0 %v3007, 64
        %v6612 = vpop.permute.xlu0 %6611
        %6613 = vrot.lane.b32.xlu0 %v3012, 64
        %v6614 = vpop.permute.xlu0 %6613
        %6615 = vrot.lane.b32.xlu0 %v3017, 64
        %v6616 = vpop.permute.xlu0 %6615
        %6617 = vrot.lane.b32.xlu0 %v3022, 64
        %v6618 = vpop.permute.xlu0 %6617
        %6619 = vrot.lane.b32.xlu0 %v3027, 64
        %v6620 = vpop.permute.xlu0 %6619
        %6621 = vrot.lane.b32.xlu0 %v3032, 64
        %v6622 = vpop.permute.xlu0 %6621
        %6623 = vrot.lane.b32.xlu0 %v3037, 64
        %v6624 = vpop.permute.xlu0 %6623
        %6625 = vrot.lane.b32.xlu0 %v3042, 64
        %v6626 = vpop.permute.xlu0 %6625
        %6627 = vrot.lane.b32.xlu0 %v3047, 64
        %v6628 = vpop.permute.xlu0 %6627
        %6629 = vrot.lane.b32.xlu0 %v3052, 64
        %v6630 = vpop.permute.xlu0 %6629
        %6631 = vrot.lane.b32.xlu0 %v3057, 64
        %v6632 = vpop.permute.xlu0 %6631
        %6633 = vrot.lane.b32.xlu0 %v3062, 64
        %v6634 = vpop.permute.xlu0 %6633
        %6635 = vrot.lane.b32.xlu0 %v3067, 64
        %v6636 = vpop.permute.xlu0 %6635
        %6637 = vrot.lane.b32.xlu0 %v3072, 64
        %v6638 = vpop.permute.xlu0 %6637
        %6639 = vrot.lane.b32.xlu0 %v3077, 64
        %v6640 = vpop.permute.xlu0 %6639
        %6641 = vrot.lane.b32.xlu0 %v3082, 64
        %v6642 = vpop.permute.xlu0 %6641
        %v6643 = vrot.slane %v6612, 4
        %v6644 = vrot.slane %v6614, 4
        %v6645 = vrot.slane %v6616, 4
        %v6646 = vrot.slane %v6618, 4
        %v6647 = vrot.slane %v6620, 4
        %v6648 = vrot.slane %v6622, 4
        %v6649 = vrot.slane %v6624, 4
        %v6650 = vrot.slane %v6626, 4
        %v6651 = vrot.slane %v6628, 4
        %v6652 = vrot.slane %v6630, 4
        %v6653 = vrot.slane %v6632, 4
        %v6654 = vrot.slane %v6634, 4
        %v6655 = vrot.slane %v6636, 4
        %v6656 = vrot.slane %v6638, 4
        %v6657 = vrot.slane %v6640, 4
        %v6658 = vrot.slane %v6642, 4
        %6659 = vrot.lane.b32.xlu0 %v5969, 64
        %v6660 = vpop.permute.xlu0 %6659
        %6661 = vrot.lane.b32.xlu0 %v5970, 64
        %v6662 = vpop.permute.xlu0 %6661
        %6663 = vrot.lane.b32.xlu0 %v5971, 64
        %v6664 = vpop.permute.xlu0 %6663
        %6665 = vrot.lane.b32.xlu0 %v5972, 64
        %v6666 = vpop.permute.xlu0 %6665
        %6667 = vrot.lane.b32.xlu0 %v5973, 64
        %v6668 = vpop.permute.xlu0 %6667
        %6669 = vrot.lane.b32.xlu0 %v5974, 64
        %v6670 = vpop.permute.xlu0 %6669
        %6671 = vrot.lane.b32.xlu0 %v5975, 64
        %v6672 = vpop.permute.xlu0 %6671
        %6673 = vrot.lane.b32.xlu0 %v5976, 64
        %v6674 = vpop.permute.xlu0 %6673
        %v6675 = vunpack.c.l.b16 %v6643
        %v6676 = vunpack.c.l.b16 %v6644
        %v6677 = vunpack.c.l.b16 %v6645
        %v6678 = vunpack.c.l.b16 %v6646
        %v6679 = vunpack.c.l.b16 %v6647
        %v6680 = vunpack.c.l.b16 %v6648
        %v6681 = vunpack.c.l.b16 %v6649
        %v6682 = vunpack.c.l.b16 %v6650
        %v6683 = vunpack.c.l.b16 %v6651
        %v6684 = vunpack.c.l.b16 %v6652
        %v6685 = vunpack.c.l.b16 %v6653
        %v6686 = vunpack.c.l.b16 %v6654
        %v6687 = vunpack.c.l.b16 %v6655
        %v6688 = vunpack.c.l.b16 %v6656
        %v6689 = vunpack.c.l.b16 %v6657
        %v6690 = vunpack.c.l.b16 %v6658
        %v6691 = vpack.c.b16 %v6676, %v6675
        %v6692 = vpack.c.b16 %v6678, %v6677
        %v6693 = vpack.c.b16 %v6680, %v6679
        %v6694 = vpack.c.b16 %v6682, %v6681
        %v6695 = vpack.c.b16 %v6684, %v6683
        %v6696 = vpack.c.b16 %v6686, %v6685
        %v6697 = vpack.c.b16 %v6688, %v6687
        %v6698 = vpack.c.b16 %v6690, %v6689
        %v6700 = vsel %vm3232, %v6660, 0
        %v6703 = vsel %vm3232, %v6662, 0
        %v6706 = vsel %vm3232, %v6664, 0
        %v6709 = vsel %vm3232, %v6666, 0
        %v6712 = vsel %vm3232, %v6668, 0
        %v6715 = vsel %vm3232, %v6670, 0
        %v6718 = vsel %vm3232, %v6672, 0
        %v6721 = vsel %vm3232, %v6674, 0
        %v6724 = vsel %vm3232, %v6691, 0
        %v6727 = vsel %vm3232, %v6692, 0
        %v6730 = vsel %vm3232, %v6693, 0
        %v6733 = vsel %vm3232, %v6694, 0
        %v6736 = vsel %vm3232, %v6695, 0
        %v6739 = vsel %vm3232, %v6696, 0
        %v6742 = vsel %vm3232, %v6697, 0
        %v6745 = vsel %vm3232, %v6698, 0
        %6747 = vmatpush.bf16.xpose.msra.mxu0 %v6745
        %6748 = vmatpush.bf16.xpose.msra.mxu0 %v6742
        %6749 = vmatpush.bf16.xpose.msra.mxu0 %v6739
        %6750 = vmatpush.bf16.xpose.msra.mxu0 %v6736
        %6751 = vmatpush.bf16.xpose.msra.mxu0 %v6733
        %6752 = vmatpush.bf16.xpose.msra.mxu0 %v6730
        %6753 = vmatpush.bf16.xpose.msra.mxu0 %v6727
        %6754 = vmatpush.bf16.xpose.msra.mxu0 %v6724
        %6755 = vmatmul.bf16.gmra.mxu0 %v6700
        %v6756 = vpop.f32.mrf.mxu0
        %v6757 = vadd.f32 %v3120, %v6756
        %v6758 = vpop.f32.mrf.mxu0
        %v6759 = vadd.f32 %v3121, %v6758
        %6760 = vmatmul.bf16.gmra.mxu0 %v6703
        %v6761 = vpop.f32.mrf.mxu0
        %v6762 = vadd.f32 %v3122, %v6761
        %v6763 = vpop.f32.mrf.mxu0
        %v6764 = vadd.f32 %v3123, %v6763
        %6765 = vmatmul.bf16.gmra.mxu0 %v6706
        %v6766 = vpop.f32.mrf.mxu0
        %v6767 = vadd.f32 %v3124, %v6766
        %v6768 = vpop.f32.mrf.mxu0
        %v6769 = vadd.f32 %v3125, %v6768
        %6770 = vmatmul.bf16.gmra.mxu0 %v6709
        %v6771 = vpop.f32.mrf.mxu0
        %v6772 = vadd.f32 %v3126, %v6771
        %v6773 = vpop.f32.mrf.mxu0
        %v6774 = vadd.f32 %v3127, %v6773
        %6775 = vmatmul.bf16.gmra.mxu0 %v6712
        %v6776 = vpop.f32.mrf.mxu0
        %v6777 = vadd.f32 %v3128, %v6776
        %v6778 = vpop.f32.mrf.mxu0
        %v6779 = vadd.f32 %v3129, %v6778
        %6780 = vmatmul.bf16.gmra.mxu0 %v6715
        %v6781 = vpop.f32.mrf.mxu0
        %v6782 = vadd.f32 %v3130, %v6781
        %v6783 = vpop.f32.mrf.mxu0
        %v6784 = vadd.f32 %v3131, %v6783
        %6785 = vmatmul.bf16.gmra.mxu0 %v6718
        %v6786 = vpop.f32.mrf.mxu0
        %v6787 = vadd.f32 %v3132, %v6786
        %v6788 = vpop.f32.mrf.mxu0
        %v6789 = vadd.f32 %v3133, %v6788
        %6790 = vmatmul.bf16.gmra.mxu0 %v6721
        %v6791 = vpop.f32.mrf.mxu0
        %v6792 = vadd.f32 %v3134, %v6791
        %v6793 = vpop.f32.mrf.mxu0
        %v6794 = vadd.f32 %v3135, %v6793
        %6795 = vdwg.mxu0
        %6796 = vmax.xlane.f32.xlu0 %v6757
        %v6797 = vpop.xlane.xlu0 %6796
        %6798 = vmax.xlane.f32.xlu0 %v6759
        %v6799 = vpop.xlane.xlu0 %6798
        %6800 = vmax.xlane.f32.xlu0 %v6762
        %v6801 = vpop.xlane.xlu0 %6800
        %6802 = vmax.xlane.f32.xlu0 %v6764
        %v6803 = vpop.xlane.xlu0 %6802
        %6804 = vmax.xlane.f32.xlu0 %v6767
        %v6805 = vpop.xlane.xlu0 %6804
        %6806 = vmax.xlane.f32.xlu0 %v6769
        %v6807 = vpop.xlane.xlu0 %6806
        %6808 = vmax.xlane.f32.xlu0 %v6772
        %v6809 = vpop.xlane.xlu0 %6808
        %6810 = vmax.xlane.f32.xlu0 %v6774
        %v6811 = vpop.xlane.xlu0 %6810
        %6812 = vmax.xlane.f32.xlu0 %v6777
        %v6813 = vpop.xlane.xlu0 %6812
        %6814 = vmax.xlane.f32.xlu0 %v6779
        %v6815 = vpop.xlane.xlu0 %6814
        %6816 = vmax.xlane.f32.xlu0 %v6782
        %v6817 = vpop.xlane.xlu0 %6816
        %6818 = vmax.xlane.f32.xlu0 %v6784
        %v6819 = vpop.xlane.xlu0 %6818
        %6820 = vmax.xlane.f32.xlu0 %v6787
        %v6821 = vpop.xlane.xlu0 %6820
        %6822 = vmax.xlane.f32.xlu0 %v6789
        %v6823 = vpop.xlane.xlu0 %6822
        %6824 = vmax.xlane.f32.xlu0 %v6792
        %v6825 = vpop.xlane.xlu0 %6824
        %6826 = vmax.xlane.f32.xlu0 %v6794
        %v6827 = vpop.xlane.xlu0 %6826
        %v6828 = vsub.f32 %v6757, %v6797
        %v6829 = vsub.f32 %v6759, %v6799
        %v6830 = vsub.f32 %v6762, %v6801
        %v6831 = vsub.f32 %v6764, %v6803
        %v6832 = vsub.f32 %v6767, %v6805
        %v6833 = vsub.f32 %v6769, %v6807
        %v6834 = vsub.f32 %v6772, %v6809
        %v6835 = vsub.f32 %v6774, %v6811
        %v6836 = vsub.f32 %v6777, %v6813
        %v6837 = vsub.f32 %v6779, %v6815
        %v6838 = vsub.f32 %v6782, %v6817
        %v6839 = vsub.f32 %v6784, %v6819
        %v6840 = vsub.f32 %v6787, %v6821
        %v6841 = vsub.f32 %v6789, %v6823
        %v6842 = vsub.f32 %v6792, %v6825
        %v6843 = vsub.f32 %v6794, %v6827
        %v6844 = vmul.f32 %v6828, 1.442695
        %v6845 = vpow.pop %v6844
        %v6846 = vmul.f32 %v6829, 1.442695
        %v6847 = vpow.pop %v6846
        %v6848 = vmul.f32 %v6830, 1.442695
        %v6849 = vpow.pop %v6848
        %v6850 = vmul.f32 %v6831, 1.442695
        %v6851 = vpow.pop %v6850
        %v6852 = vmul.f32 %v6832, 1.442695
        %v6853 = vpow.pop %v6852
        %v6854 = vmul.f32 %v6833, 1.442695
        %v6855 = vpow.pop %v6854
        %v6856 = vmul.f32 %v6834, 1.442695
        %v6857 = vpow.pop %v6856
        %v6858 = vmul.f32 %v6835, 1.442695
        %v6859 = vpow.pop %v6858
        %v6860 = vmul.f32 %v6836, 1.442695
        %v6861 = vpow.pop %v6860
        %v6862 = vmul.f32 %v6837, 1.442695
        %v6863 = vpow.pop %v6862
        %v6864 = vmul.f32 %v6838, 1.442695
        %v6865 = vpow.pop %v6864
        %v6866 = vmul.f32 %v6839, 1.442695
        %v6867 = vpow.pop %v6866
        %v6868 = vmul.f32 %v6840, 1.442695
        %v6869 = vpow.pop %v6868
        %v6870 = vmul.f32 %v6841, 1.442695
        %v6871 = vpow.pop %v6870
        %v6872 = vmul.f32 %v6842, 1.442695
        %v6873 = vpow.pop %v6872
        %v6874 = vmul.f32 %v6843, 1.442695
        %v6875 = vpow.pop %v6874
        %6876 = vadd.xlane.f32.xlu0 %v6845
        %v6877 = vpop.xlane.xlu0 %6876
        %6878 = vadd.xlane.f32.xlu0 %v6847
        %v6879 = vpop.xlane.xlu0 %6878
        %6880 = vadd.xlane.f32.xlu0 %v6849
        %v6881 = vpop.xlane.xlu0 %6880
        %6882 = vadd.xlane.f32.xlu0 %v6851
        %v6883 = vpop.xlane.xlu0 %6882
        %6884 = vadd.xlane.f32.xlu0 %v6853
        %v6885 = vpop.xlane.xlu0 %6884
        %6886 = vadd.xlane.f32.xlu0 %v6855
        %v6887 = vpop.xlane.xlu0 %6886
        %6888 = vadd.xlane.f32.xlu0 %v6857
        %v6889 = vpop.xlane.xlu0 %6888
        %6890 = vadd.xlane.f32.xlu0 %v6859
        %v6891 = vpop.xlane.xlu0 %6890
        %6892 = vadd.xlane.f32.xlu0 %v6861
        %v6893 = vpop.xlane.xlu0 %6892
        %6894 = vadd.xlane.f32.xlu0 %v6863
        %v6895 = vpop.xlane.xlu0 %6894
        %6896 = vadd.xlane.f32.xlu0 %v6865
        %v6897 = vpop.xlane.xlu0 %6896
        %6898 = vadd.xlane.f32.xlu0 %v6867
        %v6899 = vpop.xlane.xlu0 %6898
        %6900 = vadd.xlane.f32.xlu0 %v6869
        %v6901 = vpop.xlane.xlu0 %6900
        %6902 = vadd.xlane.f32.xlu0 %v6871
        %v6903 = vpop.xlane.xlu0 %6902
        %6904 = vadd.xlane.f32.xlu0 %v6873
        %v6905 = vpop.xlane.xlu0 %6904
        %6906 = vadd.xlane.f32.xlu0 %v6875
        %v6907 = vpop.xlane.xlu0 %6906
        %v6908 = vrcp.pop %v6877
        %v6909 = vmul.f32 %v6877, %v6908
        %v6910 = vsub.f32 1.0, %v6909
        %v6911 = vmul.f32 %v6908, %v6910
        %v6912 = vadd.f32 %v6908, %v6911
        %vm6913 = vweird.f32 %v6877
        %vm6914 = vweird.f32 %v6908
        %vm6915 = vmor %vm6913, %vm6914
        %v6916 = vsel %vm6915, %v6908, %v6912
        %v6917 = vand.u32 2147483647, %v6877
        %vm6918 = vcmp.eq.f32.partialorder %v6917, 8.507059e+37
        %v6919 = vand.u32 %v6877, 2147483648
        %v6920 = vor.u32 1.1754944e-38, %v6919
        %v6921 = vsel %vm6918, %v6920, %v6916
        %v6922 = vrcp.pop %v6879
        %v6923 = vmul.f32 %v6879, %v6922
        %v6924 = vsub.f32 1.0, %v6923
        %v6925 = vmul.f32 %v6922, %v6924
        %v6926 = vadd.f32 %v6922, %v6925
        %vm6927 = vweird.f32 %v6879
        %vm6928 = vweird.f32 %v6922
        %vm6929 = vmor %vm6927, %vm6928
        %v6930 = vsel %vm6929, %v6922, %v6926
        %v6931 = vand.u32 2147483647, %v6879
        %vm6932 = vcmp.eq.f32.partialorder %v6931, 8.507059e+37
        %v6933 = vand.u32 %v6879, 2147483648
        %v6934 = vor.u32 1.1754944e-38, %v6933
        %v6935 = vsel %vm6932, %v6934, %v6930
        %v6936 = vrcp.pop %v6881
        %v6937 = vmul.f32 %v6881, %v6936
        %v6938 = vsub.f32 1.0, %v6937
        %v6939 = vmul.f32 %v6936, %v6938
        %v6940 = vadd.f32 %v6936, %v6939
        %vm6941 = vweird.f32 %v6881
        %vm6942 = vweird.f32 %v6936
        %vm6943 = vmor %vm6941, %vm6942
        %v6944 = vsel %vm6943, %v6936, %v6940
        %v6945 = vand.u32 2147483647, %v6881
        %vm6946 = vcmp.eq.f32.partialorder %v6945, 8.507059e+37
        %v6947 = vand.u32 %v6881, 2147483648
        %v6948 = vor.u32 1.1754944e-38, %v6947
        %v6949 = vsel %vm6946, %v6948, %v6944
        %v6950 = vrcp.pop %v6883
        %v6951 = vmul.f32 %v6883, %v6950
        %v6952 = vsub.f32 1.0, %v6951
        %v6953 = vmul.f32 %v6950, %v6952
        %v6954 = vadd.f32 %v6950, %v6953
        %vm6955 = vweird.f32 %v6883
        %vm6956 = vweird.f32 %v6950
        %vm6957 = vmor %vm6955, %vm6956
        %v6958 = vsel %vm6957, %v6950, %v6954
        %v6959 = vand.u32 2147483647, %v6883
        %vm6960 = vcmp.eq.f32.partialorder %v6959, 8.507059e+37
        %v6961 = vand.u32 %v6883, 2147483648
        %v6962 = vor.u32 1.1754944e-38, %v6961
        %v6963 = vsel %vm6960, %v6962, %v6958
        %v6964 = vrcp.pop %v6885
        %v6965 = vmul.f32 %v6885, %v6964
        %v6966 = vsub.f32 1.0, %v6965
        %v6967 = vmul.f32 %v6964, %v6966
        %v6968 = vadd.f32 %v6964, %v6967
        %vm6969 = vweird.f32 %v6885
        %vm6970 = vweird.f32 %v6964
        %vm6971 = vmor %vm6969, %vm6970
        %v6972 = vsel %vm6971, %v6964, %v6968
        %v6973 = vand.u32 2147483647, %v6885
        %vm6974 = vcmp.eq.f32.partialorder %v6973, 8.507059e+37
        %v6975 = vand.u32 %v6885, 2147483648
        %v6976 = vor.u32 1.1754944e-38, %v6975
        %v6977 = vsel %vm6974, %v6976, %v6972
        %v6978 = vrcp.pop %v6887
        %v6979 = vmul.f32 %v6887, %v6978
        %v6980 = vsub.f32 1.0, %v6979
        %v6981 = vmul.f32 %v6978, %v6980
        %v6982 = vadd.f32 %v6978, %v6981
        %vm6983 = vweird.f32 %v6887
        %vm6984 = vweird.f32 %v6978
        %vm6985 = vmor %vm6983, %vm6984
        %v6986 = vsel %vm6985, %v6978, %v6982
        %v6987 = vand.u32 2147483647, %v6887
        %vm6988 = vcmp.eq.f32.partialorder %v6987, 8.507059e+37
        %v6989 = vand.u32 %v6887, 2147483648
        %v6990 = vor.u32 1.1754944e-38, %v6989
        %v6991 = vsel %vm6988, %v6990, %v6986
        %v6992 = vrcp.pop %v6889
        %v6993 = vmul.f32 %v6889, %v6992
        %v6994 = vsub.f32 1.0, %v6993
        %v6995 = vmul.f32 %v6992, %v6994
        %v6996 = vadd.f32 %v6992, %v6995
        %vm6997 = vweird.f32 %v6889
        %vm6998 = vweird.f32 %v6992
        %vm6999 = vmor %vm6997, %vm6998
        %v7000 = vsel %vm6999, %v6992, %v6996
        %v7001 = vand.u32 2147483647, %v6889
        %vm7002 = vcmp.eq.f32.partialorder %v7001, 8.507059e+37
        %v7003 = vand.u32 %v6889, 2147483648
        %v7004 = vor.u32 1.1754944e-38, %v7003
        %v7005 = vsel %vm7002, %v7004, %v7000
        %v7006 = vrcp.pop %v6891
        %v7007 = vmul.f32 %v6891, %v7006
        %v7008 = vsub.f32 1.0, %v7007
        %v7009 = vmul.f32 %v7006, %v7008
        %v7010 = vadd.f32 %v7006, %v7009
        %vm7011 = vweird.f32 %v6891
        %vm7012 = vweird.f32 %v7006
        %vm7013 = vmor %vm7011, %vm7012
        %v7014 = vsel %vm7013, %v7006, %v7010
        %v7015 = vand.u32 2147483647, %v6891
        %vm7016 = vcmp.eq.f32.partialorder %v7015, 8.507059e+37
        %v7017 = vand.u32 %v6891, 2147483648
        %v7018 = vor.u32 1.1754944e-38, %v7017
        %v7019 = vsel %vm7016, %v7018, %v7014
        %v7020 = vrcp.pop %v6893
        %v7021 = vmul.f32 %v6893, %v7020
        %v7022 = vsub.f32 1.0, %v7021
        %v7023 = vmul.f32 %v7020, %v7022
        %v7024 = vadd.f32 %v7020, %v7023
        %vm7025 = vweird.f32 %v6893
        %vm7026 = vweird.f32 %v7020
        %vm7027 = vmor %vm7025, %vm7026
        %v7028 = vsel %vm7027, %v7020, %v7024
        %v7029 = vand.u32 2147483647, %v6893
        %vm7030 = vcmp.eq.f32.partialorder %v7029, 8.507059e+37
        %v7031 = vand.u32 %v6893, 2147483648
        %v7032 = vor.u32 1.1754944e-38, %v7031
        %v7033 = vsel %vm7030, %v7032, %v7028
        %v7034 = vrcp.pop %v6895
        %v7035 = vmul.f32 %v6895, %v7034
        %v7036 = vsub.f32 1.0, %v7035
        %v7037 = vmul.f32 %v7034, %v7036
        %v7038 = vadd.f32 %v7034, %v7037
        %vm7039 = vweird.f32 %v6895
        %vm7040 = vweird.f32 %v7034
        %vm7041 = vmor %vm7039, %vm7040
        %v7042 = vsel %vm7041, %v7034, %v7038
        %v7043 = vand.u32 2147483647, %v6895
        %vm7044 = vcmp.eq.f32.partialorder %v7043, 8.507059e+37
        %v7045 = vand.u32 %v6895, 2147483648
        %v7046 = vor.u32 1.1754944e-38, %v7045
        %v7047 = vsel %vm7044, %v7046, %v7042
        %v7048 = vrcp.pop %v6897
        %v7049 = vmul.f32 %v6897, %v7048
        %v7050 = vsub.f32 1.0, %v7049
        %v7051 = vmul.f32 %v7048, %v7050
        %v7052 = vadd.f32 %v7048, %v7051
        %vm7053 = vweird.f32 %v6897
        %vm7054 = vweird.f32 %v7048
        %vm7055 = vmor %vm7053, %vm7054
        %v7056 = vsel %vm7055, %v7048, %v7052
        %v7057 = vand.u32 2147483647, %v6897
        %vm7058 = vcmp.eq.f32.partialorder %v7057, 8.507059e+37
        %v7059 = vand.u32 %v6897, 2147483648
        %v7060 = vor.u32 1.1754944e-38, %v7059
        %v7061 = vsel %vm7058, %v7060, %v7056
        %v7062 = vrcp.pop %v6899
        %v7063 = vmul.f32 %v6899, %v7062
        %v7064 = vsub.f32 1.0, %v7063
        %v7065 = vmul.f32 %v7062, %v7064
        %v7066 = vadd.f32 %v7062, %v7065
        %vm7067 = vweird.f32 %v6899
        %vm7068 = vweird.f32 %v7062
        %vm7069 = vmor %vm7067, %vm7068
        %v7070 = vsel %vm7069, %v7062, %v7066
        %v7071 = vand.u32 2147483647, %v6899
        %vm7072 = vcmp.eq.f32.partialorder %v7071, 8.507059e+37
        %v7073 = vand.u32 %v6899, 2147483648
        %v7074 = vor.u32 1.1754944e-38, %v7073
        %v7075 = vsel %vm7072, %v7074, %v7070
        %v7076 = vrcp.pop %v6901
        %v7077 = vmul.f32 %v6901, %v7076
        %v7078 = vsub.f32 1.0, %v7077
        %v7079 = vmul.f32 %v7076, %v7078
        %v7080 = vadd.f32 %v7076, %v7079
        %vm7081 = vweird.f32 %v6901
        %vm7082 = vweird.f32 %v7076
        %vm7083 = vmor %vm7081, %vm7082
        %v7084 = vsel %vm7083, %v7076, %v7080
        %v7085 = vand.u32 2147483647, %v6901
        %vm7086 = vcmp.eq.f32.partialorder %v7085, 8.507059e+37
        %v7087 = vand.u32 %v6901, 2147483648
        %v7088 = vor.u32 1.1754944e-38, %v7087
        %v7089 = vsel %vm7086, %v7088, %v7084
        %v7090 = vrcp.pop %v6903
        %v7091 = vmul.f32 %v6903, %v7090
        %v7092 = vsub.f32 1.0, %v7091
        %v7093 = vmul.f32 %v7090, %v7092
        %v7094 = vadd.f32 %v7090, %v7093
        %vm7095 = vweird.f32 %v6903
        %vm7096 = vweird.f32 %v7090
        %vm7097 = vmor %vm7095, %vm7096
        %v7098 = vsel %vm7097, %v7090, %v7094
        %v7099 = vand.u32 2147483647, %v6903
        %vm7100 = vcmp.eq.f32.partialorder %v7099, 8.507059e+37
        %v7101 = vand.u32 %v6903, 2147483648
        %v7102 = vor.u32 1.1754944e-38, %v7101
        %v7103 = vsel %vm7100, %v7102, %v7098
        %v7104 = vrcp.pop %v6905
        %v7105 = vmul.f32 %v6905, %v7104
        %v7106 = vsub.f32 1.0, %v7105
        %v7107 = vmul.f32 %v7104, %v7106
        %v7108 = vadd.f32 %v7104, %v7107
        %vm7109 = vweird.f32 %v6905
        %vm7110 = vweird.f32 %v7104
        %vm7111 = vmor %vm7109, %vm7110
        %v7112 = vsel %vm7111, %v7104, %v7108
        %v7113 = vand.u32 2147483647, %v6905
        %vm7114 = vcmp.eq.f32.partialorder %v7113, 8.507059e+37
        %v7115 = vand.u32 %v6905, 2147483648
        %v7116 = vor.u32 1.1754944e-38, %v7115
        %v7117 = vsel %vm7114, %v7116, %v7112
        %v7118 = vrcp.pop %v6907
        %v7119 = vmul.f32 %v6907, %v7118
        %v7120 = vsub.f32 1.0, %v7119
        %v7121 = vmul.f32 %v7118, %v7120
        %v7122 = vadd.f32 %v7118, %v7121
        %vm7123 = vweird.f32 %v6907
        %vm7124 = vweird.f32 %v7118
        %vm7125 = vmor %vm7123, %vm7124
        %v7126 = vsel %vm7125, %v7118, %v7122
        %v7127 = vand.u32 2147483647, %v6907
        %vm7128 = vcmp.eq.f32.partialorder %v7127, 8.507059e+37
        %v7129 = vand.u32 %v6907, 2147483648
        %v7130 = vor.u32 1.1754944e-38, %v7129
        %v7131 = vsel %vm7128, %v7130, %v7126
        %v7132 = vmul.f32 %v6845, %v6921
        %v7133 = vmul.f32 %v6847, %v6935
        %v7134 = vmul.f32 %v6849, %v6949
        %v7135 = vmul.f32 %v6851, %v6963
        %v7136 = vmul.f32 %v6853, %v6977
        %v7137 = vmul.f32 %v6855, %v6991
        %v7138 = vmul.f32 %v6857, %v7005
        %v7139 = vmul.f32 %v6859, %v7019
        %v7140 = vmul.f32 %v6861, %v7033
        %v7141 = vmul.f32 %v6863, %v7047
        %v7142 = vmul.f32 %v6865, %v7061
        %v7143 = vmul.f32 %v6867, %v7075
        %v7144 = vmul.f32 %v6869, %v7089
        %v7145 = vmul.f32 %v6871, %v7103
        %v7146 = vmul.f32 %v6873, %v7117
        %v7147 = vmul.f32 %v6875, %v7131
        %v7148 = vpack.c.bf16 %v7132, %v7132
        %v7149 = vpack.c.bf16 %v7133, %v7133
        %v7150 = vpack.c.bf16 %v7134, %v7134
        %v7151 = vpack.c.bf16 %v7135, %v7135
        %v7152 = vpack.c.bf16 %v7136, %v7136
        %v7153 = vpack.c.bf16 %v7137, %v7137
        %v7154 = vpack.c.bf16 %v7138, %v7138
        %v7155 = vpack.c.bf16 %v7139, %v7139
        %v7156 = vpack.c.bf16 %v7140, %v7140
        %v7157 = vpack.c.bf16 %v7141, %v7141
        %v7158 = vpack.c.bf16 %v7142, %v7142
        %v7159 = vpack.c.bf16 %v7143, %v7143
        %v7160 = vpack.c.bf16 %v7144, %v7144
        %v7161 = vpack.c.bf16 %v7145, %v7145
        %v7162 = vpack.c.bf16 %v7146, %v7146
        %v7163 = vpack.c.bf16 %v7147, %v7147
        %v7180 = vunpack.c.l.b16 %v7148
        %v7181 = vunpack.c.l.b16 %v7149
        %v7182 = vunpack.c.l.b16 %v7150
        %v7183 = vunpack.c.l.b16 %v7151
        %v7184 = vunpack.c.l.b16 %v7152
        %v7185 = vunpack.c.l.b16 %v7153
        %v7186 = vunpack.c.l.b16 %v7154
        %v7187 = vunpack.c.l.b16 %v7155
        %v7188 = vunpack.c.l.b16 %v7156
        %v7189 = vunpack.c.l.b16 %v7157
        %v7190 = vunpack.c.l.b16 %v7158
        %v7191 = vunpack.c.l.b16 %v7159
        %v7192 = vunpack.c.l.b16 %v7160
        %v7193 = vunpack.c.l.b16 %v7161
        %v7194 = vunpack.c.l.b16 %v7162
        %v7195 = vunpack.c.l.b16 %v7163
        %v7196 = vpack.c.b16 %v7181, %v7180
        %v7197 = vpack.c.b16 %v7183, %v7182
        %v7198 = vpack.c.b16 %v7185, %v7184
        %v7199 = vpack.c.b16 %v7187, %v7186
        %v7200 = vpack.c.b16 %v7189, %v7188
        %v7201 = vpack.c.b16 %v7191, %v7190
        %v7202 = vpack.c.b16 %v7193, %v7192
        %v7203 = vpack.c.b16 %v7195, %v7194
        %7212 = vrot.lane.b32.xlu0 %v6546, 64
        %v7213 = vpop.permute.xlu0 %7212
        %7214 = vrot.lane.b32.xlu0 %v6547, 64
        %v7215 = vpop.permute.xlu0 %7214
        %7216 = vrot.lane.b32.xlu0 %v6548, 64
        %v7217 = vpop.permute.xlu0 %7216
        %7218 = vrot.lane.b32.xlu0 %v6549, 64
        %v7219 = vpop.permute.xlu0 %7218
        %7220 = vrot.lane.b32.xlu0 %v6550, 64
        %v7221 = vpop.permute.xlu0 %7220
        %7222 = vrot.lane.b32.xlu0 %v6551, 64
        %v7223 = vpop.permute.xlu0 %7222
        %7224 = vrot.lane.b32.xlu0 %v6552, 64
        %v7225 = vpop.permute.xlu0 %7224
        %7226 = vrot.lane.b32.xlu0 %v6553, 64
        %v7227 = vpop.permute.xlu0 %7226
        %7236 = vmatpush.bf16.msra.mxu0 %v7227
        %7237 = vmatpush.bf16.msra.mxu0 %v7225
        %7238 = vmatpush.bf16.msra.mxu0 %v7223
        %7239 = vmatpush.bf16.msra.mxu0 %v7221
        %7240 = vmatpush.bf16.msra.mxu0 %v7219
        %7241 = vmatpush.bf16.msra.mxu0 %v7217
        %7242 = vmatpush.bf16.msra.mxu0 %v7215
        %7243 = vmatpush.bf16.msra.mxu0 %v7213
        %7244 = vmatmul.bf16.gmra.mxu0 %v7196
        %v7245 = vpop.f32.mrf.mxu0
        %v7246 = vadd.f32 0.0, %v7245
        %v7247 = vpop.f32.mrf.mxu0
        %v7248 = vadd.f32 0.0, %v7247
        %7249 = vmatmul.bf16.gmra.mxu0 %v7197
        %v7250 = vpop.f32.mrf.mxu0
        %v7251 = vadd.f32 0.0, %v7250
        %v7252 = vpop.f32.mrf.mxu0
        %v7253 = vadd.f32 0.0, %v7252
        %7254 = vmatmul.bf16.gmra.mxu0 %v7198
        %v7255 = vpop.f32.mrf.mxu0
        %v7256 = vadd.f32 0.0, %v7255
        %v7257 = vpop.f32.mrf.mxu0
        %v7258 = vadd.f32 0.0, %v7257
        %7259 = vmatmul.bf16.gmra.mxu0 %v7199
        %v7260 = vpop.f32.mrf.mxu0
        %v7261 = vadd.f32 0.0, %v7260
        %v7262 = vpop.f32.mrf.mxu0
        %v7263 = vadd.f32 0.0, %v7262
        %7264 = vmatmul.bf16.gmra.mxu0 %v7200
        %v7265 = vpop.f32.mrf.mxu0
        %v7266 = vadd.f32 0.0, %v7265
        %v7267 = vpop.f32.mrf.mxu0
        %v7268 = vadd.f32 0.0, %v7267
        %7269 = vmatmul.bf16.gmra.mxu0 %v7201
        %v7270 = vpop.f32.mrf.mxu0
        %v7271 = vadd.f32 0.0, %v7270
        %v7272 = vpop.f32.mrf.mxu0
        %v7273 = vadd.f32 0.0, %v7272
        %7274 = vmatmul.bf16.gmra.mxu0 %v7202
        %v7275 = vpop.f32.mrf.mxu0
        %v7276 = vadd.f32 0.0, %v7275
        %v7277 = vpop.f32.mrf.mxu0
        %v7278 = vadd.f32 0.0, %v7277
        %7279 = vmatmul.bf16.gmra.mxu0 %v7203
        %v7280 = vpop.f32.mrf.mxu0
        %v7281 = vadd.f32 0.0, %v7280
        %v7282 = vpop.f32.mrf.mxu0
        %v7283 = vadd.f32 0.0, %v7282
        %7284 = vdwg.mxu0
        %7301 = vrot.lane.b32.xlu0 %v4478, 64
        %v7302 = vpop.permute.xlu0 %7301
        %7303 = vrot.lane.b32.xlu0 %v4480, 64
        %v7304 = vpop.permute.xlu0 %7303
        %7305 = vrot.lane.b32.xlu0 %v4483, 64
        %v7306 = vpop.permute.xlu0 %7305
        %7307 = vrot.lane.b32.xlu0 %v4485, 64
        %v7308 = vpop.permute.xlu0 %7307
        %7309 = vrot.lane.b32.xlu0 %v4488, 64
        %v7310 = vpop.permute.xlu0 %7309
        %7311 = vrot.lane.b32.xlu0 %v4490, 64
        %v7312 = vpop.permute.xlu0 %7311
        %7313 = vrot.lane.b32.xlu0 %v4493, 64
        %v7314 = vpop.permute.xlu0 %7313
        %7315 = vrot.lane.b32.xlu0 %v4495, 64
        %v7316 = vpop.permute.xlu0 %7315
        %7317 = vrot.lane.b32.xlu0 %v4498, 64
        %v7318 = vpop.permute.xlu0 %7317
        %7319 = vrot.lane.b32.xlu0 %v4500, 64
        %v7320 = vpop.permute.xlu0 %7319
        %7321 = vrot.lane.b32.xlu0 %v4503, 64
        %v7322 = vpop.permute.xlu0 %7321
        %7323 = vrot.lane.b32.xlu0 %v4505, 64
        %v7324 = vpop.permute.xlu0 %7323
        %7325 = vrot.lane.b32.xlu0 %v4508, 64
        %v7326 = vpop.permute.xlu0 %7325
        %7327 = vrot.lane.b32.xlu0 %v4510, 64
        %v7328 = vpop.permute.xlu0 %7327
        %7329 = vrot.lane.b32.xlu0 %v4513, 64
        %v7330 = vpop.permute.xlu0 %7329
        %7331 = vrot.lane.b32.xlu0 %v4515, 64
        %v7332 = vpop.permute.xlu0 %7331
        %7365 = vrot.lane.b32.xlu0 %v5898, 64
        %v7366 = vpop.permute.xlu0 %7365
        %7367 = vrot.lane.b32.xlu0 %v5900, 64
        %v7368 = vpop.permute.xlu0 %7367
        %7369 = vrot.lane.b32.xlu0 %v5903, 64
        %v7370 = vpop.permute.xlu0 %7369
        %7371 = vrot.lane.b32.xlu0 %v5905, 64
        %v7372 = vpop.permute.xlu0 %7371
        %7373 = vrot.lane.b32.xlu0 %v5908, 64
        %v7374 = vpop.permute.xlu0 %7373
        %7375 = vrot.lane.b32.xlu0 %v5910, 64
        %v7376 = vpop.permute.xlu0 %7375
        %7377 = vrot.lane.b32.xlu0 %v5913, 64
        %v7378 = vpop.permute.xlu0 %7377
        %7379 = vrot.lane.b32.xlu0 %v5915, 64
        %v7380 = vpop.permute.xlu0 %7379
        %7381 = vrot.lane.b32.xlu0 %v5918, 64
        %v7382 = vpop.permute.xlu0 %7381
        %7383 = vrot.lane.b32.xlu0 %v5920, 64
        %v7384 = vpop.permute.xlu0 %7383
        %7385 = vrot.lane.b32.xlu0 %v5923, 64
        %v7386 = vpop.permute.xlu0 %7385
        %7387 = vrot.lane.b32.xlu0 %v5925, 64
        %v7388 = vpop.permute.xlu0 %7387
        %7389 = vrot.lane.b32.xlu0 %v5928, 64
        %v7390 = vpop.permute.xlu0 %7389
        %7391 = vrot.lane.b32.xlu0 %v5930, 64
        %v7392 = vpop.permute.xlu0 %7391
        %7393 = vrot.lane.b32.xlu0 %v5933, 64
        %v7394 = vpop.permute.xlu0 %7393
        %7395 = vrot.lane.b32.xlu0 %v5935, 64
        %v7396 = vpop.permute.xlu0 %7395
        %7429 = vrot.lane.b32.xlu0 %v7246, 64
        %v7430 = vpop.permute.xlu0 %7429
        %7431 = vrot.lane.b32.xlu0 %v7248, 64
        %v7432 = vpop.permute.xlu0 %7431
        %7433 = vrot.lane.b32.xlu0 %v7251, 64
        %v7434 = vpop.permute.xlu0 %7433
        %7435 = vrot.lane.b32.xlu0 %v7253, 64
        %v7436 = vpop.permute.xlu0 %7435
        %7437 = vrot.lane.b32.xlu0 %v7256, 64
        %v7438 = vpop.permute.xlu0 %7437
        %7439 = vrot.lane.b32.xlu0 %v7258, 64
        %v7440 = vpop.permute.xlu0 %7439
        %7441 = vrot.lane.b32.xlu0 %v7261, 64
        %v7442 = vpop.permute.xlu0 %7441
        %7443 = vrot.lane.b32.xlu0 %v7263, 64
        %v7444 = vpop.permute.xlu0 %7443
        %7445 = vrot.lane.b32.xlu0 %v7266, 64
        %v7446 = vpop.permute.xlu0 %7445
        %7447 = vrot.lane.b32.xlu0 %v7268, 64
        %v7448 = vpop.permute.xlu0 %7447
        %7449 = vrot.lane.b32.xlu0 %v7271, 64
        %v7450 = vpop.permute.xlu0 %7449
        %7451 = vrot.lane.b32.xlu0 %v7273, 64
        %v7452 = vpop.permute.xlu0 %7451
        %7453 = vrot.lane.b32.xlu0 %v7276, 64
        %v7454 = vpop.permute.xlu0 %7453
        %7455 = vrot.lane.b32.xlu0 %v7278, 64
        %v7456 = vpop.permute.xlu0 %7455
        %7457 = vrot.lane.b32.xlu0 %v7281, 64
        %v7458 = vpop.permute.xlu0 %7457
        %7459 = vrot.lane.b32.xlu0 %v7283, 64
        %v7460 = vpop.permute.xlu0 %7459
        %v7477 = vsel %vm3232, %v3804, %v7302
        %v7478 = vsel %vm3232, %v3806, %v7304
        %v7479 = vsel %vm3232, %v3809, %v7306
        %v7480 = vsel %vm3232, %v3811, %v7308
        %v7481 = vsel %vm3232, %v3814, %v7310
        %v7482 = vsel %vm3232, %v3816, %v7312
        %v7483 = vsel %vm3232, %v3819, %v7314
        %v7484 = vsel %vm3232, %v3821, %v7316
        %v7485 = vsel %vm3232, %v3824, %v7318
        %v7486 = vsel %vm3232, %v3826, %v7320
        %v7487 = vsel %vm3232, %v3829, %v7322
        %v7488 = vsel %vm3232, %v3831, %v7324
        %v7489 = vsel %vm3232, %v3834, %v7326
        %v7490 = vsel %vm3232, %v3836, %v7328
        %v7491 = vsel %vm3232, %v3839, %v7330
        %v7492 = vsel %vm3232, %v3841, %v7332
        %v7493 = vsel %vm3232, %v5168, %v7366
        %v7494 = vsel %vm3232, %v5170, %v7368
        %v7495 = vsel %vm3232, %v5173, %v7370
        %v7496 = vsel %vm3232, %v5175, %v7372
        %v7497 = vsel %vm3232, %v5178, %v7374
        %v7498 = vsel %vm3232, %v5180, %v7376
        %v7499 = vsel %vm3232, %v5183, %v7378
        %v7500 = vsel %vm3232, %v5185, %v7380
        %v7501 = vsel %vm3232, %v5188, %v7382
        %v7502 = vsel %vm3232, %v5190, %v7384
        %v7503 = vsel %vm3232, %v5193, %v7386
        %v7504 = vsel %vm3232, %v5195, %v7388
        %v7505 = vsel %vm3232, %v5198, %v7390
        %v7506 = vsel %vm3232, %v5200, %v7392
        %v7507 = vsel %vm3232, %v5203, %v7394
        %v7508 = vsel %vm3232, %v5205, %v7396
        %v7509 = vsel %vm3232, %v6572, %v7430
        %v7510 = vsel %vm3232, %v6574, %v7432
        %v7511 = vsel %vm3232, %v6577, %v7434
        %v7512 = vsel %vm3232, %v6579, %v7436
        %v7513 = vsel %vm3232, %v6582, %v7438
        %v7514 = vsel %vm3232, %v6584, %v7440
        %v7515 = vsel %vm3232, %v6587, %v7442
        %v7516 = vsel %vm3232, %v6589, %v7444
        %v7517 = vsel %vm3232, %v6592, %v7446
        %v7518 = vsel %vm3232, %v6594, %v7448
        %v7519 = vsel %vm3232, %v6597, %v7450
        %v7520 = vsel %vm3232, %v6599, %v7452
        %v7521 = vsel %vm3232, %v6602, %v7454
        %v7522 = vsel %vm3232, %v6604, %v7456
        %v7523 = vsel %vm3232, %v6607, %v7458
        %v7524 = vsel %vm3232, %v6609, %v7460
        %v7525 = vpack.c.bf16 %v7478, %v7477
        %v7526 = vpack.c.bf16 %v7494, %v7493
        %v7527 = vpack.c.bf16 %v7510, %v7509
        %v7528 = vpack.c.bf16 %v7480, %v7479
        %v7529 = vpack.c.bf16 %v7496, %v7495
        %v7530 = vpack.c.bf16 %v7512, %v7511
        %v7531 = vpack.c.bf16 %v7482, %v7481
        %v7532 = vpack.c.bf16 %v7498, %v7497
        %v7533 = vpack.c.bf16 %v7514, %v7513
        %v7534 = vpack.c.bf16 %v7484, %v7483
        %v7535 = vpack.c.bf16 %v7500, %v7499
        %v7536 = vpack.c.bf16 %v7516, %v7515
        %v7537 = vpack.c.bf16 %v7486, %v7485
        %v7538 = vpack.c.bf16 %v7502, %v7501
        %v7539 = vpack.c.bf16 %v7518, %v7517
        %v7540 = vpack.c.bf16 %v7488, %v7487
        %v7541 = vpack.c.bf16 %v7504, %v7503
        %v7542 = vpack.c.bf16 %v7520, %v7519
        %v7543 = vpack.c.bf16 %v7490, %v7489
        %v7544 = vpack.c.bf16 %v7506, %v7505
        %v7545 = vpack.c.bf16 %v7522, %v7521
        %v7546 = vpack.c.bf16 %v7492, %v7491
        %v7547 = vpack.c.bf16 %v7508, %v7507
        %v7548 = vpack.c.bf16 %v7524, %v7523
        %v7549 = vld [vmem:[#allocation7] sm:$0xff]
        %v7550 = vld [vmem:[#allocation7 + $0x8] sm:$0xf]
        %v7551 = vld [vmem:[#allocation7 + $0xc] sm:$0xff]
        %v7552 = vld [vmem:[#allocation7 + $0x14] sm:$0xf]
        %v7553 = vld [vmem:[#allocation7 + $0x18] sm:$0xff]
        %v7554 = vld [vmem:[#allocation7 + $0x20] sm:$0xf]
        %v7555 = vld [vmem:[#allocation7 + $0x24] sm:$0xff]
        %v7556 = vld [vmem:[#allocation7 + $0x2c] sm:$0xf]
        %v7557 = vld [vmem:[#allocation7 + $0x30] sm:$0xff]
        %v7558 = vld [vmem:[#allocation7 + $0x38] sm:$0xf]
        %v7559 = vld [vmem:[#allocation7 + $0x3c] sm:$0xff]
        %v7560 = vld [vmem:[#allocation7 + $0x44] sm:$0xf]
        %v7561 = vld [vmem:[#allocation7 + $0x48] sm:$0xff]
        %v7562 = vld [vmem:[#allocation7 + $0x50] sm:$0xf]
        %v7563 = vld [vmem:[#allocation7 + $0x54] sm:$0xff]
        %v7564 = vld [vmem:[#allocation7 + $0x5c] sm:$0xf]
        %v7565 = vld [vmem:[#allocation7 + $0x60] sm:$0xff]
        %v7566 = vld [vmem:[#allocation7 + $0x68] sm:$0xf]
        %v7567 = vld [vmem:[#allocation7 + $0x6c] sm:$0xff]
        %v7568 = vld [vmem:[#allocation7 + $0x74] sm:$0xf]
        %v7569 = vld [vmem:[#allocation7 + $0x78] sm:$0xff]
        %v7570 = vld [vmem:[#allocation7 + $0x80] sm:$0xf]
        %v7571 = vld [vmem:[#allocation7 + $0x84] sm:$0xff]
        %v7572 = vld [vmem:[#allocation7 + $0x8c] sm:$0xf]
        %v7573 = vld [vmem:[#allocation7 + $0x90] sm:$0xff]
        %v7574 = vld [vmem:[#allocation7 + $0x98] sm:$0xf]
        %v7575 = vld [vmem:[#allocation7 + $0x9c] sm:$0xff]
        %v7576 = vld [vmem:[#allocation7 + $0xa4] sm:$0xf]
        %v7577 = vld [vmem:[#allocation7 + $0xa8] sm:$0xff]
        %v7578 = vld [vmem:[#allocation7 + $0xb0] sm:$0xf]
        %v7579 = vld [vmem:[#allocation7 + $0xb4] sm:$0xff]
        %v7580 = vld [vmem:[#allocation7 + $0xbc] sm:$0xf]
        %v7581 = vld [vmem:[#allocation7 + $0xc0] sm:$0xff]
        %v7582 = vld [vmem:[#allocation7 + $0xc8] sm:$0xf]
        %v7583 = vld [vmem:[#allocation7 + $0xcc] sm:$0xff]
        %v7584 = vld [vmem:[#allocation7 + $0xd4] sm:$0xf]
        %v7585 = vld [vmem:[#allocation7 + $0xd8] sm:$0xff]
        %v7586 = vld [vmem:[#allocation7 + $0xe0] sm:$0xf]
        %v7587 = vld [vmem:[#allocation7 + $0xe4] sm:$0xff]
        %v7588 = vld [vmem:[#allocation7 + $0xec] sm:$0xf]
        %v7589 = vld [vmem:[#allocation7 + $0xf0] sm:$0xff]
        %v7590 = vld [vmem:[#allocation7 + $0xf8] sm:$0xf]
        %v7591 = vld [vmem:[#allocation7 + $0xfc] sm:$0xff]
        %v7592 = vld [vmem:[#allocation7 + $0x104] sm:$0xf]
        %v7593 = vld [vmem:[#allocation7 + $0x108] sm:$0xff]
        %v7594 = vld [vmem:[#allocation7 + $0x110] sm:$0xf]
        %v7595 = vld [vmem:[#allocation7 + $0x114] sm:$0xff]
        %v7596 = vld [vmem:[#allocation7 + $0x11c] sm:$0xf]
        %v7597 = vld [vmem:[#allocation7 + $0x120] sm:$0xff]
        %v7598 = vld [vmem:[#allocation7 + $0x128] sm:$0xf]
        %v7599 = vld [vmem:[#allocation7 + $0x12c] sm:$0xff]
        %v7600 = vld [vmem:[#allocation7 + $0x134] sm:$0xf]
        %v7601 = vld [vmem:[#allocation7 + $0x138] sm:$0xff]
        %v7602 = vld [vmem:[#allocation7 + $0x140] sm:$0xf]
        %v7603 = vld [vmem:[#allocation7 + $0x144] sm:$0xff]
        %v7604 = vld [vmem:[#allocation7 + $0x14c] sm:$0xf]
        %v7605 = vld [vmem:[#allocation7 + $0x150] sm:$0xff]
        %v7606 = vld [vmem:[#allocation7 + $0x158] sm:$0xf]
        %v7607 = vld [vmem:[#allocation7 + $0x15c] sm:$0xff]
        %v7608 = vld [vmem:[#allocation7 + $0x164] sm:$0xf]
        %v7609 = vld [vmem:[#allocation7 + $0x168] sm:$0xff]
        %v7610 = vld [vmem:[#allocation7 + $0x170] sm:$0xf]
        %v7611 = vld [vmem:[#allocation7 + $0x174] sm:$0xff]
        %v7612 = vld [vmem:[#allocation7 + $0x17c] sm:$0xf]
        %v7613 = vld [vmem:[#allocation7 + $0x180] sm:$0xff]
        %v7614 = vld [vmem:[#allocation7 + $0x188] sm:$0xf]
        %v7615 = vld [vmem:[#allocation7 + $0x18c] sm:$0xff]
        %v7616 = vld [vmem:[#allocation7 + $0x194] sm:$0xf]
        %v7617 = vld [vmem:[#allocation7 + $0x198] sm:$0xff]
        %v7618 = vld [vmem:[#allocation7 + $0x1a0] sm:$0xf]
        %v7619 = vld [vmem:[#allocation7 + $0x1a4] sm:$0xff]
        %v7620 = vld [vmem:[#allocation7 + $0x1ac] sm:$0xf]
        %v7621 = vld [vmem:[#allocation7 + $0x1b0] sm:$0xff]
        %v7622 = vld [vmem:[#allocation7 + $0x1b8] sm:$0xf]
        %v7623 = vld [vmem:[#allocation7 + $0x1bc] sm:$0xff]
        %v7624 = vld [vmem:[#allocation7 + $0x1c4] sm:$0xf]
        %v7625 = vld [vmem:[#allocation7 + $0x1c8] sm:$0xff]
        %v7626 = vld [vmem:[#allocation7 + $0x1d0] sm:$0xf]
        %v7627 = vld [vmem:[#allocation7 + $0x1d4] sm:$0xff]
        %v7628 = vld [vmem:[#allocation7 + $0x1dc] sm:$0xf]
        %v7629 = vld [vmem:[#allocation7 + $0x1e0] sm:$0xff]
        %v7630 = vld [vmem:[#allocation7 + $0x1e8] sm:$0xf]
        %v7631 = vld [vmem:[#allocation7 + $0x1ec] sm:$0xff]
        %v7632 = vld [vmem:[#allocation7 + $0x1f4] sm:$0xf]
        %v7633 = vld [vmem:[#allocation7 + $0x1f8] sm:$0xff]
        %v7634 = vld [vmem:[#allocation7 + $0x200] sm:$0xf]
        %v7635 = vld [vmem:[#allocation7 + $0x204] sm:$0xff]
        %v7636 = vld [vmem:[#allocation7 + $0x20c] sm:$0xf]
        %v7637 = vld [vmem:[#allocation7 + $0x210] sm:$0xff]
        %v7638 = vld [vmem:[#allocation7 + $0x218] sm:$0xf]
        %v7639 = vld [vmem:[#allocation7 + $0x21c] sm:$0xff]
        %v7640 = vld [vmem:[#allocation7 + $0x224] sm:$0xf]
        %v7641 = vld [vmem:[#allocation7 + $0x228] sm:$0xff]
        %v7642 = vld [vmem:[#allocation7 + $0x230] sm:$0xf]
        %v7643 = vld [vmem:[#allocation7 + $0x234] sm:$0xff]
        %v7644 = vld [vmem:[#allocation7 + $0x23c] sm:$0xf]
        %v7645 = vld [vmem:[#allocation8] sm:$0x7]
        %v7647 = vperm.slane %v7645, 0
        %v7648 = vperm.slane %v7645, 1
        %v7649 = vperm.slane %v7645, 2
        %v7749 = vunpack.c.l.b16 %v7549
        %v7750 = vunpack.c.h.b16 %v7549
        %v7751 = vunpack.c.l.b16 %v7550
        %v7752 = vunpack.c.l.b16 %v7551
        %v7753 = vunpack.c.h.b16 %v7551
        %v7754 = vunpack.c.l.b16 %v7552
        %v7755 = vunpack.c.l.b16 %v7553
        %v7756 = vunpack.c.h.b16 %v7553
        %v7757 = vunpack.c.l.b16 %v7554
        %v7758 = vunpack.c.l.b16 %v7555
        %v7759 = vunpack.c.h.b16 %v7555
        %v7760 = vunpack.c.l.b16 %v7556
        %v7761 = vunpack.c.l.b16 %v7557
        %v7762 = vunpack.c.h.b16 %v7557
        %v7763 = vunpack.c.l.b16 %v7558
        %v7764 = vunpack.c.l.b16 %v7559
        %v7765 = vunpack.c.h.b16 %v7559
        %v7766 = vunpack.c.l.b16 %v7560
        %v7767 = vunpack.c.l.b16 %v7561
        %v7768 = vunpack.c.h.b16 %v7561
        %v7769 = vunpack.c.l.b16 %v7562
        %v7770 = vunpack.c.l.b16 %v7563
        %v7771 = vunpack.c.h.b16 %v7563
        %v7772 = vunpack.c.l.b16 %v7564
        %v7773 = vunpack.c.l.b16 %v7565
        %v7774 = vunpack.c.h.b16 %v7565
        %v7775 = vunpack.c.l.b16 %v7566
        %v7776 = vunpack.c.l.b16 %v7567
        %v7777 = vunpack.c.h.b16 %v7567
        %v7778 = vunpack.c.l.b16 %v7568
        %v7779 = vunpack.c.l.b16 %v7569
        %v7780 = vunpack.c.h.b16 %v7569
        %v7781 = vunpack.c.l.b16 %v7570
        %v7782 = vunpack.c.l.b16 %v7571
        %v7783 = vunpack.c.h.b16 %v7571
        %v7784 = vunpack.c.l.b16 %v7572
        %v7785 = vunpack.c.l.b16 %v7573
        %v7786 = vunpack.c.h.b16 %v7573
        %v7787 = vunpack.c.l.b16 %v7574
        %v7788 = vunpack.c.l.b16 %v7575
        %v7789 = vunpack.c.h.b16 %v7575
        %v7790 = vunpack.c.l.b16 %v7576
        %v7791 = vunpack.c.l.b16 %v7577
        %v7792 = vunpack.c.h.b16 %v7577
        %v7793 = vunpack.c.l.b16 %v7578
        %v7794 = vunpack.c.l.b16 %v7579
        %v7795 = vunpack.c.h.b16 %v7579
        %v7796 = vunpack.c.l.b16 %v7580
        %v7797 = vunpack.c.l.b16 %v7581
        %v7798 = vunpack.c.h.b16 %v7581
        %v7799 = vunpack.c.l.b16 %v7582
        %v7800 = vunpack.c.l.b16 %v7583
        %v7801 = vunpack.c.h.b16 %v7583
        %v7802 = vunpack.c.l.b16 %v7584
        %v7803 = vunpack.c.l.b16 %v7585
        %v7804 = vunpack.c.h.b16 %v7585
        %v7805 = vunpack.c.l.b16 %v7586
        %v7806 = vunpack.c.l.b16 %v7587
        %v7807 = vunpack.c.h.b16 %v7587
        %v7808 = vunpack.c.l.b16 %v7588
        %v7809 = vunpack.c.l.b16 %v7589
        %v7810 = vunpack.c.h.b16 %v7589
        %v7811 = vunpack.c.l.b16 %v7590
        %v7812 = vunpack.c.l.b16 %v7591
        %v7813 = vunpack.c.h.b16 %v7591
        %v7814 = vunpack.c.l.b16 %v7592
        %v7815 = vunpack.c.l.b16 %v7593
        %v7816 = vunpack.c.h.b16 %v7593
        %v7817 = vunpack.c.l.b16 %v7594
        %v7818 = vunpack.c.l.b16 %v7595
        %v7819 = vunpack.c.h.b16 %v7595
        %v7820 = vunpack.c.l.b16 %v7596
        %v7821 = vunpack.c.l.b16 %v7597
        %v7822 = vunpack.c.h.b16 %v7597
        %v7823 = vunpack.c.l.b16 %v7598
        %v7824 = vunpack.c.l.b16 %v7599
        %v7825 = vunpack.c.h.b16 %v7599
        %v7826 = vunpack.c.l.b16 %v7600
        %v7827 = vunpack.c.l.b16 %v7601
        %v7828 = vunpack.c.h.b16 %v7601
        %v7829 = vunpack.c.l.b16 %v7602
        %v7830 = vunpack.c.l.b16 %v7603
        %v7831 = vunpack.c.h.b16 %v7603
        %v7832 = vunpack.c.l.b16 %v7604
        %v7833 = vunpack.c.l.b16 %v7605
        %v7834 = vunpack.c.h.b16 %v7605
        %v7835 = vunpack.c.l.b16 %v7606
        %v7836 = vunpack.c.l.b16 %v7607
        %v7837 = vunpack.c.h.b16 %v7607
        %v7838 = vunpack.c.l.b16 %v7608
        %v7839 = vunpack.c.l.b16 %v7609
        %v7840 = vunpack.c.h.b16 %v7609
        %v7841 = vunpack.c.l.b16 %v7610
        %v7842 = vunpack.c.l.b16 %v7611
        %v7843 = vunpack.c.h.b16 %v7611
        %v7844 = vunpack.c.l.b16 %v7612
        %v7845 = vunpack.c.l.b16 %v7613
        %v7846 = vunpack.c.h.b16 %v7613
        %v7847 = vunpack.c.l.b16 %v7614
        %v7848 = vunpack.c.l.b16 %v7615
        %v7849 = vunpack.c.h.b16 %v7615
        %v7850 = vunpack.c.l.b16 %v7616
        %v7851 = vunpack.c.l.b16 %v7617
        %v7852 = vunpack.c.h.b16 %v7617
        %v7853 = vunpack.c.l.b16 %v7618
        %v7854 = vunpack.c.l.b16 %v7619
        %v7855 = vunpack.c.h.b16 %v7619
        %v7856 = vunpack.c.l.b16 %v7620
        %v7857 = vunpack.c.l.b16 %v7621
        %v7858 = vunpack.c.h.b16 %v7621
        %v7859 = vunpack.c.l.b16 %v7622
        %v7860 = vunpack.c.l.b16 %v7623
        %v7861 = vunpack.c.h.b16 %v7623
        %v7862 = vunpack.c.l.b16 %v7624
        %v7863 = vunpack.c.l.b16 %v7625
        %v7864 = vunpack.c.h.b16 %v7625
        %v7865 = vunpack.c.l.b16 %v7626
        %v7866 = vunpack.c.l.b16 %v7627
        %v7867 = vunpack.c.h.b16 %v7627
        %v7868 = vunpack.c.l.b16 %v7628
        %v7869 = vunpack.c.l.b16 %v7629
        %v7870 = vunpack.c.h.b16 %v7629
        %v7871 = vunpack.c.l.b16 %v7630
        %v7872 = vunpack.c.l.b16 %v7631
        %v7873 = vunpack.c.h.b16 %v7631
        %v7874 = vunpack.c.l.b16 %v7632
        %v7875 = vunpack.c.l.b16 %v7633
        %v7876 = vunpack.c.h.b16 %v7633
        %v7877 = vunpack.c.l.b16 %v7634
        %v7878 = vunpack.c.l.b16 %v7635
        %v7879 = vunpack.c.h.b16 %v7635
        %v7880 = vunpack.c.l.b16 %v7636
        %v7881 = vunpack.c.l.b16 %v7637
        %v7882 = vunpack.c.h.b16 %v7637
        %v7883 = vunpack.c.l.b16 %v7638
        %v7884 = vunpack.c.l.b16 %v7639
        %v7885 = vunpack.c.h.b16 %v7639
        %v7886 = vunpack.c.l.b16 %v7640
        %v7887 = vunpack.c.l.b16 %v7641
        %v7888 = vunpack.c.h.b16 %v7641
        %v7889 = vunpack.c.l.b16 %v7642
        %v7890 = vunpack.c.l.b16 %v7643
        %v7891 = vunpack.c.h.b16 %v7643
        %v7892 = vunpack.c.l.b16 %v7644
        %v7893 = vpack.c.b16 %v7752, %v7749
        %v7894 = vpack.c.b16 %v7753, %v7750
        %v7895 = vpack.c.b16 %v7754, %v7751
        %v7896 = vpack.c.b16 %v7758, %v7755
        %v7897 = vpack.c.b16 %v7759, %v7756
        %v7898 = vpack.c.b16 %v7760, %v7757
        %v7899 = vpack.c.b16 %v7764, %v7761
        %v7900 = vpack.c.b16 %v7765, %v7762
        %v7901 = vpack.c.b16 %v7766, %v7763
        %v7902 = vpack.c.b16 %v7770, %v7767
        %v7903 = vpack.c.b16 %v7771, %v7768
        %v7904 = vpack.c.b16 %v7772, %v7769
        %v7905 = vpack.c.b16 %v7776, %v7773
        %v7906 = vpack.c.b16 %v7777, %v7774
        %v7907 = vpack.c.b16 %v7778, %v7775
        %v7908 = vpack.c.b16 %v7782, %v7779
        %v7909 = vpack.c.b16 %v7783, %v7780
        %v7910 = vpack.c.b16 %v7784, %v7781
        %v7911 = vpack.c.b16 %v7788, %v7785
        %v7912 = vpack.c.b16 %v7789, %v7786
        %v7913 = vpack.c.b16 %v7790, %v7787
        %v7914 = vpack.c.b16 %v7794, %v7791
        %v7915 = vpack.c.b16 %v7795, %v7792
        %v7916 = vpack.c.b16 %v7796, %v7793
        %v7917 = vpack.c.b16 %v7800, %v7797
        %v7918 = vpack.c.b16 %v7801, %v7798
        %v7919 = vpack.c.b16 %v7802, %v7799
        %v7920 = vpack.c.b16 %v7806, %v7803
        %v7921 = vpack.c.b16 %v7807, %v7804
        %v7922 = vpack.c.b16 %v7808, %v7805
        %v7923 = vpack.c.b16 %v7812, %v7809
        %v7924 = vpack.c.b16 %v7813, %v7810
        %v7925 = vpack.c.b16 %v7814, %v7811
        %v7926 = vpack.c.b16 %v7818, %v7815
        %v7927 = vpack.c.b16 %v7819, %v7816
        %v7928 = vpack.c.b16 %v7820, %v7817
        %v7929 = vpack.c.b16 %v7824, %v7821
        %v7930 = vpack.c.b16 %v7825, %v7822
        %v7931 = vpack.c.b16 %v7826, %v7823
        %v7932 = vpack.c.b16 %v7830, %v7827
        %v7933 = vpack.c.b16 %v7831, %v7828
        %v7934 = vpack.c.b16 %v7832, %v7829
        %v7935 = vpack.c.b16 %v7836, %v7833
        %v7936 = vpack.c.b16 %v7837, %v7834
        %v7937 = vpack.c.b16 %v7838, %v7835
        %v7938 = vpack.c.b16 %v7842, %v7839
        %v7939 = vpack.c.b16 %v7843, %v7840
        %v7940 = vpack.c.b16 %v7844, %v7841
        %v7941 = vpack.c.b16 %v7848, %v7845
        %v7942 = vpack.c.b16 %v7849, %v7846
        %v7943 = vpack.c.b16 %v7850, %v7847
        %v7944 = vpack.c.b16 %v7854, %v7851
        %v7945 = vpack.c.b16 %v7855, %v7852
        %v7946 = vpack.c.b16 %v7856, %v7853
        %v7947 = vpack.c.b16 %v7860, %v7857
        %v7948 = vpack.c.b16 %v7861, %v7858
        %v7949 = vpack.c.b16 %v7862, %v7859
        %v7950 = vpack.c.b16 %v7866, %v7863
        %v7951 = vpack.c.b16 %v7867, %v7864
        %v7952 = vpack.c.b16 %v7868, %v7865
        %v7953 = vpack.c.b16 %v7872, %v7869
        %v7954 = vpack.c.b16 %v7873, %v7870
        %v7955 = vpack.c.b16 %v7874, %v7871
        %v7956 = vpack.c.b16 %v7878, %v7875
        %v7957 = vpack.c.b16 %v7879, %v7876
        %v7958 = vpack.c.b16 %v7880, %v7877
        %v7959 = vpack.c.b16 %v7884, %v7881
        %v7960 = vpack.c.b16 %v7885, %v7882
        %v7961 = vpack.c.b16 %v7886, %v7883
        %v7962 = vpack.c.b16 %v7890, %v7887
        %v7963 = vpack.c.b16 %v7891, %v7888
        %v7964 = vpack.c.b16 %v7892, %v7889
        %8037 = vmatpush.bf16.msra.mxu0 %v7914
        %8038 = vmatpush.bf16.msra.mxu0 %v7911
        %8039 = vmatpush.bf16.msra.mxu0 %v7908
        %8040 = vmatpush.bf16.msra.mxu0 %v7905
        %8041 = vmatpush.bf16.msra.mxu0 %v7902
        %8042 = vmatpush.bf16.msra.mxu0 %v7899
        %8043 = vmatpush.bf16.msra.mxu0 %v7896
        %8044 = vmatpush.bf16.msra.mxu0 %v7893
        %8045 = vmatmul.bf16.gmra.mxu0 %v7525
        %v8046 = vpop.f32.mrf.mxu0
        %v8047 = vadd.f32 %v7647, %v8046
        %v8048 = vpop.f32.mrf.mxu0
        %v8049 = vadd.f32 %v7647, %v8048
        %8050 = vmatmul.bf16.gmra.mxu0 %v7528
        %v8051 = vpop.f32.mrf.mxu0
        %v8052 = vadd.f32 %v7647, %v8051
        %v8053 = vpop.f32.mrf.mxu0
        %v8054 = vadd.f32 %v7647, %v8053
        %8055 = vmatmul.bf16.gmra.mxu0 %v7531
        %v8056 = vpop.f32.mrf.mxu0
        %v8057 = vadd.f32 %v7647, %v8056
        %v8058 = vpop.f32.mrf.mxu0
        %v8059 = vadd.f32 %v7647, %v8058
        %8060 = vmatmul.bf16.gmra.mxu0 %v7534
        %v8061 = vpop.f32.mrf.mxu0
        %v8062 = vadd.f32 %v7647, %v8061
        %v8063 = vpop.f32.mrf.mxu0
        %v8064 = vadd.f32 %v7647, %v8063
        %8065 = vmatmul.bf16.gmra.mxu0 %v7537
        %v8066 = vpop.f32.mrf.mxu0
        %v8067 = vadd.f32 %v7647, %v8066
        %v8068 = vpop.f32.mrf.mxu0
        %v8069 = vadd.f32 %v7647, %v8068
        %8070 = vmatmul.bf16.gmra.mxu0 %v7540
        %v8071 = vpop.f32.mrf.mxu0
        %v8072 = vadd.f32 %v7647, %v8071
        %v8073 = vpop.f32.mrf.mxu0
        %v8074 = vadd.f32 %v7647, %v8073
        %8075 = vmatmul.bf16.gmra.mxu0 %v7543
        %v8076 = vpop.f32.mrf.mxu0
        %v8077 = vadd.f32 %v7647, %v8076
        %v8078 = vpop.f32.mrf.mxu0
        %v8079 = vadd.f32 %v7647, %v8078
        %8080 = vmatmul.bf16.gmra.mxu0 %v7546
        %v8081 = vpop.f32.mrf.mxu0
        %v8082 = vadd.f32 %v7647, %v8081
        %v8083 = vpop.f32.mrf.mxu0
        %v8084 = vadd.f32 %v7647, %v8083
        %8085 = vdwg.mxu0
        %8086 = vmatpush.bf16.msra.mxu0 %v7938
        %8087 = vmatpush.bf16.msra.mxu0 %v7935
        %8088 = vmatpush.bf16.msra.mxu0 %v7932
        %8089 = vmatpush.bf16.msra.mxu0 %v7929
        %8090 = vmatpush.bf16.msra.mxu0 %v7926
        %8091 = vmatpush.bf16.msra.mxu0 %v7923
        %8092 = vmatpush.bf16.msra.mxu0 %v7920
        %8093 = vmatpush.bf16.msra.mxu0 %v7917
        %8094 = vmatmul.bf16.gmra.mxu0 %v7526
        %v8095 = vpop.f32.mrf.mxu0
        %v8096 = vadd.f32 %v8047, %v8095
        %v8097 = vpop.f32.mrf.mxu0
        %v8098 = vadd.f32 %v8049, %v8097
        %8099 = vmatmul.bf16.gmra.mxu0 %v7529
        %v8100 = vpop.f32.mrf.mxu0
        %v8101 = vadd.f32 %v8052, %v8100
        %v8102 = vpop.f32.mrf.mxu0
        %v8103 = vadd.f32 %v8054, %v8102
        %8104 = vmatmul.bf16.gmra.mxu0 %v7532
        %v8105 = vpop.f32.mrf.mxu0
        %v8106 = vadd.f32 %v8057, %v8105
        %v8107 = vpop.f32.mrf.mxu0
        %v8108 = vadd.f32 %v8059, %v8107
        %8109 = vmatmul.bf16.gmra.mxu0 %v7535
        %v8110 = vpop.f32.mrf.mxu0
        %v8111 = vadd.f32 %v8062, %v8110
        %v8112 = vpop.f32.mrf.mxu0
        %v8113 = vadd.f32 %v8064, %v8112
        %8114 = vmatmul.bf16.gmra.mxu0 %v7538
        %v8115 = vpop.f32.mrf.mxu0
        %v8116 = vadd.f32 %v8067, %v8115
        %v8117 = vpop.f32.mrf.mxu0
        %v8118 = vadd.f32 %v8069, %v8117
        %8119 = vmatmul.bf16.gmra.mxu0 %v7541
        %v8120 = vpop.f32.mrf.mxu0
        %v8121 = vadd.f32 %v8072, %v8120
        %v8122 = vpop.f32.mrf.mxu0
        %v8123 = vadd.f32 %v8074, %v8122
        %8124 = vmatmul.bf16.gmra.mxu0 %v7544
        %v8125 = vpop.f32.mrf.mxu0
        %v8126 = vadd.f32 %v8077, %v8125
        %v8127 = vpop.f32.mrf.mxu0
        %v8128 = vadd.f32 %v8079, %v8127
        %8129 = vmatmul.bf16.gmra.mxu0 %v7547
        %v8130 = vpop.f32.mrf.mxu0
        %v8131 = vadd.f32 %v8082, %v8130
        %v8132 = vpop.f32.mrf.mxu0
        %v8133 = vadd.f32 %v8084, %v8132
        %8134 = vdwg.mxu0
        %8135 = vmatpush.bf16.msra.mxu0 %v7962
        %8136 = vmatpush.bf16.msra.mxu0 %v7959
        %8137 = vmatpush.bf16.msra.mxu0 %v7956
        %8138 = vmatpush.bf16.msra.mxu0 %v7953
        %8139 = vmatpush.bf16.msra.mxu0 %v7950
        %8140 = vmatpush.bf16.msra.mxu0 %v7947
        %8141 = vmatpush.bf16.msra.mxu0 %v7944
        %8142 = vmatpush.bf16.msra.mxu0 %v7941
        %8143 = vmatmul.bf16.gmra.mxu0 %v7527
        %v8144 = vpop.f32.mrf.mxu0
        %v8145 = vadd.f32 %v8096, %v8144
        %v8146 = vpop.f32.mrf.mxu0
        %v8147 = vadd.f32 %v8098, %v8146
        %8148 = vmatmul.bf16.gmra.mxu0 %v7530
        %v8149 = vpop.f32.mrf.mxu0
        %v8150 = vadd.f32 %v8101, %v8149
        %v8151 = vpop.f32.mrf.mxu0
        %v8152 = vadd.f32 %v8103, %v8151
        %8153 = vmatmul.bf16.gmra.mxu0 %v7533
        %v8154 = vpop.f32.mrf.mxu0
        %v8155 = vadd.f32 %v8106, %v8154
        %v8156 = vpop.f32.mrf.mxu0
        %v8157 = vadd.f32 %v8108, %v8156
        %8158 = vmatmul.bf16.gmra.mxu0 %v7536
        %v8159 = vpop.f32.mrf.mxu0
        %v8160 = vadd.f32 %v8111, %v8159
        %v8161 = vpop.f32.mrf.mxu0
        %v8162 = vadd.f32 %v8113, %v8161
        %8163 = vmatmul.bf16.gmra.mxu0 %v7539
        %v8164 = vpop.f32.mrf.mxu0
        %v8165 = vadd.f32 %v8116, %v8164
        %v8166 = vpop.f32.mrf.mxu0
        %v8167 = vadd.f32 %v8118, %v8166
        %8168 = vmatmul.bf16.gmra.mxu0 %v7542
        %v8169 = vpop.f32.mrf.mxu0
        %v8170 = vadd.f32 %v8121, %v8169
        %v8171 = vpop.f32.mrf.mxu0
        %v8172 = vadd.f32 %v8123, %v8171
        %8173 = vmatmul.bf16.gmra.mxu0 %v7545
        %v8174 = vpop.f32.mrf.mxu0
        %v8175 = vadd.f32 %v8126, %v8174
        %v8176 = vpop.f32.mrf.mxu0
        %v8177 = vadd.f32 %v8128, %v8176
        %8178 = vmatmul.bf16.gmra.mxu0 %v7548
        %v8179 = vpop.f32.mrf.mxu0
        %v8180 = vadd.f32 %v8131, %v8179
        %v8181 = vpop.f32.mrf.mxu0
        %v8182 = vadd.f32 %v8133, %v8181
        %8183 = vdwg.mxu0
        %8184 = vmatpush.bf16.msra.mxu0 %v7915
        %8185 = vmatpush.bf16.msra.mxu0 %v7912
        %8186 = vmatpush.bf16.msra.mxu0 %v7909
        %8187 = vmatpush.bf16.msra.mxu0 %v7906
        %8188 = vmatpush.bf16.msra.mxu0 %v7903
        %8189 = vmatpush.bf16.msra.mxu0 %v7900
        %8190 = vmatpush.bf16.msra.mxu0 %v7897
        %8191 = vmatpush.bf16.msra.mxu0 %v7894
        %8192 = vmatmul.bf16.gmra.mxu0 %v7525
        %v8193 = vpop.f32.mrf.mxu0
        %v8194 = vadd.f32 %v7648, %v8193
        %v8195 = vpop.f32.mrf.mxu0
        %v8196 = vadd.f32 %v7648, %v8195
        %8197 = vmatmul.bf16.gmra.mxu0 %v7528
        %v8198 = vpop.f32.mrf.mxu0
        %v8199 = vadd.f32 %v7648, %v8198
        %v8200 = vpop.f32.mrf.mxu0
        %v8201 = vadd.f32 %v7648, %v8200
        %8202 = vmatmul.bf16.gmra.mxu0 %v7531
        %v8203 = vpop.f32.mrf.mxu0
        %v8204 = vadd.f32 %v7648, %v8203
        %v8205 = vpop.f32.mrf.mxu0
        %v8206 = vadd.f32 %v7648, %v8205
        %8207 = vmatmul.bf16.gmra.mxu0 %v7534
        %v8208 = vpop.f32.mrf.mxu0
        %v8209 = vadd.f32 %v7648, %v8208
        %v8210 = vpop.f32.mrf.mxu0
        %v8211 = vadd.f32 %v7648, %v8210
        %8212 = vmatmul.bf16.gmra.mxu0 %v7537
        %v8213 = vpop.f32.mrf.mxu0
        %v8214 = vadd.f32 %v7648, %v8213
        %v8215 = vpop.f32.mrf.mxu0
        %v8216 = vadd.f32 %v7648, %v8215
        %8217 = vmatmul.bf16.gmra.mxu0 %v7540
        %v8218 = vpop.f32.mrf.mxu0
        %v8219 = vadd.f32 %v7648, %v8218
        %v8220 = vpop.f32.mrf.mxu0
        %v8221 = vadd.f32 %v7648, %v8220
        %8222 = vmatmul.bf16.gmra.mxu0 %v7543
        %v8223 = vpop.f32.mrf.mxu0
        %v8224 = vadd.f32 %v7648, %v8223
        %v8225 = vpop.f32.mrf.mxu0
        %v8226 = vadd.f32 %v7648, %v8225
        %8227 = vmatmul.bf16.gmra.mxu0 %v7546
        %v8228 = vpop.f32.mrf.mxu0
        %v8229 = vadd.f32 %v7648, %v8228
        %v8230 = vpop.f32.mrf.mxu0
        %v8231 = vadd.f32 %v7648, %v8230
        %8232 = vdwg.mxu0
        %8233 = vmatpush.bf16.msra.mxu0 %v7939
        %8234 = vmatpush.bf16.msra.mxu0 %v7936
        %8235 = vmatpush.bf16.msra.mxu0 %v7933
        %8236 = vmatpush.bf16.msra.mxu0 %v7930
        %8237 = vmatpush.bf16.msra.mxu0 %v7927
        %8238 = vmatpush.bf16.msra.mxu0 %v7924
        %8239 = vmatpush.bf16.msra.mxu0 %v7921
        %8240 = vmatpush.bf16.msra.mxu0 %v7918
        %8241 = vmatmul.bf16.gmra.mxu0 %v7526
        %v8242 = vpop.f32.mrf.mxu0
        %v8243 = vadd.f32 %v8194, %v8242
        %v8244 = vpop.f32.mrf.mxu0
        %v8245 = vadd.f32 %v8196, %v8244
        %8246 = vmatmul.bf16.gmra.mxu0 %v7529
        %v8247 = vpop.f32.mrf.mxu0
        %v8248 = vadd.f32 %v8199, %v8247
        %v8249 = vpop.f32.mrf.mxu0
        %v8250 = vadd.f32 %v8201, %v8249
        %8251 = vmatmul.bf16.gmra.mxu0 %v7532
        %v8252 = vpop.f32.mrf.mxu0
        %v8253 = vadd.f32 %v8204, %v8252
        %v8254 = vpop.f32.mrf.mxu0
        %v8255 = vadd.f32 %v8206, %v8254
        %8256 = vmatmul.bf16.gmra.mxu0 %v7535
        %v8257 = vpop.f32.mrf.mxu0
        %v8258 = vadd.f32 %v8209, %v8257
        %v8259 = vpop.f32.mrf.mxu0
        %v8260 = vadd.f32 %v8211, %v8259
        %8261 = vmatmul.bf16.gmra.mxu0 %v7538
        %v8262 = vpop.f32.mrf.mxu0
        %v8263 = vadd.f32 %v8214, %v8262
        %v8264 = vpop.f32.mrf.mxu0
        %v8265 = vadd.f32 %v8216, %v8264
        %8266 = vmatmul.bf16.gmra.mxu0 %v7541
        %v8267 = vpop.f32.mrf.mxu0
        %v8268 = vadd.f32 %v8219, %v8267
        %v8269 = vpop.f32.mrf.mxu0
        %v8270 = vadd.f32 %v8221, %v8269
        %8271 = vmatmul.bf16.gmra.mxu0 %v7544
        %v8272 = vpop.f32.mrf.mxu0
        %v8273 = vadd.f32 %v8224, %v8272
        %v8274 = vpop.f32.mrf.mxu0
        %v8275 = vadd.f32 %v8226, %v8274
        %8276 = vmatmul.bf16.gmra.mxu0 %v7547
        %v8277 = vpop.f32.mrf.mxu0
        %v8278 = vadd.f32 %v8229, %v8277
        %v8279 = vpop.f32.mrf.mxu0
        %v8280 = vadd.f32 %v8231, %v8279
        %8281 = vdwg.mxu0
        %8282 = vmatpush.bf16.msra.mxu0 %v7963
        %8283 = vmatpush.bf16.msra.mxu0 %v7960
        %8284 = vmatpush.bf16.msra.mxu0 %v7957
        %8285 = vmatpush.bf16.msra.mxu0 %v7954
        %8286 = vmatpush.bf16.msra.mxu0 %v7951
        %8287 = vmatpush.bf16.msra.mxu0 %v7948
        %8288 = vmatpush.bf16.msra.mxu0 %v7945
        %8289 = vmatpush.bf16.msra.mxu0 %v7942
        %8290 = vmatmul.bf16.gmra.mxu0 %v7527
        %v8291 = vpop.f32.mrf.mxu0
        %v8292 = vadd.f32 %v8243, %v8291
        %v8293 = vpop.f32.mrf.mxu0
        %v8294 = vadd.f32 %v8245, %v8293
        %8295 = vmatmul.bf16.gmra.mxu0 %v7530
        %v8296 = vpop.f32.mrf.mxu0
        %v8297 = vadd.f32 %v8248, %v8296
        %v8298 = vpop.f32.mrf.mxu0
        %v8299 = vadd.f32 %v8250, %v8298
        %8300 = vmatmul.bf16.gmra.mxu0 %v7533
        %v8301 = vpop.f32.mrf.mxu0
        %v8302 = vadd.f32 %v8253, %v8301
        %v8303 = vpop.f32.mrf.mxu0
        %v8304 = vadd.f32 %v8255, %v8303
        %8305 = vmatmul.bf16.gmra.mxu0 %v7536
        %v8306 = vpop.f32.mrf.mxu0
        %v8307 = vadd.f32 %v8258, %v8306
        %v8308 = vpop.f32.mrf.mxu0
        %v8309 = vadd.f32 %v8260, %v8308
        %8310 = vmatmul.bf16.gmra.mxu0 %v7539
        %v8311 = vpop.f32.mrf.mxu0
        %v8312 = vadd.f32 %v8263, %v8311
        %v8313 = vpop.f32.mrf.mxu0
        %v8314 = vadd.f32 %v8265, %v8313
        %8315 = vmatmul.bf16.gmra.mxu0 %v7542
        %v8316 = vpop.f32.mrf.mxu0
        %v8317 = vadd.f32 %v8268, %v8316
        %v8318 = vpop.f32.mrf.mxu0
        %v8319 = vadd.f32 %v8270, %v8318
        %8320 = vmatmul.bf16.gmra.mxu0 %v7545
        %v8321 = vpop.f32.mrf.mxu0
        %v8322 = vadd.f32 %v8273, %v8321
        %v8323 = vpop.f32.mrf.mxu0
        %v8324 = vadd.f32 %v8275, %v8323
        %8325 = vmatmul.bf16.gmra.mxu0 %v7548
        %v8326 = vpop.f32.mrf.mxu0
        %v8327 = vadd.f32 %v8278, %v8326
        %v8328 = vpop.f32.mrf.mxu0
        %v8329 = vadd.f32 %v8280, %v8328
        %8330 = vdwg.mxu0
        %8331 = vmatpush.bf16.msra.mxu0 %v7916
        %8332 = vmatpush.bf16.msra.mxu0 %v7913
        %8333 = vmatpush.bf16.msra.mxu0 %v7910
        %8334 = vmatpush.bf16.msra.mxu0 %v7907
        %8335 = vmatpush.bf16.msra.mxu0 %v7904
        %8336 = vmatpush.bf16.msra.mxu0 %v7901
        %8337 = vmatpush.bf16.msra.mxu0 %v7898
        %8338 = vmatpush.bf16.msra.mxu0 %v7895
        %8339 = vmatmul.bf16.gmra.mxu0 %v7525
        %v8340 = vpop.f32.mrf.mxu0
        %v8341 = vadd.f32 %v7649, %v8340
        %v8342 = vpop.f32.mrf.mxu0
        %v8343 = vadd.f32 %v7649, %v8342
        %8344 = vmatmul.bf16.gmra.mxu0 %v7528
        %v8345 = vpop.f32.mrf.mxu0
        %v8346 = vadd.f32 %v7649, %v8345
        %v8347 = vpop.f32.mrf.mxu0
        %v8348 = vadd.f32 %v7649, %v8347
        %8349 = vmatmul.bf16.gmra.mxu0 %v7531
        %v8350 = vpop.f32.mrf.mxu0
        %v8351 = vadd.f32 %v7649, %v8350
        %v8352 = vpop.f32.mrf.mxu0
        %v8353 = vadd.f32 %v7649, %v8352
        %8354 = vmatmul.bf16.gmra.mxu0 %v7534
        %v8355 = vpop.f32.mrf.mxu0
        %v8356 = vadd.f32 %v7649, %v8355
        %v8357 = vpop.f32.mrf.mxu0
        %v8358 = vadd.f32 %v7649, %v8357
        %8359 = vmatmul.bf16.gmra.mxu0 %v7537
        %v8360 = vpop.f32.mrf.mxu0
        %v8361 = vadd.f32 %v7649, %v8360
        %v8362 = vpop.f32.mrf.mxu0
        %v8363 = vadd.f32 %v7649, %v8362
        %8364 = vmatmul.bf16.gmra.mxu0 %v7540
        %v8365 = vpop.f32.mrf.mxu0
        %v8366 = vadd.f32 %v7649, %v8365
        %v8367 = vpop.f32.mrf.mxu0
        %v8368 = vadd.f32 %v7649, %v8367
        %8369 = vmatmul.bf16.gmra.mxu0 %v7543
        %v8370 = vpop.f32.mrf.mxu0
        %v8371 = vadd.f32 %v7649, %v8370
        %v8372 = vpop.f32.mrf.mxu0
        %v8373 = vadd.f32 %v7649, %v8372
        %8374 = vmatmul.bf16.gmra.mxu0 %v7546
        %v8375 = vpop.f32.mrf.mxu0
        %v8376 = vadd.f32 %v7649, %v8375
        %v8377 = vpop.f32.mrf.mxu0
        %v8378 = vadd.f32 %v7649, %v8377
        %8379 = vdwg.mxu0
        %8380 = vmatpush.bf16.msra.mxu0 %v7940
        %8381 = vmatpush.bf16.msra.mxu0 %v7937
        %8382 = vmatpush.bf16.msra.mxu0 %v7934
        %8383 = vmatpush.bf16.msra.mxu0 %v7931
        %8384 = vmatpush.bf16.msra.mxu0 %v7928
        %8385 = vmatpush.bf16.msra.mxu0 %v7925
        %8386 = vmatpush.bf16.msra.mxu0 %v7922
        %8387 = vmatpush.bf16.msra.mxu0 %v7919
        %8388 = vmatmul.bf16.gmra.mxu0 %v7526
        %v8389 = vpop.f32.mrf.mxu0
        %v8390 = vadd.f32 %v8341, %v8389
        %v8391 = vpop.f32.mrf.mxu0
        %v8392 = vadd.f32 %v8343, %v8391
        %8393 = vmatmul.bf16.gmra.mxu0 %v7529
        %v8394 = vpop.f32.mrf.mxu0
        %v8395 = vadd.f32 %v8346, %v8394
        %v8396 = vpop.f32.mrf.mxu0
        %v8397 = vadd.f32 %v8348, %v8396
        %8398 = vmatmul.bf16.gmra.mxu0 %v7532
        %v8399 = vpop.f32.mrf.mxu0
        %v8400 = vadd.f32 %v8351, %v8399
        %v8401 = vpop.f32.mrf.mxu0
        %v8402 = vadd.f32 %v8353, %v8401
        %8403 = vmatmul.bf16.gmra.mxu0 %v7535
        %v8404 = vpop.f32.mrf.mxu0
        %v8405 = vadd.f32 %v8356, %v8404
        %v8406 = vpop.f32.mrf.mxu0
        %v8407 = vadd.f32 %v8358, %v8406
        %8408 = vmatmul.bf16.gmra.mxu0 %v7538
        %v8409 = vpop.f32.mrf.mxu0
        %v8410 = vadd.f32 %v8361, %v8409
        %v8411 = vpop.f32.mrf.mxu0
        %v8412 = vadd.f32 %v8363, %v8411
        %8413 = vmatmul.bf16.gmra.mxu0 %v7541
        %v8414 = vpop.f32.mrf.mxu0
        %v8415 = vadd.f32 %v8366, %v8414
        %v8416 = vpop.f32.mrf.mxu0
        %v8417 = vadd.f32 %v8368, %v8416
        %8418 = vmatmul.bf16.gmra.mxu0 %v7544
        %v8419 = vpop.f32.mrf.mxu0
        %v8420 = vadd.f32 %v8371, %v8419
        %v8421 = vpop.f32.mrf.mxu0
        %v8422 = vadd.f32 %v8373, %v8421
        %8423 = vmatmul.bf16.gmra.mxu0 %v7547
        %v8424 = vpop.f32.mrf.mxu0
        %v8425 = vadd.f32 %v8376, %v8424
        %v8426 = vpop.f32.mrf.mxu0
        %v8427 = vadd.f32 %v8378, %v8426
        %8428 = vdwg.mxu0
        %8429 = vmatpush.bf16.msra.mxu0 %v7964
        %8430 = vmatpush.bf16.msra.mxu0 %v7961
        %8431 = vmatpush.bf16.msra.mxu0 %v7958
        %8432 = vmatpush.bf16.msra.mxu0 %v7955
        %8433 = vmatpush.bf16.msra.mxu0 %v7952
        %8434 = vmatpush.bf16.msra.mxu0 %v7949
        %8435 = vmatpush.bf16.msra.mxu0 %v7946
        %8436 = vmatpush.bf16.msra.mxu0 %v7943
        %8437 = vmatmul.bf16.gmra.mxu0 %v7527
        %v8438 = vpop.f32.mrf.mxu0
        %v8439 = vadd.f32 %v8390, %v8438
        %v8440 = vpop.f32.mrf.mxu0
        %v8441 = vadd.f32 %v8392, %v8440
        %8442 = vmatmul.bf16.gmra.mxu0 %v7530
        %v8443 = vpop.f32.mrf.mxu0
        %v8444 = vadd.f32 %v8395, %v8443
        %v8445 = vpop.f32.mrf.mxu0
        %v8446 = vadd.f32 %v8397, %v8445
        %8447 = vmatmul.bf16.gmra.mxu0 %v7533
        %v8448 = vpop.f32.mrf.mxu0
        %v8449 = vadd.f32 %v8400, %v8448
        %v8450 = vpop.f32.mrf.mxu0
        %v8451 = vadd.f32 %v8402, %v8450
        %8452 = vmatmul.bf16.gmra.mxu0 %v7536
        %v8453 = vpop.f32.mrf.mxu0
        %v8454 = vadd.f32 %v8405, %v8453
        %v8455 = vpop.f32.mrf.mxu0
        %v8456 = vadd.f32 %v8407, %v8455
        %8457 = vmatmul.bf16.gmra.mxu0 %v7539
        %v8458 = vpop.f32.mrf.mxu0
        %v8459 = vadd.f32 %v8410, %v8458
        %v8460 = vpop.f32.mrf.mxu0
        %v8461 = vadd.f32 %v8412, %v8460
        %8462 = vmatmul.bf16.gmra.mxu0 %v7542
        %v8463 = vpop.f32.mrf.mxu0
        %v8464 = vadd.f32 %v8415, %v8463
        %v8465 = vpop.f32.mrf.mxu0
        %v8466 = vadd.f32 %v8417, %v8465
        %8467 = vmatmul.bf16.gmra.mxu0 %v7545
        %v8468 = vpop.f32.mrf.mxu0
        %v8469 = vadd.f32 %v8420, %v8468
        %v8470 = vpop.f32.mrf.mxu0
        %v8471 = vadd.f32 %v8422, %v8470
        %8472 = vmatmul.bf16.gmra.mxu0 %v7548
        %v8473 = vpop.f32.mrf.mxu0
        %v8474 = vadd.f32 %v8425, %v8473
        %v8475 = vpop.f32.mrf.mxu0
        %v8476 = vadd.f32 %v8427, %v8475
        %8477 = vdwg.mxu0
        %8478 = vst [vmem:[%s265] sm:$0xff] %v8145
        %8479 = vst [vmem:[%s265 + $0x8] sm:$0xff] %v8292
        %8480 = vst [vmem:[%s265 + $0x10] sm:$0xff] %v8439
        %8481 = vst [vmem:[%s265 + $0x18] sm:$0xff] %v8147
        %8482 = vst [vmem:[%s265 + $0x20] sm:$0xff] %v8294
        %8483 = vst [vmem:[%s265 + $0x28] sm:$0xff] %v8441
        %8484 = vst [vmem:[%s265 + $0x30] sm:$0xff] %v8150
        %8485 = vst [vmem:[%s265 + $0x38] sm:$0xff] %v8297
        %8486 = vst [vmem:[%s265 + $0x40] sm:$0xff] %v8444
        %8487 = vst [vmem:[%s265 + $0x48] sm:$0xff] %v8152
        %8488 = vst [vmem:[%s265 + $0x50] sm:$0xff] %v8299
        %8489 = vst [vmem:[%s265 + $0x58] sm:$0xff] %v8446
        %8490 = vst [vmem:[%s265 + $0x60] sm:$0xff] %v8155
        %8491 = vst [vmem:[%s265 + $0x68] sm:$0xff] %v8302
        %8492 = vst [vmem:[%s265 + $0x70] sm:$0xff] %v8449
        %8493 = vst [vmem:[%s265 + $0x78] sm:$0xff] %v8157
        %8494 = vst [vmem:[%s265 + $0x80] sm:$0xff] %v8304
        %8495 = vst [vmem:[%s265 + $0x88] sm:$0xff] %v8451
        %8496 = vst [vmem:[%s265 + $0x90] sm:$0xff] %v8160
        %8497 = vst [vmem:[%s265 + $0x98] sm:$0xff] %v8307
        %8498 = vst [vmem:[%s265 + $0xa0] sm:$0xff] %v8454
        %8499 = vst [vmem:[%s265 + $0xa8] sm:$0xff] %v8162
        %8500 = vst [vmem:[%s265 + $0xb0] sm:$0xff] %v8309
        %8501 = vst [vmem:[%s265 + $0xb8] sm:$0xff] %v8456
        %8502 = vst [vmem:[%s265 + $0xc0] sm:$0xff] %v8165
        %8503 = vst [vmem:[%s265 + $0xc8] sm:$0xff] %v8312
        %8504 = vst [vmem:[%s265 + $0xd0] sm:$0xff] %v8459
        %8505 = vst [vmem:[%s265 + $0xd8] sm:$0xff] %v8167
        %8506 = vst [vmem:[%s265 + $0xe0] sm:$0xff] %v8314
        %8507 = vst [vmem:[%s265 + $0xe8] sm:$0xff] %v8461
        %8508 = vst [vmem:[%s265 + $0xf0] sm:$0xff] %v8170
        %8509 = vst [vmem:[%s265 + $0xf8] sm:$0xff] %v8317
        %8510 = vst [vmem:[%s265 + $0x100] sm:$0xff] %v8464
        %8511 = vst [vmem:[%s265 + $0x108] sm:$0xff] %v8172
        %8512 = vst [vmem:[%s265 + $0x110] sm:$0xff] %v8319
        %8513 = vst [vmem:[%s265 + $0x118] sm:$0xff] %v8466
        %8514 = vst [vmem:[%s265 + $0x120] sm:$0xff] %v8175
        %8515 = vst [vmem:[%s265 + $0x128] sm:$0xff] %v8322
        %8516 = vst [vmem:[%s265 + $0x130] sm:$0xff] %v8469
        %8517 = vst [vmem:[%s265 + $0x138] sm:$0xff] %v8177
        %8518 = vst [vmem:[%s265 + $0x140] sm:$0xff] %v8324
        %8519 = vst [vmem:[%s265 + $0x148] sm:$0xff] %v8471
        %8520 = vst [vmem:[%s265 + $0x150] sm:$0xff] %v8180
        %8521 = vst [vmem:[%s265 + $0x158] sm:$0xff] %v8327
        %8522 = vst [vmem:[%s265 + $0x160] sm:$0xff] %v8474
        %8523 = vst [vmem:[%s265 + $0x168] sm:$0xff] %v8182
        %8524 = vst [vmem:[%s265 + $0x170] sm:$0xff] %v8329
        %8525 = vst [vmem:[%s265 + $0x178] sm:$0xff] %v8476
        %s8526 = sand.u32 %s120, 1
        %s8527 = scalar_lea.sflag [#allocation4], %s8526
        %s8528 = sand.u32 %s120, 1
        %s8529 = smul.addr %s8528, 384
        %s8530 = scalar_lea.vmem [#allocation10], %s8529
        // Predicated region
        $region53: #{tpu_custom_call.1} parent=35 // pred_check
          %p8531 = pneg %p130
        $region54: #{tpu_custom_call.1} parent=35 // pred_check_branch
          %8533 = sbr.rel (%p8531) target = $region56
        $region55: #{tpu_custom_call.1} parent=35 // pred_region
          %8535 = vsyncadd %s8527, 0
          %s8536 = smul.addr %s23, 48
          %s8537 = smul.addr %s8536, 8
          %s8538 = scalar_lea.hbm %s4, %s8537
          %s8539 = sshll.u32 %s8530, 4
          %s8540 = int_to_ptr.vmem [resolvable:$true] %s8539
          %s8541 = sshll.u32 %s8538, 4
          %s8542 = int_to_ptr.hbm [resolvable:$true] %s8541
          %8547 = dma.vmem_to_hbm [thread:$0]  %s8540, 6144, %s8542, %s8527, 384, 384, 24
        $region56: #{tpu_custom_call.1} parent=35 // pred_fallthru
          _
      $region36: #{tpu_custom_call.1} parent=5 // pred_fallthru
        _
      %p8548 = scmp.le.s32.totalorder 2, %s18
      // Predicated region
      $region57: #{tpu_custom_call.1} parent=5 // pred_check
        %p8549 = pneg %p8548
      $region58: #{tpu_custom_call.1} parent=5 // pred_check_branch
        %8551 = sbr.rel (%p8549) target = $region60
      $region59: #{tpu_custom_call.1} parent=5 // pred_region
        %s8552 = ssub.s32 %s18, 2
        // Predicated region
        $region61: #{tpu_custom_call.1} parent=59 // pred_check
          %p8553 = pneg %p136
        $region62: #{tpu_custom_call.1} parent=59 // pred_check_branch
          %8555 = sbr.rel (%p8553) target = $region64
        $region63: #{tpu_custom_call.1} parent=59 // pred_region
          %s8556 = sand.u32 %s121, 1
          %s8557 = scalar_lea.sflag [#allocation4], %s8556
          %s8558 = sand.u32 %s121, 1
          %s8559 = smul.addr %s8558, 384
          %s8560 = scalar_lea.vmem [#allocation10], %s8559
          %8562 = dma.done %s8557, 6144
        $region64: #{tpu_custom_call.1} parent=59 // pred_fallthru
          _
      $region60: #{tpu_custom_call.1} parent=5 // pred_fallthru
        _
    $region6: #{tpu_custom_call.1} parent=1 // loop_footer
      %s22 = sadd.s32 1, %s18
    $region7: #{tpu_custom_call.1} parent=1 // loop_footer_branch
      %17 = sbr.rel target = $region3
    $region8: #{tpu_custom_call.1} parent=1 // loop_exit
      _
    %8563 = vsyncpa [#allocation3], 1
    %s8564 = scalar_lea.sflag [#allocation3], 1
    %8565 = vsyncpa %s8564, 1
    %8566 = vsyncpa [#allocation6], 1
    %8567 = vsyncpa [#allocation9], 1
    %8568 = vsyncpa [#allocation4], 1
    %s8569 = scalar_lea.sflag [#allocation4], 1
    %8570 = vsyncpa %s8569, 1

</llo_original>
